<compile_context>
chip_gen: v7x
topology: tpu7x:2x2x1
jax: 0.10.0
libtpu: 0.0.40
codegen_flags: <defaults>
</compile_context>

<pallas_src>
import functools

import jax
import jax.numpy as jnp
from jax.experimental import pallas as pl
from jax.experimental.pallas import tpu as pltpu


def _basic_block_kernel(x_ref, w1_ref, s1_ref, b1_ref, w2_ref, s2_ref, b2_ref,
                        out_ref, xpad_s, ypad_s, *, H, W, C, Nb, last):
    """One batch block (Nb samples) of the BasicBlock, NHWC layout.

    x_ref   : (Nb, H, W, C)        unpadded input (also used as the residual)
    w?_ref  : (9, C, C)            conv taps, tap = kh*3 + kw, laid out (Cin, Cout)
    s?/b?   : (1, C)               folded BatchNorm scale / bias (f32)
    out_ref : (Nb, H, W, C)
    xpad_s  : (Nb, H+2, W+2, C)    VMEM scratch: zero-padded input
    ypad_s  : (Nb, H+2, W+2, C)    VMEM scratch: zero-padded conv1->bn1->relu output
    """
    M = Nb * H * W
    mxu_dtype = w1_ref.dtype

    # Zero only the 1-pixel borders of the padded scratches; the interiors are
    # fully overwritten below.  Done every step -> safe under "parallel" megacore
    # sharding (no reliance on program_id==0 having run on this core).
    zrow = jnp.zeros((Nb, 1, W + 2, C), jnp.float32)
    zcol = jnp.zeros((Nb, H + 2, 1, C), jnp.float32)
    for s in (xpad_s, ypad_s):
        s[:, 0:1, :, :] = zrow
        s[:, H + 1:H + 2, :, :] = zrow
        s[:, :, 0:1, :] = zcol
        s[:, :, W + 1:W + 2, :] = zcol

    # Stage the unpadded input block into the interior of the padded scratch
    # (replaces the wrapper-side jnp.pad HBM pass).
    xin = x_ref[...]                                   # (Nb, H, W, C) f32; also the residual
    xpad_s[:, 1:1 + H, 1:1 + W, :] = xin

    def conv3x3(pad_ref, w_ref):
        # 9 accumulated GEMMs: (Nb*H*W, C) x (C, C), f32 accumulation on the MXU.
        acc = jnp.zeros((M, C), jnp.float32)
        for kh in range(3):
            for kw in range(3):
                xt = pad_ref[:, kh:kh + H, kw:kw + W, :]          # (Nb, H, W, C)
                xt = xt.reshape(M, C).astype(mxu_dtype)           # layout-preserving collapse
                acc = acc + jnp.dot(xt, w_ref[kh * 3 + kw],
                                    preferred_element_type=jnp.float32)
        return acc

    # ---- conv1 -> bn1 -> relu ----
    y1 = conv3x3(xpad_s, w1_ref)                        # (M, C) f32
    y1 = jnp.maximum(y1 * s1_ref[...] + b1_ref[...], 0.0)
    ypad_s[:, 1:1 + H, 1:1 + W, :] = y1.reshape(Nb, H, W, C)

    # ---- conv2 -> bn2 -> + identity -> relu (unless last) ----
    y2 = conv3x3(ypad_s, w2_ref)                        # (M, C) f32
    y2 = y2 * s2_ref[...] + b2_ref[...]
    y2 = y2.reshape(Nb, H, W, C) + xin                  # residual read from resident input
    if not last:
        y2 = jnp.maximum(y2, 0.0)
    out_ref[...] = y2.astype(out_ref.dtype)


def _pick_batch_block(N, H, W, C, budget_bytes=6 << 20):
    """Largest divisor of N whose per-step VMEM working set fits the budget."""
    per_sample = 2 * (H * W * C * 4) * 2              # in + out blocks, double-buffered, f32
    per_sample += 2 * (H + 2) * (W + 2) * C * 4       # two padded f32 scratches
    nb = int(max(1, min(N, budget_bytes // max(per_sample, 1))))
    while N % nb:
        nb -= 1
    return nb


def basic_block_forward_nhwc(x_nhwc, params, *, last=False, eps=1e-5,
                             mxu_dtype=jnp.bfloat16):
    """BasicBlock forward on NHWC activations (preferred: avoids per-block transposes)."""
    N, H, W, C = x_nhwc.shape
    x = x_nhwc.astype(jnp.float32)

    def fold_bn(gamma, beta, mean, var):
        scale = gamma.astype(jnp.float32) / jnp.sqrt(var.astype(jnp.float32) + eps)
        bias = beta.astype(jnp.float32) - mean.astype(jnp.float32) * scale
        return scale.reshape(1, C), bias.reshape(1, C)

    def fold_w(w_oihw):   # (Cout, Cin, 3, 3) -> (9, Cin, Cout), MXU input dtype
        return jnp.transpose(w_oihw, (2, 3, 1, 0)).reshape(9, C, C).astype(mxu_dtype)

    w1 = fold_w(params["conv1_w"])
    w2 = fold_w(params["conv2_w"])
    s1, b1 = fold_bn(params["bn1_gamma"], params["bn1_beta"],
                     params["bn1_mean"], params["bn1_var"])
    s2, b2 = fold_bn(params["bn2_gamma"], params["bn2_beta"],
                     params["bn2_mean"], params["bn2_var"])

    Nb = _pick_batch_block(N, H, W, C)
    kernel = functools.partial(_basic_block_kernel, H=H, W=W, C=C, Nb=Nb, last=last)

    return pl.pallas_call(
        kernel,
        out_shape=jax.ShapeDtypeStruct((N, H, W, C), jnp.float32),
        grid_spec=pltpu.PrefetchScalarGridSpec(
            num_scalar_prefetch=0,
            grid=(N // Nb,),
            in_specs=[
                pl.BlockSpec((Nb, H, W, C), lambda n: (n, 0, 0, 0)),   # x (also residual)
                pl.BlockSpec((9, C, C), lambda n: (0, 0, 0)),          # w1 taps
                pl.BlockSpec((1, C), lambda n: (0, 0)),                # bn1 scale
                pl.BlockSpec((1, C), lambda n: (0, 0)),                # bn1 bias
                pl.BlockSpec((9, C, C), lambda n: (0, 0, 0)),          # w2 taps
                pl.BlockSpec((1, C), lambda n: (0, 0)),                # bn2 scale
                pl.BlockSpec((1, C), lambda n: (0, 0)),                # bn2 bias
            ],
            out_specs=pl.BlockSpec((Nb, H, W, C), lambda n: (n, 0, 0, 0)),
            scratch_shapes=[pltpu.VMEM((Nb, H + 2, W + 2, C), jnp.float32),
                            pltpu.VMEM((Nb, H + 2, W + 2, C), jnp.float32)],
        ),
        compiler_params=pltpu.CompilerParams(
            dimension_semantics=("parallel",),           # batch elems independent (v7x: 2 TCs)
            vmem_limit_bytes=32 * 1024 * 1024),
    )(x, w1, s1, b1, w2, s2, b2)


def basic_block_forward(x_nchw, params, *, last=False, eps=1e-5,
                        mxu_dtype=jnp.bfloat16):
    """NCHW wrapper (matches the PyTorch interface). Prefer the NHWC entry point
    across a whole network to avoid these two transposes per block."""
    x = jnp.transpose(x_nchw, (0, 2, 3, 1))
    y = basic_block_forward_nhwc(x, params, last=last, eps=eps, mxu_dtype=mxu_dtype)
    return jnp.transpose(y, (0, 3, 1, 2))


# ----------------------------- pure-JAX reference -----------------------------
def _reference_forward(x, params, *, last=False, eps=1e-5):
    def conv3x3(x, w):
        return jax.lax.conv_general_dilated(
            x, w, window_strides=(1, 1), padding=((1, 1), (1, 1)),
            dimension_numbers=("NCHW", "OIHW", "NCHW"))

    def bn(x, g, b, m, v):
        g, b, m, v = (a[None, :, None, None] for a in (g, b, m, v))
        return (x - m) / jnp.sqrt(v + eps) * g + b

    out = conv3x3(x, params["conv1_w"])
    out = bn(out, params["bn1_gamma"], params["bn1_beta"],
             params["bn1_mean"], params["bn1_var"])
    out = jnp.maximum(out, 0.0)
    out = conv3x3(out, params["conv2_w"])
    out = bn(out, params["bn2_gamma"], params["bn2_beta"],
             params["bn2_mean"], params["bn2_var"])
    out = out + x
    if not last:
        out = jnp.maximum(out, 0.0)
    return out


if __name__ == "__main__":
    N, C, H, W = 2, 4, 16, 16            # inplanes == planes, stride=1, downsample=None
    key = jax.random.PRNGKey(0)
    keys = jax.random.split(key, 9)

    x = jax.random.normal(keys[0], (N, C, H, W), jnp.float32)
    params = {
        "conv1_w":  jax.random.normal(keys[1], (C, C, 3, 3), jnp.float32) * 0.1,
        "conv2_w":  jax.random.normal(keys[2], (C, C, 3, 3), jnp.float32) * 0.1,
        "bn1_gamma": jax.random.uniform(keys[3], (C,), jnp.float32, 0.5, 1.5),
        "bn1_beta":  jax.random.normal(keys[4], (C,), jnp.float32) * 0.1,
        "bn1_mean":  jax.random.normal(keys[5], (C,), jnp.float32) * 0.1,
        "bn1_var":   jax.random.uniform(keys[6], (C,), jnp.float32, 0.5, 1.5),
        "bn2_gamma": jax.random.uniform(keys[7], (C,), jnp.float32, 0.5, 1.5),
        "bn2_beta":  jax.random.normal(keys[8], (C,), jnp.float32) * 0.1,
        "bn2_mean":  jnp.zeros((C,), jnp.float32),
        "bn2_var":   jnp.ones((C,), jnp.float32),
    }

    ref = jax.block_until_ready(_reference_forward(x, params, last=False))

    # 1) f32 MXU-input path (tight check)
    out_f32 = jax.block_until_ready(
        basic_block_forward(x, params, last=False, mxu_dtype=jnp.float32))
    assert out_f32.shape == (N, C, H, W)
    assert jnp.allclose(out_f32, ref, atol=1e-3, rtol=1e-3), \
        float(jnp.max(jnp.abs(out_f32 - ref)))

    # 2) last=True path (final ReLU skipped)
    ref_last = jax.block_until_ready(_reference_forward(x, params, last=True))
    out_last = jax.block_until_ready(
        basic_block_forward(x, params, last=True, mxu_dtype=jnp.float32))
    assert jnp.allclose(out_last, ref_last, atol=1e-3, rtol=1e-3), \
        float(jnp.max(jnp.abs(out_last - ref_last)))

    # 3) default bf16 MXU-input path (f32 accumulation; looser tolerance)
    out_bf16 = jax.block_until_ready(basic_block_forward(x, params, last=False))
    assert jnp.allclose(out_bf16, ref, atol=1e-1, rtol=1e-1), \
        float(jnp.max(jnp.abs(out_bf16 - ref)))

    print("KERNEL_OK")
</pallas_src>

<mosaic_0001>
module attributes {stable_mosaic.version = 11 : i64} {
  func.func @_basic_block_kernel(%arg0: i32, %arg1: memref<2x16x16x4xf32, #tpu.memory_space<vmem>>, %arg2: memref<9x4x4xf32, #tpu.memory_space<vmem>>, %arg3: memref<1x4xf32, #tpu.memory_space<vmem>>, %arg4: memref<1x4xf32, #tpu.memory_space<vmem>>, %arg5: memref<9x4x4xf32, #tpu.memory_space<vmem>>, %arg6: memref<1x4xf32, #tpu.memory_space<vmem>>, %arg7: memref<1x4xf32, #tpu.memory_space<vmem>>, %arg8: memref<2x16x16x4xf32, #tpu.memory_space<vmem>>, %arg9: memref<2x18x18x4xf32, #tpu.memory_space<vmem>>, %arg10: memref<2x18x18x4xf32, #tpu.memory_space<vmem>>) attributes {dimension_semantics = [#tpu.dimension_semantics<parallel>], iteration_bounds = array<i64: 1>, scalar_prefetch = 0 : i64, scratch_operands = 2 : i64, tpu.core_type = #tpu.core_type<tc>, window_params = [{transform_indices = @transform_0, window_bounds = array<i64: 2, 16, 16, 4>}, {pipeline_mode = #tpu.pipeline_mode<synchronous>, transform_indices = @transform_1, window_bounds = array<i64: 9, 4, 4>}, {pipeline_mode = #tpu.pipeline_mode<synchronous>, transform_indices = @transform_2, window_bounds = array<i64: 1, 4>}, {pipeline_mode = #tpu.pipeline_mode<synchronous>, transform_indices = @transform_3, window_bounds = array<i64: 1, 4>}, {pipeline_mode = #tpu.pipeline_mode<synchronous>, transform_indices = @transform_4, window_bounds = array<i64: 9, 4, 4>}, {pipeline_mode = #tpu.pipeline_mode<synchronous>, transform_indices = @transform_5, window_bounds = array<i64: 1, 4>}, {pipeline_mode = #tpu.pipeline_mode<synchronous>, transform_indices = @transform_6, window_bounds = array<i64: 1, 4>}, {transform_indices = @transform_7, window_bounds = array<i64: 2, 16, 16, 4>}]} {
    %cst = arith.constant 0.000000e+00 : f32
    %0 = vector.broadcast %cst : f32 to vector<2x1x18x4xf32>
    %cst_0 = arith.constant 0.000000e+00 : f32
    %1 = vector.broadcast %cst_0 : f32 to vector<2x18x1x4xf32>
    %c0 = arith.constant 0 : index
    %c0_1 = arith.constant 0 : index
    %c0_2 = arith.constant 0 : index
    %c0_3 = arith.constant 0 : index
    %2 = vector.load %arg9[%c0, %c0_1, %c0_2, %c0_3] : memref<2x18x18x4xf32, #tpu.memory_space<vmem>>, vector<2x1x18x4xf32>
    tpu.vector_store %arg9[%c0, %c0_1, %c0_2, %c0_3], %0 {strides = array<i32>} : memref<2x18x18x4xf32, #tpu.memory_space<vmem>>, vector<2x1x18x4xf32>,
    %c0_4 = arith.constant 0 : index
    %c17 = arith.constant 17 : index
    %c0_5 = arith.constant 0 : index
    %c0_6 = arith.constant 0 : index
    %3 = vector.load %arg9[%c0_4, %c17, %c0_5, %c0_6] : memref<2x18x18x4xf32, #tpu.memory_space<vmem>>, vector<2x1x18x4xf32>
    tpu.vector_store %arg9[%c0_4, %c17, %c0_5, %c0_6], %0 {strides = array<i32>} : memref<2x18x18x4xf32, #tpu.memory_space<vmem>>, vector<2x1x18x4xf32>,
    %c0_7 = arith.constant 0 : index
    %c0_8 = arith.constant 0 : index
    %c0_9 = arith.constant 0 : index
    %c0_10 = arith.constant 0 : index
    %4 = vector.load %arg9[%c0_7, %c0_8, %c0_9, %c0_10] : memref<2x18x18x4xf32, #tpu.memory_space<vmem>>, vector<2x18x1x4xf32>
    tpu.vector_store %arg9[%c0_7, %c0_8, %c0_9, %c0_10], %1 {strides = array<i32>} : memref<2x18x18x4xf32, #tpu.memory_space<vmem>>, vector<2x18x1x4xf32>,
    %c0_11 = arith.constant 0 : index
    %c0_12 = arith.constant 0 : index
    %c17_13 = arith.constant 17 : index
    %c0_14 = arith.constant 0 : index
    %5 = vector.load %arg9[%c0_11, %c0_12, %c17_13, %c0_14] : memref<2x18x18x4xf32, #tpu.memory_space<vmem>>, vector<2x18x1x4xf32>
    tpu.vector_store %arg9[%c0_11, %c0_12, %c17_13, %c0_14], %1 {strides = array<i32>} : memref<2x18x18x4xf32, #tpu.memory_space<vmem>>, vector<2x18x1x4xf32>,
    %c0_15 = arith.constant 0 : index
    %c0_16 = arith.constant 0 : index
    %c0_17 = arith.constant 0 : index
    %c0_18 = arith.constant 0 : index
    %6 = vector.load %arg10[%c0_15, %c0_16, %c0_17, %c0_18] : memref<2x18x18x4xf32, #tpu.memory_space<vmem>>, vector<2x1x18x4xf32>
    tpu.vector_store %arg10[%c0_15, %c0_16, %c0_17, %c0_18], %0 {strides = array<i32>} : memref<2x18x18x4xf32, #tpu.memory_space<vmem>>, vector<2x1x18x4xf32>,
    %c0_19 = arith.constant 0 : index
    %c17_20 = arith.constant 17 : index
    %c0_21 = arith.constant 0 : index
    %c0_22 = arith.constant 0 : index
    %7 = vector.load %arg10[%c0_19, %c17_20, %c0_21, %c0_22] : memref<2x18x18x4xf32, #tpu.memory_space<vmem>>, vector<2x1x18x4xf32>
    tpu.vector_store %arg10[%c0_19, %c17_20, %c0_21, %c0_22], %0 {strides = array<i32>} : memref<2x18x18x4xf32, #tpu.memory_space<vmem>>, vector<2x1x18x4xf32>,
    %c0_23 = arith.constant 0 : index
    %c0_24 = arith.constant 0 : index
    %c0_25 = arith.constant 0 : index
    %c0_26 = arith.constant 0 : index
    %8 = vector.load %arg10[%c0_23, %c0_24, %c0_25, %c0_26] : memref<2x18x18x4xf32, #tpu.memory_space<vmem>>, vector<2x18x1x4xf32>
    tpu.vector_store %arg10[%c0_23, %c0_24, %c0_25, %c0_26], %1 {strides = array<i32>} : memref<2x18x18x4xf32, #tpu.memory_space<vmem>>, vector<2x18x1x4xf32>,
    %c0_27 = arith.constant 0 : index
    %c0_28 = arith.constant 0 : index
    %c17_29 = arith.constant 17 : index
    %c0_30 = arith.constant 0 : index
    %9 = vector.load %arg10[%c0_27, %c0_28, %c17_29, %c0_30] : memref<2x18x18x4xf32, #tpu.memory_space<vmem>>, vector<2x18x1x4xf32>
    tpu.vector_store %arg10[%c0_27, %c0_28, %c17_29, %c0_30], %1 {strides = array<i32>} : memref<2x18x18x4xf32, #tpu.memory_space<vmem>>, vector<2x18x1x4xf32>,
    %c0_31 = arith.constant 0 : index
    %c0_32 = arith.constant 0 : index
    %c0_33 = arith.constant 0 : index
    %c0_34 = arith.constant 0 : index
    %10 = vector.load %arg1[%c0_31, %c0_32, %c0_33, %c0_34] : memref<2x16x16x4xf32, #tpu.memory_space<vmem>>, vector<2x16x16x4xf32>
    %c0_35 = arith.constant 0 : index
    %c1 = arith.constant 1 : index
    %c1_36 = arith.constant 1 : index
    %c0_37 = arith.constant 0 : index
    %11 = vector.load %arg9[%c0_35, %c1, %c1_36, %c0_37] : memref<2x18x18x4xf32, #tpu.memory_space<vmem>>, vector<2x16x16x4xf32>
    tpu.vector_store %arg9[%c0_35, %c1, %c1_36, %c0_37], %10 {strides = array<i32>} : memref<2x18x18x4xf32, #tpu.memory_space<vmem>>, vector<2x16x16x4xf32>,
    %cst_38 = arith.constant 0.000000e+00 : f32
    %12 = vector.broadcast %cst_38 : f32 to vector<512x4xf32>
    %c0_39 = arith.constant 0 : index
    %c0_40 = arith.constant 0 : index
    %c0_41 = arith.constant 0 : index
    %c0_42 = arith.constant 0 : index
    %13 = vector.load %arg9[%c0_39, %c0_40, %c0_41, %c0_42] : memref<2x18x18x4xf32, #tpu.memory_space<vmem>>, vector<2x16x16x4xf32>
    %14 = vector.shape_cast %13 : vector<2x16x16x4xf32> to vector<512x4xf32>
    %c0_43 = arith.constant 0 : index
    %c0_44 = arith.constant 0 : index
    %c0_45 = arith.constant 0 : index
    %15 = vector.load %arg2[%c0_43, %c0_44, %c0_45] : memref<9x4x4xf32, #tpu.memory_space<vmem>>, vector<1x4x4xf32>
    %16 = vector.shape_cast %15 : vector<1x4x4xf32> to vector<4x4xf32>
    %cst_46 = arith.constant dense<0.000000e+00> : vector<512x4xf32>
    %17 = tpu.matmul %14, %16, %cst_46 {dimension_numbers = #tpu.dot_dimension_numbers<[1], [0], [0], [1], [0, 0, 1, 1], [], []>} : vector<512x4xf32>, vector<4x4xf32>, vector<512x4xf32> -> vector<512x4xf32>
    %18 = arith.addf %12, %17 : vector<512x4xf32>
    %c0_47 = arith.constant 0 : index
    %c0_48 = arith.constant 0 : index
    %c1_49 = arith.constant 1 : index
    %c0_50 = arith.constant 0 : index
    %19 = vector.load %arg9[%c0_47, %c0_48, %c1_49, %c0_50] : memref<2x18x18x4xf32, #tpu.memory_space<vmem>>, vector<2x16x16x4xf32>
    %20 = vector.shape_cast %19 : vector<2x16x16x4xf32> to vector<512x4xf32>
    %c1_51 = arith.constant 1 : index
    %c0_52 = arith.constant 0 : index
    %c0_53 = arith.constant 0 : index
    %21 = vector.load %arg2[%c1_51, %c0_52, %c0_53] : memref<9x4x4xf32, #tpu.memory_space<vmem>>, vector<1x4x4xf32>
    %22 = vector.shape_cast %21 : vector<1x4x4xf32> to vector<4x4xf32>
    %cst_54 = arith.constant dense<0.000000e+00> : vector<512x4xf32>
    %23 = tpu.matmul %20, %22, %cst_54 {dimension_numbers = #tpu.dot_dimension_numbers<[1], [0], [0], [1], [0, 0, 1, 1], [], []>} : vector<512x4xf32>, vector<4x4xf32>, vector<512x4xf32> -> vector<512x4xf32>
    %24 = arith.addf %18, %23 : vector<512x4xf32>
    %c0_55 = arith.constant 0 : index
    %c0_56 = arith.constant 0 : index
    %c2 = arith.constant 2 : index
    %c0_57 = arith.constant 0 : index
    %25 = vector.load %arg9[%c0_55, %c0_56, %c2, %c0_57] : memref<2x18x18x4xf32, #tpu.memory_space<vmem>>, vector<2x16x16x4xf32>
    %26 = vector.shape_cast %25 : vector<2x16x16x4xf32> to vector<512x4xf32>
    %c2_58 = arith.constant 2 : index
    %c0_59 = arith.constant 0 : index
    %c0_60 = arith.constant 0 : index
    %27 = vector.load %arg2[%c2_58, %c0_59, %c0_60] : memref<9x4x4xf32, #tpu.memory_space<vmem>>, vector<1x4x4xf32>
    %28 = vector.shape_cast %27 : vector<1x4x4xf32> to vector<4x4xf32>
    %cst_61 = arith.constant dense<0.000000e+00> : vector<512x4xf32>
    %29 = tpu.matmul %26, %28, %cst_61 {dimension_numbers = #tpu.dot_dimension_numbers<[1], [0], [0], [1], [0, 0, 1, 1], [], []>} : vector<512x4xf32>, vector<4x4xf32>, vector<512x4xf32> -> vector<512x4xf32>
    %30 = arith.addf %24, %29 : vector<512x4xf32>
    %c0_62 = arith.constant 0 : index
    %c1_63 = arith.constant 1 : index
    %c0_64 = arith.constant 0 : index
    %c0_65 = arith.constant 0 : index
    %31 = vector.load %arg9[%c0_62, %c1_63, %c0_64, %c0_65] : memref<2x18x18x4xf32, #tpu.memory_space<vmem>>, vector<2x16x16x4xf32>
    %32 = vector.shape_cast %31 : vector<2x16x16x4xf32> to vector<512x4xf32>
    %c3 = arith.constant 3 : index
    %c0_66 = arith.constant 0 : index
    %c0_67 = arith.constant 0 : index
    %33 = vector.load %arg2[%c3, %c0_66, %c0_67] : memref<9x4x4xf32, #tpu.memory_space<vmem>>, vector<1x4x4xf32>
    %34 = vector.shape_cast %33 : vector<1x4x4xf32> to vector<4x4xf32>
    %cst_68 = arith.constant dense<0.000000e+00> : vector<512x4xf32>
    %35 = tpu.matmul %32, %34, %cst_68 {dimension_numbers = #tpu.dot_dimension_numbers<[1], [0], [0], [1], [0, 0, 1, 1], [], []>} : vector<512x4xf32>, vector<4x4xf32>, vector<512x4xf32> -> vector<512x4xf32>
    %36 = arith.addf %30, %35 : vector<512x4xf32>
    %c0_69 = arith.constant 0 : index
    %c1_70 = arith.constant 1 : index
    %c1_71 = arith.constant 1 : index
    %c0_72 = arith.constant 0 : index
    %37 = vector.load %arg9[%c0_69, %c1_70, %c1_71, %c0_72] : memref<2x18x18x4xf32, #tpu.memory_space<vmem>>, vector<2x16x16x4xf32>
    %38 = vector.shape_cast %37 : vector<2x16x16x4xf32> to vector<512x4xf32>
    %c4 = arith.constant 4 : index
    %c0_73 = arith.constant 0 : index
    %c0_74 = arith.constant 0 : index
    %39 = vector.load %arg2[%c4, %c0_73, %c0_74] : memref<9x4x4xf32, #tpu.memory_space<vmem>>, vector<1x4x4xf32>
    %40 = vector.shape_cast %39 : vector<1x4x4xf32> to vector<4x4xf32>
    %cst_75 = arith.constant dense<0.000000e+00> : vector<512x4xf32>
    %41 = tpu.matmul %38, %40, %cst_75 {dimension_numbers = #tpu.dot_dimension_numbers<[1], [0], [0], [1], [0, 0, 1, 1], [], []>} : vector<512x4xf32>, vector<4x4xf32>, vector<512x4xf32> -> vector<512x4xf32>
    %42 = arith.addf %36, %41 : vector<512x4xf32>
    %c0_76 = arith.constant 0 : index
    %c1_77 = arith.constant 1 : index
    %c2_78 = arith.constant 2 : index
    %c0_79 = arith.constant 0 : index
    %43 = vector.load %arg9[%c0_76, %c1_77, %c2_78, %c0_79] : memref<2x18x18x4xf32, #tpu.memory_space<vmem>>, vector<2x16x16x4xf32>
    %44 = vector.shape_cast %43 : vector<2x16x16x4xf32> to vector<512x4xf32>
    %c5 = arith.constant 5 : index
    %c0_80 = arith.constant 0 : index
    %c0_81 = arith.constant 0 : index
    %45 = vector.load %arg2[%c5, %c0_80, %c0_81] : memref<9x4x4xf32, #tpu.memory_space<vmem>>, vector<1x4x4xf32>
    %46 = vector.shape_cast %45 : vector<1x4x4xf32> to vector<4x4xf32>
    %cst_82 = arith.constant dense<0.000000e+00> : vector<512x4xf32>
    %47 = tpu.matmul %44, %46, %cst_82 {dimension_numbers = #tpu.dot_dimension_numbers<[1], [0], [0], [1], [0, 0, 1, 1], [], []>} : vector<512x4xf32>, vector<4x4xf32>, vector<512x4xf32> -> vector<512x4xf32>
    %48 = arith.addf %42, %47 : vector<512x4xf32>
    %c0_83 = arith.constant 0 : index
    %c2_84 = arith.constant 2 : index
    %c0_85 = arith.constant 0 : index
    %c0_86 = arith.constant 0 : index
    %49 = vector.load %arg9[%c0_83, %c2_84, %c0_85, %c0_86] : memref<2x18x18x4xf32, #tpu.memory_space<vmem>>, vector<2x16x16x4xf32>
    %50 = vector.shape_cast %49 : vector<2x16x16x4xf32> to vector<512x4xf32>
    %c6 = arith.constant 6 : index
    %c0_87 = arith.constant 0 : index
    %c0_88 = arith.constant 0 : index
    %51 = vector.load %arg2[%c6, %c0_87, %c0_88] : memref<9x4x4xf32, #tpu.memory_space<vmem>>, vector<1x4x4xf32>
    %52 = vector.shape_cast %51 : vector<1x4x4xf32> to vector<4x4xf32>
    %cst_89 = arith.constant dense<0.000000e+00> : vector<512x4xf32>
    %53 = tpu.matmul %50, %52, %cst_89 {dimension_numbers = #tpu.dot_dimension_numbers<[1], [0], [0], [1], [0, 0, 1, 1], [], []>} : vector<512x4xf32>, vector<4x4xf32>, vector<512x4xf32> -> vector<512x4xf32>
    %54 = arith.addf %48, %53 : vector<512x4xf32>
    %c0_90 = arith.constant 0 : index
    %c2_91 = arith.constant 2 : index
    %c1_92 = arith.constant 1 : index
    %c0_93 = arith.constant 0 : index
    %55 = vector.load %arg9[%c0_90, %c2_91, %c1_92, %c0_93] : memref<2x18x18x4xf32, #tpu.memory_space<vmem>>, vector<2x16x16x4xf32>
    %56 = vector.shape_cast %55 : vector<2x16x16x4xf32> to vector<512x4xf32>
    %c7 = arith.constant 7 : index
    %c0_94 = arith.constant 0 : index
    %c0_95 = arith.constant 0 : index
    %57 = vector.load %arg2[%c7, %c0_94, %c0_95] : memref<9x4x4xf32, #tpu.memory_space<vmem>>, vector<1x4x4xf32>
    %58 = vector.shape_cast %57 : vector<1x4x4xf32> to vector<4x4xf32>
    %cst_96 = arith.constant dense<0.000000e+00> : vector<512x4xf32>
    %59 = tpu.matmul %56, %58, %cst_96 {dimension_numbers = #tpu.dot_dimension_numbers<[1], [0], [0], [1], [0, 0, 1, 1], [], []>} : vector<512x4xf32>, vector<4x4xf32>, vector<512x4xf32> -> vector<512x4xf32>
    %60 = arith.addf %54, %59 : vector<512x4xf32>
    %c0_97 = arith.constant 0 : index
    %c2_98 = arith.constant 2 : index
    %c2_99 = arith.constant 2 : index
    %c0_100 = arith.constant 0 : index
    %61 = vector.load %arg9[%c0_97, %c2_98, %c2_99, %c0_100] : memref<2x18x18x4xf32, #tpu.memory_space<vmem>>, vector<2x16x16x4xf32>
    %62 = vector.shape_cast %61 : vector<2x16x16x4xf32> to vector<512x4xf32>
    %c8 = arith.constant 8 : index
    %c0_101 = arith.constant 0 : index
    %c0_102 = arith.constant 0 : index
    %63 = vector.load %arg2[%c8, %c0_101, %c0_102] : memref<9x4x4xf32, #tpu.memory_space<vmem>>, vector<1x4x4xf32>
    %64 = vector.shape_cast %63 : vector<1x4x4xf32> to vector<4x4xf32>
    %cst_103 = arith.constant dense<0.000000e+00> : vector<512x4xf32>
    %65 = tpu.matmul %62, %64, %cst_103 {dimension_numbers = #tpu.dot_dimension_numbers<[1], [0], [0], [1], [0, 0, 1, 1], [], []>} : vector<512x4xf32>, vector<4x4xf32>, vector<512x4xf32> -> vector<512x4xf32>
    %66 = arith.addf %60, %65 : vector<512x4xf32>
    %c0_104 = arith.constant 0 : index
    %c0_105 = arith.constant 0 : index
    %67 = vector.load %arg3[%c0_104, %c0_105] : memref<1x4xf32, #tpu.memory_space<vmem>>, vector<1x4xf32>
    %68 = vector.broadcast %67 : vector<1x4xf32> to vector<512x4xf32>
    %69 = arith.mulf %66, %68 : vector<512x4xf32>
    %c0_106 = arith.constant 0 : index
    %c0_107 = arith.constant 0 : index
    %70 = vector.load %arg4[%c0_106, %c0_107] : memref<1x4xf32, #tpu.memory_space<vmem>>, vector<1x4xf32>
    %71 = vector.broadcast %70 : vector<1x4xf32> to vector<512x4xf32>
    %72 = arith.addf %69, %71 : vector<512x4xf32>
    %cst_108 = arith.constant 0.000000e+00 : f32
    %73 = vector.broadcast %cst_108 : f32 to vector<512x4xf32>
    %74 = arith.maximumf %72, %73 : vector<512x4xf32>
    %75 = vector.shape_cast %74 : vector<512x4xf32> to vector<2x16x16x4xf32>
    %c0_109 = arith.constant 0 : index
    %c1_110 = arith.constant 1 : index
    %c1_111 = arith.constant 1 : index
    %c0_112 = arith.constant 0 : index
    %76 = vector.load %arg10[%c0_109, %c1_110, %c1_111, %c0_112] : memref<2x18x18x4xf32, #tpu.memory_space<vmem>>, vector<2x16x16x4xf32>
    tpu.vector_store %arg10[%c0_109, %c1_110, %c1_111, %c0_112], %75 {strides = array<i32>} : memref<2x18x18x4xf32, #tpu.memory_space<vmem>>, vector<2x16x16x4xf32>,
    %cst_113 = arith.constant 0.000000e+00 : f32
    %77 = vector.broadcast %cst_113 : f32 to vector<512x4xf32>
    %c0_114 = arith.constant 0 : index
    %c0_115 = arith.constant 0 : index
    %c0_116 = arith.constant 0 : index
    %c0_117 = arith.constant 0 : index
    %78 = vector.load %arg10[%c0_114, %c0_115, %c0_116, %c0_117] : memref<2x18x18x4xf32, #tpu.memory_space<vmem>>, vector<2x16x16x4xf32>
    %79 = vector.shape_cast %78 : vector<2x16x16x4xf32> to vector<512x4xf32>
    %c0_118 = arith.constant 0 : index
    %c0_119 = arith.constant 0 : index
    %c0_120 = arith.constant 0 : index
    %80 = vector.load %arg5[%c0_118, %c0_119, %c0_120] : memref<9x4x4xf32, #tpu.memory_space<vmem>>, vector<1x4x4xf32>
    %81 = vector.shape_cast %80 : vector<1x4x4xf32> to vector<4x4xf32>
    %cst_121 = arith.constant dense<0.000000e+00> : vector<512x4xf32>
    %82 = tpu.matmul %79, %81, %cst_121 {dimension_numbers = #tpu.dot_dimension_numbers<[1], [0], [0], [1], [0, 0, 1, 1], [], []>} : vector<512x4xf32>, vector<4x4xf32>, vector<512x4xf32> -> vector<512x4xf32>
    %83 = arith.addf %77, %82 : vector<512x4xf32>
    %c0_122 = arith.constant 0 : index
    %c0_123 = arith.constant 0 : index
    %c1_124 = arith.constant 1 : index
    %c0_125 = arith.constant 0 : index
    %84 = vector.load %arg10[%c0_122, %c0_123, %c1_124, %c0_125] : memref<2x18x18x4xf32, #tpu.memory_space<vmem>>, vector<2x16x16x4xf32>
    %85 = vector.shape_cast %84 : vector<2x16x16x4xf32> to vector<512x4xf32>
    %c1_126 = arith.constant 1 : index
    %c0_127 = arith.constant 0 : index
    %c0_128 = arith.constant 0 : index
    %86 = vector.load %arg5[%c1_126, %c0_127, %c0_128] : memref<9x4x4xf32, #tpu.memory_space<vmem>>, vector<1x4x4xf32>
    %87 = vector.shape_cast %86 : vector<1x4x4xf32> to vector<4x4xf32>
    %cst_129 = arith.constant dense<0.000000e+00> : vector<512x4xf32>
    %88 = tpu.matmul %85, %87, %cst_129 {dimension_numbers = #tpu.dot_dimension_numbers<[1], [0], [0], [1], [0, 0, 1, 1], [], []>} : vector<512x4xf32>, vector<4x4xf32>, vector<512x4xf32> -> vector<512x4xf32>
    %89 = arith.addf %83, %88 : vector<512x4xf32>
    %c0_130 = arith.constant 0 : index
    %c0_131 = arith.constant 0 : index
    %c2_132 = arith.constant 2 : index
    %c0_133 = arith.constant 0 : index
    %90 = vector.load %arg10[%c0_130, %c0_131, %c2_132, %c0_133] : memref<2x18x18x4xf32, #tpu.memory_space<vmem>>, vector<2x16x16x4xf32>
    %91 = vector.shape_cast %90 : vector<2x16x16x4xf32> to vector<512x4xf32>
    %c2_134 = arith.constant 2 : index
    %c0_135 = arith.constant 0 : index
    %c0_136 = arith.constant 0 : index
    %92 = vector.load %arg5[%c2_134, %c0_135, %c0_136] : memref<9x4x4xf32, #tpu.memory_space<vmem>>, vector<1x4x4xf32>
    %93 = vector.shape_cast %92 : vector<1x4x4xf32> to vector<4x4xf32>
    %cst_137 = arith.constant dense<0.000000e+00> : vector<512x4xf32>
    %94 = tpu.matmul %91, %93, %cst_137 {dimension_numbers = #tpu.dot_dimension_numbers<[1], [0], [0], [1], [0, 0, 1, 1], [], []>} : vector<512x4xf32>, vector<4x4xf32>, vector<512x4xf32> -> vector<512x4xf32>
    %95 = arith.addf %89, %94 : vector<512x4xf32>
    %c0_138 = arith.constant 0 : index
    %c1_139 = arith.constant 1 : index
    %c0_140 = arith.constant 0 : index
    %c0_141 = arith.constant 0 : index
    %96 = vector.load %arg10[%c0_138, %c1_139, %c0_140, %c0_141] : memref<2x18x18x4xf32, #tpu.memory_space<vmem>>, vector<2x16x16x4xf32>
    %97 = vector.shape_cast %96 : vector<2x16x16x4xf32> to vector<512x4xf32>
    %c3_142 = arith.constant 3 : index
    %c0_143 = arith.constant 0 : index
    %c0_144 = arith.constant 0 : index
    %98 = vector.load %arg5[%c3_142, %c0_143, %c0_144] : memref<9x4x4xf32, #tpu.memory_space<vmem>>, vector<1x4x4xf32>
    %99 = vector.shape_cast %98 : vector<1x4x4xf32> to vector<4x4xf32>
    %cst_145 = arith.constant dense<0.000000e+00> : vector<512x4xf32>
    %100 = tpu.matmul %97, %99, %cst_145 {dimension_numbers = #tpu.dot_dimension_numbers<[1], [0], [0], [1], [0, 0, 1, 1], [], []>} : vector<512x4xf32>, vector<4x4xf32>, vector<512x4xf32> -> vector<512x4xf32>
    %101 = arith.addf %95, %100 : vector<512x4xf32>
    %c0_146 = arith.constant 0 : index
    %c1_147 = arith.constant 1 : index
    %c1_148 = arith.constant 1 : index
    %c0_149 = arith.constant 0 : index
    %102 = vector.load %arg10[%c0_146, %c1_147, %c1_148, %c0_149] : memref<2x18x18x4xf32, #tpu.memory_space<vmem>>, vector<2x16x16x4xf32>
    %103 = vector.shape_cast %102 : vector<2x16x16x4xf32> to vector<512x4xf32>
    %c4_150 = arith.constant 4 : index
    %c0_151 = arith.constant 0 : index
    %c0_152 = arith.constant 0 : index
    %104 = vector.load %arg5[%c4_150, %c0_151, %c0_152] : memref<9x4x4xf32, #tpu.memory_space<vmem>>, vector<1x4x4xf32>
    %105 = vector.shape_cast %104 : vector<1x4x4xf32> to vector<4x4xf32>
    %cst_153 = arith.constant dense<0.000000e+00> : vector<512x4xf32>
    %106 = tpu.matmul %103, %105, %cst_153 {dimension_numbers = #tpu.dot_dimension_numbers<[1], [0], [0], [1], [0, 0, 1, 1], [], []>} : vector<512x4xf32>, vector<4x4xf32>, vector<512x4xf32> -> vector<512x4xf32>
    %107 = arith.addf %101, %106 : vector<512x4xf32>
    %c0_154 = arith.constant 0 : index
    %c1_155 = arith.constant 1 : index
    %c2_156 = arith.constant 2 : index
    %c0_157 = arith.constant 0 : index
    %108 = vector.load %arg10[%c0_154, %c1_155, %c2_156, %c0_157] : memref<2x18x18x4xf32, #tpu.memory_space<vmem>>, vector<2x16x16x4xf32>
    %109 = vector.shape_cast %108 : vector<2x16x16x4xf32> to vector<512x4xf32>
    %c5_158 = arith.constant 5 : index
    %c0_159 = arith.constant 0 : index
    %c0_160 = arith.constant 0 : index
    %110 = vector.load %arg5[%c5_158, %c0_159, %c0_160] : memref<9x4x4xf32, #tpu.memory_space<vmem>>, vector<1x4x4xf32>
    %111 = vector.shape_cast %110 : vector<1x4x4xf32> to vector<4x4xf32>
    %cst_161 = arith.constant dense<0.000000e+00> : vector<512x4xf32>
    %112 = tpu.matmul %109, %111, %cst_161 {dimension_numbers = #tpu.dot_dimension_numbers<[1], [0], [0], [1], [0, 0, 1, 1], [], []>} : vector<512x4xf32>, vector<4x4xf32>, vector<512x4xf32> -> vector<512x4xf32>
    %113 = arith.addf %107, %112 : vector<512x4xf32>
    %c0_162 = arith.constant 0 : index
    %c2_163 = arith.constant 2 : index
    %c0_164 = arith.constant 0 : index
    %c0_165 = arith.constant 0 : index
    %114 = vector.load %arg10[%c0_162, %c2_163, %c0_164, %c0_165] : memref<2x18x18x4xf32, #tpu.memory_space<vmem>>, vector<2x16x16x4xf32>
    %115 = vector.shape_cast %114 : vector<2x16x16x4xf32> to vector<512x4xf32>
    %c6_166 = arith.constant 6 : index
    %c0_167 = arith.constant 0 : index
    %c0_168 = arith.constant 0 : index
    %116 = vector.load %arg5[%c6_166, %c0_167, %c0_168] : memref<9x4x4xf32, #tpu.memory_space<vmem>>, vector<1x4x4xf32>
    %117 = vector.shape_cast %116 : vector<1x4x4xf32> to vector<4x4xf32>
    %cst_169 = arith.constant dense<0.000000e+00> : vector<512x4xf32>
    %118 = tpu.matmul %115, %117, %cst_169 {dimension_numbers = #tpu.dot_dimension_numbers<[1], [0], [0], [1], [0, 0, 1, 1], [], []>} : vector<512x4xf32>, vector<4x4xf32>, vector<512x4xf32> -> vector<512x4xf32>
    %119 = arith.addf %113, %118 : vector<512x4xf32>
    %c0_170 = arith.constant 0 : index
    %c2_171 = arith.constant 2 : index
    %c1_172 = arith.constant 1 : index
    %c0_173 = arith.constant 0 : index
    %120 = vector.load %arg10[%c0_170, %c2_171, %c1_172, %c0_173] : memref<2x18x18x4xf32, #tpu.memory_space<vmem>>, vector<2x16x16x4xf32>
    %121 = vector.shape_cast %120 : vector<2x16x16x4xf32> to vector<512x4xf32>
    %c7_174 = arith.constant 7 : index
    %c0_175 = arith.constant 0 : index
    %c0_176 = arith.constant 0 : index
    %122 = vector.load %arg5[%c7_174, %c0_175, %c0_176] : memref<9x4x4xf32, #tpu.memory_space<vmem>>, vector<1x4x4xf32>
    %123 = vector.shape_cast %122 : vector<1x4x4xf32> to vector<4x4xf32>
    %cst_177 = arith.constant dense<0.000000e+00> : vector<512x4xf32>
    %124 = tpu.matmul %121, %123, %cst_177 {dimension_numbers = #tpu.dot_dimension_numbers<[1], [0], [0], [1], [0, 0, 1, 1], [], []>} : vector<512x4xf32>, vector<4x4xf32>, vector<512x4xf32> -> vector<512x4xf32>
    %125 = arith.addf %119, %124 : vector<512x4xf32>
    %c0_178 = arith.constant 0 : index
    %c2_179 = arith.constant 2 : index
    %c2_180 = arith.constant 2 : index
    %c0_181 = arith.constant 0 : index
    %126 = vector.load %arg10[%c0_178, %c2_179, %c2_180, %c0_181] : memref<2x18x18x4xf32, #tpu.memory_space<vmem>>, vector<2x16x16x4xf32>
    %127 = vector.shape_cast %126 : vector<2x16x16x4xf32> to vector<512x4xf32>
    %c8_182 = arith.constant 8 : index
    %c0_183 = arith.constant 0 : index
    %c0_184 = arith.constant 0 : index
    %128 = vector.load %arg5[%c8_182, %c0_183, %c0_184] : memref<9x4x4xf32, #tpu.memory_space<vmem>>, vector<1x4x4xf32>
    %129 = vector.shape_cast %128 : vector<1x4x4xf32> to vector<4x4xf32>
    %cst_185 = arith.constant dense<0.000000e+00> : vector<512x4xf32>
    %130 = tpu.matmul %127, %129, %cst_185 {dimension_numbers = #tpu.dot_dimension_numbers<[1], [0], [0], [1], [0, 0, 1, 1], [], []>} : vector<512x4xf32>, vector<4x4xf32>, vector<512x4xf32> -> vector<512x4xf32>
    %131 = arith.addf %125, %130 : vector<512x4xf32>
    %c0_186 = arith.constant 0 : index
    %c0_187 = arith.constant 0 : index
    %132 = vector.load %arg6[%c0_186, %c0_187] : memref<1x4xf32, #tpu.memory_space<vmem>>, vector<1x4xf32>
    %133 = vector.broadcast %132 : vector<1x4xf32> to vector<512x4xf32>
    %134 = arith.mulf %131, %133 : vector<512x4xf32>
    %c0_188 = arith.constant 0 : index
    %c0_189 = arith.constant 0 : index
    %135 = vector.load %arg7[%c0_188, %c0_189] : memref<1x4xf32, #tpu.memory_space<vmem>>, vector<1x4xf32>
    %136 = vector.broadcast %135 : vector<1x4xf32> to vector<512x4xf32>
    %137 = arith.addf %134, %136 : vector<512x4xf32>
    %138 = vector.shape_cast %137 : vector<512x4xf32> to vector<2x16x16x4xf32>
    %139 = arith.addf %138, %10 : vector<2x16x16x4xf32>
    %cst_190 = arith.constant 0.000000e+00 : f32
    %140 = vector.broadcast %cst_190 : f32 to vector<2x16x16x4xf32>
    %141 = arith.maximumf %139, %140 : vector<2x16x16x4xf32>
    %c0_191 = arith.constant 0 : index
    %c0_192 = arith.constant 0 : index
    %c0_193 = arith.constant 0 : index
    %c0_194 = arith.constant 0 : index
    %142 = vector.load %arg8[%c0_191, %c0_192, %c0_193, %c0_194] : memref<2x16x16x4xf32, #tpu.memory_space<vmem>>, vector<2x16x16x4xf32>
    tpu.vector_store %arg8[%c0_191, %c0_192, %c0_193, %c0_194], %141 {strides = array<i32>} : memref<2x16x16x4xf32, #tpu.memory_space<vmem>>, vector<2x16x16x4xf32>,
    return
  }
  func.func @transform_0(%arg0: i32) -> (i32, i32, i32, i32) {
    %c0_i32 = arith.constant 0 : i32
    %c0_i32_0 = arith.constant 0 : i32
    %c0_i32_1 = arith.constant 0 : i32
    %c0_i32_2 = arith.constant 0 : i32
    return %arg0, %c0_i32, %c0_i32_0, %c0_i32_1 : i32, i32, i32, i32
  }
  func.func @transform_1(%arg0: i32) -> (i32, i32, i32) {
    %c0_i32 = arith.constant 0 : i32
    %c0_i32_0 = arith.constant 0 : i32
    %c0_i32_1 = arith.constant 0 : i32
    %c0_i32_2 = arith.constant 0 : i32
    return %c0_i32, %c0_i32_0, %c0_i32_1 : i32, i32, i32
  }
  func.func @transform_2(%arg0: i32) -> (i32, i32) {
    %c0_i32 = arith.constant 0 : i32
    %c0_i32_0 = arith.constant 0 : i32
    %c0_i32_1 = arith.constant 0 : i32
    return %c0_i32, %c0_i32_0 : i32, i32
  }
  func.func @transform_3(%arg0: i32) -> (i32, i32) {
    %c0_i32 = arith.constant 0 : i32
    %c0_i32_0 = arith.constant 0 : i32
    %c0_i32_1 = arith.constant 0 : i32
    return %c0_i32, %c0_i32_0 : i32, i32
  }
  func.func @transform_4(%arg0: i32) -> (i32, i32, i32) {
    %c0_i32 = arith.constant 0 : i32
    %c0_i32_0 = arith.constant 0 : i32
    %c0_i32_1 = arith.constant 0 : i32
    %c0_i32_2 = arith.constant 0 : i32
    return %c0_i32, %c0_i32_0, %c0_i32_1 : i32, i32, i32
  }
  func.func @transform_5(%arg0: i32) -> (i32, i32) {
    %c0_i32 = arith.constant 0 : i32
    %c0_i32_0 = arith.constant 0 : i32
    %c0_i32_1 = arith.constant 0 : i32
    return %c0_i32, %c0_i32_0 : i32, i32
  }
  func.func @transform_6(%arg0: i32) -> (i32, i32) {
    %c0_i32 = arith.constant 0 : i32
    %c0_i32_0 = arith.constant 0 : i32
    %c0_i32_1 = arith.constant 0 : i32
    return %c0_i32, %c0_i32_0 : i32, i32
  }
  func.func @transform_7(%arg0: i32) -> (i32, i32, i32, i32) {
    %c0_i32 = arith.constant 0 : i32
    %c0_i32_0 = arith.constant 0 : i32
    %c0_i32_1 = arith.constant 0 : i32
    %c0_i32_2 = arith.constant 0 : i32
    return %arg0, %c0_i32, %c0_i32_0, %c0_i32_1 : i32, i32, i32, i32
  }
}

</mosaic_0001>

<llo_original>
// kernel: tpu_custom_call.1
$region0: #{tpu_custom_call.1}
  #allocation0 [shape = 'u32[]', space=smem, size = 0x4, offset = 0x4, fixed_abs, tag = 'smem constant byte address 0x4 - core index']
  #allocation1 [shape = 'u32[144,128]{1,0:T(1,128)}', space=vmem, size = 0x12000, scoped, tag = 'internal scratch']
  #allocation2 [shape = 'f32[2,18,18,4]{3,2,1,0:T(8,128)}', space=vmem, size = 0x6c000, scoped, tag = 'scratch operand']
  #allocation3 [shape = 'f32[2,18,18,4]{3,2,1,0:T(8,128)}', space=vmem, size = 0x6c000, scoped, tag = 'scratch operand']
  %s0 = inlined_call_operand.vmem [shape: f32[2,16,16,4], index: 0, kind: input, shape index: {}]
  %s1 = inlined_call_operand.vmem [shape: f32[9,4,4], index: 1, kind: input, shape index: {}]
  %s2 = inlined_call_operand.vmem [shape: f32[1,4], index: 2, kind: input, shape index: {}]
  %s3 = inlined_call_operand.vmem [shape: f32[1,4], index: 3, kind: input, shape index: {}]
  %s4 = inlined_call_operand.vmem [shape: f32[9,4,4], index: 4, kind: input, shape index: {}]
  %s5 = inlined_call_operand.vmem [shape: f32[1,4], index: 5, kind: input, shape index: {}]
  %s6 = inlined_call_operand.vmem [shape: f32[1,4], index: 6, kind: input, shape index: {}]
  %s7 = inlined_call_operand.vmem [shape: f32[2,16,16,4], index: 7, kind: output, shape index: {}]
  %s8 = sld [smem:[#allocation0]]
  $region38: #{tpu_custom_call.1} parent=0
    _
  %s10 = ssub.s32 1, %s8
  %s11 = scalar_select 0, %s10, %s8
  // Predicated region
  $region2: #{tpu_custom_call.1} parent=0 // pred_check
    _
  $region3: #{tpu_custom_call.1} parent=0 // pred_check_branch
    %13 = sbr.rel (0) target = $region5
  $region4: #{tpu_custom_call.1} parent=0 // pred_region
    _
  $region5: #{tpu_custom_call.1} parent=0 // pred_fallthru
    _
  // Predicated region
  $region6: #{tpu_custom_call.1} parent=0 // pred_check
    _
  $region7: #{tpu_custom_call.1} parent=0 // pred_check_branch
    %15 = sbr.rel (0) target = $region9
  $region8: #{tpu_custom_call.1} parent=0 // pred_region
    _
  $region9: #{tpu_custom_call.1} parent=0 // pred_fallthru
    _
  // Predicated region
  $region10: #{tpu_custom_call.1} parent=0 // pred_check
    _
  $region11: #{tpu_custom_call.1} parent=0 // pred_check_branch
    %17 = sbr.rel (0) target = $region13
  $region12: #{tpu_custom_call.1} parent=0 // pred_region
    _
  $region13: #{tpu_custom_call.1} parent=0 // pred_fallthru
    _
  // Predicated region
  $region14: #{tpu_custom_call.1} parent=0 // pred_check
    _
  $region15: #{tpu_custom_call.1} parent=0 // pred_check_branch
    %19 = sbr.rel (0) target = $region17
  $region16: #{tpu_custom_call.1} parent=0 // pred_region
    _
  $region17: #{tpu_custom_call.1} parent=0 // pred_fallthru
    _
  // Predicated region
  $region18: #{tpu_custom_call.1} parent=0 // pred_check
    _
  $region19: #{tpu_custom_call.1} parent=0 // pred_check_branch
    %21 = sbr.rel (0) target = $region21
  $region20: #{tpu_custom_call.1} parent=0 // pred_region
    _
  $region21: #{tpu_custom_call.1} parent=0 // pred_fallthru
    _
  // Predicated region
  $region22: #{tpu_custom_call.1} parent=0 // pred_check
    _
  $region23: #{tpu_custom_call.1} parent=0 // pred_check_branch
    %23 = sbr.rel (0) target = $region25
  $region24: #{tpu_custom_call.1} parent=0 // pred_region
    _
  $region25: #{tpu_custom_call.1} parent=0 // pred_fallthru
    _
  // Predicated region
  $region26: #{tpu_custom_call.1} parent=0 // pred_check
    _
  $region27: #{tpu_custom_call.1} parent=0 // pred_check_branch
    %25 = sbr.rel (0) target = $region29
  $region28: #{tpu_custom_call.1} parent=0 // pred_region
    _
  $region29: #{tpu_custom_call.1} parent=0 // pred_fallthru
    _
  %vm26 = vcmask 31744
  %27 = vst.msk [vmem:[#allocation2] sm:$0xff] %vm26, 0.0
  %28 = vst.msk [vmem:[#allocation2 + $0x8] sm:$0xff] %vm26, 0.0
  %vm29 = vcmask 25600
  %30 = vst.msk [vmem:[#allocation2 + $0x10] sm:$0x3] %vm29, 0.0
  %31 = vst.msk [vmem:[#allocation2 + $0x1b0] sm:$0xff] %vm26, 0.0
  %32 = vst.msk [vmem:[#allocation2 + $0x1b8] sm:$0xff] %vm26, 0.0
  %33 = vst.msk [vmem:[#allocation2 + $0x1c0] sm:$0x3] %vm29, 0.0
  %s34 = scalar_lea.vmem [#allocation2], 408
  %35 = vst.msk [vmem:[%s34] sm:$0xff] %vm26, 0.0
  %36 = vst.msk [vmem:[%s34 + $0x8] sm:$0xff] %vm26, 0.0
  %37 = vst.msk [vmem:[%s34 + $0x10] sm:$0x3] %vm29, 0.0
  %38 = vst.msk [vmem:[%s34 + $0x1b0] sm:$0xff] %vm26, 0.0
  %39 = vst.msk [vmem:[%s34 + $0x1b8] sm:$0xff] %vm26, 0.0
  %40 = vst.msk [vmem:[%s34 + $0x1c0] sm:$0x3] %vm29, 0.0
  %vm41 = vcmask 24576
  %42 = vst.msk [vmem:[#allocation2] sm:$0x1] %vm41, 0.0
  %43 = vst.msk [vmem:[#allocation2 + $0x18] sm:$0x1] %vm41, 0.0
  %44 = vst.msk [vmem:[#allocation2 + $0x30] sm:$0x1] %vm41, 0.0
  %45 = vst.msk [vmem:[#allocation2 + $0x48] sm:$0x1] %vm41, 0.0
  %46 = vst.msk [vmem:[#allocation2 + $0x60] sm:$0x1] %vm41, 0.0
  %47 = vst.msk [vmem:[#allocation2 + $0x78] sm:$0x1] %vm41, 0.0
  %48 = vst.msk [vmem:[#allocation2 + $0x90] sm:$0x1] %vm41, 0.0
  %49 = vst.msk [vmem:[#allocation2 + $0xa8] sm:$0x1] %vm41, 0.0
  %50 = vst.msk [vmem:[#allocation2 + $0xc0] sm:$0x1] %vm41, 0.0
  %51 = vst.msk [vmem:[#allocation2 + $0xd8] sm:$0x1] %vm41, 0.0
  %52 = vst.msk [vmem:[#allocation2 + $0xf0] sm:$0x1] %vm41, 0.0
  %53 = vst.msk [vmem:[#allocation2 + $0x108] sm:$0x1] %vm41, 0.0
  %54 = vst.msk [vmem:[#allocation2 + $0x120] sm:$0x1] %vm41, 0.0
  %55 = vst.msk [vmem:[#allocation2 + $0x138] sm:$0x1] %vm41, 0.0
  %56 = vst.msk [vmem:[#allocation2 + $0x150] sm:$0x1] %vm41, 0.0
  %57 = vst.msk [vmem:[#allocation2 + $0x168] sm:$0x1] %vm41, 0.0
  %58 = vst.msk [vmem:[#allocation2 + $0x180] sm:$0x1] %vm41, 0.0
  %59 = vst.msk [vmem:[#allocation2 + $0x198] sm:$0x1] %vm41, 0.0
  %60 = vst.msk [vmem:[#allocation2 + $0x1b0] sm:$0x1] %vm41, 0.0
  %61 = vst.msk [vmem:[#allocation2 + $0x1c8] sm:$0x1] %vm41, 0.0
  %62 = vst.msk [vmem:[#allocation2 + $0x1e0] sm:$0x1] %vm41, 0.0
  %63 = vst.msk [vmem:[#allocation2 + $0x1f8] sm:$0x1] %vm41, 0.0
  %64 = vst.msk [vmem:[#allocation2 + $0x210] sm:$0x1] %vm41, 0.0
  %65 = vst.msk [vmem:[#allocation2 + $0x228] sm:$0x1] %vm41, 0.0
  %66 = vst.msk [vmem:[#allocation2 + $0x240] sm:$0x1] %vm41, 0.0
  %67 = vst.msk [vmem:[#allocation2 + $0x258] sm:$0x1] %vm41, 0.0
  %68 = vst.msk [vmem:[#allocation2 + $0x270] sm:$0x1] %vm41, 0.0
  %69 = vst.msk [vmem:[#allocation2 + $0x288] sm:$0x1] %vm41, 0.0
  %70 = vst.msk [vmem:[#allocation2 + $0x2a0] sm:$0x1] %vm41, 0.0
  %71 = vst.msk [vmem:[#allocation2 + $0x2b8] sm:$0x1] %vm41, 0.0
  %72 = vst.msk [vmem:[#allocation2 + $0x2d0] sm:$0x1] %vm41, 0.0
  %73 = vst.msk [vmem:[#allocation2 + $0x2e8] sm:$0x1] %vm41, 0.0
  %74 = vst.msk [vmem:[#allocation2 + $0x300] sm:$0x1] %vm41, 0.0
  %75 = vst.msk [vmem:[#allocation2 + $0x318] sm:$0x1] %vm41, 0.0
  %76 = vst.msk [vmem:[#allocation2 + $0x330] sm:$0x1] %vm41, 0.0
  %77 = vst.msk [vmem:[#allocation2 + $0x348] sm:$0x1] %vm41, 0.0
  %78 = vst.msk [vmem:[#allocation2 + $0x11] sm:$0x1] %vm41, 0.0
  %79 = vst.msk [vmem:[#allocation2 + $0x29] sm:$0x1] %vm41, 0.0
  %80 = vst.msk [vmem:[#allocation2 + $0x41] sm:$0x1] %vm41, 0.0
  %81 = vst.msk [vmem:[#allocation2 + $0x59] sm:$0x1] %vm41, 0.0
  %82 = vst.msk [vmem:[#allocation2 + $0x71] sm:$0x1] %vm41, 0.0
  %83 = vst.msk [vmem:[#allocation2 + $0x89] sm:$0x1] %vm41, 0.0
  %84 = vst.msk [vmem:[#allocation2 + $0xa1] sm:$0x1] %vm41, 0.0
  %85 = vst.msk [vmem:[#allocation2 + $0xb9] sm:$0x1] %vm41, 0.0
  %86 = vst.msk [vmem:[#allocation2 + $0xd1] sm:$0x1] %vm41, 0.0
  %87 = vst.msk [vmem:[#allocation2 + $0xe9] sm:$0x1] %vm41, 0.0
  %88 = vst.msk [vmem:[#allocation2 + $0x101] sm:$0x1] %vm41, 0.0
  %89 = vst.msk [vmem:[#allocation2 + $0x119] sm:$0x1] %vm41, 0.0
  %90 = vst.msk [vmem:[#allocation2 + $0x131] sm:$0x1] %vm41, 0.0
  %91 = vst.msk [vmem:[#allocation2 + $0x149] sm:$0x1] %vm41, 0.0
  %92 = vst.msk [vmem:[#allocation2 + $0x161] sm:$0x1] %vm41, 0.0
  %93 = vst.msk [vmem:[#allocation2 + $0x179] sm:$0x1] %vm41, 0.0
  %94 = vst.msk [vmem:[#allocation2 + $0x191] sm:$0x1] %vm41, 0.0
  %95 = vst.msk [vmem:[#allocation2 + $0x1a9] sm:$0x1] %vm41, 0.0
  %96 = vst.msk [vmem:[#allocation2 + $0x1c1] sm:$0x1] %vm41, 0.0
  %97 = vst.msk [vmem:[#allocation2 + $0x1d9] sm:$0x1] %vm41, 0.0
  %98 = vst.msk [vmem:[#allocation2 + $0x1f1] sm:$0x1] %vm41, 0.0
  %99 = vst.msk [vmem:[#allocation2 + $0x209] sm:$0x1] %vm41, 0.0
  %100 = vst.msk [vmem:[#allocation2 + $0x221] sm:$0x1] %vm41, 0.0
  %101 = vst.msk [vmem:[#allocation2 + $0x239] sm:$0x1] %vm41, 0.0
  %102 = vst.msk [vmem:[#allocation2 + $0x251] sm:$0x1] %vm41, 0.0
  %103 = vst.msk [vmem:[#allocation2 + $0x269] sm:$0x1] %vm41, 0.0
  %104 = vst.msk [vmem:[#allocation2 + $0x281] sm:$0x1] %vm41, 0.0
  %105 = vst.msk [vmem:[#allocation2 + $0x299] sm:$0x1] %vm41, 0.0
  %106 = vst.msk [vmem:[#allocation2 + $0x2b1] sm:$0x1] %vm41, 0.0
  %107 = vst.msk [vmem:[#allocation2 + $0x2c9] sm:$0x1] %vm41, 0.0
  %108 = vst.msk [vmem:[#allocation2 + $0x2e1] sm:$0x1] %vm41, 0.0
  %109 = vst.msk [vmem:[#allocation2 + $0x2f9] sm:$0x1] %vm41, 0.0
  %110 = vst.msk [vmem:[#allocation2 + $0x311] sm:$0x1] %vm41, 0.0
  %111 = vst.msk [vmem:[#allocation2 + $0x329] sm:$0x1] %vm41, 0.0
  %112 = vst.msk [vmem:[#allocation2 + $0x341] sm:$0x1] %vm41, 0.0
  %113 = vst.msk [vmem:[#allocation2 + $0x359] sm:$0x1] %vm41, 0.0
  %114 = vst.msk [vmem:[#allocation3] sm:$0xff] %vm26, 0.0
  %115 = vst.msk [vmem:[#allocation3 + $0x8] sm:$0xff] %vm26, 0.0
  %116 = vst.msk [vmem:[#allocation3 + $0x10] sm:$0x3] %vm29, 0.0
  %117 = vst.msk [vmem:[#allocation3 + $0x1b0] sm:$0xff] %vm26, 0.0
  %118 = vst.msk [vmem:[#allocation3 + $0x1b8] sm:$0xff] %vm26, 0.0
  %119 = vst.msk [vmem:[#allocation3 + $0x1c0] sm:$0x3] %vm29, 0.0
  %s120 = scalar_lea.vmem [#allocation3], 408
  %121 = vst.msk [vmem:[%s120] sm:$0xff] %vm26, 0.0
  %122 = vst.msk [vmem:[%s120 + $0x8] sm:$0xff] %vm26, 0.0
  %123 = vst.msk [vmem:[%s120 + $0x10] sm:$0x3] %vm29, 0.0
  %124 = vst.msk [vmem:[%s120 + $0x1b0] sm:$0xff] %vm26, 0.0
  %125 = vst.msk [vmem:[%s120 + $0x1b8] sm:$0xff] %vm26, 0.0
  %126 = vst.msk [vmem:[%s120 + $0x1c0] sm:$0x3] %vm29, 0.0
  %127 = vst.msk [vmem:[#allocation3] sm:$0x1] %vm41, 0.0
  %128 = vst.msk [vmem:[#allocation3 + $0x18] sm:$0x1] %vm41, 0.0
  %129 = vst.msk [vmem:[#allocation3 + $0x30] sm:$0x1] %vm41, 0.0
  %130 = vst.msk [vmem:[#allocation3 + $0x48] sm:$0x1] %vm41, 0.0
  %131 = vst.msk [vmem:[#allocation3 + $0x60] sm:$0x1] %vm41, 0.0
  %132 = vst.msk [vmem:[#allocation3 + $0x78] sm:$0x1] %vm41, 0.0
  %133 = vst.msk [vmem:[#allocation3 + $0x90] sm:$0x1] %vm41, 0.0
  %134 = vst.msk [vmem:[#allocation3 + $0xa8] sm:$0x1] %vm41, 0.0
  %135 = vst.msk [vmem:[#allocation3 + $0xc0] sm:$0x1] %vm41, 0.0
  %136 = vst.msk [vmem:[#allocation3 + $0xd8] sm:$0x1] %vm41, 0.0
  %137 = vst.msk [vmem:[#allocation3 + $0xf0] sm:$0x1] %vm41, 0.0
  %138 = vst.msk [vmem:[#allocation3 + $0x108] sm:$0x1] %vm41, 0.0
  %139 = vst.msk [vmem:[#allocation3 + $0x120] sm:$0x1] %vm41, 0.0
  %140 = vst.msk [vmem:[#allocation3 + $0x138] sm:$0x1] %vm41, 0.0
  %141 = vst.msk [vmem:[#allocation3 + $0x150] sm:$0x1] %vm41, 0.0
  %142 = vst.msk [vmem:[#allocation3 + $0x168] sm:$0x1] %vm41, 0.0
  %143 = vst.msk [vmem:[#allocation3 + $0x180] sm:$0x1] %vm41, 0.0
  %144 = vst.msk [vmem:[#allocation3 + $0x198] sm:$0x1] %vm41, 0.0
  %145 = vst.msk [vmem:[#allocation3 + $0x1b0] sm:$0x1] %vm41, 0.0
  %146 = vst.msk [vmem:[#allocation3 + $0x1c8] sm:$0x1] %vm41, 0.0
  %147 = vst.msk [vmem:[#allocation3 + $0x1e0] sm:$0x1] %vm41, 0.0
  %148 = vst.msk [vmem:[#allocation3 + $0x1f8] sm:$0x1] %vm41, 0.0
  %149 = vst.msk [vmem:[#allocation3 + $0x210] sm:$0x1] %vm41, 0.0
  %150 = vst.msk [vmem:[#allocation3 + $0x228] sm:$0x1] %vm41, 0.0
  %151 = vst.msk [vmem:[#allocation3 + $0x240] sm:$0x1] %vm41, 0.0
  %152 = vst.msk [vmem:[#allocation3 + $0x258] sm:$0x1] %vm41, 0.0
  %153 = vst.msk [vmem:[#allocation3 + $0x270] sm:$0x1] %vm41, 0.0
  %154 = vst.msk [vmem:[#allocation3 + $0x288] sm:$0x1] %vm41, 0.0
  %155 = vst.msk [vmem:[#allocation3 + $0x2a0] sm:$0x1] %vm41, 0.0
  %156 = vst.msk [vmem:[#allocation3 + $0x2b8] sm:$0x1] %vm41, 0.0
  %157 = vst.msk [vmem:[#allocation3 + $0x2d0] sm:$0x1] %vm41, 0.0
  %158 = vst.msk [vmem:[#allocation3 + $0x2e8] sm:$0x1] %vm41, 0.0
  %159 = vst.msk [vmem:[#allocation3 + $0x300] sm:$0x1] %vm41, 0.0
  %160 = vst.msk [vmem:[#allocation3 + $0x318] sm:$0x1] %vm41, 0.0
  %161 = vst.msk [vmem:[#allocation3 + $0x330] sm:$0x1] %vm41, 0.0
  %162 = vst.msk [vmem:[#allocation3 + $0x348] sm:$0x1] %vm41, 0.0
  %163 = vst.msk [vmem:[#allocation3 + $0x11] sm:$0x1] %vm41, 0.0
  %164 = vst.msk [vmem:[#allocation3 + $0x29] sm:$0x1] %vm41, 0.0
  %165 = vst.msk [vmem:[#allocation3 + $0x41] sm:$0x1] %vm41, 0.0
  %166 = vst.msk [vmem:[#allocation3 + $0x59] sm:$0x1] %vm41, 0.0
  %167 = vst.msk [vmem:[#allocation3 + $0x71] sm:$0x1] %vm41, 0.0
  %168 = vst.msk [vmem:[#allocation3 + $0x89] sm:$0x1] %vm41, 0.0
  %169 = vst.msk [vmem:[#allocation3 + $0xa1] sm:$0x1] %vm41, 0.0
  %170 = vst.msk [vmem:[#allocation3 + $0xb9] sm:$0x1] %vm41, 0.0
  %171 = vst.msk [vmem:[#allocation3 + $0xd1] sm:$0x1] %vm41, 0.0
  %172 = vst.msk [vmem:[#allocation3 + $0xe9] sm:$0x1] %vm41, 0.0
  %173 = vst.msk [vmem:[#allocation3 + $0x101] sm:$0x1] %vm41, 0.0
  %174 = vst.msk [vmem:[#allocation3 + $0x119] sm:$0x1] %vm41, 0.0
  %175 = vst.msk [vmem:[#allocation3 + $0x131] sm:$0x1] %vm41, 0.0
  %176 = vst.msk [vmem:[#allocation3 + $0x149] sm:$0x1] %vm41, 0.0
  %177 = vst.msk [vmem:[#allocation3 + $0x161] sm:$0x1] %vm41, 0.0
  %178 = vst.msk [vmem:[#allocation3 + $0x179] sm:$0x1] %vm41, 0.0
  %179 = vst.msk [vmem:[#allocation3 + $0x191] sm:$0x1] %vm41, 0.0
  %180 = vst.msk [vmem:[#allocation3 + $0x1a9] sm:$0x1] %vm41, 0.0
  %181 = vst.msk [vmem:[#allocation3 + $0x1c1] sm:$0x1] %vm41, 0.0
  %182 = vst.msk [vmem:[#allocation3 + $0x1d9] sm:$0x1] %vm41, 0.0
  %183 = vst.msk [vmem:[#allocation3 + $0x1f1] sm:$0x1] %vm41, 0.0
  %184 = vst.msk [vmem:[#allocation3 + $0x209] sm:$0x1] %vm41, 0.0
  %185 = vst.msk [vmem:[#allocation3 + $0x221] sm:$0x1] %vm41, 0.0
  %186 = vst.msk [vmem:[#allocation3 + $0x239] sm:$0x1] %vm41, 0.0
  %187 = vst.msk [vmem:[#allocation3 + $0x251] sm:$0x1] %vm41, 0.0
  %188 = vst.msk [vmem:[#allocation3 + $0x269] sm:$0x1] %vm41, 0.0
  %189 = vst.msk [vmem:[#allocation3 + $0x281] sm:$0x1] %vm41, 0.0
  %190 = vst.msk [vmem:[#allocation3 + $0x299] sm:$0x1] %vm41, 0.0
  %191 = vst.msk [vmem:[#allocation3 + $0x2b1] sm:$0x1] %vm41, 0.0
  %192 = vst.msk [vmem:[#allocation3 + $0x2c9] sm:$0x1] %vm41, 0.0
  %193 = vst.msk [vmem:[#allocation3 + $0x2e1] sm:$0x1] %vm41, 0.0
  %194 = vst.msk [vmem:[#allocation3 + $0x2f9] sm:$0x1] %vm41, 0.0
  %195 = vst.msk [vmem:[#allocation3 + $0x311] sm:$0x1] %vm41, 0.0
  %196 = vst.msk [vmem:[#allocation3 + $0x329] sm:$0x1] %vm41, 0.0
  %197 = vst.msk [vmem:[#allocation3 + $0x341] sm:$0x1] %vm41, 0.0
  %198 = vst.msk [vmem:[#allocation3 + $0x359] sm:$0x1] %vm41, 0.0
  %v199 = vld [vmem:[%s0] sm:$0xff]
  %v200 = vld [vmem:[%s0 + $0x8] sm:$0xff]
  %v201 = vld [vmem:[%s0 + $0x10] sm:$0xff]
  %v202 = vld [vmem:[%s0 + $0x18] sm:$0xff]
  %v203 = vld [vmem:[%s0 + $0x20] sm:$0xff]
  %v204 = vld [vmem:[%s0 + $0x28] sm:$0xff]
  %v205 = vld [vmem:[%s0 + $0x30] sm:$0xff]
  %v206 = vld [vmem:[%s0 + $0x38] sm:$0xff]
  %v207 = vld [vmem:[%s0 + $0x40] sm:$0xff]
  %v208 = vld [vmem:[%s0 + $0x48] sm:$0xff]
  %v209 = vld [vmem:[%s0 + $0x50] sm:$0xff]
  %v210 = vld [vmem:[%s0 + $0x58] sm:$0xff]
  %v211 = vld [vmem:[%s0 + $0x60] sm:$0xff]
  %v212 = vld [vmem:[%s0 + $0x68] sm:$0xff]
  %v213 = vld [vmem:[%s0 + $0x70] sm:$0xff]
  %v214 = vld [vmem:[%s0 + $0x78] sm:$0xff]
  %v215 = vld [vmem:[%s0 + $0x80] sm:$0xff]
  %v216 = vld [vmem:[%s0 + $0x88] sm:$0xff]
  %v217 = vld [vmem:[%s0 + $0x90] sm:$0xff]
  %v218 = vld [vmem:[%s0 + $0x98] sm:$0xff]
  %v219 = vld [vmem:[%s0 + $0xa0] sm:$0xff]
  %v220 = vld [vmem:[%s0 + $0xa8] sm:$0xff]
  %v221 = vld [vmem:[%s0 + $0xb0] sm:$0xff]
  %v222 = vld [vmem:[%s0 + $0xb8] sm:$0xff]
  %v223 = vld [vmem:[%s0 + $0xc0] sm:$0xff]
  %v224 = vld [vmem:[%s0 + $0xc8] sm:$0xff]
  %v225 = vld [vmem:[%s0 + $0xd0] sm:$0xff]
  %v226 = vld [vmem:[%s0 + $0xd8] sm:$0xff]
  %v227 = vld [vmem:[%s0 + $0xe0] sm:$0xff]
  %v228 = vld [vmem:[%s0 + $0xe8] sm:$0xff]
  %v229 = vld [vmem:[%s0 + $0xf0] sm:$0xff]
  %v230 = vld [vmem:[%s0 + $0xf8] sm:$0xff]
  %v231 = vld [vmem:[%s0 + $0x100] sm:$0xff]
  %v232 = vld [vmem:[%s0 + $0x108] sm:$0xff]
  %v233 = vld [vmem:[%s0 + $0x110] sm:$0xff]
  %v234 = vld [vmem:[%s0 + $0x118] sm:$0xff]
  %v235 = vld [vmem:[%s0 + $0x120] sm:$0xff]
  %v236 = vld [vmem:[%s0 + $0x128] sm:$0xff]
  %v237 = vld [vmem:[%s0 + $0x130] sm:$0xff]
  %v238 = vld [vmem:[%s0 + $0x138] sm:$0xff]
  %v239 = vld [vmem:[%s0 + $0x140] sm:$0xff]
  %v240 = vld [vmem:[%s0 + $0x148] sm:$0xff]
  %v241 = vld [vmem:[%s0 + $0x150] sm:$0xff]
  %v242 = vld [vmem:[%s0 + $0x158] sm:$0xff]
  %v243 = vld [vmem:[%s0 + $0x160] sm:$0xff]
  %v244 = vld [vmem:[%s0 + $0x168] sm:$0xff]
  %v245 = vld [vmem:[%s0 + $0x170] sm:$0xff]
  %v246 = vld [vmem:[%s0 + $0x178] sm:$0xff]
  %v247 = vld [vmem:[%s0 + $0x180] sm:$0xff]
  %v248 = vld [vmem:[%s0 + $0x188] sm:$0xff]
  %v249 = vld [vmem:[%s0 + $0x190] sm:$0xff]
  %v250 = vld [vmem:[%s0 + $0x198] sm:$0xff]
  %v251 = vld [vmem:[%s0 + $0x1a0] sm:$0xff]
  %v252 = vld [vmem:[%s0 + $0x1a8] sm:$0xff]
  %v253 = vld [vmem:[%s0 + $0x1b0] sm:$0xff]
  %v254 = vld [vmem:[%s0 + $0x1b8] sm:$0xff]
  %v255 = vld [vmem:[%s0 + $0x1c0] sm:$0xff]
  %v256 = vld [vmem:[%s0 + $0x1c8] sm:$0xff]
  %v257 = vld [vmem:[%s0 + $0x1d0] sm:$0xff]
  %v258 = vld [vmem:[%s0 + $0x1d8] sm:$0xff]
  %v259 = vld [vmem:[%s0 + $0x1e0] sm:$0xff]
  %v260 = vld [vmem:[%s0 + $0x1e8] sm:$0xff]
  %v261 = vld [vmem:[%s0 + $0x1f0] sm:$0xff]
  %v262 = vld [vmem:[%s0 + $0x1f8] sm:$0xff]
  %s263 = scalar_lea.vmem [#allocation2], 24
  %264 = vst.msk [vmem:[%s263 + $0x1] sm:$0xff] %vm26, %v199
  %265 = vst.msk [vmem:[%s263 + $0x9] sm:$0xff] %vm26, %v200
  %266 = vst.msk [vmem:[%s263 + $0x19] sm:$0xff] %vm26, %v201
  %267 = vst.msk [vmem:[%s263 + $0x21] sm:$0xff] %vm26, %v202
  %268 = vst.msk [vmem:[%s263 + $0x31] sm:$0xff] %vm26, %v203
  %269 = vst.msk [vmem:[%s263 + $0x39] sm:$0xff] %vm26, %v204
  %270 = vst.msk [vmem:[%s263 + $0x49] sm:$0xff] %vm26, %v205
  %271 = vst.msk [vmem:[%s263 + $0x51] sm:$0xff] %vm26, %v206
  %272 = vst.msk [vmem:[%s263 + $0x61] sm:$0xff] %vm26, %v207
  %273 = vst.msk [vmem:[%s263 + $0x69] sm:$0xff] %vm26, %v208
  %274 = vst.msk [vmem:[%s263 + $0x79] sm:$0xff] %vm26, %v209
  %275 = vst.msk [vmem:[%s263 + $0x81] sm:$0xff] %vm26, %v210
  %276 = vst.msk [vmem:[%s263 + $0x91] sm:$0xff] %vm26, %v211
  %277 = vst.msk [vmem:[%s263 + $0x99] sm:$0xff] %vm26, %v212
  %278 = vst.msk [vmem:[%s263 + $0xa9] sm:$0xff] %vm26, %v213
  %279 = vst.msk [vmem:[%s263 + $0xb1] sm:$0xff] %vm26, %v214
  %280 = vst.msk [vmem:[%s263 + $0xc1] sm:$0xff] %vm26, %v215
  %281 = vst.msk [vmem:[%s263 + $0xc9] sm:$0xff] %vm26, %v216
  %282 = vst.msk [vmem:[%s263 + $0xd9] sm:$0xff] %vm26, %v217
  %283 = vst.msk [vmem:[%s263 + $0xe1] sm:$0xff] %vm26, %v218
  %284 = vst.msk [vmem:[%s263 + $0xf1] sm:$0xff] %vm26, %v219
  %285 = vst.msk [vmem:[%s263 + $0xf9] sm:$0xff] %vm26, %v220
  %286 = vst.msk [vmem:[%s263 + $0x109] sm:$0xff] %vm26, %v221
  %287 = vst.msk [vmem:[%s263 + $0x111] sm:$0xff] %vm26, %v222
  %288 = vst.msk [vmem:[%s263 + $0x121] sm:$0xff] %vm26, %v223
  %289 = vst.msk [vmem:[%s263 + $0x129] sm:$0xff] %vm26, %v224
  %290 = vst.msk [vmem:[%s263 + $0x139] sm:$0xff] %vm26, %v225
  %291 = vst.msk [vmem:[%s263 + $0x141] sm:$0xff] %vm26, %v226
  %292 = vst.msk [vmem:[%s263 + $0x151] sm:$0xff] %vm26, %v227
  %293 = vst.msk [vmem:[%s263 + $0x159] sm:$0xff] %vm26, %v228
  %294 = vst.msk [vmem:[%s263 + $0x169] sm:$0xff] %vm26, %v229
  %295 = vst.msk [vmem:[%s263 + $0x171] sm:$0xff] %vm26, %v230
  %296 = vst.msk [vmem:[%s263 + $0x1b1] sm:$0xff] %vm26, %v231
  %297 = vst.msk [vmem:[%s263 + $0x1b9] sm:$0xff] %vm26, %v232
  %298 = vst.msk [vmem:[%s263 + $0x1c9] sm:$0xff] %vm26, %v233
  %299 = vst.msk [vmem:[%s263 + $0x1d1] sm:$0xff] %vm26, %v234
  %300 = vst.msk [vmem:[%s263 + $0x1e1] sm:$0xff] %vm26, %v235
  %301 = vst.msk [vmem:[%s263 + $0x1e9] sm:$0xff] %vm26, %v236
  %302 = vst.msk [vmem:[%s263 + $0x1f9] sm:$0xff] %vm26, %v237
  %303 = vst.msk [vmem:[%s263 + $0x201] sm:$0xff] %vm26, %v238
  %304 = vst.msk [vmem:[%s263 + $0x211] sm:$0xff] %vm26, %v239
  %305 = vst.msk [vmem:[%s263 + $0x219] sm:$0xff] %vm26, %v240
  %306 = vst.msk [vmem:[%s263 + $0x229] sm:$0xff] %vm26, %v241
  %307 = vst.msk [vmem:[%s263 + $0x231] sm:$0xff] %vm26, %v242
  %308 = vst.msk [vmem:[%s263 + $0x241] sm:$0xff] %vm26, %v243
  %309 = vst.msk [vmem:[%s263 + $0x249] sm:$0xff] %vm26, %v244
  %310 = vst.msk [vmem:[%s263 + $0x259] sm:$0xff] %vm26, %v245
  %311 = vst.msk [vmem:[%s263 + $0x261] sm:$0xff] %vm26, %v246
  %312 = vst.msk [vmem:[%s263 + $0x271] sm:$0xff] %vm26, %v247
  %313 = vst.msk [vmem:[%s263 + $0x279] sm:$0xff] %vm26, %v248
  %314 = vst.msk [vmem:[%s263 + $0x289] sm:$0xff] %vm26, %v249
  %315 = vst.msk [vmem:[%s263 + $0x291] sm:$0xff] %vm26, %v250
  %316 = vst.msk [vmem:[%s263 + $0x2a1] sm:$0xff] %vm26, %v251
  %317 = vst.msk [vmem:[%s263 + $0x2a9] sm:$0xff] %vm26, %v252
  %318 = vst.msk [vmem:[%s263 + $0x2b9] sm:$0xff] %vm26, %v253
  %319 = vst.msk [vmem:[%s263 + $0x2c1] sm:$0xff] %vm26, %v254
  %320 = vst.msk [vmem:[%s263 + $0x2d1] sm:$0xff] %vm26, %v255
  %321 = vst.msk [vmem:[%s263 + $0x2d9] sm:$0xff] %vm26, %v256
  %322 = vst.msk [vmem:[%s263 + $0x2e9] sm:$0xff] %vm26, %v257
  %323 = vst.msk [vmem:[%s263 + $0x2f1] sm:$0xff] %vm26, %v258
  %324 = vst.msk [vmem:[%s263 + $0x301] sm:$0xff] %vm26, %v259
  %325 = vst.msk [vmem:[%s263 + $0x309] sm:$0xff] %vm26, %v260
  %326 = vst.msk [vmem:[%s263 + $0x319] sm:$0xff] %vm26, %v261
  %327 = vst.msk [vmem:[%s263 + $0x321] sm:$0xff] %vm26, %v262
  %v328 = vld [vmem:[#allocation2] sm:$0xff]
  %v329 = vld [vmem:[#allocation2 + $0x8] sm:$0xff]
  %v330 = vld [vmem:[#allocation2 + $0x18] sm:$0xff]
  %v331 = vld [vmem:[#allocation2 + $0x20] sm:$0xff]
  %v332 = vld [vmem:[#allocation2 + $0x30] sm:$0xff]
  %v333 = vld [vmem:[#allocation2 + $0x38] sm:$0xff]
  %v334 = vld [vmem:[#allocation2 + $0x48] sm:$0xff]
  %v335 = vld [vmem:[#allocation2 + $0x50] sm:$0xff]
  %v336 = vld [vmem:[#allocation2 + $0x60] sm:$0xff]
  %v337 = vld [vmem:[#allocation2 + $0x68] sm:$0xff]
  %v338 = vld [vmem:[#allocation2 + $0x78] sm:$0xff]
  %v339 = vld [vmem:[#allocation2 + $0x80] sm:$0xff]
  %v340 = vld [vmem:[#allocation2 + $0x90] sm:$0xff]
  %v341 = vld [vmem:[#allocation2 + $0x98] sm:$0xff]
  %v342 = vld [vmem:[#allocation2 + $0xa8] sm:$0xff]
  %v343 = vld [vmem:[#allocation2 + $0xb0] sm:$0xff]
  %v344 = vld [vmem:[#allocation2 + $0xc0] sm:$0xff]
  %v345 = vld [vmem:[#allocation2 + $0xc8] sm:$0xff]
  %v346 = vld [vmem:[#allocation2 + $0xd8] sm:$0xff]
  %v347 = vld [vmem:[#allocation2 + $0xe0] sm:$0xff]
  %v348 = vld [vmem:[#allocation2 + $0xf0] sm:$0xff]
  %v349 = vld [vmem:[#allocation2 + $0xf8] sm:$0xff]
  %v350 = vld [vmem:[#allocation2 + $0x108] sm:$0xff]
  %v351 = vld [vmem:[#allocation2 + $0x110] sm:$0xff]
  %v352 = vld [vmem:[#allocation2 + $0x120] sm:$0xff]
  %v353 = vld [vmem:[#allocation2 + $0x128] sm:$0xff]
  %v354 = vld [vmem:[#allocation2 + $0x138] sm:$0xff]
  %v355 = vld [vmem:[#allocation2 + $0x140] sm:$0xff]
  %v356 = vld [vmem:[#allocation2 + $0x150] sm:$0xff]
  %v357 = vld [vmem:[#allocation2 + $0x158] sm:$0xff]
  %v358 = vld [vmem:[#allocation2 + $0x168] sm:$0xff]
  %v359 = vld [vmem:[#allocation2 + $0x170] sm:$0xff]
  %v360 = vld [vmem:[#allocation2 + $0x1b0] sm:$0xff]
  %v361 = vld [vmem:[#allocation2 + $0x1b8] sm:$0xff]
  %v362 = vld [vmem:[#allocation2 + $0x1c8] sm:$0xff]
  %v363 = vld [vmem:[#allocation2 + $0x1d0] sm:$0xff]
  %v364 = vld [vmem:[#allocation2 + $0x1e0] sm:$0xff]
  %v365 = vld [vmem:[#allocation2 + $0x1e8] sm:$0xff]
  %v366 = vld [vmem:[#allocation2 + $0x1f8] sm:$0xff]
  %v367 = vld [vmem:[#allocation2 + $0x200] sm:$0xff]
  %v368 = vld [vmem:[#allocation2 + $0x210] sm:$0xff]
  %v369 = vld [vmem:[#allocation2 + $0x218] sm:$0xff]
  %v370 = vld [vmem:[#allocation2 + $0x228] sm:$0xff]
  %v371 = vld [vmem:[#allocation2 + $0x230] sm:$0xff]
  %v372 = vld [vmem:[#allocation2 + $0x240] sm:$0xff]
  %v373 = vld [vmem:[#allocation2 + $0x248] sm:$0xff]
  %v374 = vld [vmem:[#allocation2 + $0x258] sm:$0xff]
  %v375 = vld [vmem:[#allocation2 + $0x260] sm:$0xff]
  %v376 = vld [vmem:[#allocation2 + $0x270] sm:$0xff]
  %v377 = vld [vmem:[#allocation2 + $0x278] sm:$0xff]
  %v378 = vld [vmem:[#allocation2 + $0x288] sm:$0xff]
  %v379 = vld [vmem:[#allocation2 + $0x290] sm:$0xff]
  %v380 = vld [vmem:[#allocation2 + $0x2a0] sm:$0xff]
  %v381 = vld [vmem:[#allocation2 + $0x2a8] sm:$0xff]
  %v382 = vld [vmem:[#allocation2 + $0x2b8] sm:$0xff]
  %v383 = vld [vmem:[#allocation2 + $0x2c0] sm:$0xff]
  %v384 = vld [vmem:[#allocation2 + $0x2d0] sm:$0xff]
  %v385 = vld [vmem:[#allocation2 + $0x2d8] sm:$0xff]
  %v386 = vld [vmem:[#allocation2 + $0x2e8] sm:$0xff]
  %v387 = vld [vmem:[#allocation2 + $0x2f0] sm:$0xff]
  %v388 = vld [vmem:[#allocation2 + $0x300] sm:$0xff]
  %v389 = vld [vmem:[#allocation2 + $0x308] sm:$0xff]
  %v390 = vld [vmem:[#allocation2 + $0x318] sm:$0xff]
  %v391 = vld [vmem:[#allocation2 + $0x320] sm:$0xff]
  %v392 = vld [vmem:[%s1] sm:$0xf]
  %v393 = vld [vmem:[#allocation2 + $0x1] sm:$0xff]
  %v394 = vld [vmem:[#allocation2 + $0x9] sm:$0xff]
  %v395 = vld [vmem:[#allocation2 + $0x19] sm:$0xff]
  %v396 = vld [vmem:[#allocation2 + $0x21] sm:$0xff]
  %v397 = vld [vmem:[#allocation2 + $0x31] sm:$0xff]
  %v398 = vld [vmem:[#allocation2 + $0x39] sm:$0xff]
  %v399 = vld [vmem:[#allocation2 + $0x49] sm:$0xff]
  %v400 = vld [vmem:[#allocation2 + $0x51] sm:$0xff]
  %v401 = vld [vmem:[#allocation2 + $0x61] sm:$0xff]
  %v402 = vld [vmem:[#allocation2 + $0x69] sm:$0xff]
  %v403 = vld [vmem:[#allocation2 + $0x79] sm:$0xff]
  %v404 = vld [vmem:[#allocation2 + $0x81] sm:$0xff]
  %v405 = vld [vmem:[#allocation2 + $0x91] sm:$0xff]
  %v406 = vld [vmem:[#allocation2 + $0x99] sm:$0xff]
  %v407 = vld [vmem:[#allocation2 + $0xa9] sm:$0xff]
  %v408 = vld [vmem:[#allocation2 + $0xb1] sm:$0xff]
  %v409 = vld [vmem:[#allocation2 + $0xc1] sm:$0xff]
  %v410 = vld [vmem:[#allocation2 + $0xc9] sm:$0xff]
  %v411 = vld [vmem:[#allocation2 + $0xd9] sm:$0xff]
  %v412 = vld [vmem:[#allocation2 + $0xe1] sm:$0xff]
  %v413 = vld [vmem:[#allocation2 + $0xf1] sm:$0xff]
  %v414 = vld [vmem:[#allocation2 + $0xf9] sm:$0xff]
  %v415 = vld [vmem:[#allocation2 + $0x109] sm:$0xff]
  %v416 = vld [vmem:[#allocation2 + $0x111] sm:$0xff]
  %v417 = vld [vmem:[#allocation2 + $0x121] sm:$0xff]
  %v418 = vld [vmem:[#allocation2 + $0x129] sm:$0xff]
  %v419 = vld [vmem:[#allocation2 + $0x139] sm:$0xff]
  %v420 = vld [vmem:[#allocation2 + $0x141] sm:$0xff]
  %v421 = vld [vmem:[#allocation2 + $0x151] sm:$0xff]
  %v422 = vld [vmem:[#allocation2 + $0x159] sm:$0xff]
  %v423 = vld [vmem:[#allocation2 + $0x169] sm:$0xff]
  %v424 = vld [vmem:[#allocation2 + $0x171] sm:$0xff]
  %v425 = vld [vmem:[#allocation2 + $0x1b1] sm:$0xff]
  %v426 = vld [vmem:[#allocation2 + $0x1b9] sm:$0xff]
  %v427 = vld [vmem:[#allocation2 + $0x1c9] sm:$0xff]
  %v428 = vld [vmem:[#allocation2 + $0x1d1] sm:$0xff]
  %v429 = vld [vmem:[#allocation2 + $0x1e1] sm:$0xff]
  %v430 = vld [vmem:[#allocation2 + $0x1e9] sm:$0xff]
  %v431 = vld [vmem:[#allocation2 + $0x1f9] sm:$0xff]
  %v432 = vld [vmem:[#allocation2 + $0x201] sm:$0xff]
  %v433 = vld [vmem:[#allocation2 + $0x211] sm:$0xff]
  %v434 = vld [vmem:[#allocation2 + $0x219] sm:$0xff]
  %v435 = vld [vmem:[#allocation2 + $0x229] sm:$0xff]
  %v436 = vld [vmem:[#allocation2 + $0x231] sm:$0xff]
  %v437 = vld [vmem:[#allocation2 + $0x241] sm:$0xff]
  %v438 = vld [vmem:[#allocation2 + $0x249] sm:$0xff]
  %v439 = vld [vmem:[#allocation2 + $0x259] sm:$0xff]
  %v440 = vld [vmem:[#allocation2 + $0x261] sm:$0xff]
  %v441 = vld [vmem:[#allocation2 + $0x271] sm:$0xff]
  %v442 = vld [vmem:[#allocation2 + $0x279] sm:$0xff]
  %v443 = vld [vmem:[#allocation2 + $0x289] sm:$0xff]
  %v444 = vld [vmem:[#allocation2 + $0x291] sm:$0xff]
  %v445 = vld [vmem:[#allocation2 + $0x2a1] sm:$0xff]
  %v446 = vld [vmem:[#allocation2 + $0x2a9] sm:$0xff]
  %v447 = vld [vmem:[#allocation2 + $0x2b9] sm:$0xff]
  %v448 = vld [vmem:[#allocation2 + $0x2c1] sm:$0xff]
  %v449 = vld [vmem:[#allocation2 + $0x2d1] sm:$0xff]
  %v450 = vld [vmem:[#allocation2 + $0x2d9] sm:$0xff]
  %v451 = vld [vmem:[#allocation2 + $0x2e9] sm:$0xff]
  %v452 = vld [vmem:[#allocation2 + $0x2f1] sm:$0xff]
  %v453 = vld [vmem:[#allocation2 + $0x301] sm:$0xff]
  %v454 = vld [vmem:[#allocation2 + $0x309] sm:$0xff]
  %v455 = vld [vmem:[#allocation2 + $0x319] sm:$0xff]
  %v456 = vld [vmem:[#allocation2 + $0x321] sm:$0xff]
  %s457 = scalar_lea.vmem %s1, 4
  %v458 = vld [vmem:[%s457] sm:$0xf]
  %v460 = vsel %vm26, %v393, 0
  %v463 = vsel %vm26, %v394, 0
  %v466 = vsel %vm26, %v395, 0
  %v469 = vsel %vm26, %v396, 0
  %v472 = vsel %vm26, %v397, 0
  %v475 = vsel %vm26, %v398, 0
  %v478 = vsel %vm26, %v399, 0
  %v481 = vsel %vm26, %v400, 0
  %v484 = vsel %vm26, %v401, 0
  %v487 = vsel %vm26, %v402, 0
  %v490 = vsel %vm26, %v403, 0
  %v493 = vsel %vm26, %v404, 0
  %v496 = vsel %vm26, %v405, 0
  %v499 = vsel %vm26, %v406, 0
  %v502 = vsel %vm26, %v407, 0
  %v505 = vsel %vm26, %v408, 0
  %v508 = vsel %vm26, %v409, 0
  %v511 = vsel %vm26, %v410, 0
  %v514 = vsel %vm26, %v411, 0
  %v517 = vsel %vm26, %v412, 0
  %v520 = vsel %vm26, %v413, 0
  %v523 = vsel %vm26, %v414, 0
  %v526 = vsel %vm26, %v415, 0
  %v529 = vsel %vm26, %v416, 0
  %v532 = vsel %vm26, %v417, 0
  %v535 = vsel %vm26, %v418, 0
  %v538 = vsel %vm26, %v419, 0
  %v541 = vsel %vm26, %v420, 0
  %v544 = vsel %vm26, %v421, 0
  %v547 = vsel %vm26, %v422, 0
  %v550 = vsel %vm26, %v423, 0
  %v553 = vsel %vm26, %v424, 0
  %v556 = vsel %vm26, %v425, 0
  %v559 = vsel %vm26, %v426, 0
  %v562 = vsel %vm26, %v427, 0
  %v565 = vsel %vm26, %v428, 0
  %v568 = vsel %vm26, %v429, 0
  %v571 = vsel %vm26, %v430, 0
  %v574 = vsel %vm26, %v431, 0
  %v577 = vsel %vm26, %v432, 0
  %v580 = vsel %vm26, %v433, 0
  %v583 = vsel %vm26, %v434, 0
  %v586 = vsel %vm26, %v435, 0
  %v589 = vsel %vm26, %v436, 0
  %v592 = vsel %vm26, %v437, 0
  %v595 = vsel %vm26, %v438, 0
  %v598 = vsel %vm26, %v439, 0
  %v601 = vsel %vm26, %v440, 0
  %v604 = vsel %vm26, %v441, 0
  %v607 = vsel %vm26, %v442, 0
  %v610 = vsel %vm26, %v443, 0
  %v613 = vsel %vm26, %v444, 0
  %v616 = vsel %vm26, %v445, 0
  %v619 = vsel %vm26, %v446, 0
  %v622 = vsel %vm26, %v447, 0
  %v625 = vsel %vm26, %v448, 0
  %v628 = vsel %vm26, %v449, 0
  %v631 = vsel %vm26, %v450, 0
  %v634 = vsel %vm26, %v451, 0
  %v637 = vsel %vm26, %v452, 0
  %v640 = vsel %vm26, %v453, 0
  %v643 = vsel %vm26, %v454, 0
  %v646 = vsel %vm26, %v455, 0
  %v649 = vsel %vm26, %v456, 0
  %vm651 = vcmask 1043456
  %v653 = vsel %vm651, %v458, 0
  %655 = vmatprep.subr.mxu0 0.0
  %656 = vmatpush1.msra.mxu0 %v653
  %657 = vmatprep.subr.mxu0 0.0
  %658 = vmatpush1.msra.mxu0 0.0
  %659 = vmatprep.subr.mxu0 0.0
  %660 = vmatpush1.msra.mxu0 0.0
  %661 = vmatprep.subr.mxu0 0.0
  %662 = vmatpush1.msra.mxu0 0.0
  %663 = vmatprep.subr.mxu0 0.0
  %664 = vmatpush1.msra.mxu0 0.0
  %665 = vmatprep.subr.mxu0 0.0
  %666 = vmatpush1.msra.mxu0 0.0
  %667 = vmatprep.subr.mxu0 0.0
  %668 = vmatpush1.msra.mxu0 0.0
  %669 = vmatprep.subr.mxu0 0.0
  %670 = vmatpush1.msra.mxu0 0.0
  %671 = vmatprep.subr.mxu0 0.0
  %672 = vmatpush1.msra.mxu0 0.0
  %673 = vmatprep.subr.mxu0 0.0
  %674 = vmatpush1.msra.mxu0 0.0
  %675 = vmatprep.subr.mxu0 0.0
  %676 = vmatpush1.msra.mxu0 0.0
  %677 = vmatprep.subr.mxu0 0.0
  %678 = vmatpush1.msra.mxu0 0.0
  %679 = vmatprep.subr.mxu0 0.0
  %680 = vmatpush1.msra.mxu0 0.0
  %681 = vmatprep.subr.mxu0 0.0
  %682 = vmatpush1.msra.mxu0 0.0
  %683 = vmatprep.subr.mxu0 0.0
  %684 = vmatpush1.msra.mxu0 0.0
  %685 = vmatprep.subr.mxu0 0.0
  %686 = vmatpush1.msra.mxu0 0.0
  %687 = vmatprep.subr.mxu0 0.0
  %688 = vmatpush1.msra.mxu0 0.0
  %689 = vmatprep.subr.mxu0 0.0
  %690 = vmatpush1.msra.mxu0 0.0
  %691 = vmatprep.subr.mxu0 0.0
  %692 = vmatpush1.msra.mxu0 0.0
  %693 = vmatprep.subr.mxu0 0.0
  %694 = vmatpush1.msra.mxu0 0.0
  %695 = vmatprep.subr.mxu0 0.0
  %696 = vmatpush1.msra.mxu0 0.0
  %697 = vmatprep.subr.mxu0 0.0
  %698 = vmatpush1.msra.mxu0 0.0
  %699 = vmatprep.subr.mxu0 0.0
  %700 = vmatpush1.msra.mxu0 0.0
  %701 = vmatprep.subr.mxu0 0.0
  %702 = vmatpush1.msra.mxu0 0.0
  %703 = vmatprep.subr.mxu0 0.0
  %704 = vmatpush1.msra.mxu0 0.0
  %705 = vmatprep.subr.mxu0 0.0
  %706 = vmatpush1.msra.mxu0 0.0
  %707 = vmatprep.subr.mxu0 0.0
  %708 = vmatpush1.msra.mxu0 0.0
  %709 = vmatprep.subr.mxu0 0.0
  %710 = vmatpush1.msra.mxu0 0.0
  %711 = vmatprep.subr.mxu0 0.0
  %712 = vmatpush1.msra.mxu0 0.0
  %713 = vmatprep.subr.mxu0 0.0
  %714 = vmatpush1.msra.mxu0 0.0
  %715 = vmatprep.subr.mxu0 0.0
  %716 = vmatpush1.msra.mxu0 0.0
  %717 = vmatprep.subr.mxu0 0.0
  %718 = vmatpush1.msra.mxu0 0.0
  %719 = vmatprep.mubr.f32.mxu0 0.0
  %720 = vmatmul.mubr.f32.gmra.mrb[0].mxu0 %v460
  %v721 = vpop.f32.mrb[0].mxu0
  %v722 = vadd.f32 0.0, %v721
  %v723 = vpop.f32.mrb[0].mxu0
  %724 = vmatprep.mubr.f32.mxu0 0.0
  %725 = vmatmul.mubr.f32.gmra.mrb[0].mxu0 %v463
  %v726 = vpop.f32.mrb[0].mxu0
  %v727 = vadd.f32 0.0, %v726
  %v728 = vpop.f32.mrb[0].mxu0
  %729 = vmatprep.mubr.f32.mxu0 0.0
  %730 = vmatmul.mubr.f32.gmra.mrb[0].mxu0 %v466
  %v731 = vpop.f32.mrb[0].mxu0
  %v732 = vadd.f32 0.0, %v731
  %v733 = vpop.f32.mrb[0].mxu0
  %734 = vmatprep.mubr.f32.mxu0 0.0
  %735 = vmatmul.mubr.f32.gmra.mrb[0].mxu0 %v469
  %v736 = vpop.f32.mrb[0].mxu0
  %v737 = vadd.f32 0.0, %v736
  %v738 = vpop.f32.mrb[0].mxu0
  %739 = vmatprep.mubr.f32.mxu0 0.0
  %740 = vmatmul.mubr.f32.gmra.mrb[0].mxu0 %v472
  %v741 = vpop.f32.mrb[0].mxu0
  %v742 = vadd.f32 0.0, %v741
  %v743 = vpop.f32.mrb[0].mxu0
  %744 = vmatprep.mubr.f32.mxu0 0.0
  %745 = vmatmul.mubr.f32.gmra.mrb[0].mxu0 %v475
  %v746 = vpop.f32.mrb[0].mxu0
  %v747 = vadd.f32 0.0, %v746
  %v748 = vpop.f32.mrb[0].mxu0
  %749 = vmatprep.mubr.f32.mxu0 0.0
  %750 = vmatmul.mubr.f32.gmra.mrb[0].mxu0 %v478
  %v751 = vpop.f32.mrb[0].mxu0
  %v752 = vadd.f32 0.0, %v751
  %v753 = vpop.f32.mrb[0].mxu0
  %754 = vmatprep.mubr.f32.mxu0 0.0
  %755 = vmatmul.mubr.f32.gmra.mrb[0].mxu0 %v481
  %v756 = vpop.f32.mrb[0].mxu0
  %v757 = vadd.f32 0.0, %v756
  %v758 = vpop.f32.mrb[0].mxu0
  %759 = vmatprep.mubr.f32.mxu0 0.0
  %760 = vmatmul.mubr.f32.gmra.mrb[0].mxu0 %v484
  %v761 = vpop.f32.mrb[0].mxu0
  %v762 = vadd.f32 0.0, %v761
  %v763 = vpop.f32.mrb[0].mxu0
  %764 = vmatprep.mubr.f32.mxu0 0.0
  %765 = vmatmul.mubr.f32.gmra.mrb[0].mxu0 %v487
  %v766 = vpop.f32.mrb[0].mxu0
  %v767 = vadd.f32 0.0, %v766
  %v768 = vpop.f32.mrb[0].mxu0
  %769 = vmatprep.mubr.f32.mxu0 0.0
  %770 = vmatmul.mubr.f32.gmra.mrb[0].mxu0 %v490
  %v771 = vpop.f32.mrb[0].mxu0
  %v772 = vadd.f32 0.0, %v771
  %v773 = vpop.f32.mrb[0].mxu0
  %774 = vmatprep.mubr.f32.mxu0 0.0
  %775 = vmatmul.mubr.f32.gmra.mrb[0].mxu0 %v493
  %v776 = vpop.f32.mrb[0].mxu0
  %v777 = vadd.f32 0.0, %v776
  %v778 = vpop.f32.mrb[0].mxu0
  %779 = vmatprep.mubr.f32.mxu0 0.0
  %780 = vmatmul.mubr.f32.gmra.mrb[0].mxu0 %v496
  %v781 = vpop.f32.mrb[0].mxu0
  %v782 = vadd.f32 0.0, %v781
  %v783 = vpop.f32.mrb[0].mxu0
  %784 = vmatprep.mubr.f32.mxu0 0.0
  %785 = vmatmul.mubr.f32.gmra.mrb[0].mxu0 %v499
  %v786 = vpop.f32.mrb[0].mxu0
  %v787 = vadd.f32 0.0, %v786
  %v788 = vpop.f32.mrb[0].mxu0
  %789 = vmatprep.mubr.f32.mxu0 0.0
  %790 = vmatmul.mubr.f32.gmra.mrb[0].mxu0 %v502
  %v791 = vpop.f32.mrb[0].mxu0
  %v792 = vadd.f32 0.0, %v791
  %v793 = vpop.f32.mrb[0].mxu0
  %794 = vmatprep.mubr.f32.mxu0 0.0
  %795 = vmatmul.mubr.f32.gmra.mrb[0].mxu0 %v505
  %v796 = vpop.f32.mrb[0].mxu0
  %v797 = vadd.f32 0.0, %v796
  %v798 = vpop.f32.mrb[0].mxu0
  %799 = vmatprep.mubr.f32.mxu0 0.0
  %800 = vmatmul.mubr.f32.gmra.mrb[0].mxu0 %v508
  %v801 = vpop.f32.mrb[0].mxu0
  %v802 = vadd.f32 0.0, %v801
  %v803 = vpop.f32.mrb[0].mxu0
  %804 = vmatprep.mubr.f32.mxu0 0.0
  %805 = vmatmul.mubr.f32.gmra.mrb[0].mxu0 %v511
  %v806 = vpop.f32.mrb[0].mxu0
  %v807 = vadd.f32 0.0, %v806
  %v808 = vpop.f32.mrb[0].mxu0
  %809 = vmatprep.mubr.f32.mxu0 0.0
  %810 = vmatmul.mubr.f32.gmra.mrb[0].mxu0 %v514
  %v811 = vpop.f32.mrb[0].mxu0
  %v812 = vadd.f32 0.0, %v811
  %v813 = vpop.f32.mrb[0].mxu0
  %814 = vmatprep.mubr.f32.mxu0 0.0
  %815 = vmatmul.mubr.f32.gmra.mrb[0].mxu0 %v517
  %v816 = vpop.f32.mrb[0].mxu0
  %v817 = vadd.f32 0.0, %v816
  %v818 = vpop.f32.mrb[0].mxu0
  %819 = vmatprep.mubr.f32.mxu0 0.0
  %820 = vmatmul.mubr.f32.gmra.mrb[0].mxu0 %v520
  %v821 = vpop.f32.mrb[0].mxu0
  %v822 = vadd.f32 0.0, %v821
  %v823 = vpop.f32.mrb[0].mxu0
  %824 = vmatprep.mubr.f32.mxu0 0.0
  %825 = vmatmul.mubr.f32.gmra.mrb[0].mxu0 %v523
  %v826 = vpop.f32.mrb[0].mxu0
  %v827 = vadd.f32 0.0, %v826
  %v828 = vpop.f32.mrb[0].mxu0
  %829 = vmatprep.mubr.f32.mxu0 0.0
  %830 = vmatmul.mubr.f32.gmra.mrb[0].mxu0 %v526
  %v831 = vpop.f32.mrb[0].mxu0
  %v832 = vadd.f32 0.0, %v831
  %v833 = vpop.f32.mrb[0].mxu0
  %834 = vmatprep.mubr.f32.mxu0 0.0
  %835 = vmatmul.mubr.f32.gmra.mrb[0].mxu0 %v529
  %v836 = vpop.f32.mrb[0].mxu0
  %v837 = vadd.f32 0.0, %v836
  %v838 = vpop.f32.mrb[0].mxu0
  %839 = vmatprep.mubr.f32.mxu0 0.0
  %840 = vmatmul.mubr.f32.gmra.mrb[0].mxu0 %v532
  %v841 = vpop.f32.mrb[0].mxu0
  %v842 = vadd.f32 0.0, %v841
  %v843 = vpop.f32.mrb[0].mxu0
  %844 = vmatprep.mubr.f32.mxu0 0.0
  %845 = vmatmul.mubr.f32.gmra.mrb[0].mxu0 %v535
  %v846 = vpop.f32.mrb[0].mxu0
  %v847 = vadd.f32 0.0, %v846
  %v848 = vpop.f32.mrb[0].mxu0
  %849 = vmatprep.mubr.f32.mxu0 0.0
  %850 = vmatmul.mubr.f32.gmra.mrb[0].mxu0 %v538
  %v851 = vpop.f32.mrb[0].mxu0
  %v852 = vadd.f32 0.0, %v851
  %v853 = vpop.f32.mrb[0].mxu0
  %854 = vmatprep.mubr.f32.mxu0 0.0
  %855 = vmatmul.mubr.f32.gmra.mrb[0].mxu0 %v541
  %v856 = vpop.f32.mrb[0].mxu0
  %v857 = vadd.f32 0.0, %v856
  %v858 = vpop.f32.mrb[0].mxu0
  %859 = vmatprep.mubr.f32.mxu0 0.0
  %860 = vmatmul.mubr.f32.gmra.mrb[0].mxu0 %v544
  %v861 = vpop.f32.mrb[0].mxu0
  %v862 = vadd.f32 0.0, %v861
  %v863 = vpop.f32.mrb[0].mxu0
  %864 = vmatprep.mubr.f32.mxu0 0.0
  %865 = vmatmul.mubr.f32.gmra.mrb[0].mxu0 %v547
  %v866 = vpop.f32.mrb[0].mxu0
  %v867 = vadd.f32 0.0, %v866
  %v868 = vpop.f32.mrb[0].mxu0
  %869 = vmatprep.mubr.f32.mxu0 0.0
  %870 = vmatmul.mubr.f32.gmra.mrb[0].mxu0 %v550
  %v871 = vpop.f32.mrb[0].mxu0
  %v872 = vadd.f32 0.0, %v871
  %v873 = vpop.f32.mrb[0].mxu0
  %874 = vmatprep.mubr.f32.mxu0 0.0
  %875 = vmatmul.mubr.f32.gmra.mrb[0].mxu0 %v553
  %v876 = vpop.f32.mrb[0].mxu0
  %v877 = vadd.f32 0.0, %v876
  %v878 = vpop.f32.mrb[0].mxu0
  %879 = vmatprep.mubr.f32.mxu0 0.0
  %880 = vmatmul.mubr.f32.gmra.mrb[0].mxu0 %v556
  %v881 = vpop.f32.mrb[0].mxu0
  %v882 = vadd.f32 0.0, %v881
  %v883 = vpop.f32.mrb[0].mxu0
  %884 = vmatprep.mubr.f32.mxu0 0.0
  %885 = vmatmul.mubr.f32.gmra.mrb[0].mxu0 %v559
  %v886 = vpop.f32.mrb[0].mxu0
  %v887 = vadd.f32 0.0, %v886
  %v888 = vpop.f32.mrb[0].mxu0
  %889 = vmatprep.mubr.f32.mxu0 0.0
  %890 = vmatmul.mubr.f32.gmra.mrb[0].mxu0 %v562
  %v891 = vpop.f32.mrb[0].mxu0
  %v892 = vadd.f32 0.0, %v891
  %v893 = vpop.f32.mrb[0].mxu0
  %894 = vmatprep.mubr.f32.mxu0 0.0
  %895 = vmatmul.mubr.f32.gmra.mrb[0].mxu0 %v565
  %v896 = vpop.f32.mrb[0].mxu0
  %v897 = vadd.f32 0.0, %v896
  %v898 = vpop.f32.mrb[0].mxu0
  %899 = vmatprep.mubr.f32.mxu0 0.0
  %900 = vmatmul.mubr.f32.gmra.mrb[0].mxu0 %v568
  %v901 = vpop.f32.mrb[0].mxu0
  %v902 = vadd.f32 0.0, %v901
  %v903 = vpop.f32.mrb[0].mxu0
  %904 = vmatprep.mubr.f32.mxu0 0.0
  %905 = vmatmul.mubr.f32.gmra.mrb[0].mxu0 %v571
  %v906 = vpop.f32.mrb[0].mxu0
  %v907 = vadd.f32 0.0, %v906
  %v908 = vpop.f32.mrb[0].mxu0
  %909 = vmatprep.mubr.f32.mxu0 0.0
  %910 = vmatmul.mubr.f32.gmra.mrb[0].mxu0 %v574
  %v911 = vpop.f32.mrb[0].mxu0
  %v912 = vadd.f32 0.0, %v911
  %v913 = vpop.f32.mrb[0].mxu0
  %914 = vmatprep.mubr.f32.mxu0 0.0
  %915 = vmatmul.mubr.f32.gmra.mrb[0].mxu0 %v577
  %v916 = vpop.f32.mrb[0].mxu0
  %v917 = vadd.f32 0.0, %v916
  %v918 = vpop.f32.mrb[0].mxu0
  %919 = vmatprep.mubr.f32.mxu0 0.0
  %920 = vmatmul.mubr.f32.gmra.mrb[0].mxu0 %v580
  %v921 = vpop.f32.mrb[0].mxu0
  %v922 = vadd.f32 0.0, %v921
  %v923 = vpop.f32.mrb[0].mxu0
  %924 = vmatprep.mubr.f32.mxu0 0.0
  %925 = vmatmul.mubr.f32.gmra.mrb[0].mxu0 %v583
  %v926 = vpop.f32.mrb[0].mxu0
  %v927 = vadd.f32 0.0, %v926
  %v928 = vpop.f32.mrb[0].mxu0
  %929 = vmatprep.mubr.f32.mxu0 0.0
  %930 = vmatmul.mubr.f32.gmra.mrb[0].mxu0 %v586
  %v931 = vpop.f32.mrb[0].mxu0
  %v932 = vadd.f32 0.0, %v931
  %v933 = vpop.f32.mrb[0].mxu0
  %934 = vmatprep.mubr.f32.mxu0 0.0
  %935 = vmatmul.mubr.f32.gmra.mrb[0].mxu0 %v589
  %v936 = vpop.f32.mrb[0].mxu0
  %v937 = vadd.f32 0.0, %v936
  %v938 = vpop.f32.mrb[0].mxu0
  %939 = vmatprep.mubr.f32.mxu0 0.0
  %940 = vmatmul.mubr.f32.gmra.mrb[0].mxu0 %v592
  %v941 = vpop.f32.mrb[0].mxu0
  %v942 = vadd.f32 0.0, %v941
  %v943 = vpop.f32.mrb[0].mxu0
  %944 = vmatprep.mubr.f32.mxu0 0.0
  %945 = vmatmul.mubr.f32.gmra.mrb[0].mxu0 %v595
  %v946 = vpop.f32.mrb[0].mxu0
  %v947 = vadd.f32 0.0, %v946
  %v948 = vpop.f32.mrb[0].mxu0
  %949 = vmatprep.mubr.f32.mxu0 0.0
  %950 = vmatmul.mubr.f32.gmra.mrb[0].mxu0 %v598
  %v951 = vpop.f32.mrb[0].mxu0
  %v952 = vadd.f32 0.0, %v951
  %v953 = vpop.f32.mrb[0].mxu0
  %954 = vmatprep.mubr.f32.mxu0 0.0
  %955 = vmatmul.mubr.f32.gmra.mrb[0].mxu0 %v601
  %v956 = vpop.f32.mrb[0].mxu0
  %v957 = vadd.f32 0.0, %v956
  %v958 = vpop.f32.mrb[0].mxu0
  %959 = vmatprep.mubr.f32.mxu0 0.0
  %960 = vmatmul.mubr.f32.gmra.mrb[0].mxu0 %v604
  %v961 = vpop.f32.mrb[0].mxu0
  %v962 = vadd.f32 0.0, %v961
  %v963 = vpop.f32.mrb[0].mxu0
  %964 = vmatprep.mubr.f32.mxu0 0.0
  %965 = vmatmul.mubr.f32.gmra.mrb[0].mxu0 %v607
  %v966 = vpop.f32.mrb[0].mxu0
  %v967 = vadd.f32 0.0, %v966
  %v968 = vpop.f32.mrb[0].mxu0
  %969 = vmatprep.mubr.f32.mxu0 0.0
  %970 = vmatmul.mubr.f32.gmra.mrb[0].mxu0 %v610
  %v971 = vpop.f32.mrb[0].mxu0
  %v972 = vadd.f32 0.0, %v971
  %v973 = vpop.f32.mrb[0].mxu0
  %974 = vmatprep.mubr.f32.mxu0 0.0
  %975 = vmatmul.mubr.f32.gmra.mrb[0].mxu0 %v613
  %v976 = vpop.f32.mrb[0].mxu0
  %v977 = vadd.f32 0.0, %v976
  %v978 = vpop.f32.mrb[0].mxu0
  %979 = vmatprep.mubr.f32.mxu0 0.0
  %980 = vmatmul.mubr.f32.gmra.mrb[0].mxu0 %v616
  %v981 = vpop.f32.mrb[0].mxu0
  %v982 = vadd.f32 0.0, %v981
  %v983 = vpop.f32.mrb[0].mxu0
  %984 = vmatprep.mubr.f32.mxu0 0.0
  %985 = vmatmul.mubr.f32.gmra.mrb[0].mxu0 %v619
  %v986 = vpop.f32.mrb[0].mxu0
  %v987 = vadd.f32 0.0, %v986
  %v988 = vpop.f32.mrb[0].mxu0
  %989 = vmatprep.mubr.f32.mxu0 0.0
  %990 = vmatmul.mubr.f32.gmra.mrb[0].mxu0 %v622
  %v991 = vpop.f32.mrb[0].mxu0
  %v992 = vadd.f32 0.0, %v991
  %v993 = vpop.f32.mrb[0].mxu0
  %994 = vmatprep.mubr.f32.mxu0 0.0
  %995 = vmatmul.mubr.f32.gmra.mrb[0].mxu0 %v625
  %v996 = vpop.f32.mrb[0].mxu0
  %v997 = vadd.f32 0.0, %v996
  %v998 = vpop.f32.mrb[0].mxu0
  %999 = vmatprep.mubr.f32.mxu0 0.0
  %1000 = vmatmul.mubr.f32.gmra.mrb[0].mxu0 %v628
  %v1001 = vpop.f32.mrb[0].mxu0
  %v1002 = vadd.f32 0.0, %v1001
  %v1003 = vpop.f32.mrb[0].mxu0
  %1004 = vmatprep.mubr.f32.mxu0 0.0
  %1005 = vmatmul.mubr.f32.gmra.mrb[0].mxu0 %v631
  %v1006 = vpop.f32.mrb[0].mxu0
  %v1007 = vadd.f32 0.0, %v1006
  %v1008 = vpop.f32.mrb[0].mxu0
  %1009 = vmatprep.mubr.f32.mxu0 0.0
  %1010 = vmatmul.mubr.f32.gmra.mrb[0].mxu0 %v634
  %v1011 = vpop.f32.mrb[0].mxu0
  %v1012 = vadd.f32 0.0, %v1011
  %v1013 = vpop.f32.mrb[0].mxu0
  %1014 = vmatprep.mubr.f32.mxu0 0.0
  %1015 = vmatmul.mubr.f32.gmra.mrb[0].mxu0 %v637
  %v1016 = vpop.f32.mrb[0].mxu0
  %v1017 = vadd.f32 0.0, %v1016
  %v1018 = vpop.f32.mrb[0].mxu0
  %1019 = vmatprep.mubr.f32.mxu0 0.0
  %1020 = vmatmul.mubr.f32.gmra.mrb[0].mxu0 %v640
  %v1021 = vpop.f32.mrb[0].mxu0
  %v1022 = vadd.f32 0.0, %v1021
  %v1023 = vpop.f32.mrb[0].mxu0
  %1024 = vmatprep.mubr.f32.mxu0 0.0
  %1025 = vmatmul.mubr.f32.gmra.mrb[0].mxu0 %v643
  %v1026 = vpop.f32.mrb[0].mxu0
  %v1027 = vadd.f32 0.0, %v1026
  %v1028 = vpop.f32.mrb[0].mxu0
  %1029 = vmatprep.mubr.f32.mxu0 0.0
  %1030 = vmatmul.mubr.f32.gmra.mrb[0].mxu0 %v646
  %v1031 = vpop.f32.mrb[0].mxu0
  %v1032 = vadd.f32 0.0, %v1031
  %v1033 = vpop.f32.mrb[0].mxu0
  %1034 = vmatprep.mubr.f32.mxu0 0.0
  %1035 = vmatmul.mubr.f32.gmra.mrb[0].mxu0 %v649
  %v1036 = vpop.f32.mrb[0].mxu0
  %v1037 = vadd.f32 0.0, %v1036
  %v1038 = vpop.f32.mrb[0].mxu0
  %1039 = vdwg.mxu0
  %v1041 = vsel %vm26, %v328, 0
  %v1044 = vsel %vm26, %v329, 0
  %v1047 = vsel %vm26, %v330, 0
  %v1050 = vsel %vm26, %v331, 0
  %v1053 = vsel %vm26, %v332, 0
  %v1056 = vsel %vm26, %v333, 0
  %v1059 = vsel %vm26, %v334, 0
  %v1062 = vsel %vm26, %v335, 0
  %v1065 = vsel %vm26, %v336, 0
  %v1068 = vsel %vm26, %v337, 0
  %v1071 = vsel %vm26, %v338, 0
  %v1074 = vsel %vm26, %v339, 0
  %v1077 = vsel %vm26, %v340, 0
  %v1080 = vsel %vm26, %v341, 0
  %v1083 = vsel %vm26, %v342, 0
  %v1086 = vsel %vm26, %v343, 0
  %v1089 = vsel %vm26, %v344, 0
  %v1092 = vsel %vm26, %v345, 0
  %v1095 = vsel %vm26, %v346, 0
  %v1098 = vsel %vm26, %v347, 0
  %v1101 = vsel %vm26, %v348, 0
  %v1104 = vsel %vm26, %v349, 0
  %v1107 = vsel %vm26, %v350, 0
  %v1110 = vsel %vm26, %v351, 0
  %v1113 = vsel %vm26, %v352, 0
  %v1116 = vsel %vm26, %v353, 0
  %v1119 = vsel %vm26, %v354, 0
  %v1122 = vsel %vm26, %v355, 0
  %v1125 = vsel %vm26, %v356, 0
  %v1128 = vsel %vm26, %v357, 0
  %v1131 = vsel %vm26, %v358, 0
  %v1134 = vsel %vm26, %v359, 0
  %v1137 = vsel %vm26, %v360, 0
  %v1140 = vsel %vm26, %v361, 0
  %v1143 = vsel %vm26, %v362, 0
  %v1146 = vsel %vm26, %v363, 0
  %v1149 = vsel %vm26, %v364, 0
  %v1152 = vsel %vm26, %v365, 0
  %v1155 = vsel %vm26, %v366, 0
  %v1158 = vsel %vm26, %v367, 0
  %v1161 = vsel %vm26, %v368, 0
  %v1164 = vsel %vm26, %v369, 0
  %v1167 = vsel %vm26, %v370, 0
  %v1170 = vsel %vm26, %v371, 0
  %v1173 = vsel %vm26, %v372, 0
  %v1176 = vsel %vm26, %v373, 0
  %v1179 = vsel %vm26, %v374, 0
  %v1182 = vsel %vm26, %v375, 0
  %v1185 = vsel %vm26, %v376, 0
  %v1188 = vsel %vm26, %v377, 0
  %v1191 = vsel %vm26, %v378, 0
  %v1194 = vsel %vm26, %v379, 0
  %v1197 = vsel %vm26, %v380, 0
  %v1200 = vsel %vm26, %v381, 0
  %v1203 = vsel %vm26, %v382, 0
  %v1206 = vsel %vm26, %v383, 0
  %v1209 = vsel %vm26, %v384, 0
  %v1212 = vsel %vm26, %v385, 0
  %v1215 = vsel %vm26, %v386, 0
  %v1218 = vsel %vm26, %v387, 0
  %v1221 = vsel %vm26, %v388, 0
  %v1224 = vsel %vm26, %v389, 0
  %v1227 = vsel %vm26, %v390, 0
  %v1230 = vsel %vm26, %v391, 0
  %v1233 = vsel %vm651, %v392, 0
  %1235 = vmatprep.subr.mxu0 0.0
  %1236 = vmatpush1.msra.mxu0 %v1233
  %1237 = vmatprep.subr.mxu0 0.0
  %1238 = vmatpush1.msra.mxu0 0.0
  %1239 = vmatprep.subr.mxu0 0.0
  %1240 = vmatpush1.msra.mxu0 0.0
  %1241 = vmatprep.subr.mxu0 0.0
  %1242 = vmatpush1.msra.mxu0 0.0
  %1243 = vmatprep.subr.mxu0 0.0
  %1244 = vmatpush1.msra.mxu0 0.0
  %1245 = vmatprep.subr.mxu0 0.0
  %1246 = vmatpush1.msra.mxu0 0.0
  %1247 = vmatprep.subr.mxu0 0.0
  %1248 = vmatpush1.msra.mxu0 0.0
  %1249 = vmatprep.subr.mxu0 0.0
  %1250 = vmatpush1.msra.mxu0 0.0
  %1251 = vmatprep.subr.mxu0 0.0
  %1252 = vmatpush1.msra.mxu0 0.0
  %1253 = vmatprep.subr.mxu0 0.0
  %1254 = vmatpush1.msra.mxu0 0.0
  %1255 = vmatprep.subr.mxu0 0.0
  %1256 = vmatpush1.msra.mxu0 0.0
  %1257 = vmatprep.subr.mxu0 0.0
  %1258 = vmatpush1.msra.mxu0 0.0
  %1259 = vmatprep.subr.mxu0 0.0
  %1260 = vmatpush1.msra.mxu0 0.0
  %1261 = vmatprep.subr.mxu0 0.0
  %1262 = vmatpush1.msra.mxu0 0.0
  %1263 = vmatprep.subr.mxu0 0.0
  %1264 = vmatpush1.msra.mxu0 0.0
  %1265 = vmatprep.subr.mxu0 0.0
  %1266 = vmatpush1.msra.mxu0 0.0
  %1267 = vmatprep.subr.mxu0 0.0
  %1268 = vmatpush1.msra.mxu0 0.0
  %1269 = vmatprep.subr.mxu0 0.0
  %1270 = vmatpush1.msra.mxu0 0.0
  %1271 = vmatprep.subr.mxu0 0.0
  %1272 = vmatpush1.msra.mxu0 0.0
  %1273 = vmatprep.subr.mxu0 0.0
  %1274 = vmatpush1.msra.mxu0 0.0
  %1275 = vmatprep.subr.mxu0 0.0
  %1276 = vmatpush1.msra.mxu0 0.0
  %1277 = vmatprep.subr.mxu0 0.0
  %1278 = vmatpush1.msra.mxu0 0.0
  %1279 = vmatprep.subr.mxu0 0.0
  %1280 = vmatpush1.msra.mxu0 0.0
  %1281 = vmatprep.subr.mxu0 0.0
  %1282 = vmatpush1.msra.mxu0 0.0
  %1283 = vmatprep.subr.mxu0 0.0
  %1284 = vmatpush1.msra.mxu0 0.0
  %1285 = vmatprep.subr.mxu0 0.0
  %1286 = vmatpush1.msra.mxu0 0.0
  %1287 = vmatprep.subr.mxu0 0.0
  %1288 = vmatpush1.msra.mxu0 0.0
  %1289 = vmatprep.subr.mxu0 0.0
  %1290 = vmatpush1.msra.mxu0 0.0
  %1291 = vmatprep.subr.mxu0 0.0
  %1292 = vmatpush1.msra.mxu0 0.0
  %1293 = vmatprep.subr.mxu0 0.0
  %1294 = vmatpush1.msra.mxu0 0.0
  %1295 = vmatprep.subr.mxu0 0.0
  %1296 = vmatpush1.msra.mxu0 0.0
  %1297 = vmatprep.subr.mxu0 0.0
  %1298 = vmatpush1.msra.mxu0 0.0
  %1299 = vmatprep.mubr.f32.mxu0 0.0
  %1300 = vmatmul.mubr.f32.gmra.mrb[0].mxu0 %v1041
  %v1301 = vpop.f32.mrb[0].mxu0
  %v1302 = vadd.f32 %v722, %v1301
  %v1303 = vpop.f32.mrb[0].mxu0
  %1304 = vmatprep.mubr.f32.mxu0 0.0
  %1305 = vmatmul.mubr.f32.gmra.mrb[0].mxu0 %v1044
  %v1306 = vpop.f32.mrb[0].mxu0
  %v1307 = vadd.f32 %v727, %v1306
  %v1308 = vpop.f32.mrb[0].mxu0
  %1309 = vmatprep.mubr.f32.mxu0 0.0
  %1310 = vmatmul.mubr.f32.gmra.mrb[0].mxu0 %v1047
  %v1311 = vpop.f32.mrb[0].mxu0
  %v1312 = vadd.f32 %v732, %v1311
  %v1313 = vpop.f32.mrb[0].mxu0
  %1314 = vmatprep.mubr.f32.mxu0 0.0
  %1315 = vmatmul.mubr.f32.gmra.mrb[0].mxu0 %v1050
  %v1316 = vpop.f32.mrb[0].mxu0
  %v1317 = vadd.f32 %v737, %v1316
  %v1318 = vpop.f32.mrb[0].mxu0
  %1319 = vmatprep.mubr.f32.mxu0 0.0
  %1320 = vmatmul.mubr.f32.gmra.mrb[0].mxu0 %v1053
  %v1321 = vpop.f32.mrb[0].mxu0
  %v1322 = vadd.f32 %v742, %v1321
  %v1323 = vpop.f32.mrb[0].mxu0
  %1324 = vmatprep.mubr.f32.mxu0 0.0
  %1325 = vmatmul.mubr.f32.gmra.mrb[0].mxu0 %v1056
  %v1326 = vpop.f32.mrb[0].mxu0
  %v1327 = vadd.f32 %v747, %v1326
  %v1328 = vpop.f32.mrb[0].mxu0
  %1329 = vmatprep.mubr.f32.mxu0 0.0
  %1330 = vmatmul.mubr.f32.gmra.mrb[0].mxu0 %v1059
  %v1331 = vpop.f32.mrb[0].mxu0
  %v1332 = vadd.f32 %v752, %v1331
  %v1333 = vpop.f32.mrb[0].mxu0
  %1334 = vmatprep.mubr.f32.mxu0 0.0
  %1335 = vmatmul.mubr.f32.gmra.mrb[0].mxu0 %v1062
  %v1336 = vpop.f32.mrb[0].mxu0
  %v1337 = vadd.f32 %v757, %v1336
  %v1338 = vpop.f32.mrb[0].mxu0
  %1339 = vmatprep.mubr.f32.mxu0 0.0
  %1340 = vmatmul.mubr.f32.gmra.mrb[0].mxu0 %v1065
  %v1341 = vpop.f32.mrb[0].mxu0
  %v1342 = vadd.f32 %v762, %v1341
  %v1343 = vpop.f32.mrb[0].mxu0
  %1344 = vmatprep.mubr.f32.mxu0 0.0
  %1345 = vmatmul.mubr.f32.gmra.mrb[0].mxu0 %v1068
  %v1346 = vpop.f32.mrb[0].mxu0
  %v1347 = vadd.f32 %v767, %v1346
  %v1348 = vpop.f32.mrb[0].mxu0
  %1349 = vmatprep.mubr.f32.mxu0 0.0
  %1350 = vmatmul.mubr.f32.gmra.mrb[0].mxu0 %v1071
  %v1351 = vpop.f32.mrb[0].mxu0
  %v1352 = vadd.f32 %v772, %v1351
  %v1353 = vpop.f32.mrb[0].mxu0
  %1354 = vmatprep.mubr.f32.mxu0 0.0
  %1355 = vmatmul.mubr.f32.gmra.mrb[0].mxu0 %v1074
  %v1356 = vpop.f32.mrb[0].mxu0
  %v1357 = vadd.f32 %v777, %v1356
  %v1358 = vpop.f32.mrb[0].mxu0
  %1359 = vmatprep.mubr.f32.mxu0 0.0
  %1360 = vmatmul.mubr.f32.gmra.mrb[0].mxu0 %v1077
  %v1361 = vpop.f32.mrb[0].mxu0
  %v1362 = vadd.f32 %v782, %v1361
  %v1363 = vpop.f32.mrb[0].mxu0
  %1364 = vmatprep.mubr.f32.mxu0 0.0
  %1365 = vmatmul.mubr.f32.gmra.mrb[0].mxu0 %v1080
  %v1366 = vpop.f32.mrb[0].mxu0
  %v1367 = vadd.f32 %v787, %v1366
  %v1368 = vpop.f32.mrb[0].mxu0
  %1369 = vmatprep.mubr.f32.mxu0 0.0
  %1370 = vmatmul.mubr.f32.gmra.mrb[0].mxu0 %v1083
  %v1371 = vpop.f32.mrb[0].mxu0
  %v1372 = vadd.f32 %v792, %v1371
  %v1373 = vpop.f32.mrb[0].mxu0
  %1374 = vmatprep.mubr.f32.mxu0 0.0
  %1375 = vmatmul.mubr.f32.gmra.mrb[0].mxu0 %v1086
  %v1376 = vpop.f32.mrb[0].mxu0
  %v1377 = vadd.f32 %v797, %v1376
  %v1378 = vpop.f32.mrb[0].mxu0
  %1379 = vmatprep.mubr.f32.mxu0 0.0
  %1380 = vmatmul.mubr.f32.gmra.mrb[0].mxu0 %v1089
  %v1381 = vpop.f32.mrb[0].mxu0
  %v1382 = vadd.f32 %v802, %v1381
  %v1383 = vpop.f32.mrb[0].mxu0
  %1384 = vmatprep.mubr.f32.mxu0 0.0
  %1385 = vmatmul.mubr.f32.gmra.mrb[0].mxu0 %v1092
  %v1386 = vpop.f32.mrb[0].mxu0
  %v1387 = vadd.f32 %v807, %v1386
  %v1388 = vpop.f32.mrb[0].mxu0
  %1389 = vmatprep.mubr.f32.mxu0 0.0
  %1390 = vmatmul.mubr.f32.gmra.mrb[0].mxu0 %v1095
  %v1391 = vpop.f32.mrb[0].mxu0
  %v1392 = vadd.f32 %v812, %v1391
  %v1393 = vpop.f32.mrb[0].mxu0
  %1394 = vmatprep.mubr.f32.mxu0 0.0
  %1395 = vmatmul.mubr.f32.gmra.mrb[0].mxu0 %v1098
  %v1396 = vpop.f32.mrb[0].mxu0
  %v1397 = vadd.f32 %v817, %v1396
  %v1398 = vpop.f32.mrb[0].mxu0
  %1399 = vmatprep.mubr.f32.mxu0 0.0
  %1400 = vmatmul.mubr.f32.gmra.mrb[0].mxu0 %v1101
  %v1401 = vpop.f32.mrb[0].mxu0
  %v1402 = vadd.f32 %v822, %v1401
  %v1403 = vpop.f32.mrb[0].mxu0
  %1404 = vmatprep.mubr.f32.mxu0 0.0
  %1405 = vmatmul.mubr.f32.gmra.mrb[0].mxu0 %v1104
  %v1406 = vpop.f32.mrb[0].mxu0
  %v1407 = vadd.f32 %v827, %v1406
  %v1408 = vpop.f32.mrb[0].mxu0
  %1409 = vmatprep.mubr.f32.mxu0 0.0
  %1410 = vmatmul.mubr.f32.gmra.mrb[0].mxu0 %v1107
  %v1411 = vpop.f32.mrb[0].mxu0
  %v1412 = vadd.f32 %v832, %v1411
  %v1413 = vpop.f32.mrb[0].mxu0
  %1414 = vmatprep.mubr.f32.mxu0 0.0
  %1415 = vmatmul.mubr.f32.gmra.mrb[0].mxu0 %v1110
  %v1416 = vpop.f32.mrb[0].mxu0
  %v1417 = vadd.f32 %v837, %v1416
  %v1418 = vpop.f32.mrb[0].mxu0
  %1419 = vmatprep.mubr.f32.mxu0 0.0
  %1420 = vmatmul.mubr.f32.gmra.mrb[0].mxu0 %v1113
  %v1421 = vpop.f32.mrb[0].mxu0
  %v1422 = vadd.f32 %v842, %v1421
  %v1423 = vpop.f32.mrb[0].mxu0
  %1424 = vmatprep.mubr.f32.mxu0 0.0
  %1425 = vmatmul.mubr.f32.gmra.mrb[0].mxu0 %v1116
  %v1426 = vpop.f32.mrb[0].mxu0
  %v1427 = vadd.f32 %v847, %v1426
  %v1428 = vpop.f32.mrb[0].mxu0
  %1429 = vmatprep.mubr.f32.mxu0 0.0
  %1430 = vmatmul.mubr.f32.gmra.mrb[0].mxu0 %v1119
  %v1431 = vpop.f32.mrb[0].mxu0
  %v1432 = vadd.f32 %v852, %v1431
  %v1433 = vpop.f32.mrb[0].mxu0
  %1434 = vmatprep.mubr.f32.mxu0 0.0
  %1435 = vmatmul.mubr.f32.gmra.mrb[0].mxu0 %v1122
  %v1436 = vpop.f32.mrb[0].mxu0
  %v1437 = vadd.f32 %v857, %v1436
  %v1438 = vpop.f32.mrb[0].mxu0
  %1439 = vmatprep.mubr.f32.mxu0 0.0
  %1440 = vmatmul.mubr.f32.gmra.mrb[0].mxu0 %v1125
  %v1441 = vpop.f32.mrb[0].mxu0
  %v1442 = vadd.f32 %v862, %v1441
  %v1443 = vpop.f32.mrb[0].mxu0
  %1444 = vmatprep.mubr.f32.mxu0 0.0
  %1445 = vmatmul.mubr.f32.gmra.mrb[0].mxu0 %v1128
  %v1446 = vpop.f32.mrb[0].mxu0
  %v1447 = vadd.f32 %v867, %v1446
  %v1448 = vpop.f32.mrb[0].mxu0
  %1449 = vmatprep.mubr.f32.mxu0 0.0
  %1450 = vmatmul.mubr.f32.gmra.mrb[0].mxu0 %v1131
  %v1451 = vpop.f32.mrb[0].mxu0
  %v1452 = vadd.f32 %v872, %v1451
  %v1453 = vpop.f32.mrb[0].mxu0
  %1454 = vmatprep.mubr.f32.mxu0 0.0
  %1455 = vmatmul.mubr.f32.gmra.mrb[0].mxu0 %v1134
  %v1456 = vpop.f32.mrb[0].mxu0
  %v1457 = vadd.f32 %v877, %v1456
  %v1458 = vpop.f32.mrb[0].mxu0
  %1459 = vmatprep.mubr.f32.mxu0 0.0
  %1460 = vmatmul.mubr.f32.gmra.mrb[0].mxu0 %v1137
  %v1461 = vpop.f32.mrb[0].mxu0
  %v1462 = vadd.f32 %v882, %v1461
  %v1463 = vpop.f32.mrb[0].mxu0
  %1464 = vmatprep.mubr.f32.mxu0 0.0
  %1465 = vmatmul.mubr.f32.gmra.mrb[0].mxu0 %v1140
  %v1466 = vpop.f32.mrb[0].mxu0
  %v1467 = vadd.f32 %v887, %v1466
  %v1468 = vpop.f32.mrb[0].mxu0
  %1469 = vmatprep.mubr.f32.mxu0 0.0
  %1470 = vmatmul.mubr.f32.gmra.mrb[0].mxu0 %v1143
  %v1471 = vpop.f32.mrb[0].mxu0
  %v1472 = vadd.f32 %v892, %v1471
  %v1473 = vpop.f32.mrb[0].mxu0
  %1474 = vmatprep.mubr.f32.mxu0 0.0
  %1475 = vmatmul.mubr.f32.gmra.mrb[0].mxu0 %v1146
  %v1476 = vpop.f32.mrb[0].mxu0
  %v1477 = vadd.f32 %v897, %v1476
  %v1478 = vpop.f32.mrb[0].mxu0
  %1479 = vmatprep.mubr.f32.mxu0 0.0
  %1480 = vmatmul.mubr.f32.gmra.mrb[0].mxu0 %v1149
  %v1481 = vpop.f32.mrb[0].mxu0
  %v1482 = vadd.f32 %v902, %v1481
  %v1483 = vpop.f32.mrb[0].mxu0
  %1484 = vmatprep.mubr.f32.mxu0 0.0
  %1485 = vmatmul.mubr.f32.gmra.mrb[0].mxu0 %v1152
  %v1486 = vpop.f32.mrb[0].mxu0
  %v1487 = vadd.f32 %v907, %v1486
  %v1488 = vpop.f32.mrb[0].mxu0
  %1489 = vmatprep.mubr.f32.mxu0 0.0
  %1490 = vmatmul.mubr.f32.gmra.mrb[0].mxu0 %v1155
  %v1491 = vpop.f32.mrb[0].mxu0
  %v1492 = vadd.f32 %v912, %v1491
  %v1493 = vpop.f32.mrb[0].mxu0
  %1494 = vmatprep.mubr.f32.mxu0 0.0
  %1495 = vmatmul.mubr.f32.gmra.mrb[0].mxu0 %v1158
  %v1496 = vpop.f32.mrb[0].mxu0
  %v1497 = vadd.f32 %v917, %v1496
  %v1498 = vpop.f32.mrb[0].mxu0
  %1499 = vmatprep.mubr.f32.mxu0 0.0
  %1500 = vmatmul.mubr.f32.gmra.mrb[0].mxu0 %v1161
  %v1501 = vpop.f32.mrb[0].mxu0
  %v1502 = vadd.f32 %v922, %v1501
  %v1503 = vpop.f32.mrb[0].mxu0
  %1504 = vmatprep.mubr.f32.mxu0 0.0
  %1505 = vmatmul.mubr.f32.gmra.mrb[0].mxu0 %v1164
  %v1506 = vpop.f32.mrb[0].mxu0
  %v1507 = vadd.f32 %v927, %v1506
  %v1508 = vpop.f32.mrb[0].mxu0
  %1509 = vmatprep.mubr.f32.mxu0 0.0
  %1510 = vmatmul.mubr.f32.gmra.mrb[0].mxu0 %v1167
  %v1511 = vpop.f32.mrb[0].mxu0
  %v1512 = vadd.f32 %v932, %v1511
  %v1513 = vpop.f32.mrb[0].mxu0
  %1514 = vmatprep.mubr.f32.mxu0 0.0
  %1515 = vmatmul.mubr.f32.gmra.mrb[0].mxu0 %v1170
  %v1516 = vpop.f32.mrb[0].mxu0
  %v1517 = vadd.f32 %v937, %v1516
  %v1518 = vpop.f32.mrb[0].mxu0
  %1519 = vmatprep.mubr.f32.mxu0 0.0
  %1520 = vmatmul.mubr.f32.gmra.mrb[0].mxu0 %v1173
  %v1521 = vpop.f32.mrb[0].mxu0
  %v1522 = vadd.f32 %v942, %v1521
  %v1523 = vpop.f32.mrb[0].mxu0
  %1524 = vmatprep.mubr.f32.mxu0 0.0
  %1525 = vmatmul.mubr.f32.gmra.mrb[0].mxu0 %v1176
  %v1526 = vpop.f32.mrb[0].mxu0
  %v1527 = vadd.f32 %v947, %v1526
  %v1528 = vpop.f32.mrb[0].mxu0
  %1529 = vmatprep.mubr.f32.mxu0 0.0
  %1530 = vmatmul.mubr.f32.gmra.mrb[0].mxu0 %v1179
  %v1531 = vpop.f32.mrb[0].mxu0
  %v1532 = vadd.f32 %v952, %v1531
  %v1533 = vpop.f32.mrb[0].mxu0
  %1534 = vmatprep.mubr.f32.mxu0 0.0
  %1535 = vmatmul.mubr.f32.gmra.mrb[0].mxu0 %v1182
  %v1536 = vpop.f32.mrb[0].mxu0
  %v1537 = vadd.f32 %v957, %v1536
  %v1538 = vpop.f32.mrb[0].mxu0
  %1539 = vmatprep.mubr.f32.mxu0 0.0
  %1540 = vmatmul.mubr.f32.gmra.mrb[0].mxu0 %v1185
  %v1541 = vpop.f32.mrb[0].mxu0
  %v1542 = vadd.f32 %v962, %v1541
  %v1543 = vpop.f32.mrb[0].mxu0
  %1544 = vmatprep.mubr.f32.mxu0 0.0
  %1545 = vmatmul.mubr.f32.gmra.mrb[0].mxu0 %v1188
  %v1546 = vpop.f32.mrb[0].mxu0
  %v1547 = vadd.f32 %v967, %v1546
  %v1548 = vpop.f32.mrb[0].mxu0
  %1549 = vmatprep.mubr.f32.mxu0 0.0
  %1550 = vmatmul.mubr.f32.gmra.mrb[0].mxu0 %v1191
  %v1551 = vpop.f32.mrb[0].mxu0
  %v1552 = vadd.f32 %v972, %v1551
  %v1553 = vpop.f32.mrb[0].mxu0
  %1554 = vmatprep.mubr.f32.mxu0 0.0
  %1555 = vmatmul.mubr.f32.gmra.mrb[0].mxu0 %v1194
  %v1556 = vpop.f32.mrb[0].mxu0
  %v1557 = vadd.f32 %v977, %v1556
  %v1558 = vpop.f32.mrb[0].mxu0
  %1559 = vmatprep.mubr.f32.mxu0 0.0
  %1560 = vmatmul.mubr.f32.gmra.mrb[0].mxu0 %v1197
  %v1561 = vpop.f32.mrb[0].mxu0
  %v1562 = vadd.f32 %v982, %v1561
  %v1563 = vpop.f32.mrb[0].mxu0
  %1564 = vmatprep.mubr.f32.mxu0 0.0
  %1565 = vmatmul.mubr.f32.gmra.mrb[0].mxu0 %v1200
  %v1566 = vpop.f32.mrb[0].mxu0
  %v1567 = vadd.f32 %v987, %v1566
  %v1568 = vpop.f32.mrb[0].mxu0
  %1569 = vmatprep.mubr.f32.mxu0 0.0
  %1570 = vmatmul.mubr.f32.gmra.mrb[0].mxu0 %v1203
  %v1571 = vpop.f32.mrb[0].mxu0
  %v1572 = vadd.f32 %v992, %v1571
  %v1573 = vpop.f32.mrb[0].mxu0
  %1574 = vmatprep.mubr.f32.mxu0 0.0
  %1575 = vmatmul.mubr.f32.gmra.mrb[0].mxu0 %v1206
  %v1576 = vpop.f32.mrb[0].mxu0
  %v1577 = vadd.f32 %v997, %v1576
  %v1578 = vpop.f32.mrb[0].mxu0
  %1579 = vmatprep.mubr.f32.mxu0 0.0
  %1580 = vmatmul.mubr.f32.gmra.mrb[0].mxu0 %v1209
  %v1581 = vpop.f32.mrb[0].mxu0
  %v1582 = vadd.f32 %v1002, %v1581
  %v1583 = vpop.f32.mrb[0].mxu0
  %1584 = vmatprep.mubr.f32.mxu0 0.0
  %1585 = vmatmul.mubr.f32.gmra.mrb[0].mxu0 %v1212
  %v1586 = vpop.f32.mrb[0].mxu0
  %v1587 = vadd.f32 %v1007, %v1586
  %v1588 = vpop.f32.mrb[0].mxu0
  %1589 = vmatprep.mubr.f32.mxu0 0.0
  %1590 = vmatmul.mubr.f32.gmra.mrb[0].mxu0 %v1215
  %v1591 = vpop.f32.mrb[0].mxu0
  %v1592 = vadd.f32 %v1012, %v1591
  %v1593 = vpop.f32.mrb[0].mxu0
  %1594 = vmatprep.mubr.f32.mxu0 0.0
  %1595 = vmatmul.mubr.f32.gmra.mrb[0].mxu0 %v1218
  %v1596 = vpop.f32.mrb[0].mxu0
  %v1597 = vadd.f32 %v1017, %v1596
  %v1598 = vpop.f32.mrb[0].mxu0
  %1599 = vmatprep.mubr.f32.mxu0 0.0
  %1600 = vmatmul.mubr.f32.gmra.mrb[0].mxu0 %v1221
  %v1601 = vpop.f32.mrb[0].mxu0
  %v1602 = vadd.f32 %v1022, %v1601
  %v1603 = vpop.f32.mrb[0].mxu0
  %1604 = vmatprep.mubr.f32.mxu0 0.0
  %1605 = vmatmul.mubr.f32.gmra.mrb[0].mxu0 %v1224
  %v1606 = vpop.f32.mrb[0].mxu0
  %v1607 = vadd.f32 %v1027, %v1606
  %v1608 = vpop.f32.mrb[0].mxu0
  %1609 = vmatprep.mubr.f32.mxu0 0.0
  %1610 = vmatmul.mubr.f32.gmra.mrb[0].mxu0 %v1227
  %v1611 = vpop.f32.mrb[0].mxu0
  %v1612 = vadd.f32 %v1032, %v1611
  %v1613 = vpop.f32.mrb[0].mxu0
  %1614 = vmatprep.mubr.f32.mxu0 0.0
  %1615 = vmatmul.mubr.f32.gmra.mrb[0].mxu0 %v1230
  %v1616 = vpop.f32.mrb[0].mxu0
  %v1617 = vadd.f32 %v1037, %v1616
  %v1618 = vpop.f32.mrb[0].mxu0
  %1619 = vdwg.mxu0
  %v1620 = vld [vmem:[#allocation2 + $0x2] sm:$0xff]
  %v1621 = vld [vmem:[#allocation2 + $0xa] sm:$0xff]
  %v1622 = vld [vmem:[#allocation2 + $0x1a] sm:$0xff]
  %v1623 = vld [vmem:[#allocation2 + $0x22] sm:$0xff]
  %v1624 = vld [vmem:[#allocation2 + $0x32] sm:$0xff]
  %v1625 = vld [vmem:[#allocation2 + $0x3a] sm:$0xff]
  %v1626 = vld [vmem:[#allocation2 + $0x4a] sm:$0xff]
  %v1627 = vld [vmem:[#allocation2 + $0x52] sm:$0xff]
  %v1628 = vld [vmem:[#allocation2 + $0x62] sm:$0xff]
  %v1629 = vld [vmem:[#allocation2 + $0x6a] sm:$0xff]
  %v1630 = vld [vmem:[#allocation2 + $0x7a] sm:$0xff]
  %v1631 = vld [vmem:[#allocation2 + $0x82] sm:$0xff]
  %v1632 = vld [vmem:[#allocation2 + $0x92] sm:$0xff]
  %v1633 = vld [vmem:[#allocation2 + $0x9a] sm:$0xff]
  %v1634 = vld [vmem:[#allocation2 + $0xaa] sm:$0xff]
  %v1635 = vld [vmem:[#allocation2 + $0xb2] sm:$0xff]
  %v1636 = vld [vmem:[#allocation2 + $0xc2] sm:$0xff]
  %v1637 = vld [vmem:[#allocation2 + $0xca] sm:$0xff]
  %v1638 = vld [vmem:[#allocation2 + $0xda] sm:$0xff]
  %v1639 = vld [vmem:[#allocation2 + $0xe2] sm:$0xff]
  %v1640 = vld [vmem:[#allocation2 + $0xf2] sm:$0xff]
  %v1641 = vld [vmem:[#allocation2 + $0xfa] sm:$0xff]
  %v1642 = vld [vmem:[#allocation2 + $0x10a] sm:$0xff]
  %v1643 = vld [vmem:[#allocation2 + $0x112] sm:$0xff]
  %v1644 = vld [vmem:[#allocation2 + $0x122] sm:$0xff]
  %v1645 = vld [vmem:[#allocation2 + $0x12a] sm:$0xff]
  %v1646 = vld [vmem:[#allocation2 + $0x13a] sm:$0xff]
  %v1647 = vld [vmem:[#allocation2 + $0x142] sm:$0xff]
  %v1648 = vld [vmem:[#allocation2 + $0x152] sm:$0xff]
  %v1649 = vld [vmem:[#allocation2 + $0x15a] sm:$0xff]
  %v1650 = vld [vmem:[#allocation2 + $0x16a] sm:$0xff]
  %v1651 = vld [vmem:[#allocation2 + $0x172] sm:$0xff]
  %v1652 = vld [vmem:[#allocation2 + $0x1b2] sm:$0xff]
  %v1653 = vld [vmem:[#allocation2 + $0x1ba] sm:$0xff]
  %v1654 = vld [vmem:[#allocation2 + $0x1ca] sm:$0xff]
  %v1655 = vld [vmem:[#allocation2 + $0x1d2] sm:$0xff]
  %v1656 = vld [vmem:[#allocation2 + $0x1e2] sm:$0xff]
  %v1657 = vld [vmem:[#allocation2 + $0x1ea] sm:$0xff]
  %v1658 = vld [vmem:[#allocation2 + $0x1fa] sm:$0xff]
  %v1659 = vld [vmem:[#allocation2 + $0x202] sm:$0xff]
  %v1660 = vld [vmem:[#allocation2 + $0x212] sm:$0xff]
  %v1661 = vld [vmem:[#allocation2 + $0x21a] sm:$0xff]
  %v1662 = vld [vmem:[#allocation2 + $0x22a] sm:$0xff]
  %v1663 = vld [vmem:[#allocation2 + $0x232] sm:$0xff]
  %v1664 = vld [vmem:[#allocation2 + $0x242] sm:$0xff]
  %v1665 = vld [vmem:[#allocation2 + $0x24a] sm:$0xff]
  %v1666 = vld [vmem:[#allocation2 + $0x25a] sm:$0xff]
  %v1667 = vld [vmem:[#allocation2 + $0x262] sm:$0xff]
  %v1668 = vld [vmem:[#allocation2 + $0x272] sm:$0xff]
  %v1669 = vld [vmem:[#allocation2 + $0x27a] sm:$0xff]
  %v1670 = vld [vmem:[#allocation2 + $0x28a] sm:$0xff]
  %v1671 = vld [vmem:[#allocation2 + $0x292] sm:$0xff]
  %v1672 = vld [vmem:[#allocation2 + $0x2a2] sm:$0xff]
  %v1673 = vld [vmem:[#allocation2 + $0x2aa] sm:$0xff]
  %v1674 = vld [vmem:[#allocation2 + $0x2ba] sm:$0xff]
  %v1675 = vld [vmem:[#allocation2 + $0x2c2] sm:$0xff]
  %v1676 = vld [vmem:[#allocation2 + $0x2d2] sm:$0xff]
  %v1677 = vld [vmem:[#allocation2 + $0x2da] sm:$0xff]
  %v1678 = vld [vmem:[#allocation2 + $0x2ea] sm:$0xff]
  %v1679 = vld [vmem:[#allocation2 + $0x2f2] sm:$0xff]
  %v1680 = vld [vmem:[#allocation2 + $0x302] sm:$0xff]
  %v1681 = vld [vmem:[#allocation2 + $0x30a] sm:$0xff]
  %v1682 = vld [vmem:[#allocation2 + $0x31a] sm:$0xff]
  %v1683 = vld [vmem:[#allocation2 + $0x322] sm:$0xff]
  %s1684 = scalar_lea.vmem %s1, 8
  %v1685 = vld [vmem:[%s1684] sm:$0xf]
  %v1687 = vsel %vm26, %v1620, 0
  %v1690 = vsel %vm26, %v1621, 0
  %v1693 = vsel %vm26, %v1622, 0
  %v1696 = vsel %vm26, %v1623, 0
  %v1699 = vsel %vm26, %v1624, 0
  %v1702 = vsel %vm26, %v1625, 0
  %v1705 = vsel %vm26, %v1626, 0
  %v1708 = vsel %vm26, %v1627, 0
  %v1711 = vsel %vm26, %v1628, 0
  %v1714 = vsel %vm26, %v1629, 0
  %v1717 = vsel %vm26, %v1630, 0
  %v1720 = vsel %vm26, %v1631, 0
  %v1723 = vsel %vm26, %v1632, 0
  %v1726 = vsel %vm26, %v1633, 0
  %v1729 = vsel %vm26, %v1634, 0
  %v1732 = vsel %vm26, %v1635, 0
  %v1735 = vsel %vm26, %v1636, 0
  %v1738 = vsel %vm26, %v1637, 0
  %v1741 = vsel %vm26, %v1638, 0
  %v1744 = vsel %vm26, %v1639, 0
  %v1747 = vsel %vm26, %v1640, 0
  %v1750 = vsel %vm26, %v1641, 0
  %v1753 = vsel %vm26, %v1642, 0
  %v1756 = vsel %vm26, %v1643, 0
  %v1759 = vsel %vm26, %v1644, 0
  %v1762 = vsel %vm26, %v1645, 0
  %v1765 = vsel %vm26, %v1646, 0
  %v1768 = vsel %vm26, %v1647, 0
  %v1771 = vsel %vm26, %v1648, 0
  %v1774 = vsel %vm26, %v1649, 0
  %v1777 = vsel %vm26, %v1650, 0
  %v1780 = vsel %vm26, %v1651, 0
  %v1783 = vsel %vm26, %v1652, 0
  %v1786 = vsel %vm26, %v1653, 0
  %v1789 = vsel %vm26, %v1654, 0
  %v1792 = vsel %vm26, %v1655, 0
  %v1795 = vsel %vm26, %v1656, 0
  %v1798 = vsel %vm26, %v1657, 0
  %v1801 = vsel %vm26, %v1658, 0
  %v1804 = vsel %vm26, %v1659, 0
  %v1807 = vsel %vm26, %v1660, 0
  %v1810 = vsel %vm26, %v1661, 0
  %v1813 = vsel %vm26, %v1662, 0
  %v1816 = vsel %vm26, %v1663, 0
  %v1819 = vsel %vm26, %v1664, 0
  %v1822 = vsel %vm26, %v1665, 0
  %v1825 = vsel %vm26, %v1666, 0
  %v1828 = vsel %vm26, %v1667, 0
  %v1831 = vsel %vm26, %v1668, 0
  %v1834 = vsel %vm26, %v1669, 0
  %v1837 = vsel %vm26, %v1670, 0
  %v1840 = vsel %vm26, %v1671, 0
  %v1843 = vsel %vm26, %v1672, 0
  %v1846 = vsel %vm26, %v1673, 0
  %v1849 = vsel %vm26, %v1674, 0
  %v1852 = vsel %vm26, %v1675, 0
  %v1855 = vsel %vm26, %v1676, 0
  %v1858 = vsel %vm26, %v1677, 0
  %v1861 = vsel %vm26, %v1678, 0
  %v1864 = vsel %vm26, %v1679, 0
  %v1867 = vsel %vm26, %v1680, 0
  %v1870 = vsel %vm26, %v1681, 0
  %v1873 = vsel %vm26, %v1682, 0
  %v1876 = vsel %vm26, %v1683, 0
  %v1879 = vsel %vm651, %v1685, 0
  %1881 = vmatprep.subr.mxu0 0.0
  %1882 = vmatpush1.msra.mxu0 %v1879
  %1883 = vmatprep.subr.mxu0 0.0
  %1884 = vmatpush1.msra.mxu0 0.0
  %1885 = vmatprep.subr.mxu0 0.0
  %1886 = vmatpush1.msra.mxu0 0.0
  %1887 = vmatprep.subr.mxu0 0.0
  %1888 = vmatpush1.msra.mxu0 0.0
  %1889 = vmatprep.subr.mxu0 0.0
  %1890 = vmatpush1.msra.mxu0 0.0
  %1891 = vmatprep.subr.mxu0 0.0
  %1892 = vmatpush1.msra.mxu0 0.0
  %1893 = vmatprep.subr.mxu0 0.0
  %1894 = vmatpush1.msra.mxu0 0.0
  %1895 = vmatprep.subr.mxu0 0.0
  %1896 = vmatpush1.msra.mxu0 0.0
  %1897 = vmatprep.subr.mxu0 0.0
  %1898 = vmatpush1.msra.mxu0 0.0
  %1899 = vmatprep.subr.mxu0 0.0
  %1900 = vmatpush1.msra.mxu0 0.0
  %1901 = vmatprep.subr.mxu0 0.0
  %1902 = vmatpush1.msra.mxu0 0.0
  %1903 = vmatprep.subr.mxu0 0.0
  %1904 = vmatpush1.msra.mxu0 0.0
  %1905 = vmatprep.subr.mxu0 0.0
  %1906 = vmatpush1.msra.mxu0 0.0
  %1907 = vmatprep.subr.mxu0 0.0
  %1908 = vmatpush1.msra.mxu0 0.0
  %1909 = vmatprep.subr.mxu0 0.0
  %1910 = vmatpush1.msra.mxu0 0.0
  %1911 = vmatprep.subr.mxu0 0.0
  %1912 = vmatpush1.msra.mxu0 0.0
  %1913 = vmatprep.subr.mxu0 0.0
  %1914 = vmatpush1.msra.mxu0 0.0
  %1915 = vmatprep.subr.mxu0 0.0
  %1916 = vmatpush1.msra.mxu0 0.0
  %1917 = vmatprep.subr.mxu0 0.0
  %1918 = vmatpush1.msra.mxu0 0.0
  %1919 = vmatprep.subr.mxu0 0.0
  %1920 = vmatpush1.msra.mxu0 0.0
  %1921 = vmatprep.subr.mxu0 0.0
  %1922 = vmatpush1.msra.mxu0 0.0
  %1923 = vmatprep.subr.mxu0 0.0
  %1924 = vmatpush1.msra.mxu0 0.0
  %1925 = vmatprep.subr.mxu0 0.0
  %1926 = vmatpush1.msra.mxu0 0.0
  %1927 = vmatprep.subr.mxu0 0.0
  %1928 = vmatpush1.msra.mxu0 0.0
  %1929 = vmatprep.subr.mxu0 0.0
  %1930 = vmatpush1.msra.mxu0 0.0
  %1931 = vmatprep.subr.mxu0 0.0
  %1932 = vmatpush1.msra.mxu0 0.0
  %1933 = vmatprep.subr.mxu0 0.0
  %1934 = vmatpush1.msra.mxu0 0.0
  %1935 = vmatprep.subr.mxu0 0.0
  %1936 = vmatpush1.msra.mxu0 0.0
  %1937 = vmatprep.subr.mxu0 0.0
  %1938 = vmatpush1.msra.mxu0 0.0
  %1939 = vmatprep.subr.mxu0 0.0
  %1940 = vmatpush1.msra.mxu0 0.0
  %1941 = vmatprep.subr.mxu0 0.0
  %1942 = vmatpush1.msra.mxu0 0.0
  %1943 = vmatprep.subr.mxu0 0.0
  %1944 = vmatpush1.msra.mxu0 0.0
  %1945 = vmatprep.mubr.f32.mxu0 0.0
  %1946 = vmatmul.mubr.f32.gmra.mrb[0].mxu0 %v1687
  %v1947 = vpop.f32.mrb[0].mxu0
  %v1948 = vadd.f32 0.0, %v1947
  %v1949 = vpop.f32.mrb[0].mxu0
  %1950 = vmatprep.mubr.f32.mxu0 0.0
  %1951 = vmatmul.mubr.f32.gmra.mrb[0].mxu0 %v1690
  %v1952 = vpop.f32.mrb[0].mxu0
  %v1953 = vadd.f32 0.0, %v1952
  %v1954 = vpop.f32.mrb[0].mxu0
  %1955 = vmatprep.mubr.f32.mxu0 0.0
  %1956 = vmatmul.mubr.f32.gmra.mrb[0].mxu0 %v1693
  %v1957 = vpop.f32.mrb[0].mxu0
  %v1958 = vadd.f32 0.0, %v1957
  %v1959 = vpop.f32.mrb[0].mxu0
  %1960 = vmatprep.mubr.f32.mxu0 0.0
  %1961 = vmatmul.mubr.f32.gmra.mrb[0].mxu0 %v1696
  %v1962 = vpop.f32.mrb[0].mxu0
  %v1963 = vadd.f32 0.0, %v1962
  %v1964 = vpop.f32.mrb[0].mxu0
  %1965 = vmatprep.mubr.f32.mxu0 0.0
  %1966 = vmatmul.mubr.f32.gmra.mrb[0].mxu0 %v1699
  %v1967 = vpop.f32.mrb[0].mxu0
  %v1968 = vadd.f32 0.0, %v1967
  %v1969 = vpop.f32.mrb[0].mxu0
  %1970 = vmatprep.mubr.f32.mxu0 0.0
  %1971 = vmatmul.mubr.f32.gmra.mrb[0].mxu0 %v1702
  %v1972 = vpop.f32.mrb[0].mxu0
  %v1973 = vadd.f32 0.0, %v1972
  %v1974 = vpop.f32.mrb[0].mxu0
  %1975 = vmatprep.mubr.f32.mxu0 0.0
  %1976 = vmatmul.mubr.f32.gmra.mrb[0].mxu0 %v1705
  %v1977 = vpop.f32.mrb[0].mxu0
  %v1978 = vadd.f32 0.0, %v1977
  %v1979 = vpop.f32.mrb[0].mxu0
  %1980 = vmatprep.mubr.f32.mxu0 0.0
  %1981 = vmatmul.mubr.f32.gmra.mrb[0].mxu0 %v1708
  %v1982 = vpop.f32.mrb[0].mxu0
  %v1983 = vadd.f32 0.0, %v1982
  %v1984 = vpop.f32.mrb[0].mxu0
  %1985 = vmatprep.mubr.f32.mxu0 0.0
  %1986 = vmatmul.mubr.f32.gmra.mrb[0].mxu0 %v1711
  %v1987 = vpop.f32.mrb[0].mxu0
  %v1988 = vadd.f32 0.0, %v1987
  %v1989 = vpop.f32.mrb[0].mxu0
  %1990 = vmatprep.mubr.f32.mxu0 0.0
  %1991 = vmatmul.mubr.f32.gmra.mrb[0].mxu0 %v1714
  %v1992 = vpop.f32.mrb[0].mxu0
  %v1993 = vadd.f32 0.0, %v1992
  %v1994 = vpop.f32.mrb[0].mxu0
  %1995 = vmatprep.mubr.f32.mxu0 0.0
  %1996 = vmatmul.mubr.f32.gmra.mrb[0].mxu0 %v1717
  %v1997 = vpop.f32.mrb[0].mxu0
  %v1998 = vadd.f32 0.0, %v1997
  %v1999 = vpop.f32.mrb[0].mxu0
  %2000 = vmatprep.mubr.f32.mxu0 0.0
  %2001 = vmatmul.mubr.f32.gmra.mrb[0].mxu0 %v1720
  %v2002 = vpop.f32.mrb[0].mxu0
  %v2003 = vadd.f32 0.0, %v2002
  %v2004 = vpop.f32.mrb[0].mxu0
  %2005 = vmatprep.mubr.f32.mxu0 0.0
  %2006 = vmatmul.mubr.f32.gmra.mrb[0].mxu0 %v1723
  %v2007 = vpop.f32.mrb[0].mxu0
  %v2008 = vadd.f32 0.0, %v2007
  %v2009 = vpop.f32.mrb[0].mxu0
  %2010 = vmatprep.mubr.f32.mxu0 0.0
  %2011 = vmatmul.mubr.f32.gmra.mrb[0].mxu0 %v1726
  %v2012 = vpop.f32.mrb[0].mxu0
  %v2013 = vadd.f32 0.0, %v2012
  %v2014 = vpop.f32.mrb[0].mxu0
  %2015 = vmatprep.mubr.f32.mxu0 0.0
  %2016 = vmatmul.mubr.f32.gmra.mrb[0].mxu0 %v1729
  %v2017 = vpop.f32.mrb[0].mxu0
  %v2018 = vadd.f32 0.0, %v2017
  %v2019 = vpop.f32.mrb[0].mxu0
  %2020 = vmatprep.mubr.f32.mxu0 0.0
  %2021 = vmatmul.mubr.f32.gmra.mrb[0].mxu0 %v1732
  %v2022 = vpop.f32.mrb[0].mxu0
  %v2023 = vadd.f32 0.0, %v2022
  %v2024 = vpop.f32.mrb[0].mxu0
  %2025 = vmatprep.mubr.f32.mxu0 0.0
  %2026 = vmatmul.mubr.f32.gmra.mrb[0].mxu0 %v1735
  %v2027 = vpop.f32.mrb[0].mxu0
  %v2028 = vadd.f32 0.0, %v2027
  %v2029 = vpop.f32.mrb[0].mxu0
  %2030 = vmatprep.mubr.f32.mxu0 0.0
  %2031 = vmatmul.mubr.f32.gmra.mrb[0].mxu0 %v1738
  %v2032 = vpop.f32.mrb[0].mxu0
  %v2033 = vadd.f32 0.0, %v2032
  %v2034 = vpop.f32.mrb[0].mxu0
  %2035 = vmatprep.mubr.f32.mxu0 0.0
  %2036 = vmatmul.mubr.f32.gmra.mrb[0].mxu0 %v1741
  %v2037 = vpop.f32.mrb[0].mxu0
  %v2038 = vadd.f32 0.0, %v2037
  %v2039 = vpop.f32.mrb[0].mxu0
  %2040 = vmatprep.mubr.f32.mxu0 0.0
  %2041 = vmatmul.mubr.f32.gmra.mrb[0].mxu0 %v1744
  %v2042 = vpop.f32.mrb[0].mxu0
  %v2043 = vadd.f32 0.0, %v2042
  %v2044 = vpop.f32.mrb[0].mxu0
  %2045 = vmatprep.mubr.f32.mxu0 0.0
  %2046 = vmatmul.mubr.f32.gmra.mrb[0].mxu0 %v1747
  %v2047 = vpop.f32.mrb[0].mxu0
  %v2048 = vadd.f32 0.0, %v2047
  %v2049 = vpop.f32.mrb[0].mxu0
  %2050 = vmatprep.mubr.f32.mxu0 0.0
  %2051 = vmatmul.mubr.f32.gmra.mrb[0].mxu0 %v1750
  %v2052 = vpop.f32.mrb[0].mxu0
  %v2053 = vadd.f32 0.0, %v2052
  %v2054 = vpop.f32.mrb[0].mxu0
  %2055 = vmatprep.mubr.f32.mxu0 0.0
  %2056 = vmatmul.mubr.f32.gmra.mrb[0].mxu0 %v1753
  %v2057 = vpop.f32.mrb[0].mxu0
  %v2058 = vadd.f32 0.0, %v2057
  %v2059 = vpop.f32.mrb[0].mxu0
  %2060 = vmatprep.mubr.f32.mxu0 0.0
  %2061 = vmatmul.mubr.f32.gmra.mrb[0].mxu0 %v1756
  %v2062 = vpop.f32.mrb[0].mxu0
  %v2063 = vadd.f32 0.0, %v2062
  %v2064 = vpop.f32.mrb[0].mxu0
  %2065 = vmatprep.mubr.f32.mxu0 0.0
  %2066 = vmatmul.mubr.f32.gmra.mrb[0].mxu0 %v1759
  %v2067 = vpop.f32.mrb[0].mxu0
  %v2068 = vadd.f32 0.0, %v2067
  %v2069 = vpop.f32.mrb[0].mxu0
  %2070 = vmatprep.mubr.f32.mxu0 0.0
  %2071 = vmatmul.mubr.f32.gmra.mrb[0].mxu0 %v1762
  %v2072 = vpop.f32.mrb[0].mxu0
  %v2073 = vadd.f32 0.0, %v2072
  %v2074 = vpop.f32.mrb[0].mxu0
  %2075 = vmatprep.mubr.f32.mxu0 0.0
  %2076 = vmatmul.mubr.f32.gmra.mrb[0].mxu0 %v1765
  %v2077 = vpop.f32.mrb[0].mxu0
  %v2078 = vadd.f32 0.0, %v2077
  %v2079 = vpop.f32.mrb[0].mxu0
  %2080 = vmatprep.mubr.f32.mxu0 0.0
  %2081 = vmatmul.mubr.f32.gmra.mrb[0].mxu0 %v1768
  %v2082 = vpop.f32.mrb[0].mxu0
  %v2083 = vadd.f32 0.0, %v2082
  %v2084 = vpop.f32.mrb[0].mxu0
  %2085 = vmatprep.mubr.f32.mxu0 0.0
  %2086 = vmatmul.mubr.f32.gmra.mrb[0].mxu0 %v1771
  %v2087 = vpop.f32.mrb[0].mxu0
  %v2088 = vadd.f32 0.0, %v2087
  %v2089 = vpop.f32.mrb[0].mxu0
  %2090 = vmatprep.mubr.f32.mxu0 0.0
  %2091 = vmatmul.mubr.f32.gmra.mrb[0].mxu0 %v1774
  %v2092 = vpop.f32.mrb[0].mxu0
  %v2093 = vadd.f32 0.0, %v2092
  %v2094 = vpop.f32.mrb[0].mxu0
  %2095 = vmatprep.mubr.f32.mxu0 0.0
  %2096 = vmatmul.mubr.f32.gmra.mrb[0].mxu0 %v1777
  %v2097 = vpop.f32.mrb[0].mxu0
  %v2098 = vadd.f32 0.0, %v2097
  %v2099 = vpop.f32.mrb[0].mxu0
  %2100 = vmatprep.mubr.f32.mxu0 0.0
  %2101 = vmatmul.mubr.f32.gmra.mrb[0].mxu0 %v1780
  %v2102 = vpop.f32.mrb[0].mxu0
  %v2103 = vadd.f32 0.0, %v2102
  %v2104 = vpop.f32.mrb[0].mxu0
  %2105 = vmatprep.mubr.f32.mxu0 0.0
  %2106 = vmatmul.mubr.f32.gmra.mrb[0].mxu0 %v1783
  %v2107 = vpop.f32.mrb[0].mxu0
  %v2108 = vadd.f32 0.0, %v2107
  %v2109 = vpop.f32.mrb[0].mxu0
  %2110 = vmatprep.mubr.f32.mxu0 0.0
  %2111 = vmatmul.mubr.f32.gmra.mrb[0].mxu0 %v1786
  %v2112 = vpop.f32.mrb[0].mxu0
  %v2113 = vadd.f32 0.0, %v2112
  %v2114 = vpop.f32.mrb[0].mxu0
  %2115 = vmatprep.mubr.f32.mxu0 0.0
  %2116 = vmatmul.mubr.f32.gmra.mrb[0].mxu0 %v1789
  %v2117 = vpop.f32.mrb[0].mxu0
  %v2118 = vadd.f32 0.0, %v2117
  %v2119 = vpop.f32.mrb[0].mxu0
  %2120 = vmatprep.mubr.f32.mxu0 0.0
  %2121 = vmatmul.mubr.f32.gmra.mrb[0].mxu0 %v1792
  %v2122 = vpop.f32.mrb[0].mxu0
  %v2123 = vadd.f32 0.0, %v2122
  %v2124 = vpop.f32.mrb[0].mxu0
  %2125 = vmatprep.mubr.f32.mxu0 0.0
  %2126 = vmatmul.mubr.f32.gmra.mrb[0].mxu0 %v1795
  %v2127 = vpop.f32.mrb[0].mxu0
  %v2128 = vadd.f32 0.0, %v2127
  %v2129 = vpop.f32.mrb[0].mxu0
  %2130 = vmatprep.mubr.f32.mxu0 0.0
  %2131 = vmatmul.mubr.f32.gmra.mrb[0].mxu0 %v1798
  %v2132 = vpop.f32.mrb[0].mxu0
  %v2133 = vadd.f32 0.0, %v2132
  %v2134 = vpop.f32.mrb[0].mxu0
  %2135 = vmatprep.mubr.f32.mxu0 0.0
  %2136 = vmatmul.mubr.f32.gmra.mrb[0].mxu0 %v1801
  %v2137 = vpop.f32.mrb[0].mxu0
  %v2138 = vadd.f32 0.0, %v2137
  %v2139 = vpop.f32.mrb[0].mxu0
  %2140 = vmatprep.mubr.f32.mxu0 0.0
  %2141 = vmatmul.mubr.f32.gmra.mrb[0].mxu0 %v1804
  %v2142 = vpop.f32.mrb[0].mxu0
  %v2143 = vadd.f32 0.0, %v2142
  %v2144 = vpop.f32.mrb[0].mxu0
  %2145 = vmatprep.mubr.f32.mxu0 0.0
  %2146 = vmatmul.mubr.f32.gmra.mrb[0].mxu0 %v1807
  %v2147 = vpop.f32.mrb[0].mxu0
  %v2148 = vadd.f32 0.0, %v2147
  %v2149 = vpop.f32.mrb[0].mxu0
  %2150 = vmatprep.mubr.f32.mxu0 0.0
  %2151 = vmatmul.mubr.f32.gmra.mrb[0].mxu0 %v1810
  %v2152 = vpop.f32.mrb[0].mxu0
  %v2153 = vadd.f32 0.0, %v2152
  %v2154 = vpop.f32.mrb[0].mxu0
  %2155 = vmatprep.mubr.f32.mxu0 0.0
  %2156 = vmatmul.mubr.f32.gmra.mrb[0].mxu0 %v1813
  %v2157 = vpop.f32.mrb[0].mxu0
  %v2158 = vadd.f32 0.0, %v2157
  %v2159 = vpop.f32.mrb[0].mxu0
  %2160 = vmatprep.mubr.f32.mxu0 0.0
  %2161 = vmatmul.mubr.f32.gmra.mrb[0].mxu0 %v1816
  %v2162 = vpop.f32.mrb[0].mxu0
  %v2163 = vadd.f32 0.0, %v2162
  %v2164 = vpop.f32.mrb[0].mxu0
  %2165 = vmatprep.mubr.f32.mxu0 0.0
  %2166 = vmatmul.mubr.f32.gmra.mrb[0].mxu0 %v1819
  %v2167 = vpop.f32.mrb[0].mxu0
  %v2168 = vadd.f32 0.0, %v2167
  %v2169 = vpop.f32.mrb[0].mxu0
  %2170 = vmatprep.mubr.f32.mxu0 0.0
  %2171 = vmatmul.mubr.f32.gmra.mrb[0].mxu0 %v1822
  %v2172 = vpop.f32.mrb[0].mxu0
  %v2173 = vadd.f32 0.0, %v2172
  %v2174 = vpop.f32.mrb[0].mxu0
  %2175 = vmatprep.mubr.f32.mxu0 0.0
  %2176 = vmatmul.mubr.f32.gmra.mrb[0].mxu0 %v1825
  %v2177 = vpop.f32.mrb[0].mxu0
  %v2178 = vadd.f32 0.0, %v2177
  %v2179 = vpop.f32.mrb[0].mxu0
  %2180 = vmatprep.mubr.f32.mxu0 0.0
  %2181 = vmatmul.mubr.f32.gmra.mrb[0].mxu0 %v1828
  %v2182 = vpop.f32.mrb[0].mxu0
  %v2183 = vadd.f32 0.0, %v2182
  %v2184 = vpop.f32.mrb[0].mxu0
  %2185 = vmatprep.mubr.f32.mxu0 0.0
  %2186 = vmatmul.mubr.f32.gmra.mrb[0].mxu0 %v1831
  %v2187 = vpop.f32.mrb[0].mxu0
  %v2188 = vadd.f32 0.0, %v2187
  %v2189 = vpop.f32.mrb[0].mxu0
  %2190 = vmatprep.mubr.f32.mxu0 0.0
  %2191 = vmatmul.mubr.f32.gmra.mrb[0].mxu0 %v1834
  %v2192 = vpop.f32.mrb[0].mxu0
  %v2193 = vadd.f32 0.0, %v2192
  %v2194 = vpop.f32.mrb[0].mxu0
  %2195 = vmatprep.mubr.f32.mxu0 0.0
  %2196 = vmatmul.mubr.f32.gmra.mrb[0].mxu0 %v1837
  %v2197 = vpop.f32.mrb[0].mxu0
  %v2198 = vadd.f32 0.0, %v2197
  %v2199 = vpop.f32.mrb[0].mxu0
  %2200 = vmatprep.mubr.f32.mxu0 0.0
  %2201 = vmatmul.mubr.f32.gmra.mrb[0].mxu0 %v1840
  %v2202 = vpop.f32.mrb[0].mxu0
  %v2203 = vadd.f32 0.0, %v2202
  %v2204 = vpop.f32.mrb[0].mxu0
  %2205 = vmatprep.mubr.f32.mxu0 0.0
  %2206 = vmatmul.mubr.f32.gmra.mrb[0].mxu0 %v1843
  %v2207 = vpop.f32.mrb[0].mxu0
  %v2208 = vadd.f32 0.0, %v2207
  %v2209 = vpop.f32.mrb[0].mxu0
  %2210 = vmatprep.mubr.f32.mxu0 0.0
  %2211 = vmatmul.mubr.f32.gmra.mrb[0].mxu0 %v1846
  %v2212 = vpop.f32.mrb[0].mxu0
  %v2213 = vadd.f32 0.0, %v2212
  %v2214 = vpop.f32.mrb[0].mxu0
  %2215 = vmatprep.mubr.f32.mxu0 0.0
  %2216 = vmatmul.mubr.f32.gmra.mrb[0].mxu0 %v1849
  %v2217 = vpop.f32.mrb[0].mxu0
  %v2218 = vadd.f32 0.0, %v2217
  %v2219 = vpop.f32.mrb[0].mxu0
  %2220 = vmatprep.mubr.f32.mxu0 0.0
  %2221 = vmatmul.mubr.f32.gmra.mrb[0].mxu0 %v1852
  %v2222 = vpop.f32.mrb[0].mxu0
  %v2223 = vadd.f32 0.0, %v2222
  %v2224 = vpop.f32.mrb[0].mxu0
  %2225 = vmatprep.mubr.f32.mxu0 0.0
  %2226 = vmatmul.mubr.f32.gmra.mrb[0].mxu0 %v1855
  %v2227 = vpop.f32.mrb[0].mxu0
  %v2228 = vadd.f32 0.0, %v2227
  %v2229 = vpop.f32.mrb[0].mxu0
  %2230 = vmatprep.mubr.f32.mxu0 0.0
  %2231 = vmatmul.mubr.f32.gmra.mrb[0].mxu0 %v1858
  %v2232 = vpop.f32.mrb[0].mxu0
  %v2233 = vadd.f32 0.0, %v2232
  %v2234 = vpop.f32.mrb[0].mxu0
  %2235 = vmatprep.mubr.f32.mxu0 0.0
  %2236 = vmatmul.mubr.f32.gmra.mrb[0].mxu0 %v1861
  %v2237 = vpop.f32.mrb[0].mxu0
  %v2238 = vadd.f32 0.0, %v2237
  %v2239 = vpop.f32.mrb[0].mxu0
  %2240 = vmatprep.mubr.f32.mxu0 0.0
  %2241 = vmatmul.mubr.f32.gmra.mrb[0].mxu0 %v1864
  %v2242 = vpop.f32.mrb[0].mxu0
  %v2243 = vadd.f32 0.0, %v2242
  %v2244 = vpop.f32.mrb[0].mxu0
  %2245 = vmatprep.mubr.f32.mxu0 0.0
  %2246 = vmatmul.mubr.f32.gmra.mrb[0].mxu0 %v1867
  %v2247 = vpop.f32.mrb[0].mxu0
  %v2248 = vadd.f32 0.0, %v2247
  %v2249 = vpop.f32.mrb[0].mxu0
  %2250 = vmatprep.mubr.f32.mxu0 0.0
  %2251 = vmatmul.mubr.f32.gmra.mrb[0].mxu0 %v1870
  %v2252 = vpop.f32.mrb[0].mxu0
  %v2253 = vadd.f32 0.0, %v2252
  %v2254 = vpop.f32.mrb[0].mxu0
  %2255 = vmatprep.mubr.f32.mxu0 0.0
  %2256 = vmatmul.mubr.f32.gmra.mrb[0].mxu0 %v1873
  %v2257 = vpop.f32.mrb[0].mxu0
  %v2258 = vadd.f32 0.0, %v2257
  %v2259 = vpop.f32.mrb[0].mxu0
  %2260 = vmatprep.mubr.f32.mxu0 0.0
  %2261 = vmatmul.mubr.f32.gmra.mrb[0].mxu0 %v1876
  %v2262 = vpop.f32.mrb[0].mxu0
  %v2263 = vadd.f32 0.0, %v2262
  %v2264 = vpop.f32.mrb[0].mxu0
  %2265 = vdwg.mxu0
  %v2266 = vadd.f32 %v1302, %v1948
  %v2267 = vadd.f32 %v1307, %v1953
  %v2268 = vadd.f32 %v1312, %v1958
  %v2269 = vadd.f32 %v1317, %v1963
  %v2270 = vadd.f32 %v1322, %v1968
  %v2271 = vadd.f32 %v1327, %v1973
  %v2272 = vadd.f32 %v1332, %v1978
  %v2273 = vadd.f32 %v1337, %v1983
  %v2274 = vadd.f32 %v1342, %v1988
  %v2275 = vadd.f32 %v1347, %v1993
  %v2276 = vadd.f32 %v1352, %v1998
  %v2277 = vadd.f32 %v1357, %v2003
  %v2278 = vadd.f32 %v1362, %v2008
  %v2279 = vadd.f32 %v1367, %v2013
  %v2280 = vadd.f32 %v1372, %v2018
  %v2281 = vadd.f32 %v1377, %v2023
  %v2282 = vadd.f32 %v1382, %v2028
  %v2283 = vadd.f32 %v1387, %v2033
  %v2284 = vadd.f32 %v1392, %v2038
  %v2285 = vadd.f32 %v1397, %v2043
  %v2286 = vadd.f32 %v1402, %v2048
  %v2287 = vadd.f32 %v1407, %v2053
  %v2288 = vadd.f32 %v1412, %v2058
  %v2289 = vadd.f32 %v1417, %v2063
  %v2290 = vadd.f32 %v1422, %v2068
  %v2291 = vadd.f32 %v1427, %v2073
  %v2292 = vadd.f32 %v1432, %v2078
  %v2293 = vadd.f32 %v1437, %v2083
  %v2294 = vadd.f32 %v1442, %v2088
  %v2295 = vadd.f32 %v1447, %v2093
  %v2296 = vadd.f32 %v1452, %v2098
  %v2297 = vadd.f32 %v1457, %v2103
  %v2298 = vadd.f32 %v1462, %v2108
  %v2299 = vadd.f32 %v1467, %v2113
  %v2300 = vadd.f32 %v1472, %v2118
  %v2301 = vadd.f32 %v1477, %v2123
  %v2302 = vadd.f32 %v1482, %v2128
  %v2303 = vadd.f32 %v1487, %v2133
  %v2304 = vadd.f32 %v1492, %v2138
  %v2305 = vadd.f32 %v1497, %v2143
  %v2306 = vadd.f32 %v1502, %v2148
  %v2307 = vadd.f32 %v1507, %v2153
  %v2308 = vadd.f32 %v1512, %v2158
  %v2309 = vadd.f32 %v1517, %v2163
  %v2310 = vadd.f32 %v1522, %v2168
  %v2311 = vadd.f32 %v1527, %v2173
  %v2312 = vadd.f32 %v1532, %v2178
  %v2313 = vadd.f32 %v1537, %v2183
  %v2314 = vadd.f32 %v1542, %v2188
  %v2315 = vadd.f32 %v1547, %v2193
  %v2316 = vadd.f32 %v1552, %v2198
  %v2317 = vadd.f32 %v1557, %v2203
  %v2318 = vadd.f32 %v1562, %v2208
  %v2319 = vadd.f32 %v1567, %v2213
  %v2320 = vadd.f32 %v1572, %v2218
  %v2321 = vadd.f32 %v1577, %v2223
  %v2322 = vadd.f32 %v1582, %v2228
  %v2323 = vadd.f32 %v1587, %v2233
  %v2324 = vadd.f32 %v1592, %v2238
  %v2325 = vadd.f32 %v1597, %v2243
  %v2326 = vadd.f32 %v1602, %v2248
  %v2327 = vadd.f32 %v1607, %v2253
  %v2328 = vadd.f32 %v1612, %v2258
  %v2329 = vadd.f32 %v1617, %v2263
  %v2330 = vld [vmem:[%s263] sm:$0xff]
  %v2331 = vld [vmem:[%s263 + $0x8] sm:$0xff]
  %v2332 = vld [vmem:[%s263 + $0x18] sm:$0xff]
  %v2333 = vld [vmem:[%s263 + $0x20] sm:$0xff]
  %v2334 = vld [vmem:[%s263 + $0x30] sm:$0xff]
  %v2335 = vld [vmem:[%s263 + $0x38] sm:$0xff]
  %v2336 = vld [vmem:[%s263 + $0x48] sm:$0xff]
  %v2337 = vld [vmem:[%s263 + $0x50] sm:$0xff]
  %v2338 = vld [vmem:[%s263 + $0x60] sm:$0xff]
  %v2339 = vld [vmem:[%s263 + $0x68] sm:$0xff]
  %v2340 = vld [vmem:[%s263 + $0x78] sm:$0xff]
  %v2341 = vld [vmem:[%s263 + $0x80] sm:$0xff]
  %v2342 = vld [vmem:[%s263 + $0x90] sm:$0xff]
  %v2343 = vld [vmem:[%s263 + $0x98] sm:$0xff]
  %v2344 = vld [vmem:[%s263 + $0xa8] sm:$0xff]
  %v2345 = vld [vmem:[%s263 + $0xb0] sm:$0xff]
  %v2346 = vld [vmem:[%s263 + $0xc0] sm:$0xff]
  %v2347 = vld [vmem:[%s263 + $0xc8] sm:$0xff]
  %v2348 = vld [vmem:[%s263 + $0xd8] sm:$0xff]
  %v2349 = vld [vmem:[%s263 + $0xe0] sm:$0xff]
  %v2350 = vld [vmem:[%s263 + $0xf0] sm:$0xff]
  %v2351 = vld [vmem:[%s263 + $0xf8] sm:$0xff]
  %v2352 = vld [vmem:[%s263 + $0x108] sm:$0xff]
  %v2353 = vld [vmem:[%s263 + $0x110] sm:$0xff]
  %v2354 = vld [vmem:[%s263 + $0x120] sm:$0xff]
  %v2355 = vld [vmem:[%s263 + $0x128] sm:$0xff]
  %v2356 = vld [vmem:[%s263 + $0x138] sm:$0xff]
  %v2357 = vld [vmem:[%s263 + $0x140] sm:$0xff]
  %v2358 = vld [vmem:[%s263 + $0x150] sm:$0xff]
  %v2359 = vld [vmem:[%s263 + $0x158] sm:$0xff]
  %v2360 = vld [vmem:[%s263 + $0x168] sm:$0xff]
  %v2361 = vld [vmem:[%s263 + $0x170] sm:$0xff]
  %v2362 = vld [vmem:[%s263 + $0x1b0] sm:$0xff]
  %v2363 = vld [vmem:[%s263 + $0x1b8] sm:$0xff]
  %v2364 = vld [vmem:[%s263 + $0x1c8] sm:$0xff]
  %v2365 = vld [vmem:[%s263 + $0x1d0] sm:$0xff]
  %v2366 = vld [vmem:[%s263 + $0x1e0] sm:$0xff]
  %v2367 = vld [vmem:[%s263 + $0x1e8] sm:$0xff]
  %v2368 = vld [vmem:[%s263 + $0x1f8] sm:$0xff]
  %v2369 = vld [vmem:[%s263 + $0x200] sm:$0xff]
  %v2370 = vld [vmem:[%s263 + $0x210] sm:$0xff]
  %v2371 = vld [vmem:[%s263 + $0x218] sm:$0xff]
  %v2372 = vld [vmem:[%s263 + $0x228] sm:$0xff]
  %v2373 = vld [vmem:[%s263 + $0x230] sm:$0xff]
  %v2374 = vld [vmem:[%s263 + $0x240] sm:$0xff]
  %v2375 = vld [vmem:[%s263 + $0x248] sm:$0xff]
  %v2376 = vld [vmem:[%s263 + $0x258] sm:$0xff]
  %v2377 = vld [vmem:[%s263 + $0x260] sm:$0xff]
  %v2378 = vld [vmem:[%s263 + $0x270] sm:$0xff]
  %v2379 = vld [vmem:[%s263 + $0x278] sm:$0xff]
  %v2380 = vld [vmem:[%s263 + $0x288] sm:$0xff]
  %v2381 = vld [vmem:[%s263 + $0x290] sm:$0xff]
  %v2382 = vld [vmem:[%s263 + $0x2a0] sm:$0xff]
  %v2383 = vld [vmem:[%s263 + $0x2a8] sm:$0xff]
  %v2384 = vld [vmem:[%s263 + $0x2b8] sm:$0xff]
  %v2385 = vld [vmem:[%s263 + $0x2c0] sm:$0xff]
  %v2386 = vld [vmem:[%s263 + $0x2d0] sm:$0xff]
  %v2387 = vld [vmem:[%s263 + $0x2d8] sm:$0xff]
  %v2388 = vld [vmem:[%s263 + $0x2e8] sm:$0xff]
  %v2389 = vld [vmem:[%s263 + $0x2f0] sm:$0xff]
  %v2390 = vld [vmem:[%s263 + $0x300] sm:$0xff]
  %v2391 = vld [vmem:[%s263 + $0x308] sm:$0xff]
  %v2392 = vld [vmem:[%s263 + $0x318] sm:$0xff]
  %v2393 = vld [vmem:[%s263 + $0x320] sm:$0xff]
  %s2394 = scalar_lea.vmem %s1, 12
  %v2395 = vld [vmem:[%s2394] sm:$0xf]
  %v2397 = vsel %vm26, %v2330, 0
  %v2400 = vsel %vm26, %v2331, 0
  %v2403 = vsel %vm26, %v2332, 0
  %v2406 = vsel %vm26, %v2333, 0
  %v2409 = vsel %vm26, %v2334, 0
  %v2412 = vsel %vm26, %v2335, 0
  %v2415 = vsel %vm26, %v2336, 0
  %v2418 = vsel %vm26, %v2337, 0
  %v2421 = vsel %vm26, %v2338, 0
  %v2424 = vsel %vm26, %v2339, 0
  %v2427 = vsel %vm26, %v2340, 0
  %v2430 = vsel %vm26, %v2341, 0
  %v2433 = vsel %vm26, %v2342, 0
  %v2436 = vsel %vm26, %v2343, 0
  %v2439 = vsel %vm26, %v2344, 0
  %v2442 = vsel %vm26, %v2345, 0
  %v2445 = vsel %vm26, %v2346, 0
  %v2448 = vsel %vm26, %v2347, 0
  %v2451 = vsel %vm26, %v2348, 0
  %v2454 = vsel %vm26, %v2349, 0
  %v2457 = vsel %vm26, %v2350, 0
  %v2460 = vsel %vm26, %v2351, 0
  %v2463 = vsel %vm26, %v2352, 0
  %v2466 = vsel %vm26, %v2353, 0
  %v2469 = vsel %vm26, %v2354, 0
  %v2472 = vsel %vm26, %v2355, 0
  %v2475 = vsel %vm26, %v2356, 0
  %v2478 = vsel %vm26, %v2357, 0
  %v2481 = vsel %vm26, %v2358, 0
  %v2484 = vsel %vm26, %v2359, 0
  %v2487 = vsel %vm26, %v2360, 0
  %v2490 = vsel %vm26, %v2361, 0
  %v2493 = vsel %vm26, %v2362, 0
  %v2496 = vsel %vm26, %v2363, 0
  %v2499 = vsel %vm26, %v2364, 0
  %v2502 = vsel %vm26, %v2365, 0
  %v2505 = vsel %vm26, %v2366, 0
  %v2508 = vsel %vm26, %v2367, 0
  %v2511 = vsel %vm26, %v2368, 0
  %v2514 = vsel %vm26, %v2369, 0
  %v2517 = vsel %vm26, %v2370, 0
  %v2520 = vsel %vm26, %v2371, 0
  %v2523 = vsel %vm26, %v2372, 0
  %v2526 = vsel %vm26, %v2373, 0
  %v2529 = vsel %vm26, %v2374, 0
  %v2532 = vsel %vm26, %v2375, 0
  %v2535 = vsel %vm26, %v2376, 0
  %v2538 = vsel %vm26, %v2377, 0
  %v2541 = vsel %vm26, %v2378, 0
  %v2544 = vsel %vm26, %v2379, 0
  %v2547 = vsel %vm26, %v2380, 0
  %v2550 = vsel %vm26, %v2381, 0
  %v2553 = vsel %vm26, %v2382, 0
  %v2556 = vsel %vm26, %v2383, 0
  %v2559 = vsel %vm26, %v2384, 0
  %v2562 = vsel %vm26, %v2385, 0
  %v2565 = vsel %vm26, %v2386, 0
  %v2568 = vsel %vm26, %v2387, 0
  %v2571 = vsel %vm26, %v2388, 0
  %v2574 = vsel %vm26, %v2389, 0
  %v2577 = vsel %vm26, %v2390, 0
  %v2580 = vsel %vm26, %v2391, 0
  %v2583 = vsel %vm26, %v2392, 0
  %v2586 = vsel %vm26, %v2393, 0
  %v2589 = vsel %vm651, %v2395, 0
  %2591 = vmatprep.subr.mxu0 0.0
  %2592 = vmatpush1.msra.mxu0 %v2589
  %2593 = vmatprep.subr.mxu0 0.0
  %2594 = vmatpush1.msra.mxu0 0.0
  %2595 = vmatprep.subr.mxu0 0.0
  %2596 = vmatpush1.msra.mxu0 0.0
  %2597 = vmatprep.subr.mxu0 0.0
  %2598 = vmatpush1.msra.mxu0 0.0
  %2599 = vmatprep.subr.mxu0 0.0
  %2600 = vmatpush1.msra.mxu0 0.0
  %2601 = vmatprep.subr.mxu0 0.0
  %2602 = vmatpush1.msra.mxu0 0.0
  %2603 = vmatprep.subr.mxu0 0.0
  %2604 = vmatpush1.msra.mxu0 0.0
  %2605 = vmatprep.subr.mxu0 0.0
  %2606 = vmatpush1.msra.mxu0 0.0
  %2607 = vmatprep.subr.mxu0 0.0
  %2608 = vmatpush1.msra.mxu0 0.0
  %2609 = vmatprep.subr.mxu0 0.0
  %2610 = vmatpush1.msra.mxu0 0.0
  %2611 = vmatprep.subr.mxu0 0.0
  %2612 = vmatpush1.msra.mxu0 0.0
  %2613 = vmatprep.subr.mxu0 0.0
  %2614 = vmatpush1.msra.mxu0 0.0
  %2615 = vmatprep.subr.mxu0 0.0
  %2616 = vmatpush1.msra.mxu0 0.0
  %2617 = vmatprep.subr.mxu0 0.0
  %2618 = vmatpush1.msra.mxu0 0.0
  %2619 = vmatprep.subr.mxu0 0.0
  %2620 = vmatpush1.msra.mxu0 0.0
  %2621 = vmatprep.subr.mxu0 0.0
  %2622 = vmatpush1.msra.mxu0 0.0
  %2623 = vmatprep.subr.mxu0 0.0
  %2624 = vmatpush1.msra.mxu0 0.0
  %2625 = vmatprep.subr.mxu0 0.0
  %2626 = vmatpush1.msra.mxu0 0.0
  %2627 = vmatprep.subr.mxu0 0.0
  %2628 = vmatpush1.msra.mxu0 0.0
  %2629 = vmatprep.subr.mxu0 0.0
  %2630 = vmatpush1.msra.mxu0 0.0
  %2631 = vmatprep.subr.mxu0 0.0
  %2632 = vmatpush1.msra.mxu0 0.0
  %2633 = vmatprep.subr.mxu0 0.0
  %2634 = vmatpush1.msra.mxu0 0.0
  %2635 = vmatprep.subr.mxu0 0.0
  %2636 = vmatpush1.msra.mxu0 0.0
  %2637 = vmatprep.subr.mxu0 0.0
  %2638 = vmatpush1.msra.mxu0 0.0
  %2639 = vmatprep.subr.mxu0 0.0
  %2640 = vmatpush1.msra.mxu0 0.0
  %2641 = vmatprep.subr.mxu0 0.0
  %2642 = vmatpush1.msra.mxu0 0.0
  %2643 = vmatprep.subr.mxu0 0.0
  %2644 = vmatpush1.msra.mxu0 0.0
  %2645 = vmatprep.subr.mxu0 0.0
  %2646 = vmatpush1.msra.mxu0 0.0
  %2647 = vmatprep.subr.mxu0 0.0
  %2648 = vmatpush1.msra.mxu0 0.0
  %2649 = vmatprep.subr.mxu0 0.0
  %2650 = vmatpush1.msra.mxu0 0.0
  %2651 = vmatprep.subr.mxu0 0.0
  %2652 = vmatpush1.msra.mxu0 0.0
  %2653 = vmatprep.subr.mxu0 0.0
  %2654 = vmatpush1.msra.mxu0 0.0
  %2655 = vmatprep.mubr.f32.mxu0 0.0
  %2656 = vmatmul.mubr.f32.gmra.mrb[0].mxu0 %v2397
  %v2657 = vpop.f32.mrb[0].mxu0
  %v2658 = vadd.f32 0.0, %v2657
  %v2659 = vpop.f32.mrb[0].mxu0
  %2660 = vmatprep.mubr.f32.mxu0 0.0
  %2661 = vmatmul.mubr.f32.gmra.mrb[0].mxu0 %v2400
  %v2662 = vpop.f32.mrb[0].mxu0
  %v2663 = vadd.f32 0.0, %v2662
  %v2664 = vpop.f32.mrb[0].mxu0
  %2665 = vmatprep.mubr.f32.mxu0 0.0
  %2666 = vmatmul.mubr.f32.gmra.mrb[0].mxu0 %v2403
  %v2667 = vpop.f32.mrb[0].mxu0
  %v2668 = vadd.f32 0.0, %v2667
  %v2669 = vpop.f32.mrb[0].mxu0
  %2670 = vmatprep.mubr.f32.mxu0 0.0
  %2671 = vmatmul.mubr.f32.gmra.mrb[0].mxu0 %v2406
  %v2672 = vpop.f32.mrb[0].mxu0
  %v2673 = vadd.f32 0.0, %v2672
  %v2674 = vpop.f32.mrb[0].mxu0
  %2675 = vmatprep.mubr.f32.mxu0 0.0
  %2676 = vmatmul.mubr.f32.gmra.mrb[0].mxu0 %v2409
  %v2677 = vpop.f32.mrb[0].mxu0
  %v2678 = vadd.f32 0.0, %v2677
  %v2679 = vpop.f32.mrb[0].mxu0
  %2680 = vmatprep.mubr.f32.mxu0 0.0
  %2681 = vmatmul.mubr.f32.gmra.mrb[0].mxu0 %v2412
  %v2682 = vpop.f32.mrb[0].mxu0
  %v2683 = vadd.f32 0.0, %v2682
  %v2684 = vpop.f32.mrb[0].mxu0
  %2685 = vmatprep.mubr.f32.mxu0 0.0
  %2686 = vmatmul.mubr.f32.gmra.mrb[0].mxu0 %v2415
  %v2687 = vpop.f32.mrb[0].mxu0
  %v2688 = vadd.f32 0.0, %v2687
  %v2689 = vpop.f32.mrb[0].mxu0
  %2690 = vmatprep.mubr.f32.mxu0 0.0
  %2691 = vmatmul.mubr.f32.gmra.mrb[0].mxu0 %v2418
  %v2692 = vpop.f32.mrb[0].mxu0
  %v2693 = vadd.f32 0.0, %v2692
  %v2694 = vpop.f32.mrb[0].mxu0
  %2695 = vmatprep.mubr.f32.mxu0 0.0
  %2696 = vmatmul.mubr.f32.gmra.mrb[0].mxu0 %v2421
  %v2697 = vpop.f32.mrb[0].mxu0
  %v2698 = vadd.f32 0.0, %v2697
  %v2699 = vpop.f32.mrb[0].mxu0
  %2700 = vmatprep.mubr.f32.mxu0 0.0
  %2701 = vmatmul.mubr.f32.gmra.mrb[0].mxu0 %v2424
  %v2702 = vpop.f32.mrb[0].mxu0
  %v2703 = vadd.f32 0.0, %v2702
  %v2704 = vpop.f32.mrb[0].mxu0
  %2705 = vmatprep.mubr.f32.mxu0 0.0
  %2706 = vmatmul.mubr.f32.gmra.mrb[0].mxu0 %v2427
  %v2707 = vpop.f32.mrb[0].mxu0
  %v2708 = vadd.f32 0.0, %v2707
  %v2709 = vpop.f32.mrb[0].mxu0
  %2710 = vmatprep.mubr.f32.mxu0 0.0
  %2711 = vmatmul.mubr.f32.gmra.mrb[0].mxu0 %v2430
  %v2712 = vpop.f32.mrb[0].mxu0
  %v2713 = vadd.f32 0.0, %v2712
  %v2714 = vpop.f32.mrb[0].mxu0
  %2715 = vmatprep.mubr.f32.mxu0 0.0
  %2716 = vmatmul.mubr.f32.gmra.mrb[0].mxu0 %v2433
  %v2717 = vpop.f32.mrb[0].mxu0
  %v2718 = vadd.f32 0.0, %v2717
  %v2719 = vpop.f32.mrb[0].mxu0
  %2720 = vmatprep.mubr.f32.mxu0 0.0
  %2721 = vmatmul.mubr.f32.gmra.mrb[0].mxu0 %v2436
  %v2722 = vpop.f32.mrb[0].mxu0
  %v2723 = vadd.f32 0.0, %v2722
  %v2724 = vpop.f32.mrb[0].mxu0
  %2725 = vmatprep.mubr.f32.mxu0 0.0
  %2726 = vmatmul.mubr.f32.gmra.mrb[0].mxu0 %v2439
  %v2727 = vpop.f32.mrb[0].mxu0
  %v2728 = vadd.f32 0.0, %v2727
  %v2729 = vpop.f32.mrb[0].mxu0
  %2730 = vmatprep.mubr.f32.mxu0 0.0
  %2731 = vmatmul.mubr.f32.gmra.mrb[0].mxu0 %v2442
  %v2732 = vpop.f32.mrb[0].mxu0
  %v2733 = vadd.f32 0.0, %v2732
  %v2734 = vpop.f32.mrb[0].mxu0
  %2735 = vmatprep.mubr.f32.mxu0 0.0
  %2736 = vmatmul.mubr.f32.gmra.mrb[0].mxu0 %v2445
  %v2737 = vpop.f32.mrb[0].mxu0
  %v2738 = vadd.f32 0.0, %v2737
  %v2739 = vpop.f32.mrb[0].mxu0
  %2740 = vmatprep.mubr.f32.mxu0 0.0
  %2741 = vmatmul.mubr.f32.gmra.mrb[0].mxu0 %v2448
  %v2742 = vpop.f32.mrb[0].mxu0
  %v2743 = vadd.f32 0.0, %v2742
  %v2744 = vpop.f32.mrb[0].mxu0
  %2745 = vmatprep.mubr.f32.mxu0 0.0
  %2746 = vmatmul.mubr.f32.gmra.mrb[0].mxu0 %v2451
  %v2747 = vpop.f32.mrb[0].mxu0
  %v2748 = vadd.f32 0.0, %v2747
  %v2749 = vpop.f32.mrb[0].mxu0
  %2750 = vmatprep.mubr.f32.mxu0 0.0
  %2751 = vmatmul.mubr.f32.gmra.mrb[0].mxu0 %v2454
  %v2752 = vpop.f32.mrb[0].mxu0
  %v2753 = vadd.f32 0.0, %v2752
  %v2754 = vpop.f32.mrb[0].mxu0
  %2755 = vmatprep.mubr.f32.mxu0 0.0
  %2756 = vmatmul.mubr.f32.gmra.mrb[0].mxu0 %v2457
  %v2757 = vpop.f32.mrb[0].mxu0
  %v2758 = vadd.f32 0.0, %v2757
  %v2759 = vpop.f32.mrb[0].mxu0
  %2760 = vmatprep.mubr.f32.mxu0 0.0
  %2761 = vmatmul.mubr.f32.gmra.mrb[0].mxu0 %v2460
  %v2762 = vpop.f32.mrb[0].mxu0
  %v2763 = vadd.f32 0.0, %v2762
  %v2764 = vpop.f32.mrb[0].mxu0
  %2765 = vmatprep.mubr.f32.mxu0 0.0
  %2766 = vmatmul.mubr.f32.gmra.mrb[0].mxu0 %v2463
  %v2767 = vpop.f32.mrb[0].mxu0
  %v2768 = vadd.f32 0.0, %v2767
  %v2769 = vpop.f32.mrb[0].mxu0
  %2770 = vmatprep.mubr.f32.mxu0 0.0
  %2771 = vmatmul.mubr.f32.gmra.mrb[0].mxu0 %v2466
  %v2772 = vpop.f32.mrb[0].mxu0
  %v2773 = vadd.f32 0.0, %v2772
  %v2774 = vpop.f32.mrb[0].mxu0
  %2775 = vmatprep.mubr.f32.mxu0 0.0
  %2776 = vmatmul.mubr.f32.gmra.mrb[0].mxu0 %v2469
  %v2777 = vpop.f32.mrb[0].mxu0
  %v2778 = vadd.f32 0.0, %v2777
  %v2779 = vpop.f32.mrb[0].mxu0
  %2780 = vmatprep.mubr.f32.mxu0 0.0
  %2781 = vmatmul.mubr.f32.gmra.mrb[0].mxu0 %v2472
  %v2782 = vpop.f32.mrb[0].mxu0
  %v2783 = vadd.f32 0.0, %v2782
  %v2784 = vpop.f32.mrb[0].mxu0
  %2785 = vmatprep.mubr.f32.mxu0 0.0
  %2786 = vmatmul.mubr.f32.gmra.mrb[0].mxu0 %v2475
  %v2787 = vpop.f32.mrb[0].mxu0
  %v2788 = vadd.f32 0.0, %v2787
  %v2789 = vpop.f32.mrb[0].mxu0
  %2790 = vmatprep.mubr.f32.mxu0 0.0
  %2791 = vmatmul.mubr.f32.gmra.mrb[0].mxu0 %v2478
  %v2792 = vpop.f32.mrb[0].mxu0
  %v2793 = vadd.f32 0.0, %v2792
  %v2794 = vpop.f32.mrb[0].mxu0
  %2795 = vmatprep.mubr.f32.mxu0 0.0
  %2796 = vmatmul.mubr.f32.gmra.mrb[0].mxu0 %v2481
  %v2797 = vpop.f32.mrb[0].mxu0
  %v2798 = vadd.f32 0.0, %v2797
  %v2799 = vpop.f32.mrb[0].mxu0
  %2800 = vmatprep.mubr.f32.mxu0 0.0
  %2801 = vmatmul.mubr.f32.gmra.mrb[0].mxu0 %v2484
  %v2802 = vpop.f32.mrb[0].mxu0
  %v2803 = vadd.f32 0.0, %v2802
  %v2804 = vpop.f32.mrb[0].mxu0
  %2805 = vmatprep.mubr.f32.mxu0 0.0
  %2806 = vmatmul.mubr.f32.gmra.mrb[0].mxu0 %v2487
  %v2807 = vpop.f32.mrb[0].mxu0
  %v2808 = vadd.f32 0.0, %v2807
  %v2809 = vpop.f32.mrb[0].mxu0
  %2810 = vmatprep.mubr.f32.mxu0 0.0
  %2811 = vmatmul.mubr.f32.gmra.mrb[0].mxu0 %v2490
  %v2812 = vpop.f32.mrb[0].mxu0
  %v2813 = vadd.f32 0.0, %v2812
  %v2814 = vpop.f32.mrb[0].mxu0
  %2815 = vmatprep.mubr.f32.mxu0 0.0
  %2816 = vmatmul.mubr.f32.gmra.mrb[0].mxu0 %v2493
  %v2817 = vpop.f32.mrb[0].mxu0
  %v2818 = vadd.f32 0.0, %v2817
  %v2819 = vpop.f32.mrb[0].mxu0
  %2820 = vmatprep.mubr.f32.mxu0 0.0
  %2821 = vmatmul.mubr.f32.gmra.mrb[0].mxu0 %v2496
  %v2822 = vpop.f32.mrb[0].mxu0
  %v2823 = vadd.f32 0.0, %v2822
  %v2824 = vpop.f32.mrb[0].mxu0
  %2825 = vmatprep.mubr.f32.mxu0 0.0
  %2826 = vmatmul.mubr.f32.gmra.mrb[0].mxu0 %v2499
  %v2827 = vpop.f32.mrb[0].mxu0
  %v2828 = vadd.f32 0.0, %v2827
  %v2829 = vpop.f32.mrb[0].mxu0
  %2830 = vmatprep.mubr.f32.mxu0 0.0
  %2831 = vmatmul.mubr.f32.gmra.mrb[0].mxu0 %v2502
  %v2832 = vpop.f32.mrb[0].mxu0
  %v2833 = vadd.f32 0.0, %v2832
  %v2834 = vpop.f32.mrb[0].mxu0
  %2835 = vmatprep.mubr.f32.mxu0 0.0
  %2836 = vmatmul.mubr.f32.gmra.mrb[0].mxu0 %v2505
  %v2837 = vpop.f32.mrb[0].mxu0
  %v2838 = vadd.f32 0.0, %v2837
  %v2839 = vpop.f32.mrb[0].mxu0
  %2840 = vmatprep.mubr.f32.mxu0 0.0
  %2841 = vmatmul.mubr.f32.gmra.mrb[0].mxu0 %v2508
  %v2842 = vpop.f32.mrb[0].mxu0
  %v2843 = vadd.f32 0.0, %v2842
  %v2844 = vpop.f32.mrb[0].mxu0
  %2845 = vmatprep.mubr.f32.mxu0 0.0
  %2846 = vmatmul.mubr.f32.gmra.mrb[0].mxu0 %v2511
  %v2847 = vpop.f32.mrb[0].mxu0
  %v2848 = vadd.f32 0.0, %v2847
  %v2849 = vpop.f32.mrb[0].mxu0
  %2850 = vmatprep.mubr.f32.mxu0 0.0
  %2851 = vmatmul.mubr.f32.gmra.mrb[0].mxu0 %v2514
  %v2852 = vpop.f32.mrb[0].mxu0
  %v2853 = vadd.f32 0.0, %v2852
  %v2854 = vpop.f32.mrb[0].mxu0
  %2855 = vmatprep.mubr.f32.mxu0 0.0
  %2856 = vmatmul.mubr.f32.gmra.mrb[0].mxu0 %v2517
  %v2857 = vpop.f32.mrb[0].mxu0
  %v2858 = vadd.f32 0.0, %v2857
  %v2859 = vpop.f32.mrb[0].mxu0
  %2860 = vmatprep.mubr.f32.mxu0 0.0
  %2861 = vmatmul.mubr.f32.gmra.mrb[0].mxu0 %v2520
  %v2862 = vpop.f32.mrb[0].mxu0
  %v2863 = vadd.f32 0.0, %v2862
  %v2864 = vpop.f32.mrb[0].mxu0
  %2865 = vmatprep.mubr.f32.mxu0 0.0
  %2866 = vmatmul.mubr.f32.gmra.mrb[0].mxu0 %v2523
  %v2867 = vpop.f32.mrb[0].mxu0
  %v2868 = vadd.f32 0.0, %v2867
  %v2869 = vpop.f32.mrb[0].mxu0
  %2870 = vmatprep.mubr.f32.mxu0 0.0
  %2871 = vmatmul.mubr.f32.gmra.mrb[0].mxu0 %v2526
  %v2872 = vpop.f32.mrb[0].mxu0
  %v2873 = vadd.f32 0.0, %v2872
  %v2874 = vpop.f32.mrb[0].mxu0
  %2875 = vmatprep.mubr.f32.mxu0 0.0
  %2876 = vmatmul.mubr.f32.gmra.mrb[0].mxu0 %v2529
  %v2877 = vpop.f32.mrb[0].mxu0
  %v2878 = vadd.f32 0.0, %v2877
  %v2879 = vpop.f32.mrb[0].mxu0
  %2880 = vmatprep.mubr.f32.mxu0 0.0
  %2881 = vmatmul.mubr.f32.gmra.mrb[0].mxu0 %v2532
  %v2882 = vpop.f32.mrb[0].mxu0
  %v2883 = vadd.f32 0.0, %v2882
  %v2884 = vpop.f32.mrb[0].mxu0
  %2885 = vmatprep.mubr.f32.mxu0 0.0
  %2886 = vmatmul.mubr.f32.gmra.mrb[0].mxu0 %v2535
  %v2887 = vpop.f32.mrb[0].mxu0
  %v2888 = vadd.f32 0.0, %v2887
  %v2889 = vpop.f32.mrb[0].mxu0
  %2890 = vmatprep.mubr.f32.mxu0 0.0
  %2891 = vmatmul.mubr.f32.gmra.mrb[0].mxu0 %v2538
  %v2892 = vpop.f32.mrb[0].mxu0
  %v2893 = vadd.f32 0.0, %v2892
  %v2894 = vpop.f32.mrb[0].mxu0
  %2895 = vmatprep.mubr.f32.mxu0 0.0
  %2896 = vmatmul.mubr.f32.gmra.mrb[0].mxu0 %v2541
  %v2897 = vpop.f32.mrb[0].mxu0
  %v2898 = vadd.f32 0.0, %v2897
  %v2899 = vpop.f32.mrb[0].mxu0
  %2900 = vmatprep.mubr.f32.mxu0 0.0
  %2901 = vmatmul.mubr.f32.gmra.mrb[0].mxu0 %v2544
  %v2902 = vpop.f32.mrb[0].mxu0
  %v2903 = vadd.f32 0.0, %v2902
  %v2904 = vpop.f32.mrb[0].mxu0
  %2905 = vmatprep.mubr.f32.mxu0 0.0
  %2906 = vmatmul.mubr.f32.gmra.mrb[0].mxu0 %v2547
  %v2907 = vpop.f32.mrb[0].mxu0
  %v2908 = vadd.f32 0.0, %v2907
  %v2909 = vpop.f32.mrb[0].mxu0
  %2910 = vmatprep.mubr.f32.mxu0 0.0
  %2911 = vmatmul.mubr.f32.gmra.mrb[0].mxu0 %v2550
  %v2912 = vpop.f32.mrb[0].mxu0
  %v2913 = vadd.f32 0.0, %v2912
  %v2914 = vpop.f32.mrb[0].mxu0
  %2915 = vmatprep.mubr.f32.mxu0 0.0
  %2916 = vmatmul.mubr.f32.gmra.mrb[0].mxu0 %v2553
  %v2917 = vpop.f32.mrb[0].mxu0
  %v2918 = vadd.f32 0.0, %v2917
  %v2919 = vpop.f32.mrb[0].mxu0
  %2920 = vmatprep.mubr.f32.mxu0 0.0
  %2921 = vmatmul.mubr.f32.gmra.mrb[0].mxu0 %v2556
  %v2922 = vpop.f32.mrb[0].mxu0
  %v2923 = vadd.f32 0.0, %v2922
  %v2924 = vpop.f32.mrb[0].mxu0
  %2925 = vmatprep.mubr.f32.mxu0 0.0
  %2926 = vmatmul.mubr.f32.gmra.mrb[0].mxu0 %v2559
  %v2927 = vpop.f32.mrb[0].mxu0
  %v2928 = vadd.f32 0.0, %v2927
  %v2929 = vpop.f32.mrb[0].mxu0
  %2930 = vmatprep.mubr.f32.mxu0 0.0
  %2931 = vmatmul.mubr.f32.gmra.mrb[0].mxu0 %v2562
  %v2932 = vpop.f32.mrb[0].mxu0
  %v2933 = vadd.f32 0.0, %v2932
  %v2934 = vpop.f32.mrb[0].mxu0
  %2935 = vmatprep.mubr.f32.mxu0 0.0
  %2936 = vmatmul.mubr.f32.gmra.mrb[0].mxu0 %v2565
  %v2937 = vpop.f32.mrb[0].mxu0
  %v2938 = vadd.f32 0.0, %v2937
  %v2939 = vpop.f32.mrb[0].mxu0
  %2940 = vmatprep.mubr.f32.mxu0 0.0
  %2941 = vmatmul.mubr.f32.gmra.mrb[0].mxu0 %v2568
  %v2942 = vpop.f32.mrb[0].mxu0
  %v2943 = vadd.f32 0.0, %v2942
  %v2944 = vpop.f32.mrb[0].mxu0
  %2945 = vmatprep.mubr.f32.mxu0 0.0
  %2946 = vmatmul.mubr.f32.gmra.mrb[0].mxu0 %v2571
  %v2947 = vpop.f32.mrb[0].mxu0
  %v2948 = vadd.f32 0.0, %v2947
  %v2949 = vpop.f32.mrb[0].mxu0
  %2950 = vmatprep.mubr.f32.mxu0 0.0
  %2951 = vmatmul.mubr.f32.gmra.mrb[0].mxu0 %v2574
  %v2952 = vpop.f32.mrb[0].mxu0
  %v2953 = vadd.f32 0.0, %v2952
  %v2954 = vpop.f32.mrb[0].mxu0
  %2955 = vmatprep.mubr.f32.mxu0 0.0
  %2956 = vmatmul.mubr.f32.gmra.mrb[0].mxu0 %v2577
  %v2957 = vpop.f32.mrb[0].mxu0
  %v2958 = vadd.f32 0.0, %v2957
  %v2959 = vpop.f32.mrb[0].mxu0
  %2960 = vmatprep.mubr.f32.mxu0 0.0
  %2961 = vmatmul.mubr.f32.gmra.mrb[0].mxu0 %v2580
  %v2962 = vpop.f32.mrb[0].mxu0
  %v2963 = vadd.f32 0.0, %v2962
  %v2964 = vpop.f32.mrb[0].mxu0
  %2965 = vmatprep.mubr.f32.mxu0 0.0
  %2966 = vmatmul.mubr.f32.gmra.mrb[0].mxu0 %v2583
  %v2967 = vpop.f32.mrb[0].mxu0
  %v2968 = vadd.f32 0.0, %v2967
  %v2969 = vpop.f32.mrb[0].mxu0
  %2970 = vmatprep.mubr.f32.mxu0 0.0
  %2971 = vmatmul.mubr.f32.gmra.mrb[0].mxu0 %v2586
  %v2972 = vpop.f32.mrb[0].mxu0
  %v2973 = vadd.f32 0.0, %v2972
  %v2974 = vpop.f32.mrb[0].mxu0
  %2975 = vdwg.mxu0
  %v2976 = vadd.f32 %v2266, %v2658
  %v2977 = vadd.f32 %v2267, %v2663
  %v2978 = vadd.f32 %v2268, %v2668
  %v2979 = vadd.f32 %v2269, %v2673
  %v2980 = vadd.f32 %v2270, %v2678
  %v2981 = vadd.f32 %v2271, %v2683
  %v2982 = vadd.f32 %v2272, %v2688
  %v2983 = vadd.f32 %v2273, %v2693
  %v2984 = vadd.f32 %v2274, %v2698
  %v2985 = vadd.f32 %v2275, %v2703
  %v2986 = vadd.f32 %v2276, %v2708
  %v2987 = vadd.f32 %v2277, %v2713
  %v2988 = vadd.f32 %v2278, %v2718
  %v2989 = vadd.f32 %v2279, %v2723
  %v2990 = vadd.f32 %v2280, %v2728
  %v2991 = vadd.f32 %v2281, %v2733
  %v2992 = vadd.f32 %v2282, %v2738
  %v2993 = vadd.f32 %v2283, %v2743
  %v2994 = vadd.f32 %v2284, %v2748
  %v2995 = vadd.f32 %v2285, %v2753
  %v2996 = vadd.f32 %v2286, %v2758
  %v2997 = vadd.f32 %v2287, %v2763
  %v2998 = vadd.f32 %v2288, %v2768
  %v2999 = vadd.f32 %v2289, %v2773
  %v3000 = vadd.f32 %v2290, %v2778
  %v3001 = vadd.f32 %v2291, %v2783
  %v3002 = vadd.f32 %v2292, %v2788
  %v3003 = vadd.f32 %v2293, %v2793
  %v3004 = vadd.f32 %v2294, %v2798
  %v3005 = vadd.f32 %v2295, %v2803
  %v3006 = vadd.f32 %v2296, %v2808
  %v3007 = vadd.f32 %v2297, %v2813
  %v3008 = vadd.f32 %v2298, %v2818
  %v3009 = vadd.f32 %v2299, %v2823
  %v3010 = vadd.f32 %v2300, %v2828
  %v3011 = vadd.f32 %v2301, %v2833
  %v3012 = vadd.f32 %v2302, %v2838
  %v3013 = vadd.f32 %v2303, %v2843
  %v3014 = vadd.f32 %v2304, %v2848
  %v3015 = vadd.f32 %v2305, %v2853
  %v3016 = vadd.f32 %v2306, %v2858
  %v3017 = vadd.f32 %v2307, %v2863
  %v3018 = vadd.f32 %v2308, %v2868
  %v3019 = vadd.f32 %v2309, %v2873
  %v3020 = vadd.f32 %v2310, %v2878
  %v3021 = vadd.f32 %v2311, %v2883
  %v3022 = vadd.f32 %v2312, %v2888
  %v3023 = vadd.f32 %v2313, %v2893
  %v3024 = vadd.f32 %v2314, %v2898
  %v3025 = vadd.f32 %v2315, %v2903
  %v3026 = vadd.f32 %v2316, %v2908
  %v3027 = vadd.f32 %v2317, %v2913
  %v3028 = vadd.f32 %v2318, %v2918
  %v3029 = vadd.f32 %v2319, %v2923
  %v3030 = vadd.f32 %v2320, %v2928
  %v3031 = vadd.f32 %v2321, %v2933
  %v3032 = vadd.f32 %v2322, %v2938
  %v3033 = vadd.f32 %v2323, %v2943
  %v3034 = vadd.f32 %v2324, %v2948
  %v3035 = vadd.f32 %v2325, %v2953
  %v3036 = vadd.f32 %v2326, %v2958
  %v3037 = vadd.f32 %v2327, %v2963
  %v3038 = vadd.f32 %v2328, %v2968
  %v3039 = vadd.f32 %v2329, %v2973
  %v3040 = vld [vmem:[%s263 + $0x1] sm:$0xff]
  %v3041 = vld [vmem:[%s263 + $0x9] sm:$0xff]
  %v3042 = vld [vmem:[%s263 + $0x19] sm:$0xff]
  %v3043 = vld [vmem:[%s263 + $0x21] sm:$0xff]
  %v3044 = vld [vmem:[%s263 + $0x31] sm:$0xff]
  %v3045 = vld [vmem:[%s263 + $0x39] sm:$0xff]
  %v3046 = vld [vmem:[%s263 + $0x49] sm:$0xff]
  %v3047 = vld [vmem:[%s263 + $0x51] sm:$0xff]
  %v3048 = vld [vmem:[%s263 + $0x61] sm:$0xff]
  %v3049 = vld [vmem:[%s263 + $0x69] sm:$0xff]
  %v3050 = vld [vmem:[%s263 + $0x79] sm:$0xff]
  %v3051 = vld [vmem:[%s263 + $0x81] sm:$0xff]
  %v3052 = vld [vmem:[%s263 + $0x91] sm:$0xff]
  %v3053 = vld [vmem:[%s263 + $0x99] sm:$0xff]
  %v3054 = vld [vmem:[%s263 + $0xa9] sm:$0xff]
  %v3055 = vld [vmem:[%s263 + $0xb1] sm:$0xff]
  %v3056 = vld [vmem:[%s263 + $0xc1] sm:$0xff]
  %v3057 = vld [vmem:[%s263 + $0xc9] sm:$0xff]
  %v3058 = vld [vmem:[%s263 + $0xd9] sm:$0xff]
  %v3059 = vld [vmem:[%s263 + $0xe1] sm:$0xff]
  %v3060 = vld [vmem:[%s263 + $0xf1] sm:$0xff]
  %v3061 = vld [vmem:[%s263 + $0xf9] sm:$0xff]
  %v3062 = vld [vmem:[%s263 + $0x109] sm:$0xff]
  %v3063 = vld [vmem:[%s263 + $0x111] sm:$0xff]
  %v3064 = vld [vmem:[%s263 + $0x121] sm:$0xff]
  %v3065 = vld [vmem:[%s263 + $0x129] sm:$0xff]
  %v3066 = vld [vmem:[%s263 + $0x139] sm:$0xff]
  %v3067 = vld [vmem:[%s263 + $0x141] sm:$0xff]
  %v3068 = vld [vmem:[%s263 + $0x151] sm:$0xff]
  %v3069 = vld [vmem:[%s263 + $0x159] sm:$0xff]
  %v3070 = vld [vmem:[%s263 + $0x169] sm:$0xff]
  %v3071 = vld [vmem:[%s263 + $0x171] sm:$0xff]
  %v3072 = vld [vmem:[%s263 + $0x1b1] sm:$0xff]
  %v3073 = vld [vmem:[%s263 + $0x1b9] sm:$0xff]
  %v3074 = vld [vmem:[%s263 + $0x1c9] sm:$0xff]
  %v3075 = vld [vmem:[%s263 + $0x1d1] sm:$0xff]
  %v3076 = vld [vmem:[%s263 + $0x1e1] sm:$0xff]
  %v3077 = vld [vmem:[%s263 + $0x1e9] sm:$0xff]
  %v3078 = vld [vmem:[%s263 + $0x1f9] sm:$0xff]
  %v3079 = vld [vmem:[%s263 + $0x201] sm:$0xff]
  %v3080 = vld [vmem:[%s263 + $0x211] sm:$0xff]
  %v3081 = vld [vmem:[%s263 + $0x219] sm:$0xff]
  %v3082 = vld [vmem:[%s263 + $0x229] sm:$0xff]
  %v3083 = vld [vmem:[%s263 + $0x231] sm:$0xff]
  %v3084 = vld [vmem:[%s263 + $0x241] sm:$0xff]
  %v3085 = vld [vmem:[%s263 + $0x249] sm:$0xff]
  %v3086 = vld [vmem:[%s263 + $0x259] sm:$0xff]
  %v3087 = vld [vmem:[%s263 + $0x261] sm:$0xff]
  %v3088 = vld [vmem:[%s263 + $0x271] sm:$0xff]
  %v3089 = vld [vmem:[%s263 + $0x279] sm:$0xff]
  %v3090 = vld [vmem:[%s263 + $0x289] sm:$0xff]
  %v3091 = vld [vmem:[%s263 + $0x291] sm:$0xff]
  %v3092 = vld [vmem:[%s263 + $0x2a1] sm:$0xff]
  %v3093 = vld [vmem:[%s263 + $0x2a9] sm:$0xff]
  %v3094 = vld [vmem:[%s263 + $0x2b9] sm:$0xff]
  %v3095 = vld [vmem:[%s263 + $0x2c1] sm:$0xff]
  %v3096 = vld [vmem:[%s263 + $0x2d1] sm:$0xff]
  %v3097 = vld [vmem:[%s263 + $0x2d9] sm:$0xff]
  %v3098 = vld [vmem:[%s263 + $0x2e9] sm:$0xff]
  %v3099 = vld [vmem:[%s263 + $0x2f1] sm:$0xff]
  %v3100 = vld [vmem:[%s263 + $0x301] sm:$0xff]
  %v3101 = vld [vmem:[%s263 + $0x309] sm:$0xff]
  %v3102 = vld [vmem:[%s263 + $0x319] sm:$0xff]
  %v3103 = vld [vmem:[%s263 + $0x321] sm:$0xff]
  %s3104 = scalar_lea.vmem %s1, 16
  %v3105 = vld [vmem:[%s3104] sm:$0xf]
  %v3107 = vsel %vm26, %v3040, 0
  %v3110 = vsel %vm26, %v3041, 0
  %v3113 = vsel %vm26, %v3042, 0
  %v3116 = vsel %vm26, %v3043, 0
  %v3119 = vsel %vm26, %v3044, 0
  %v3122 = vsel %vm26, %v3045, 0
  %v3125 = vsel %vm26, %v3046, 0
  %v3128 = vsel %vm26, %v3047, 0
  %v3131 = vsel %vm26, %v3048, 0
  %v3134 = vsel %vm26, %v3049, 0
  %v3137 = vsel %vm26, %v3050, 0
  %v3140 = vsel %vm26, %v3051, 0
  %v3143 = vsel %vm26, %v3052, 0
  %v3146 = vsel %vm26, %v3053, 0
  %v3149 = vsel %vm26, %v3054, 0
  %v3152 = vsel %vm26, %v3055, 0
  %v3155 = vsel %vm26, %v3056, 0
  %v3158 = vsel %vm26, %v3057, 0
  %v3161 = vsel %vm26, %v3058, 0
  %v3164 = vsel %vm26, %v3059, 0
  %v3167 = vsel %vm26, %v3060, 0
  %v3170 = vsel %vm26, %v3061, 0
  %v3173 = vsel %vm26, %v3062, 0
  %v3176 = vsel %vm26, %v3063, 0
  %v3179 = vsel %vm26, %v3064, 0
  %v3182 = vsel %vm26, %v3065, 0
  %v3185 = vsel %vm26, %v3066, 0
  %v3188 = vsel %vm26, %v3067, 0
  %v3191 = vsel %vm26, %v3068, 0
  %v3194 = vsel %vm26, %v3069, 0
  %v3197 = vsel %vm26, %v3070, 0
  %v3200 = vsel %vm26, %v3071, 0
  %v3203 = vsel %vm26, %v3072, 0
  %v3206 = vsel %vm26, %v3073, 0
  %v3209 = vsel %vm26, %v3074, 0
  %v3212 = vsel %vm26, %v3075, 0
  %v3215 = vsel %vm26, %v3076, 0
  %v3218 = vsel %vm26, %v3077, 0
  %v3221 = vsel %vm26, %v3078, 0
  %v3224 = vsel %vm26, %v3079, 0
  %v3227 = vsel %vm26, %v3080, 0
  %v3230 = vsel %vm26, %v3081, 0
  %v3233 = vsel %vm26, %v3082, 0
  %v3236 = vsel %vm26, %v3083, 0
  %v3239 = vsel %vm26, %v3084, 0
  %v3242 = vsel %vm26, %v3085, 0
  %v3245 = vsel %vm26, %v3086, 0
  %v3248 = vsel %vm26, %v3087, 0
  %v3251 = vsel %vm26, %v3088, 0
  %v3254 = vsel %vm26, %v3089, 0
  %v3257 = vsel %vm26, %v3090, 0
  %v3260 = vsel %vm26, %v3091, 0
  %v3263 = vsel %vm26, %v3092, 0
  %v3266 = vsel %vm26, %v3093, 0
  %v3269 = vsel %vm26, %v3094, 0
  %v3272 = vsel %vm26, %v3095, 0
  %v3275 = vsel %vm26, %v3096, 0
  %v3278 = vsel %vm26, %v3097, 0
  %v3281 = vsel %vm26, %v3098, 0
  %v3284 = vsel %vm26, %v3099, 0
  %v3287 = vsel %vm26, %v3100, 0
  %v3290 = vsel %vm26, %v3101, 0
  %v3293 = vsel %vm26, %v3102, 0
  %v3296 = vsel %vm26, %v3103, 0
  %v3299 = vsel %vm651, %v3105, 0
  %3301 = vmatprep.subr.mxu0 0.0
  %3302 = vmatpush1.msra.mxu0 %v3299
  %3303 = vmatprep.subr.mxu0 0.0
  %3304 = vmatpush1.msra.mxu0 0.0
  %3305 = vmatprep.subr.mxu0 0.0
  %3306 = vmatpush1.msra.mxu0 0.0
  %3307 = vmatprep.subr.mxu0 0.0
  %3308 = vmatpush1.msra.mxu0 0.0
  %3309 = vmatprep.subr.mxu0 0.0
  %3310 = vmatpush1.msra.mxu0 0.0
  %3311 = vmatprep.subr.mxu0 0.0
  %3312 = vmatpush1.msra.mxu0 0.0
  %3313 = vmatprep.subr.mxu0 0.0
  %3314 = vmatpush1.msra.mxu0 0.0
  %3315 = vmatprep.subr.mxu0 0.0
  %3316 = vmatpush1.msra.mxu0 0.0
  %3317 = vmatprep.subr.mxu0 0.0
  %3318 = vmatpush1.msra.mxu0 0.0
  %3319 = vmatprep.subr.mxu0 0.0
  %3320 = vmatpush1.msra.mxu0 0.0
  %3321 = vmatprep.subr.mxu0 0.0
  %3322 = vmatpush1.msra.mxu0 0.0
  %3323 = vmatprep.subr.mxu0 0.0
  %3324 = vmatpush1.msra.mxu0 0.0
  %3325 = vmatprep.subr.mxu0 0.0
  %3326 = vmatpush1.msra.mxu0 0.0
  %3327 = vmatprep.subr.mxu0 0.0
  %3328 = vmatpush1.msra.mxu0 0.0
  %3329 = vmatprep.subr.mxu0 0.0
  %3330 = vmatpush1.msra.mxu0 0.0
  %3331 = vmatprep.subr.mxu0 0.0
  %3332 = vmatpush1.msra.mxu0 0.0
  %3333 = vmatprep.subr.mxu0 0.0
  %3334 = vmatpush1.msra.mxu0 0.0
  %3335 = vmatprep.subr.mxu0 0.0
  %3336 = vmatpush1.msra.mxu0 0.0
  %3337 = vmatprep.subr.mxu0 0.0
  %3338 = vmatpush1.msra.mxu0 0.0
  %3339 = vmatprep.subr.mxu0 0.0
  %3340 = vmatpush1.msra.mxu0 0.0
  %3341 = vmatprep.subr.mxu0 0.0
  %3342 = vmatpush1.msra.mxu0 0.0
  %3343 = vmatprep.subr.mxu0 0.0
  %3344 = vmatpush1.msra.mxu0 0.0
  %3345 = vmatprep.subr.mxu0 0.0
  %3346 = vmatpush1.msra.mxu0 0.0
  %3347 = vmatprep.subr.mxu0 0.0
  %3348 = vmatpush1.msra.mxu0 0.0
  %3349 = vmatprep.subr.mxu0 0.0
  %3350 = vmatpush1.msra.mxu0 0.0
  %3351 = vmatprep.subr.mxu0 0.0
  %3352 = vmatpush1.msra.mxu0 0.0
  %3353 = vmatprep.subr.mxu0 0.0
  %3354 = vmatpush1.msra.mxu0 0.0
  %3355 = vmatprep.subr.mxu0 0.0
  %3356 = vmatpush1.msra.mxu0 0.0
  %3357 = vmatprep.subr.mxu0 0.0
  %3358 = vmatpush1.msra.mxu0 0.0
  %3359 = vmatprep.subr.mxu0 0.0
  %3360 = vmatpush1.msra.mxu0 0.0
  %3361 = vmatprep.subr.mxu0 0.0
  %3362 = vmatpush1.msra.mxu0 0.0
  %3363 = vmatprep.subr.mxu0 0.0
  %3364 = vmatpush1.msra.mxu0 0.0
  %3365 = vmatprep.mubr.f32.mxu0 0.0
  %3366 = vmatmul.mubr.f32.gmra.mrb[0].mxu0 %v3107
  %v3367 = vpop.f32.mrb[0].mxu0
  %v3368 = vadd.f32 0.0, %v3367
  %v3369 = vpop.f32.mrb[0].mxu0
  %3370 = vmatprep.mubr.f32.mxu0 0.0
  %3371 = vmatmul.mubr.f32.gmra.mrb[0].mxu0 %v3110
  %v3372 = vpop.f32.mrb[0].mxu0
  %v3373 = vadd.f32 0.0, %v3372
  %v3374 = vpop.f32.mrb[0].mxu0
  %3375 = vmatprep.mubr.f32.mxu0 0.0
  %3376 = vmatmul.mubr.f32.gmra.mrb[0].mxu0 %v3113
  %v3377 = vpop.f32.mrb[0].mxu0
  %v3378 = vadd.f32 0.0, %v3377
  %v3379 = vpop.f32.mrb[0].mxu0
  %3380 = vmatprep.mubr.f32.mxu0 0.0
  %3381 = vmatmul.mubr.f32.gmra.mrb[0].mxu0 %v3116
  %v3382 = vpop.f32.mrb[0].mxu0
  %v3383 = vadd.f32 0.0, %v3382
  %v3384 = vpop.f32.mrb[0].mxu0
  %3385 = vmatprep.mubr.f32.mxu0 0.0
  %3386 = vmatmul.mubr.f32.gmra.mrb[0].mxu0 %v3119
  %v3387 = vpop.f32.mrb[0].mxu0
  %v3388 = vadd.f32 0.0, %v3387
  %v3389 = vpop.f32.mrb[0].mxu0
  %3390 = vmatprep.mubr.f32.mxu0 0.0
  %3391 = vmatmul.mubr.f32.gmra.mrb[0].mxu0 %v3122
  %v3392 = vpop.f32.mrb[0].mxu0
  %v3393 = vadd.f32 0.0, %v3392
  %v3394 = vpop.f32.mrb[0].mxu0
  %3395 = vmatprep.mubr.f32.mxu0 0.0
  %3396 = vmatmul.mubr.f32.gmra.mrb[0].mxu0 %v3125
  %v3397 = vpop.f32.mrb[0].mxu0
  %v3398 = vadd.f32 0.0, %v3397
  %v3399 = vpop.f32.mrb[0].mxu0
  %3400 = vmatprep.mubr.f32.mxu0 0.0
  %3401 = vmatmul.mubr.f32.gmra.mrb[0].mxu0 %v3128
  %v3402 = vpop.f32.mrb[0].mxu0
  %v3403 = vadd.f32 0.0, %v3402
  %v3404 = vpop.f32.mrb[0].mxu0
  %3405 = vmatprep.mubr.f32.mxu0 0.0
  %3406 = vmatmul.mubr.f32.gmra.mrb[0].mxu0 %v3131
  %v3407 = vpop.f32.mrb[0].mxu0
  %v3408 = vadd.f32 0.0, %v3407
  %v3409 = vpop.f32.mrb[0].mxu0
  %3410 = vmatprep.mubr.f32.mxu0 0.0
  %3411 = vmatmul.mubr.f32.gmra.mrb[0].mxu0 %v3134
  %v3412 = vpop.f32.mrb[0].mxu0
  %v3413 = vadd.f32 0.0, %v3412
  %v3414 = vpop.f32.mrb[0].mxu0
  %3415 = vmatprep.mubr.f32.mxu0 0.0
  %3416 = vmatmul.mubr.f32.gmra.mrb[0].mxu0 %v3137
  %v3417 = vpop.f32.mrb[0].mxu0
  %v3418 = vadd.f32 0.0, %v3417
  %v3419 = vpop.f32.mrb[0].mxu0
  %3420 = vmatprep.mubr.f32.mxu0 0.0
  %3421 = vmatmul.mubr.f32.gmra.mrb[0].mxu0 %v3140
  %v3422 = vpop.f32.mrb[0].mxu0
  %v3423 = vadd.f32 0.0, %v3422
  %v3424 = vpop.f32.mrb[0].mxu0
  %3425 = vmatprep.mubr.f32.mxu0 0.0
  %3426 = vmatmul.mubr.f32.gmra.mrb[0].mxu0 %v3143
  %v3427 = vpop.f32.mrb[0].mxu0
  %v3428 = vadd.f32 0.0, %v3427
  %v3429 = vpop.f32.mrb[0].mxu0
  %3430 = vmatprep.mubr.f32.mxu0 0.0
  %3431 = vmatmul.mubr.f32.gmra.mrb[0].mxu0 %v3146
  %v3432 = vpop.f32.mrb[0].mxu0
  %v3433 = vadd.f32 0.0, %v3432
  %v3434 = vpop.f32.mrb[0].mxu0
  %3435 = vmatprep.mubr.f32.mxu0 0.0
  %3436 = vmatmul.mubr.f32.gmra.mrb[0].mxu0 %v3149
  %v3437 = vpop.f32.mrb[0].mxu0
  %v3438 = vadd.f32 0.0, %v3437
  %v3439 = vpop.f32.mrb[0].mxu0
  %3440 = vmatprep.mubr.f32.mxu0 0.0
  %3441 = vmatmul.mubr.f32.gmra.mrb[0].mxu0 %v3152
  %v3442 = vpop.f32.mrb[0].mxu0
  %v3443 = vadd.f32 0.0, %v3442
  %v3444 = vpop.f32.mrb[0].mxu0
  %3445 = vmatprep.mubr.f32.mxu0 0.0
  %3446 = vmatmul.mubr.f32.gmra.mrb[0].mxu0 %v3155
  %v3447 = vpop.f32.mrb[0].mxu0
  %v3448 = vadd.f32 0.0, %v3447
  %v3449 = vpop.f32.mrb[0].mxu0
  %3450 = vmatprep.mubr.f32.mxu0 0.0
  %3451 = vmatmul.mubr.f32.gmra.mrb[0].mxu0 %v3158
  %v3452 = vpop.f32.mrb[0].mxu0
  %v3453 = vadd.f32 0.0, %v3452
  %v3454 = vpop.f32.mrb[0].mxu0
  %3455 = vmatprep.mubr.f32.mxu0 0.0
  %3456 = vmatmul.mubr.f32.gmra.mrb[0].mxu0 %v3161
  %v3457 = vpop.f32.mrb[0].mxu0
  %v3458 = vadd.f32 0.0, %v3457
  %v3459 = vpop.f32.mrb[0].mxu0
  %3460 = vmatprep.mubr.f32.mxu0 0.0
  %3461 = vmatmul.mubr.f32.gmra.mrb[0].mxu0 %v3164
  %v3462 = vpop.f32.mrb[0].mxu0
  %v3463 = vadd.f32 0.0, %v3462
  %v3464 = vpop.f32.mrb[0].mxu0
  %3465 = vmatprep.mubr.f32.mxu0 0.0
  %3466 = vmatmul.mubr.f32.gmra.mrb[0].mxu0 %v3167
  %v3467 = vpop.f32.mrb[0].mxu0
  %v3468 = vadd.f32 0.0, %v3467
  %v3469 = vpop.f32.mrb[0].mxu0
  %3470 = vmatprep.mubr.f32.mxu0 0.0
  %3471 = vmatmul.mubr.f32.gmra.mrb[0].mxu0 %v3170
  %v3472 = vpop.f32.mrb[0].mxu0
  %v3473 = vadd.f32 0.0, %v3472
  %v3474 = vpop.f32.mrb[0].mxu0
  %3475 = vmatprep.mubr.f32.mxu0 0.0
  %3476 = vmatmul.mubr.f32.gmra.mrb[0].mxu0 %v3173
  %v3477 = vpop.f32.mrb[0].mxu0
  %v3478 = vadd.f32 0.0, %v3477
  %v3479 = vpop.f32.mrb[0].mxu0
  %3480 = vmatprep.mubr.f32.mxu0 0.0
  %3481 = vmatmul.mubr.f32.gmra.mrb[0].mxu0 %v3176
  %v3482 = vpop.f32.mrb[0].mxu0
  %v3483 = vadd.f32 0.0, %v3482
  %v3484 = vpop.f32.mrb[0].mxu0
  %3485 = vmatprep.mubr.f32.mxu0 0.0
  %3486 = vmatmul.mubr.f32.gmra.mrb[0].mxu0 %v3179
  %v3487 = vpop.f32.mrb[0].mxu0
  %v3488 = vadd.f32 0.0, %v3487
  %v3489 = vpop.f32.mrb[0].mxu0
  %3490 = vmatprep.mubr.f32.mxu0 0.0
  %3491 = vmatmul.mubr.f32.gmra.mrb[0].mxu0 %v3182
  %v3492 = vpop.f32.mrb[0].mxu0
  %v3493 = vadd.f32 0.0, %v3492
  %v3494 = vpop.f32.mrb[0].mxu0
  %3495 = vmatprep.mubr.f32.mxu0 0.0
  %3496 = vmatmul.mubr.f32.gmra.mrb[0].mxu0 %v3185
  %v3497 = vpop.f32.mrb[0].mxu0
  %v3498 = vadd.f32 0.0, %v3497
  %v3499 = vpop.f32.mrb[0].mxu0
  %3500 = vmatprep.mubr.f32.mxu0 0.0
  %3501 = vmatmul.mubr.f32.gmra.mrb[0].mxu0 %v3188
  %v3502 = vpop.f32.mrb[0].mxu0
  %v3503 = vadd.f32 0.0, %v3502
  %v3504 = vpop.f32.mrb[0].mxu0
  %3505 = vmatprep.mubr.f32.mxu0 0.0
  %3506 = vmatmul.mubr.f32.gmra.mrb[0].mxu0 %v3191
  %v3507 = vpop.f32.mrb[0].mxu0
  %v3508 = vadd.f32 0.0, %v3507
  %v3509 = vpop.f32.mrb[0].mxu0
  %3510 = vmatprep.mubr.f32.mxu0 0.0
  %3511 = vmatmul.mubr.f32.gmra.mrb[0].mxu0 %v3194
  %v3512 = vpop.f32.mrb[0].mxu0
  %v3513 = vadd.f32 0.0, %v3512
  %v3514 = vpop.f32.mrb[0].mxu0
  %3515 = vmatprep.mubr.f32.mxu0 0.0
  %3516 = vmatmul.mubr.f32.gmra.mrb[0].mxu0 %v3197
  %v3517 = vpop.f32.mrb[0].mxu0
  %v3518 = vadd.f32 0.0, %v3517
  %v3519 = vpop.f32.mrb[0].mxu0
  %3520 = vmatprep.mubr.f32.mxu0 0.0
  %3521 = vmatmul.mubr.f32.gmra.mrb[0].mxu0 %v3200
  %v3522 = vpop.f32.mrb[0].mxu0
  %v3523 = vadd.f32 0.0, %v3522
  %v3524 = vpop.f32.mrb[0].mxu0
  %3525 = vmatprep.mubr.f32.mxu0 0.0
  %3526 = vmatmul.mubr.f32.gmra.mrb[0].mxu0 %v3203
  %v3527 = vpop.f32.mrb[0].mxu0
  %v3528 = vadd.f32 0.0, %v3527
  %v3529 = vpop.f32.mrb[0].mxu0
  %3530 = vmatprep.mubr.f32.mxu0 0.0
  %3531 = vmatmul.mubr.f32.gmra.mrb[0].mxu0 %v3206
  %v3532 = vpop.f32.mrb[0].mxu0
  %v3533 = vadd.f32 0.0, %v3532
  %v3534 = vpop.f32.mrb[0].mxu0
  %3535 = vmatprep.mubr.f32.mxu0 0.0
  %3536 = vmatmul.mubr.f32.gmra.mrb[0].mxu0 %v3209
  %v3537 = vpop.f32.mrb[0].mxu0
  %v3538 = vadd.f32 0.0, %v3537
  %v3539 = vpop.f32.mrb[0].mxu0
  %3540 = vmatprep.mubr.f32.mxu0 0.0
  %3541 = vmatmul.mubr.f32.gmra.mrb[0].mxu0 %v3212
  %v3542 = vpop.f32.mrb[0].mxu0
  %v3543 = vadd.f32 0.0, %v3542
  %v3544 = vpop.f32.mrb[0].mxu0
  %3545 = vmatprep.mubr.f32.mxu0 0.0
  %3546 = vmatmul.mubr.f32.gmra.mrb[0].mxu0 %v3215
  %v3547 = vpop.f32.mrb[0].mxu0
  %v3548 = vadd.f32 0.0, %v3547
  %v3549 = vpop.f32.mrb[0].mxu0
  %3550 = vmatprep.mubr.f32.mxu0 0.0
  %3551 = vmatmul.mubr.f32.gmra.mrb[0].mxu0 %v3218
  %v3552 = vpop.f32.mrb[0].mxu0
  %v3553 = vadd.f32 0.0, %v3552
  %v3554 = vpop.f32.mrb[0].mxu0
  %3555 = vmatprep.mubr.f32.mxu0 0.0
  %3556 = vmatmul.mubr.f32.gmra.mrb[0].mxu0 %v3221
  %v3557 = vpop.f32.mrb[0].mxu0
  %v3558 = vadd.f32 0.0, %v3557
  %v3559 = vpop.f32.mrb[0].mxu0
  %3560 = vmatprep.mubr.f32.mxu0 0.0
  %3561 = vmatmul.mubr.f32.gmra.mrb[0].mxu0 %v3224
  %v3562 = vpop.f32.mrb[0].mxu0
  %v3563 = vadd.f32 0.0, %v3562
  %v3564 = vpop.f32.mrb[0].mxu0
  %3565 = vmatprep.mubr.f32.mxu0 0.0
  %3566 = vmatmul.mubr.f32.gmra.mrb[0].mxu0 %v3227
  %v3567 = vpop.f32.mrb[0].mxu0
  %v3568 = vadd.f32 0.0, %v3567
  %v3569 = vpop.f32.mrb[0].mxu0
  %3570 = vmatprep.mubr.f32.mxu0 0.0
  %3571 = vmatmul.mubr.f32.gmra.mrb[0].mxu0 %v3230
  %v3572 = vpop.f32.mrb[0].mxu0
  %v3573 = vadd.f32 0.0, %v3572
  %v3574 = vpop.f32.mrb[0].mxu0
  %3575 = vmatprep.mubr.f32.mxu0 0.0
  %3576 = vmatmul.mubr.f32.gmra.mrb[0].mxu0 %v3233
  %v3577 = vpop.f32.mrb[0].mxu0
  %v3578 = vadd.f32 0.0, %v3577
  %v3579 = vpop.f32.mrb[0].mxu0
  %3580 = vmatprep.mubr.f32.mxu0 0.0
  %3581 = vmatmul.mubr.f32.gmra.mrb[0].mxu0 %v3236
  %v3582 = vpop.f32.mrb[0].mxu0
  %v3583 = vadd.f32 0.0, %v3582
  %v3584 = vpop.f32.mrb[0].mxu0
  %3585 = vmatprep.mubr.f32.mxu0 0.0
  %3586 = vmatmul.mubr.f32.gmra.mrb[0].mxu0 %v3239
  %v3587 = vpop.f32.mrb[0].mxu0
  %v3588 = vadd.f32 0.0, %v3587
  %v3589 = vpop.f32.mrb[0].mxu0
  %3590 = vmatprep.mubr.f32.mxu0 0.0
  %3591 = vmatmul.mubr.f32.gmra.mrb[0].mxu0 %v3242
  %v3592 = vpop.f32.mrb[0].mxu0
  %v3593 = vadd.f32 0.0, %v3592
  %v3594 = vpop.f32.mrb[0].mxu0
  %3595 = vmatprep.mubr.f32.mxu0 0.0
  %3596 = vmatmul.mubr.f32.gmra.mrb[0].mxu0 %v3245
  %v3597 = vpop.f32.mrb[0].mxu0
  %v3598 = vadd.f32 0.0, %v3597
  %v3599 = vpop.f32.mrb[0].mxu0
  %3600 = vmatprep.mubr.f32.mxu0 0.0
  %3601 = vmatmul.mubr.f32.gmra.mrb[0].mxu0 %v3248
  %v3602 = vpop.f32.mrb[0].mxu0
  %v3603 = vadd.f32 0.0, %v3602
  %v3604 = vpop.f32.mrb[0].mxu0
  %3605 = vmatprep.mubr.f32.mxu0 0.0
  %3606 = vmatmul.mubr.f32.gmra.mrb[0].mxu0 %v3251
  %v3607 = vpop.f32.mrb[0].mxu0
  %v3608 = vadd.f32 0.0, %v3607
  %v3609 = vpop.f32.mrb[0].mxu0
  %3610 = vmatprep.mubr.f32.mxu0 0.0
  %3611 = vmatmul.mubr.f32.gmra.mrb[0].mxu0 %v3254
  %v3612 = vpop.f32.mrb[0].mxu0
  %v3613 = vadd.f32 0.0, %v3612
  %v3614 = vpop.f32.mrb[0].mxu0
  %3615 = vmatprep.mubr.f32.mxu0 0.0
  %3616 = vmatmul.mubr.f32.gmra.mrb[0].mxu0 %v3257
  %v3617 = vpop.f32.mrb[0].mxu0
  %v3618 = vadd.f32 0.0, %v3617
  %v3619 = vpop.f32.mrb[0].mxu0
  %3620 = vmatprep.mubr.f32.mxu0 0.0
  %3621 = vmatmul.mubr.f32.gmra.mrb[0].mxu0 %v3260
  %v3622 = vpop.f32.mrb[0].mxu0
  %v3623 = vadd.f32 0.0, %v3622
  %v3624 = vpop.f32.mrb[0].mxu0
  %3625 = vmatprep.mubr.f32.mxu0 0.0
  %3626 = vmatmul.mubr.f32.gmra.mrb[0].mxu0 %v3263
  %v3627 = vpop.f32.mrb[0].mxu0
  %v3628 = vadd.f32 0.0, %v3627
  %v3629 = vpop.f32.mrb[0].mxu0
  %3630 = vmatprep.mubr.f32.mxu0 0.0
  %3631 = vmatmul.mubr.f32.gmra.mrb[0].mxu0 %v3266
  %v3632 = vpop.f32.mrb[0].mxu0
  %v3633 = vadd.f32 0.0, %v3632
  %v3634 = vpop.f32.mrb[0].mxu0
  %3635 = vmatprep.mubr.f32.mxu0 0.0
  %3636 = vmatmul.mubr.f32.gmra.mrb[0].mxu0 %v3269
  %v3637 = vpop.f32.mrb[0].mxu0
  %v3638 = vadd.f32 0.0, %v3637
  %v3639 = vpop.f32.mrb[0].mxu0
  %3640 = vmatprep.mubr.f32.mxu0 0.0
  %3641 = vmatmul.mubr.f32.gmra.mrb[0].mxu0 %v3272
  %v3642 = vpop.f32.mrb[0].mxu0
  %v3643 = vadd.f32 0.0, %v3642
  %v3644 = vpop.f32.mrb[0].mxu0
  %3645 = vmatprep.mubr.f32.mxu0 0.0
  %3646 = vmatmul.mubr.f32.gmra.mrb[0].mxu0 %v3275
  %v3647 = vpop.f32.mrb[0].mxu0
  %v3648 = vadd.f32 0.0, %v3647
  %v3649 = vpop.f32.mrb[0].mxu0
  %3650 = vmatprep.mubr.f32.mxu0 0.0
  %3651 = vmatmul.mubr.f32.gmra.mrb[0].mxu0 %v3278
  %v3652 = vpop.f32.mrb[0].mxu0
  %v3653 = vadd.f32 0.0, %v3652
  %v3654 = vpop.f32.mrb[0].mxu0
  %3655 = vmatprep.mubr.f32.mxu0 0.0
  %3656 = vmatmul.mubr.f32.gmra.mrb[0].mxu0 %v3281
  %v3657 = vpop.f32.mrb[0].mxu0
  %v3658 = vadd.f32 0.0, %v3657
  %v3659 = vpop.f32.mrb[0].mxu0
  %3660 = vmatprep.mubr.f32.mxu0 0.0
  %3661 = vmatmul.mubr.f32.gmra.mrb[0].mxu0 %v3284
  %v3662 = vpop.f32.mrb[0].mxu0
  %v3663 = vadd.f32 0.0, %v3662
  %v3664 = vpop.f32.mrb[0].mxu0
  %3665 = vmatprep.mubr.f32.mxu0 0.0
  %3666 = vmatmul.mubr.f32.gmra.mrb[0].mxu0 %v3287
  %v3667 = vpop.f32.mrb[0].mxu0
  %v3668 = vadd.f32 0.0, %v3667
  %v3669 = vpop.f32.mrb[0].mxu0
  %3670 = vmatprep.mubr.f32.mxu0 0.0
  %3671 = vmatmul.mubr.f32.gmra.mrb[0].mxu0 %v3290
  %v3672 = vpop.f32.mrb[0].mxu0
  %v3673 = vadd.f32 0.0, %v3672
  %v3674 = vpop.f32.mrb[0].mxu0
  %3675 = vmatprep.mubr.f32.mxu0 0.0
  %3676 = vmatmul.mubr.f32.gmra.mrb[0].mxu0 %v3293
  %v3677 = vpop.f32.mrb[0].mxu0
  %v3678 = vadd.f32 0.0, %v3677
  %v3679 = vpop.f32.mrb[0].mxu0
  %3680 = vmatprep.mubr.f32.mxu0 0.0
  %3681 = vmatmul.mubr.f32.gmra.mrb[0].mxu0 %v3296
  %v3682 = vpop.f32.mrb[0].mxu0
  %v3683 = vadd.f32 0.0, %v3682
  %v3684 = vpop.f32.mrb[0].mxu0
  %3685 = vdwg.mxu0
  %v3686 = vadd.f32 %v2976, %v3368
  %v3687 = vadd.f32 %v2977, %v3373
  %v3688 = vadd.f32 %v2978, %v3378
  %v3689 = vadd.f32 %v2979, %v3383
  %v3690 = vadd.f32 %v2980, %v3388
  %v3691 = vadd.f32 %v2981, %v3393
  %v3692 = vadd.f32 %v2982, %v3398
  %v3693 = vadd.f32 %v2983, %v3403
  %v3694 = vadd.f32 %v2984, %v3408
  %v3695 = vadd.f32 %v2985, %v3413
  %v3696 = vadd.f32 %v2986, %v3418
  %v3697 = vadd.f32 %v2987, %v3423
  %v3698 = vadd.f32 %v2988, %v3428
  %v3699 = vadd.f32 %v2989, %v3433
  %v3700 = vadd.f32 %v2990, %v3438
  %v3701 = vadd.f32 %v2991, %v3443
  %v3702 = vadd.f32 %v2992, %v3448
  %v3703 = vadd.f32 %v2993, %v3453
  %v3704 = vadd.f32 %v2994, %v3458
  %v3705 = vadd.f32 %v2995, %v3463
  %v3706 = vadd.f32 %v2996, %v3468
  %v3707 = vadd.f32 %v2997, %v3473
  %v3708 = vadd.f32 %v2998, %v3478
  %v3709 = vadd.f32 %v2999, %v3483
  %v3710 = vadd.f32 %v3000, %v3488
  %v3711 = vadd.f32 %v3001, %v3493
  %v3712 = vadd.f32 %v3002, %v3498
  %v3713 = vadd.f32 %v3003, %v3503
  %v3714 = vadd.f32 %v3004, %v3508
  %v3715 = vadd.f32 %v3005, %v3513
  %v3716 = vadd.f32 %v3006, %v3518
  %v3717 = vadd.f32 %v3007, %v3523
  %v3718 = vadd.f32 %v3008, %v3528
  %v3719 = vadd.f32 %v3009, %v3533
  %v3720 = vadd.f32 %v3010, %v3538
  %v3721 = vadd.f32 %v3011, %v3543
  %v3722 = vadd.f32 %v3012, %v3548
  %v3723 = vadd.f32 %v3013, %v3553
  %v3724 = vadd.f32 %v3014, %v3558
  %v3725 = vadd.f32 %v3015, %v3563
  %v3726 = vadd.f32 %v3016, %v3568
  %v3727 = vadd.f32 %v3017, %v3573
  %v3728 = vadd.f32 %v3018, %v3578
  %v3729 = vadd.f32 %v3019, %v3583
  %v3730 = vadd.f32 %v3020, %v3588
  %v3731 = vadd.f32 %v3021, %v3593
  %v3732 = vadd.f32 %v3022, %v3598
  %v3733 = vadd.f32 %v3023, %v3603
  %v3734 = vadd.f32 %v3024, %v3608
  %v3735 = vadd.f32 %v3025, %v3613
  %v3736 = vadd.f32 %v3026, %v3618
  %v3737 = vadd.f32 %v3027, %v3623
  %v3738 = vadd.f32 %v3028, %v3628
  %v3739 = vadd.f32 %v3029, %v3633
  %v3740 = vadd.f32 %v3030, %v3638
  %v3741 = vadd.f32 %v3031, %v3643
  %v3742 = vadd.f32 %v3032, %v3648
  %v3743 = vadd.f32 %v3033, %v3653
  %v3744 = vadd.f32 %v3034, %v3658
  %v3745 = vadd.f32 %v3035, %v3663
  %v3746 = vadd.f32 %v3036, %v3668
  %v3747 = vadd.f32 %v3037, %v3673
  %v3748 = vadd.f32 %v3038, %v3678
  %v3749 = vadd.f32 %v3039, %v3683
  %v3750 = vld [vmem:[%s263 + $0x2] sm:$0xff]
  %v3751 = vld [vmem:[%s263 + $0xa] sm:$0xff]
  %v3752 = vld [vmem:[%s263 + $0x1a] sm:$0xff]
  %v3753 = vld [vmem:[%s263 + $0x22] sm:$0xff]
  %v3754 = vld [vmem:[%s263 + $0x32] sm:$0xff]
  %v3755 = vld [vmem:[%s263 + $0x3a] sm:$0xff]
  %v3756 = vld [vmem:[%s263 + $0x4a] sm:$0xff]
  %v3757 = vld [vmem:[%s263 + $0x52] sm:$0xff]
  %v3758 = vld [vmem:[%s263 + $0x62] sm:$0xff]
  %v3759 = vld [vmem:[%s263 + $0x6a] sm:$0xff]
  %v3760 = vld [vmem:[%s263 + $0x7a] sm:$0xff]
  %v3761 = vld [vmem:[%s263 + $0x82] sm:$0xff]
  %v3762 = vld [vmem:[%s263 + $0x92] sm:$0xff]
  %v3763 = vld [vmem:[%s263 + $0x9a] sm:$0xff]
  %v3764 = vld [vmem:[%s263 + $0xaa] sm:$0xff]
  %v3765 = vld [vmem:[%s263 + $0xb2] sm:$0xff]
  %v3766 = vld [vmem:[%s263 + $0xc2] sm:$0xff]
  %v3767 = vld [vmem:[%s263 + $0xca] sm:$0xff]
  %v3768 = vld [vmem:[%s263 + $0xda] sm:$0xff]
  %v3769 = vld [vmem:[%s263 + $0xe2] sm:$0xff]
  %v3770 = vld [vmem:[%s263 + $0xf2] sm:$0xff]
  %v3771 = vld [vmem:[%s263 + $0xfa] sm:$0xff]
  %v3772 = vld [vmem:[%s263 + $0x10a] sm:$0xff]
  %v3773 = vld [vmem:[%s263 + $0x112] sm:$0xff]
  %v3774 = vld [vmem:[%s263 + $0x122] sm:$0xff]
  %v3775 = vld [vmem:[%s263 + $0x12a] sm:$0xff]
  %v3776 = vld [vmem:[%s263 + $0x13a] sm:$0xff]
  %v3777 = vld [vmem:[%s263 + $0x142] sm:$0xff]
  %v3778 = vld [vmem:[%s263 + $0x152] sm:$0xff]
  %v3779 = vld [vmem:[%s263 + $0x15a] sm:$0xff]
  %v3780 = vld [vmem:[%s263 + $0x16a] sm:$0xff]
  %v3781 = vld [vmem:[%s263 + $0x172] sm:$0xff]
  %v3782 = vld [vmem:[%s263 + $0x1b2] sm:$0xff]
  %v3783 = vld [vmem:[%s263 + $0x1ba] sm:$0xff]
  %v3784 = vld [vmem:[%s263 + $0x1ca] sm:$0xff]
  %v3785 = vld [vmem:[%s263 + $0x1d2] sm:$0xff]
  %v3786 = vld [vmem:[%s263 + $0x1e2] sm:$0xff]
  %v3787 = vld [vmem:[%s263 + $0x1ea] sm:$0xff]
  %v3788 = vld [vmem:[%s263 + $0x1fa] sm:$0xff]
  %v3789 = vld [vmem:[%s263 + $0x202] sm:$0xff]
  %v3790 = vld [vmem:[%s263 + $0x212] sm:$0xff]
  %v3791 = vld [vmem:[%s263 + $0x21a] sm:$0xff]
  %v3792 = vld [vmem:[%s263 + $0x22a] sm:$0xff]
  %v3793 = vld [vmem:[%s263 + $0x232] sm:$0xff]
  %v3794 = vld [vmem:[%s263 + $0x242] sm:$0xff]
  %v3795 = vld [vmem:[%s263 + $0x24a] sm:$0xff]
  %v3796 = vld [vmem:[%s263 + $0x25a] sm:$0xff]
  %v3797 = vld [vmem:[%s263 + $0x262] sm:$0xff]
  %v3798 = vld [vmem:[%s263 + $0x272] sm:$0xff]
  %v3799 = vld [vmem:[%s263 + $0x27a] sm:$0xff]
  %v3800 = vld [vmem:[%s263 + $0x28a] sm:$0xff]
  %v3801 = vld [vmem:[%s263 + $0x292] sm:$0xff]
  %v3802 = vld [vmem:[%s263 + $0x2a2] sm:$0xff]
  %v3803 = vld [vmem:[%s263 + $0x2aa] sm:$0xff]
  %v3804 = vld [vmem:[%s263 + $0x2ba] sm:$0xff]
  %v3805 = vld [vmem:[%s263 + $0x2c2] sm:$0xff]
  %v3806 = vld [vmem:[%s263 + $0x2d2] sm:$0xff]
  %v3807 = vld [vmem:[%s263 + $0x2da] sm:$0xff]
  %v3808 = vld [vmem:[%s263 + $0x2ea] sm:$0xff]
  %v3809 = vld [vmem:[%s263 + $0x2f2] sm:$0xff]
  %v3810 = vld [vmem:[%s263 + $0x302] sm:$0xff]
  %v3811 = vld [vmem:[%s263 + $0x30a] sm:$0xff]
  %v3812 = vld [vmem:[%s263 + $0x31a] sm:$0xff]
  %v3813 = vld [vmem:[%s263 + $0x322] sm:$0xff]
  %s3814 = scalar_lea.vmem %s1, 20
  %v3815 = vld [vmem:[%s3814] sm:$0xf]
  %v3817 = vsel %vm26, %v3750, 0
  %v3820 = vsel %vm26, %v3751, 0
  %v3823 = vsel %vm26, %v3752, 0
  %v3826 = vsel %vm26, %v3753, 0
  %v3829 = vsel %vm26, %v3754, 0
  %v3832 = vsel %vm26, %v3755, 0
  %v3835 = vsel %vm26, %v3756, 0
  %v3838 = vsel %vm26, %v3757, 0
  %v3841 = vsel %vm26, %v3758, 0
  %v3844 = vsel %vm26, %v3759, 0
  %v3847 = vsel %vm26, %v3760, 0
  %v3850 = vsel %vm26, %v3761, 0
  %v3853 = vsel %vm26, %v3762, 0
  %v3856 = vsel %vm26, %v3763, 0
  %v3859 = vsel %vm26, %v3764, 0
  %v3862 = vsel %vm26, %v3765, 0
  %v3865 = vsel %vm26, %v3766, 0
  %v3868 = vsel %vm26, %v3767, 0
  %v3871 = vsel %vm26, %v3768, 0
  %v3874 = vsel %vm26, %v3769, 0
  %v3877 = vsel %vm26, %v3770, 0
  %v3880 = vsel %vm26, %v3771, 0
  %v3883 = vsel %vm26, %v3772, 0
  %v3886 = vsel %vm26, %v3773, 0
  %v3889 = vsel %vm26, %v3774, 0
  %v3892 = vsel %vm26, %v3775, 0
  %v3895 = vsel %vm26, %v3776, 0
  %v3898 = vsel %vm26, %v3777, 0
  %v3901 = vsel %vm26, %v3778, 0
  %v3904 = vsel %vm26, %v3779, 0
  %v3907 = vsel %vm26, %v3780, 0
  %v3910 = vsel %vm26, %v3781, 0
  %v3913 = vsel %vm26, %v3782, 0
  %v3916 = vsel %vm26, %v3783, 0
  %v3919 = vsel %vm26, %v3784, 0
  %v3922 = vsel %vm26, %v3785, 0
  %v3925 = vsel %vm26, %v3786, 0
  %v3928 = vsel %vm26, %v3787, 0
  %v3931 = vsel %vm26, %v3788, 0
  %v3934 = vsel %vm26, %v3789, 0
  %v3937 = vsel %vm26, %v3790, 0
  %v3940 = vsel %vm26, %v3791, 0
  %v3943 = vsel %vm26, %v3792, 0
  %v3946 = vsel %vm26, %v3793, 0
  %v3949 = vsel %vm26, %v3794, 0
  %v3952 = vsel %vm26, %v3795, 0
  %v3955 = vsel %vm26, %v3796, 0
  %v3958 = vsel %vm26, %v3797, 0
  %v3961 = vsel %vm26, %v3798, 0
  %v3964 = vsel %vm26, %v3799, 0
  %v3967 = vsel %vm26, %v3800, 0
  %v3970 = vsel %vm26, %v3801, 0
  %v3973 = vsel %vm26, %v3802, 0
  %v3976 = vsel %vm26, %v3803, 0
  %v3979 = vsel %vm26, %v3804, 0
  %v3982 = vsel %vm26, %v3805, 0
  %v3985 = vsel %vm26, %v3806, 0
  %v3988 = vsel %vm26, %v3807, 0
  %v3991 = vsel %vm26, %v3808, 0
  %v3994 = vsel %vm26, %v3809, 0
  %v3997 = vsel %vm26, %v3810, 0
  %v4000 = vsel %vm26, %v3811, 0
  %v4003 = vsel %vm26, %v3812, 0
  %v4006 = vsel %vm26, %v3813, 0
  %v4009 = vsel %vm651, %v3815, 0
  %4011 = vmatprep.subr.mxu0 0.0
  %4012 = vmatpush1.msra.mxu0 %v4009
  %4013 = vmatprep.subr.mxu0 0.0
  %4014 = vmatpush1.msra.mxu0 0.0
  %4015 = vmatprep.subr.mxu0 0.0
  %4016 = vmatpush1.msra.mxu0 0.0
  %4017 = vmatprep.subr.mxu0 0.0
  %4018 = vmatpush1.msra.mxu0 0.0
  %4019 = vmatprep.subr.mxu0 0.0
  %4020 = vmatpush1.msra.mxu0 0.0
  %4021 = vmatprep.subr.mxu0 0.0
  %4022 = vmatpush1.msra.mxu0 0.0
  %4023 = vmatprep.subr.mxu0 0.0
  %4024 = vmatpush1.msra.mxu0 0.0
  %4025 = vmatprep.subr.mxu0 0.0
  %4026 = vmatpush1.msra.mxu0 0.0
  %4027 = vmatprep.subr.mxu0 0.0
  %4028 = vmatpush1.msra.mxu0 0.0
  %4029 = vmatprep.subr.mxu0 0.0
  %4030 = vmatpush1.msra.mxu0 0.0
  %4031 = vmatprep.subr.mxu0 0.0
  %4032 = vmatpush1.msra.mxu0 0.0
  %4033 = vmatprep.subr.mxu0 0.0
  %4034 = vmatpush1.msra.mxu0 0.0
  %4035 = vmatprep.subr.mxu0 0.0
  %4036 = vmatpush1.msra.mxu0 0.0
  %4037 = vmatprep.subr.mxu0 0.0
  %4038 = vmatpush1.msra.mxu0 0.0
  %4039 = vmatprep.subr.mxu0 0.0
  %4040 = vmatpush1.msra.mxu0 0.0
  %4041 = vmatprep.subr.mxu0 0.0
  %4042 = vmatpush1.msra.mxu0 0.0
  %4043 = vmatprep.subr.mxu0 0.0
  %4044 = vmatpush1.msra.mxu0 0.0
  %4045 = vmatprep.subr.mxu0 0.0
  %4046 = vmatpush1.msra.mxu0 0.0
  %4047 = vmatprep.subr.mxu0 0.0
  %4048 = vmatpush1.msra.mxu0 0.0
  %4049 = vmatprep.subr.mxu0 0.0
  %4050 = vmatpush1.msra.mxu0 0.0
  %4051 = vmatprep.subr.mxu0 0.0
  %4052 = vmatpush1.msra.mxu0 0.0
  %4053 = vmatprep.subr.mxu0 0.0
  %4054 = vmatpush1.msra.mxu0 0.0
  %4055 = vmatprep.subr.mxu0 0.0
  %4056 = vmatpush1.msra.mxu0 0.0
  %4057 = vmatprep.subr.mxu0 0.0
  %4058 = vmatpush1.msra.mxu0 0.0
  %4059 = vmatprep.subr.mxu0 0.0
  %4060 = vmatpush1.msra.mxu0 0.0
  %4061 = vmatprep.subr.mxu0 0.0
  %4062 = vmatpush1.msra.mxu0 0.0
  %4063 = vmatprep.subr.mxu0 0.0
  %4064 = vmatpush1.msra.mxu0 0.0
  %4065 = vmatprep.subr.mxu0 0.0
  %4066 = vmatpush1.msra.mxu0 0.0
  %4067 = vmatprep.subr.mxu0 0.0
  %4068 = vmatpush1.msra.mxu0 0.0
  %4069 = vmatprep.subr.mxu0 0.0
  %4070 = vmatpush1.msra.mxu0 0.0
  %4071 = vmatprep.subr.mxu0 0.0
  %4072 = vmatpush1.msra.mxu0 0.0
  %4073 = vmatprep.subr.mxu0 0.0
  %4074 = vmatpush1.msra.mxu0 0.0
  %4075 = vmatprep.mubr.f32.mxu0 0.0
  %4076 = vmatmul.mubr.f32.gmra.mrb[0].mxu0 %v3817
  %v4077 = vpop.f32.mrb[0].mxu0
  %v4078 = vadd.f32 0.0, %v4077
  %v4079 = vpop.f32.mrb[0].mxu0
  %4080 = vmatprep.mubr.f32.mxu0 0.0
  %4081 = vmatmul.mubr.f32.gmra.mrb[0].mxu0 %v3820
  %v4082 = vpop.f32.mrb[0].mxu0
  %v4083 = vadd.f32 0.0, %v4082
  %v4084 = vpop.f32.mrb[0].mxu0
  %4085 = vmatprep.mubr.f32.mxu0 0.0
  %4086 = vmatmul.mubr.f32.gmra.mrb[0].mxu0 %v3823
  %v4087 = vpop.f32.mrb[0].mxu0
  %v4088 = vadd.f32 0.0, %v4087
  %v4089 = vpop.f32.mrb[0].mxu0
  %4090 = vmatprep.mubr.f32.mxu0 0.0
  %4091 = vmatmul.mubr.f32.gmra.mrb[0].mxu0 %v3826
  %v4092 = vpop.f32.mrb[0].mxu0
  %v4093 = vadd.f32 0.0, %v4092
  %v4094 = vpop.f32.mrb[0].mxu0
  %4095 = vmatprep.mubr.f32.mxu0 0.0
  %4096 = vmatmul.mubr.f32.gmra.mrb[0].mxu0 %v3829
  %v4097 = vpop.f32.mrb[0].mxu0
  %v4098 = vadd.f32 0.0, %v4097
  %v4099 = vpop.f32.mrb[0].mxu0
  %4100 = vmatprep.mubr.f32.mxu0 0.0
  %4101 = vmatmul.mubr.f32.gmra.mrb[0].mxu0 %v3832
  %v4102 = vpop.f32.mrb[0].mxu0
  %v4103 = vadd.f32 0.0, %v4102
  %v4104 = vpop.f32.mrb[0].mxu0
  %4105 = vmatprep.mubr.f32.mxu0 0.0
  %4106 = vmatmul.mubr.f32.gmra.mrb[0].mxu0 %v3835
  %v4107 = vpop.f32.mrb[0].mxu0
  %v4108 = vadd.f32 0.0, %v4107
  %v4109 = vpop.f32.mrb[0].mxu0
  %4110 = vmatprep.mubr.f32.mxu0 0.0
  %4111 = vmatmul.mubr.f32.gmra.mrb[0].mxu0 %v3838
  %v4112 = vpop.f32.mrb[0].mxu0
  %v4113 = vadd.f32 0.0, %v4112
  %v4114 = vpop.f32.mrb[0].mxu0
  %4115 = vmatprep.mubr.f32.mxu0 0.0
  %4116 = vmatmul.mubr.f32.gmra.mrb[0].mxu0 %v3841
  %v4117 = vpop.f32.mrb[0].mxu0
  %v4118 = vadd.f32 0.0, %v4117
  %v4119 = vpop.f32.mrb[0].mxu0
  %4120 = vmatprep.mubr.f32.mxu0 0.0
  %4121 = vmatmul.mubr.f32.gmra.mrb[0].mxu0 %v3844
  %v4122 = vpop.f32.mrb[0].mxu0
  %v4123 = vadd.f32 0.0, %v4122
  %v4124 = vpop.f32.mrb[0].mxu0
  %4125 = vmatprep.mubr.f32.mxu0 0.0
  %4126 = vmatmul.mubr.f32.gmra.mrb[0].mxu0 %v3847
  %v4127 = vpop.f32.mrb[0].mxu0
  %v4128 = vadd.f32 0.0, %v4127
  %v4129 = vpop.f32.mrb[0].mxu0
  %4130 = vmatprep.mubr.f32.mxu0 0.0
  %4131 = vmatmul.mubr.f32.gmra.mrb[0].mxu0 %v3850
  %v4132 = vpop.f32.mrb[0].mxu0
  %v4133 = vadd.f32 0.0, %v4132
  %v4134 = vpop.f32.mrb[0].mxu0
  %4135 = vmatprep.mubr.f32.mxu0 0.0
  %4136 = vmatmul.mubr.f32.gmra.mrb[0].mxu0 %v3853
  %v4137 = vpop.f32.mrb[0].mxu0
  %v4138 = vadd.f32 0.0, %v4137
  %v4139 = vpop.f32.mrb[0].mxu0
  %4140 = vmatprep.mubr.f32.mxu0 0.0
  %4141 = vmatmul.mubr.f32.gmra.mrb[0].mxu0 %v3856
  %v4142 = vpop.f32.mrb[0].mxu0
  %v4143 = vadd.f32 0.0, %v4142
  %v4144 = vpop.f32.mrb[0].mxu0
  %4145 = vmatprep.mubr.f32.mxu0 0.0
  %4146 = vmatmul.mubr.f32.gmra.mrb[0].mxu0 %v3859
  %v4147 = vpop.f32.mrb[0].mxu0
  %v4148 = vadd.f32 0.0, %v4147
  %v4149 = vpop.f32.mrb[0].mxu0
  %4150 = vmatprep.mubr.f32.mxu0 0.0
  %4151 = vmatmul.mubr.f32.gmra.mrb[0].mxu0 %v3862
  %v4152 = vpop.f32.mrb[0].mxu0
  %v4153 = vadd.f32 0.0, %v4152
  %v4154 = vpop.f32.mrb[0].mxu0
  %4155 = vmatprep.mubr.f32.mxu0 0.0
  %4156 = vmatmul.mubr.f32.gmra.mrb[0].mxu0 %v3865
  %v4157 = vpop.f32.mrb[0].mxu0
  %v4158 = vadd.f32 0.0, %v4157
  %v4159 = vpop.f32.mrb[0].mxu0
  %4160 = vmatprep.mubr.f32.mxu0 0.0
  %4161 = vmatmul.mubr.f32.gmra.mrb[0].mxu0 %v3868
  %v4162 = vpop.f32.mrb[0].mxu0
  %v4163 = vadd.f32 0.0, %v4162
  %v4164 = vpop.f32.mrb[0].mxu0
  %4165 = vmatprep.mubr.f32.mxu0 0.0
  %4166 = vmatmul.mubr.f32.gmra.mrb[0].mxu0 %v3871
  %v4167 = vpop.f32.mrb[0].mxu0
  %v4168 = vadd.f32 0.0, %v4167
  %v4169 = vpop.f32.mrb[0].mxu0
  %4170 = vmatprep.mubr.f32.mxu0 0.0
  %4171 = vmatmul.mubr.f32.gmra.mrb[0].mxu0 %v3874
  %v4172 = vpop.f32.mrb[0].mxu0
  %v4173 = vadd.f32 0.0, %v4172
  %v4174 = vpop.f32.mrb[0].mxu0
  %4175 = vmatprep.mubr.f32.mxu0 0.0
  %4176 = vmatmul.mubr.f32.gmra.mrb[0].mxu0 %v3877
  %v4177 = vpop.f32.mrb[0].mxu0
  %v4178 = vadd.f32 0.0, %v4177
  %v4179 = vpop.f32.mrb[0].mxu0
  %4180 = vmatprep.mubr.f32.mxu0 0.0
  %4181 = vmatmul.mubr.f32.gmra.mrb[0].mxu0 %v3880
  %v4182 = vpop.f32.mrb[0].mxu0
  %v4183 = vadd.f32 0.0, %v4182
  %v4184 = vpop.f32.mrb[0].mxu0
  %4185 = vmatprep.mubr.f32.mxu0 0.0
  %4186 = vmatmul.mubr.f32.gmra.mrb[0].mxu0 %v3883
  %v4187 = vpop.f32.mrb[0].mxu0
  %v4188 = vadd.f32 0.0, %v4187
  %v4189 = vpop.f32.mrb[0].mxu0
  %4190 = vmatprep.mubr.f32.mxu0 0.0
  %4191 = vmatmul.mubr.f32.gmra.mrb[0].mxu0 %v3886
  %v4192 = vpop.f32.mrb[0].mxu0
  %v4193 = vadd.f32 0.0, %v4192
  %v4194 = vpop.f32.mrb[0].mxu0
  %4195 = vmatprep.mubr.f32.mxu0 0.0
  %4196 = vmatmul.mubr.f32.gmra.mrb[0].mxu0 %v3889
  %v4197 = vpop.f32.mrb[0].mxu0
  %v4198 = vadd.f32 0.0, %v4197
  %v4199 = vpop.f32.mrb[0].mxu0
  %4200 = vmatprep.mubr.f32.mxu0 0.0
  %4201 = vmatmul.mubr.f32.gmra.mrb[0].mxu0 %v3892
  %v4202 = vpop.f32.mrb[0].mxu0
  %v4203 = vadd.f32 0.0, %v4202
  %v4204 = vpop.f32.mrb[0].mxu0
  %4205 = vmatprep.mubr.f32.mxu0 0.0
  %4206 = vmatmul.mubr.f32.gmra.mrb[0].mxu0 %v3895
  %v4207 = vpop.f32.mrb[0].mxu0
  %v4208 = vadd.f32 0.0, %v4207
  %v4209 = vpop.f32.mrb[0].mxu0
  %4210 = vmatprep.mubr.f32.mxu0 0.0
  %4211 = vmatmul.mubr.f32.gmra.mrb[0].mxu0 %v3898
  %v4212 = vpop.f32.mrb[0].mxu0
  %v4213 = vadd.f32 0.0, %v4212
  %v4214 = vpop.f32.mrb[0].mxu0
  %4215 = vmatprep.mubr.f32.mxu0 0.0
  %4216 = vmatmul.mubr.f32.gmra.mrb[0].mxu0 %v3901
  %v4217 = vpop.f32.mrb[0].mxu0
  %v4218 = vadd.f32 0.0, %v4217
  %v4219 = vpop.f32.mrb[0].mxu0
  %4220 = vmatprep.mubr.f32.mxu0 0.0
  %4221 = vmatmul.mubr.f32.gmra.mrb[0].mxu0 %v3904
  %v4222 = vpop.f32.mrb[0].mxu0
  %v4223 = vadd.f32 0.0, %v4222
  %v4224 = vpop.f32.mrb[0].mxu0
  %4225 = vmatprep.mubr.f32.mxu0 0.0
  %4226 = vmatmul.mubr.f32.gmra.mrb[0].mxu0 %v3907
  %v4227 = vpop.f32.mrb[0].mxu0
  %v4228 = vadd.f32 0.0, %v4227
  %v4229 = vpop.f32.mrb[0].mxu0
  %4230 = vmatprep.mubr.f32.mxu0 0.0
  %4231 = vmatmul.mubr.f32.gmra.mrb[0].mxu0 %v3910
  %v4232 = vpop.f32.mrb[0].mxu0
  %v4233 = vadd.f32 0.0, %v4232
  %v4234 = vpop.f32.mrb[0].mxu0
  %4235 = vmatprep.mubr.f32.mxu0 0.0
  %4236 = vmatmul.mubr.f32.gmra.mrb[0].mxu0 %v3913
  %v4237 = vpop.f32.mrb[0].mxu0
  %v4238 = vadd.f32 0.0, %v4237
  %v4239 = vpop.f32.mrb[0].mxu0
  %4240 = vmatprep.mubr.f32.mxu0 0.0
  %4241 = vmatmul.mubr.f32.gmra.mrb[0].mxu0 %v3916
  %v4242 = vpop.f32.mrb[0].mxu0
  %v4243 = vadd.f32 0.0, %v4242
  %v4244 = vpop.f32.mrb[0].mxu0
  %4245 = vmatprep.mubr.f32.mxu0 0.0
  %4246 = vmatmul.mubr.f32.gmra.mrb[0].mxu0 %v3919
  %v4247 = vpop.f32.mrb[0].mxu0
  %v4248 = vadd.f32 0.0, %v4247
  %v4249 = vpop.f32.mrb[0].mxu0
  %4250 = vmatprep.mubr.f32.mxu0 0.0
  %4251 = vmatmul.mubr.f32.gmra.mrb[0].mxu0 %v3922
  %v4252 = vpop.f32.mrb[0].mxu0
  %v4253 = vadd.f32 0.0, %v4252
  %v4254 = vpop.f32.mrb[0].mxu0
  %4255 = vmatprep.mubr.f32.mxu0 0.0
  %4256 = vmatmul.mubr.f32.gmra.mrb[0].mxu0 %v3925
  %v4257 = vpop.f32.mrb[0].mxu0
  %v4258 = vadd.f32 0.0, %v4257
  %v4259 = vpop.f32.mrb[0].mxu0
  %4260 = vmatprep.mubr.f32.mxu0 0.0
  %4261 = vmatmul.mubr.f32.gmra.mrb[0].mxu0 %v3928
  %v4262 = vpop.f32.mrb[0].mxu0
  %v4263 = vadd.f32 0.0, %v4262
  %v4264 = vpop.f32.mrb[0].mxu0
  %4265 = vmatprep.mubr.f32.mxu0 0.0
  %4266 = vmatmul.mubr.f32.gmra.mrb[0].mxu0 %v3931
  %v4267 = vpop.f32.mrb[0].mxu0
  %v4268 = vadd.f32 0.0, %v4267
  %v4269 = vpop.f32.mrb[0].mxu0
  %4270 = vmatprep.mubr.f32.mxu0 0.0
  %4271 = vmatmul.mubr.f32.gmra.mrb[0].mxu0 %v3934
  %v4272 = vpop.f32.mrb[0].mxu0
  %v4273 = vadd.f32 0.0, %v4272
  %v4274 = vpop.f32.mrb[0].mxu0
  %4275 = vmatprep.mubr.f32.mxu0 0.0
  %4276 = vmatmul.mubr.f32.gmra.mrb[0].mxu0 %v3937
  %v4277 = vpop.f32.mrb[0].mxu0
  %v4278 = vadd.f32 0.0, %v4277
  %v4279 = vpop.f32.mrb[0].mxu0
  %4280 = vmatprep.mubr.f32.mxu0 0.0
  %4281 = vmatmul.mubr.f32.gmra.mrb[0].mxu0 %v3940
  %v4282 = vpop.f32.mrb[0].mxu0
  %v4283 = vadd.f32 0.0, %v4282
  %v4284 = vpop.f32.mrb[0].mxu0
  %4285 = vmatprep.mubr.f32.mxu0 0.0
  %4286 = vmatmul.mubr.f32.gmra.mrb[0].mxu0 %v3943
  %v4287 = vpop.f32.mrb[0].mxu0
  %v4288 = vadd.f32 0.0, %v4287
  %v4289 = vpop.f32.mrb[0].mxu0
  %4290 = vmatprep.mubr.f32.mxu0 0.0
  %4291 = vmatmul.mubr.f32.gmra.mrb[0].mxu0 %v3946
  %v4292 = vpop.f32.mrb[0].mxu0
  %v4293 = vadd.f32 0.0, %v4292
  %v4294 = vpop.f32.mrb[0].mxu0
  %4295 = vmatprep.mubr.f32.mxu0 0.0
  %4296 = vmatmul.mubr.f32.gmra.mrb[0].mxu0 %v3949
  %v4297 = vpop.f32.mrb[0].mxu0
  %v4298 = vadd.f32 0.0, %v4297
  %v4299 = vpop.f32.mrb[0].mxu0
  %4300 = vmatprep.mubr.f32.mxu0 0.0
  %4301 = vmatmul.mubr.f32.gmra.mrb[0].mxu0 %v3952
  %v4302 = vpop.f32.mrb[0].mxu0
  %v4303 = vadd.f32 0.0, %v4302
  %v4304 = vpop.f32.mrb[0].mxu0
  %4305 = vmatprep.mubr.f32.mxu0 0.0
  %4306 = vmatmul.mubr.f32.gmra.mrb[0].mxu0 %v3955
  %v4307 = vpop.f32.mrb[0].mxu0
  %v4308 = vadd.f32 0.0, %v4307
  %v4309 = vpop.f32.mrb[0].mxu0
  %4310 = vmatprep.mubr.f32.mxu0 0.0
  %4311 = vmatmul.mubr.f32.gmra.mrb[0].mxu0 %v3958
  %v4312 = vpop.f32.mrb[0].mxu0
  %v4313 = vadd.f32 0.0, %v4312
  %v4314 = vpop.f32.mrb[0].mxu0
  %4315 = vmatprep.mubr.f32.mxu0 0.0
  %4316 = vmatmul.mubr.f32.gmra.mrb[0].mxu0 %v3961
  %v4317 = vpop.f32.mrb[0].mxu0
  %v4318 = vadd.f32 0.0, %v4317
  %v4319 = vpop.f32.mrb[0].mxu0
  %4320 = vmatprep.mubr.f32.mxu0 0.0
  %4321 = vmatmul.mubr.f32.gmra.mrb[0].mxu0 %v3964
  %v4322 = vpop.f32.mrb[0].mxu0
  %v4323 = vadd.f32 0.0, %v4322
  %v4324 = vpop.f32.mrb[0].mxu0
  %4325 = vmatprep.mubr.f32.mxu0 0.0
  %4326 = vmatmul.mubr.f32.gmra.mrb[0].mxu0 %v3967
  %v4327 = vpop.f32.mrb[0].mxu0
  %v4328 = vadd.f32 0.0, %v4327
  %v4329 = vpop.f32.mrb[0].mxu0
  %4330 = vmatprep.mubr.f32.mxu0 0.0
  %4331 = vmatmul.mubr.f32.gmra.mrb[0].mxu0 %v3970
  %v4332 = vpop.f32.mrb[0].mxu0
  %v4333 = vadd.f32 0.0, %v4332
  %v4334 = vpop.f32.mrb[0].mxu0
  %4335 = vmatprep.mubr.f32.mxu0 0.0
  %4336 = vmatmul.mubr.f32.gmra.mrb[0].mxu0 %v3973
  %v4337 = vpop.f32.mrb[0].mxu0
  %v4338 = vadd.f32 0.0, %v4337
  %v4339 = vpop.f32.mrb[0].mxu0
  %4340 = vmatprep.mubr.f32.mxu0 0.0
  %4341 = vmatmul.mubr.f32.gmra.mrb[0].mxu0 %v3976
  %v4342 = vpop.f32.mrb[0].mxu0
  %v4343 = vadd.f32 0.0, %v4342
  %v4344 = vpop.f32.mrb[0].mxu0
  %4345 = vmatprep.mubr.f32.mxu0 0.0
  %4346 = vmatmul.mubr.f32.gmra.mrb[0].mxu0 %v3979
  %v4347 = vpop.f32.mrb[0].mxu0
  %v4348 = vadd.f32 0.0, %v4347
  %v4349 = vpop.f32.mrb[0].mxu0
  %4350 = vmatprep.mubr.f32.mxu0 0.0
  %4351 = vmatmul.mubr.f32.gmra.mrb[0].mxu0 %v3982
  %v4352 = vpop.f32.mrb[0].mxu0
  %v4353 = vadd.f32 0.0, %v4352
  %v4354 = vpop.f32.mrb[0].mxu0
  %4355 = vmatprep.mubr.f32.mxu0 0.0
  %4356 = vmatmul.mubr.f32.gmra.mrb[0].mxu0 %v3985
  %v4357 = vpop.f32.mrb[0].mxu0
  %v4358 = vadd.f32 0.0, %v4357
  %v4359 = vpop.f32.mrb[0].mxu0
  %4360 = vmatprep.mubr.f32.mxu0 0.0
  %4361 = vmatmul.mubr.f32.gmra.mrb[0].mxu0 %v3988
  %v4362 = vpop.f32.mrb[0].mxu0
  %v4363 = vadd.f32 0.0, %v4362
  %v4364 = vpop.f32.mrb[0].mxu0
  %4365 = vmatprep.mubr.f32.mxu0 0.0
  %4366 = vmatmul.mubr.f32.gmra.mrb[0].mxu0 %v3991
  %v4367 = vpop.f32.mrb[0].mxu0
  %v4368 = vadd.f32 0.0, %v4367
  %v4369 = vpop.f32.mrb[0].mxu0
  %4370 = vmatprep.mubr.f32.mxu0 0.0
  %4371 = vmatmul.mubr.f32.gmra.mrb[0].mxu0 %v3994
  %v4372 = vpop.f32.mrb[0].mxu0
  %v4373 = vadd.f32 0.0, %v4372
  %v4374 = vpop.f32.mrb[0].mxu0
  %4375 = vmatprep.mubr.f32.mxu0 0.0
  %4376 = vmatmul.mubr.f32.gmra.mrb[0].mxu0 %v3997
  %v4377 = vpop.f32.mrb[0].mxu0
  %v4378 = vadd.f32 0.0, %v4377
  %v4379 = vpop.f32.mrb[0].mxu0
  %4380 = vmatprep.mubr.f32.mxu0 0.0
  %4381 = vmatmul.mubr.f32.gmra.mrb[0].mxu0 %v4000
  %v4382 = vpop.f32.mrb[0].mxu0
  %v4383 = vadd.f32 0.0, %v4382
  %v4384 = vpop.f32.mrb[0].mxu0
  %4385 = vmatprep.mubr.f32.mxu0 0.0
  %4386 = vmatmul.mubr.f32.gmra.mrb[0].mxu0 %v4003
  %v4387 = vpop.f32.mrb[0].mxu0
  %v4388 = vadd.f32 0.0, %v4387
  %v4389 = vpop.f32.mrb[0].mxu0
  %4390 = vmatprep.mubr.f32.mxu0 0.0
  %4391 = vmatmul.mubr.f32.gmra.mrb[0].mxu0 %v4006
  %v4392 = vpop.f32.mrb[0].mxu0
  %v4393 = vadd.f32 0.0, %v4392
  %v4394 = vpop.f32.mrb[0].mxu0
  %4395 = vdwg.mxu0
  %v4396 = vadd.f32 %v3686, %v4078
  %v4397 = vadd.f32 %v3687, %v4083
  %v4398 = vadd.f32 %v3688, %v4088
  %v4399 = vadd.f32 %v3689, %v4093
  %v4400 = vadd.f32 %v3690, %v4098
  %v4401 = vadd.f32 %v3691, %v4103
  %v4402 = vadd.f32 %v3692, %v4108
  %v4403 = vadd.f32 %v3693, %v4113
  %v4404 = vadd.f32 %v3694, %v4118
  %v4405 = vadd.f32 %v3695, %v4123
  %v4406 = vadd.f32 %v3696, %v4128
  %v4407 = vadd.f32 %v3697, %v4133
  %v4408 = vadd.f32 %v3698, %v4138
  %v4409 = vadd.f32 %v3699, %v4143
  %v4410 = vadd.f32 %v3700, %v4148
  %v4411 = vadd.f32 %v3701, %v4153
  %v4412 = vadd.f32 %v3702, %v4158
  %v4413 = vadd.f32 %v3703, %v4163
  %v4414 = vadd.f32 %v3704, %v4168
  %v4415 = vadd.f32 %v3705, %v4173
  %v4416 = vadd.f32 %v3706, %v4178
  %v4417 = vadd.f32 %v3707, %v4183
  %v4418 = vadd.f32 %v3708, %v4188
  %v4419 = vadd.f32 %v3709, %v4193
  %v4420 = vadd.f32 %v3710, %v4198
  %v4421 = vadd.f32 %v3711, %v4203
  %v4422 = vadd.f32 %v3712, %v4208
  %v4423 = vadd.f32 %v3713, %v4213
  %v4424 = vadd.f32 %v3714, %v4218
  %v4425 = vadd.f32 %v3715, %v4223
  %v4426 = vadd.f32 %v3716, %v4228
  %v4427 = vadd.f32 %v3717, %v4233
  %v4428 = vadd.f32 %v3718, %v4238
  %v4429 = vadd.f32 %v3719, %v4243
  %v4430 = vadd.f32 %v3720, %v4248
  %v4431 = vadd.f32 %v3721, %v4253
  %v4432 = vadd.f32 %v3722, %v4258
  %v4433 = vadd.f32 %v3723, %v4263
  %v4434 = vadd.f32 %v3724, %v4268
  %v4435 = vadd.f32 %v3725, %v4273
  %v4436 = vadd.f32 %v3726, %v4278
  %v4437 = vadd.f32 %v3727, %v4283
  %v4438 = vadd.f32 %v3728, %v4288
  %v4439 = vadd.f32 %v3729, %v4293
  %v4440 = vadd.f32 %v3730, %v4298
  %v4441 = vadd.f32 %v3731, %v4303
  %v4442 = vadd.f32 %v3732, %v4308
  %v4443 = vadd.f32 %v3733, %v4313
  %v4444 = vadd.f32 %v3734, %v4318
  %v4445 = vadd.f32 %v3735, %v4323
  %v4446 = vadd.f32 %v3736, %v4328
  %v4447 = vadd.f32 %v3737, %v4333
  %v4448 = vadd.f32 %v3738, %v4338
  %v4449 = vadd.f32 %v3739, %v4343
  %v4450 = vadd.f32 %v3740, %v4348
  %v4451 = vadd.f32 %v3741, %v4353
  %v4452 = vadd.f32 %v3742, %v4358
  %v4453 = vadd.f32 %v3743, %v4363
  %v4454 = vadd.f32 %v3744, %v4368
  %v4455 = vadd.f32 %v3745, %v4373
  %v4456 = vadd.f32 %v3746, %v4378
  %v4457 = vadd.f32 %v3747, %v4383
  %v4458 = vadd.f32 %v3748, %v4388
  %v4459 = vadd.f32 %v3749, %v4393
  %s4460 = scalar_lea.vmem [#allocation2], 48
  %v4461 = vld [vmem:[%s4460] sm:$0xff]
  %v4462 = vld [vmem:[%s4460 + $0x8] sm:$0xff]
  %v4463 = vld [vmem:[%s4460 + $0x18] sm:$0xff]
  %v4464 = vld [vmem:[%s4460 + $0x20] sm:$0xff]
  %v4465 = vld [vmem:[%s4460 + $0x30] sm:$0xff]
  %v4466 = vld [vmem:[%s4460 + $0x38] sm:$0xff]
  %v4467 = vld [vmem:[%s4460 + $0x48] sm:$0xff]
  %v4468 = vld [vmem:[%s4460 + $0x50] sm:$0xff]
  %v4469 = vld [vmem:[%s4460 + $0x60] sm:$0xff]
  %v4470 = vld [vmem:[%s4460 + $0x68] sm:$0xff]
  %v4471 = vld [vmem:[%s4460 + $0x78] sm:$0xff]
  %v4472 = vld [vmem:[%s4460 + $0x80] sm:$0xff]
  %v4473 = vld [vmem:[%s4460 + $0x90] sm:$0xff]
  %v4474 = vld [vmem:[%s4460 + $0x98] sm:$0xff]
  %v4475 = vld [vmem:[%s4460 + $0xa8] sm:$0xff]
  %v4476 = vld [vmem:[%s4460 + $0xb0] sm:$0xff]
  %v4477 = vld [vmem:[%s4460 + $0xc0] sm:$0xff]
  %v4478 = vld [vmem:[%s4460 + $0xc8] sm:$0xff]
  %v4479 = vld [vmem:[%s4460 + $0xd8] sm:$0xff]
  %v4480 = vld [vmem:[%s4460 + $0xe0] sm:$0xff]
  %v4481 = vld [vmem:[%s4460 + $0xf0] sm:$0xff]
  %v4482 = vld [vmem:[%s4460 + $0xf8] sm:$0xff]
  %v4483 = vld [vmem:[%s4460 + $0x108] sm:$0xff]
  %v4484 = vld [vmem:[%s4460 + $0x110] sm:$0xff]
  %v4485 = vld [vmem:[%s4460 + $0x120] sm:$0xff]
  %v4486 = vld [vmem:[%s4460 + $0x128] sm:$0xff]
  %v4487 = vld [vmem:[%s4460 + $0x138] sm:$0xff]
  %v4488 = vld [vmem:[%s4460 + $0x140] sm:$0xff]
  %v4489 = vld [vmem:[%s4460 + $0x150] sm:$0xff]
  %v4490 = vld [vmem:[%s4460 + $0x158] sm:$0xff]
  %v4491 = vld [vmem:[%s4460 + $0x168] sm:$0xff]
  %v4492 = vld [vmem:[%s4460 + $0x170] sm:$0xff]
  %v4493 = vld [vmem:[%s4460 + $0x1b0] sm:$0xff]
  %v4494 = vld [vmem:[%s4460 + $0x1b8] sm:$0xff]
  %v4495 = vld [vmem:[%s4460 + $0x1c8] sm:$0xff]
  %v4496 = vld [vmem:[%s4460 + $0x1d0] sm:$0xff]
  %v4497 = vld [vmem:[%s4460 + $0x1e0] sm:$0xff]
  %v4498 = vld [vmem:[%s4460 + $0x1e8] sm:$0xff]
  %v4499 = vld [vmem:[%s4460 + $0x1f8] sm:$0xff]
  %v4500 = vld [vmem:[%s4460 + $0x200] sm:$0xff]
  %v4501 = vld [vmem:[%s4460 + $0x210] sm:$0xff]
  %v4502 = vld [vmem:[%s4460 + $0x218] sm:$0xff]
  %v4503 = vld [vmem:[%s4460 + $0x228] sm:$0xff]
  %v4504 = vld [vmem:[%s4460 + $0x230] sm:$0xff]
  %v4505 = vld [vmem:[%s4460 + $0x240] sm:$0xff]
  %v4506 = vld [vmem:[%s4460 + $0x248] sm:$0xff]
  %v4507 = vld [vmem:[%s4460 + $0x258] sm:$0xff]
  %v4508 = vld [vmem:[%s4460 + $0x260] sm:$0xff]
  %v4509 = vld [vmem:[%s4460 + $0x270] sm:$0xff]
  %v4510 = vld [vmem:[%s4460 + $0x278] sm:$0xff]
  %v4511 = vld [vmem:[%s4460 + $0x288] sm:$0xff]
  %v4512 = vld [vmem:[%s4460 + $0x290] sm:$0xff]
  %v4513 = vld [vmem:[%s4460 + $0x2a0] sm:$0xff]
  %v4514 = vld [vmem:[%s4460 + $0x2a8] sm:$0xff]
  %v4515 = vld [vmem:[%s4460 + $0x2b8] sm:$0xff]
  %v4516 = vld [vmem:[%s4460 + $0x2c0] sm:$0xff]
  %v4517 = vld [vmem:[%s4460 + $0x2d0] sm:$0xff]
  %v4518 = vld [vmem:[%s4460 + $0x2d8] sm:$0xff]
  %v4519 = vld [vmem:[%s4460 + $0x2e8] sm:$0xff]
  %v4520 = vld [vmem:[%s4460 + $0x2f0] sm:$0xff]
  %v4521 = vld [vmem:[%s4460 + $0x300] sm:$0xff]
  %v4522 = vld [vmem:[%s4460 + $0x308] sm:$0xff]
  %v4523 = vld [vmem:[%s4460 + $0x318] sm:$0xff]
  %v4524 = vld [vmem:[%s4460 + $0x320] sm:$0xff]
  %s4525 = scalar_lea.vmem %s1, 24
  %v4526 = vld [vmem:[%s4525] sm:$0xf]
  %v4528 = vsel %vm26, %v4461, 0
  %v4531 = vsel %vm26, %v4462, 0
  %v4534 = vsel %vm26, %v4463, 0
  %v4537 = vsel %vm26, %v4464, 0
  %v4540 = vsel %vm26, %v4465, 0
  %v4543 = vsel %vm26, %v4466, 0
  %v4546 = vsel %vm26, %v4467, 0
  %v4549 = vsel %vm26, %v4468, 0
  %v4552 = vsel %vm26, %v4469, 0
  %v4555 = vsel %vm26, %v4470, 0
  %v4558 = vsel %vm26, %v4471, 0
  %v4561 = vsel %vm26, %v4472, 0
  %v4564 = vsel %vm26, %v4473, 0
  %v4567 = vsel %vm26, %v4474, 0
  %v4570 = vsel %vm26, %v4475, 0
  %v4573 = vsel %vm26, %v4476, 0
  %v4576 = vsel %vm26, %v4477, 0
  %v4579 = vsel %vm26, %v4478, 0
  %v4582 = vsel %vm26, %v4479, 0
  %v4585 = vsel %vm26, %v4480, 0
  %v4588 = vsel %vm26, %v4481, 0
  %v4591 = vsel %vm26, %v4482, 0
  %v4594 = vsel %vm26, %v4483, 0
  %v4597 = vsel %vm26, %v4484, 0
  %v4600 = vsel %vm26, %v4485, 0
  %v4603 = vsel %vm26, %v4486, 0
  %v4606 = vsel %vm26, %v4487, 0
  %v4609 = vsel %vm26, %v4488, 0
  %v4612 = vsel %vm26, %v4489, 0
  %v4615 = vsel %vm26, %v4490, 0
  %v4618 = vsel %vm26, %v4491, 0
  %v4621 = vsel %vm26, %v4492, 0
  %v4624 = vsel %vm26, %v4493, 0
  %v4627 = vsel %vm26, %v4494, 0
  %v4630 = vsel %vm26, %v4495, 0
  %v4633 = vsel %vm26, %v4496, 0
  %v4636 = vsel %vm26, %v4497, 0
  %v4639 = vsel %vm26, %v4498, 0
  %v4642 = vsel %vm26, %v4499, 0
  %v4645 = vsel %vm26, %v4500, 0
  %v4648 = vsel %vm26, %v4501, 0
  %v4651 = vsel %vm26, %v4502, 0
  %v4654 = vsel %vm26, %v4503, 0
  %v4657 = vsel %vm26, %v4504, 0
  %v4660 = vsel %vm26, %v4505, 0
  %v4663 = vsel %vm26, %v4506, 0
  %v4666 = vsel %vm26, %v4507, 0
  %v4669 = vsel %vm26, %v4508, 0
  %v4672 = vsel %vm26, %v4509, 0
  %v4675 = vsel %vm26, %v4510, 0
  %v4678 = vsel %vm26, %v4511, 0
  %v4681 = vsel %vm26, %v4512, 0
  %v4684 = vsel %vm26, %v4513, 0
  %v4687 = vsel %vm26, %v4514, 0
  %v4690 = vsel %vm26, %v4515, 0
  %v4693 = vsel %vm26, %v4516, 0
  %v4696 = vsel %vm26, %v4517, 0
  %v4699 = vsel %vm26, %v4518, 0
  %v4702 = vsel %vm26, %v4519, 0
  %v4705 = vsel %vm26, %v4520, 0
  %v4708 = vsel %vm26, %v4521, 0
  %v4711 = vsel %vm26, %v4522, 0
  %v4714 = vsel %vm26, %v4523, 0
  %v4717 = vsel %vm26, %v4524, 0
  %v4720 = vsel %vm651, %v4526, 0
  %4722 = vmatprep.subr.mxu0 0.0
  %4723 = vmatpush1.msra.mxu0 %v4720
  %4724 = vmatprep.subr.mxu0 0.0
  %4725 = vmatpush1.msra.mxu0 0.0
  %4726 = vmatprep.subr.mxu0 0.0
  %4727 = vmatpush1.msra.mxu0 0.0
  %4728 = vmatprep.subr.mxu0 0.0
  %4729 = vmatpush1.msra.mxu0 0.0
  %4730 = vmatprep.subr.mxu0 0.0
  %4731 = vmatpush1.msra.mxu0 0.0
  %4732 = vmatprep.subr.mxu0 0.0
  %4733 = vmatpush1.msra.mxu0 0.0
  %4734 = vmatprep.subr.mxu0 0.0
  %4735 = vmatpush1.msra.mxu0 0.0
  %4736 = vmatprep.subr.mxu0 0.0
  %4737 = vmatpush1.msra.mxu0 0.0
  %4738 = vmatprep.subr.mxu0 0.0
  %4739 = vmatpush1.msra.mxu0 0.0
  %4740 = vmatprep.subr.mxu0 0.0
  %4741 = vmatpush1.msra.mxu0 0.0
  %4742 = vmatprep.subr.mxu0 0.0
  %4743 = vmatpush1.msra.mxu0 0.0
  %4744 = vmatprep.subr.mxu0 0.0
  %4745 = vmatpush1.msra.mxu0 0.0
  %4746 = vmatprep.subr.mxu0 0.0
  %4747 = vmatpush1.msra.mxu0 0.0
  %4748 = vmatprep.subr.mxu0 0.0
  %4749 = vmatpush1.msra.mxu0 0.0
  %4750 = vmatprep.subr.mxu0 0.0
  %4751 = vmatpush1.msra.mxu0 0.0
  %4752 = vmatprep.subr.mxu0 0.0
  %4753 = vmatpush1.msra.mxu0 0.0
  %4754 = vmatprep.subr.mxu0 0.0
  %4755 = vmatpush1.msra.mxu0 0.0
  %4756 = vmatprep.subr.mxu0 0.0
  %4757 = vmatpush1.msra.mxu0 0.0
  %4758 = vmatprep.subr.mxu0 0.0
  %4759 = vmatpush1.msra.mxu0 0.0
  %4760 = vmatprep.subr.mxu0 0.0
  %4761 = vmatpush1.msra.mxu0 0.0
  %4762 = vmatprep.subr.mxu0 0.0
  %4763 = vmatpush1.msra.mxu0 0.0
  %4764 = vmatprep.subr.mxu0 0.0
  %4765 = vmatpush1.msra.mxu0 0.0
  %4766 = vmatprep.subr.mxu0 0.0
  %4767 = vmatpush1.msra.mxu0 0.0
  %4768 = vmatprep.subr.mxu0 0.0
  %4769 = vmatpush1.msra.mxu0 0.0
  %4770 = vmatprep.subr.mxu0 0.0
  %4771 = vmatpush1.msra.mxu0 0.0
  %4772 = vmatprep.subr.mxu0 0.0
  %4773 = vmatpush1.msra.mxu0 0.0
  %4774 = vmatprep.subr.mxu0 0.0
  %4775 = vmatpush1.msra.mxu0 0.0
  %4776 = vmatprep.subr.mxu0 0.0
  %4777 = vmatpush1.msra.mxu0 0.0
  %4778 = vmatprep.subr.mxu0 0.0
  %4779 = vmatpush1.msra.mxu0 0.0
  %4780 = vmatprep.subr.mxu0 0.0
  %4781 = vmatpush1.msra.mxu0 0.0
  %4782 = vmatprep.subr.mxu0 0.0
  %4783 = vmatpush1.msra.mxu0 0.0
  %4784 = vmatprep.subr.mxu0 0.0
  %4785 = vmatpush1.msra.mxu0 0.0
  %4786 = vmatprep.mubr.f32.mxu0 0.0
  %4787 = vmatmul.mubr.f32.gmra.mrb[0].mxu0 %v4528
  %v4788 = vpop.f32.mrb[0].mxu0
  %v4789 = vadd.f32 0.0, %v4788
  %v4790 = vpop.f32.mrb[0].mxu0
  %4791 = vmatprep.mubr.f32.mxu0 0.0
  %4792 = vmatmul.mubr.f32.gmra.mrb[0].mxu0 %v4531
  %v4793 = vpop.f32.mrb[0].mxu0
  %v4794 = vadd.f32 0.0, %v4793
  %v4795 = vpop.f32.mrb[0].mxu0
  %4796 = vmatprep.mubr.f32.mxu0 0.0
  %4797 = vmatmul.mubr.f32.gmra.mrb[0].mxu0 %v4534
  %v4798 = vpop.f32.mrb[0].mxu0
  %v4799 = vadd.f32 0.0, %v4798
  %v4800 = vpop.f32.mrb[0].mxu0
  %4801 = vmatprep.mubr.f32.mxu0 0.0
  %4802 = vmatmul.mubr.f32.gmra.mrb[0].mxu0 %v4537
  %v4803 = vpop.f32.mrb[0].mxu0
  %v4804 = vadd.f32 0.0, %v4803
  %v4805 = vpop.f32.mrb[0].mxu0
  %4806 = vmatprep.mubr.f32.mxu0 0.0
  %4807 = vmatmul.mubr.f32.gmra.mrb[0].mxu0 %v4540
  %v4808 = vpop.f32.mrb[0].mxu0
  %v4809 = vadd.f32 0.0, %v4808
  %v4810 = vpop.f32.mrb[0].mxu0
  %4811 = vmatprep.mubr.f32.mxu0 0.0
  %4812 = vmatmul.mubr.f32.gmra.mrb[0].mxu0 %v4543
  %v4813 = vpop.f32.mrb[0].mxu0
  %v4814 = vadd.f32 0.0, %v4813
  %v4815 = vpop.f32.mrb[0].mxu0
  %4816 = vmatprep.mubr.f32.mxu0 0.0
  %4817 = vmatmul.mubr.f32.gmra.mrb[0].mxu0 %v4546
  %v4818 = vpop.f32.mrb[0].mxu0
  %v4819 = vadd.f32 0.0, %v4818
  %v4820 = vpop.f32.mrb[0].mxu0
  %4821 = vmatprep.mubr.f32.mxu0 0.0
  %4822 = vmatmul.mubr.f32.gmra.mrb[0].mxu0 %v4549
  %v4823 = vpop.f32.mrb[0].mxu0
  %v4824 = vadd.f32 0.0, %v4823
  %v4825 = vpop.f32.mrb[0].mxu0
  %4826 = vmatprep.mubr.f32.mxu0 0.0
  %4827 = vmatmul.mubr.f32.gmra.mrb[0].mxu0 %v4552
  %v4828 = vpop.f32.mrb[0].mxu0
  %v4829 = vadd.f32 0.0, %v4828
  %v4830 = vpop.f32.mrb[0].mxu0
  %4831 = vmatprep.mubr.f32.mxu0 0.0
  %4832 = vmatmul.mubr.f32.gmra.mrb[0].mxu0 %v4555
  %v4833 = vpop.f32.mrb[0].mxu0
  %v4834 = vadd.f32 0.0, %v4833
  %v4835 = vpop.f32.mrb[0].mxu0
  %4836 = vmatprep.mubr.f32.mxu0 0.0
  %4837 = vmatmul.mubr.f32.gmra.mrb[0].mxu0 %v4558
  %v4838 = vpop.f32.mrb[0].mxu0
  %v4839 = vadd.f32 0.0, %v4838
  %v4840 = vpop.f32.mrb[0].mxu0
  %4841 = vmatprep.mubr.f32.mxu0 0.0
  %4842 = vmatmul.mubr.f32.gmra.mrb[0].mxu0 %v4561
  %v4843 = vpop.f32.mrb[0].mxu0
  %v4844 = vadd.f32 0.0, %v4843
  %v4845 = vpop.f32.mrb[0].mxu0
  %4846 = vmatprep.mubr.f32.mxu0 0.0
  %4847 = vmatmul.mubr.f32.gmra.mrb[0].mxu0 %v4564
  %v4848 = vpop.f32.mrb[0].mxu0
  %v4849 = vadd.f32 0.0, %v4848
  %v4850 = vpop.f32.mrb[0].mxu0
  %4851 = vmatprep.mubr.f32.mxu0 0.0
  %4852 = vmatmul.mubr.f32.gmra.mrb[0].mxu0 %v4567
  %v4853 = vpop.f32.mrb[0].mxu0
  %v4854 = vadd.f32 0.0, %v4853
  %v4855 = vpop.f32.mrb[0].mxu0
  %4856 = vmatprep.mubr.f32.mxu0 0.0
  %4857 = vmatmul.mubr.f32.gmra.mrb[0].mxu0 %v4570
  %v4858 = vpop.f32.mrb[0].mxu0
  %v4859 = vadd.f32 0.0, %v4858
  %v4860 = vpop.f32.mrb[0].mxu0
  %4861 = vmatprep.mubr.f32.mxu0 0.0
  %4862 = vmatmul.mubr.f32.gmra.mrb[0].mxu0 %v4573
  %v4863 = vpop.f32.mrb[0].mxu0
  %v4864 = vadd.f32 0.0, %v4863
  %v4865 = vpop.f32.mrb[0].mxu0
  %4866 = vmatprep.mubr.f32.mxu0 0.0
  %4867 = vmatmul.mubr.f32.gmra.mrb[0].mxu0 %v4576
  %v4868 = vpop.f32.mrb[0].mxu0
  %v4869 = vadd.f32 0.0, %v4868
  %v4870 = vpop.f32.mrb[0].mxu0
  %4871 = vmatprep.mubr.f32.mxu0 0.0
  %4872 = vmatmul.mubr.f32.gmra.mrb[0].mxu0 %v4579
  %v4873 = vpop.f32.mrb[0].mxu0
  %v4874 = vadd.f32 0.0, %v4873
  %v4875 = vpop.f32.mrb[0].mxu0
  %4876 = vmatprep.mubr.f32.mxu0 0.0
  %4877 = vmatmul.mubr.f32.gmra.mrb[0].mxu0 %v4582
  %v4878 = vpop.f32.mrb[0].mxu0
  %v4879 = vadd.f32 0.0, %v4878
  %v4880 = vpop.f32.mrb[0].mxu0
  %4881 = vmatprep.mubr.f32.mxu0 0.0
  %4882 = vmatmul.mubr.f32.gmra.mrb[0].mxu0 %v4585
  %v4883 = vpop.f32.mrb[0].mxu0
  %v4884 = vadd.f32 0.0, %v4883
  %v4885 = vpop.f32.mrb[0].mxu0
  %4886 = vmatprep.mubr.f32.mxu0 0.0
  %4887 = vmatmul.mubr.f32.gmra.mrb[0].mxu0 %v4588
  %v4888 = vpop.f32.mrb[0].mxu0
  %v4889 = vadd.f32 0.0, %v4888
  %v4890 = vpop.f32.mrb[0].mxu0
  %4891 = vmatprep.mubr.f32.mxu0 0.0
  %4892 = vmatmul.mubr.f32.gmra.mrb[0].mxu0 %v4591
  %v4893 = vpop.f32.mrb[0].mxu0
  %v4894 = vadd.f32 0.0, %v4893
  %v4895 = vpop.f32.mrb[0].mxu0
  %4896 = vmatprep.mubr.f32.mxu0 0.0
  %4897 = vmatmul.mubr.f32.gmra.mrb[0].mxu0 %v4594
  %v4898 = vpop.f32.mrb[0].mxu0
  %v4899 = vadd.f32 0.0, %v4898
  %v4900 = vpop.f32.mrb[0].mxu0
  %4901 = vmatprep.mubr.f32.mxu0 0.0
  %4902 = vmatmul.mubr.f32.gmra.mrb[0].mxu0 %v4597
  %v4903 = vpop.f32.mrb[0].mxu0
  %v4904 = vadd.f32 0.0, %v4903
  %v4905 = vpop.f32.mrb[0].mxu0
  %4906 = vmatprep.mubr.f32.mxu0 0.0
  %4907 = vmatmul.mubr.f32.gmra.mrb[0].mxu0 %v4600
  %v4908 = vpop.f32.mrb[0].mxu0
  %v4909 = vadd.f32 0.0, %v4908
  %v4910 = vpop.f32.mrb[0].mxu0
  %4911 = vmatprep.mubr.f32.mxu0 0.0
  %4912 = vmatmul.mubr.f32.gmra.mrb[0].mxu0 %v4603
  %v4913 = vpop.f32.mrb[0].mxu0
  %v4914 = vadd.f32 0.0, %v4913
  %v4915 = vpop.f32.mrb[0].mxu0
  %4916 = vmatprep.mubr.f32.mxu0 0.0
  %4917 = vmatmul.mubr.f32.gmra.mrb[0].mxu0 %v4606
  %v4918 = vpop.f32.mrb[0].mxu0
  %v4919 = vadd.f32 0.0, %v4918
  %v4920 = vpop.f32.mrb[0].mxu0
  %4921 = vmatprep.mubr.f32.mxu0 0.0
  %4922 = vmatmul.mubr.f32.gmra.mrb[0].mxu0 %v4609
  %v4923 = vpop.f32.mrb[0].mxu0
  %v4924 = vadd.f32 0.0, %v4923
  %v4925 = vpop.f32.mrb[0].mxu0
  %4926 = vmatprep.mubr.f32.mxu0 0.0
  %4927 = vmatmul.mubr.f32.gmra.mrb[0].mxu0 %v4612
  %v4928 = vpop.f32.mrb[0].mxu0
  %v4929 = vadd.f32 0.0, %v4928
  %v4930 = vpop.f32.mrb[0].mxu0
  %4931 = vmatprep.mubr.f32.mxu0 0.0
  %4932 = vmatmul.mubr.f32.gmra.mrb[0].mxu0 %v4615
  %v4933 = vpop.f32.mrb[0].mxu0
  %v4934 = vadd.f32 0.0, %v4933
  %v4935 = vpop.f32.mrb[0].mxu0
  %4936 = vmatprep.mubr.f32.mxu0 0.0
  %4937 = vmatmul.mubr.f32.gmra.mrb[0].mxu0 %v4618
  %v4938 = vpop.f32.mrb[0].mxu0
  %v4939 = vadd.f32 0.0, %v4938
  %v4940 = vpop.f32.mrb[0].mxu0
  %4941 = vmatprep.mubr.f32.mxu0 0.0
  %4942 = vmatmul.mubr.f32.gmra.mrb[0].mxu0 %v4621
  %v4943 = vpop.f32.mrb[0].mxu0
  %v4944 = vadd.f32 0.0, %v4943
  %v4945 = vpop.f32.mrb[0].mxu0
  %4946 = vmatprep.mubr.f32.mxu0 0.0
  %4947 = vmatmul.mubr.f32.gmra.mrb[0].mxu0 %v4624
  %v4948 = vpop.f32.mrb[0].mxu0
  %v4949 = vadd.f32 0.0, %v4948
  %v4950 = vpop.f32.mrb[0].mxu0
  %4951 = vmatprep.mubr.f32.mxu0 0.0
  %4952 = vmatmul.mubr.f32.gmra.mrb[0].mxu0 %v4627
  %v4953 = vpop.f32.mrb[0].mxu0
  %v4954 = vadd.f32 0.0, %v4953
  %v4955 = vpop.f32.mrb[0].mxu0
  %4956 = vmatprep.mubr.f32.mxu0 0.0
  %4957 = vmatmul.mubr.f32.gmra.mrb[0].mxu0 %v4630
  %v4958 = vpop.f32.mrb[0].mxu0
  %v4959 = vadd.f32 0.0, %v4958
  %v4960 = vpop.f32.mrb[0].mxu0
  %4961 = vmatprep.mubr.f32.mxu0 0.0
  %4962 = vmatmul.mubr.f32.gmra.mrb[0].mxu0 %v4633
  %v4963 = vpop.f32.mrb[0].mxu0
  %v4964 = vadd.f32 0.0, %v4963
  %v4965 = vpop.f32.mrb[0].mxu0
  %4966 = vmatprep.mubr.f32.mxu0 0.0
  %4967 = vmatmul.mubr.f32.gmra.mrb[0].mxu0 %v4636
  %v4968 = vpop.f32.mrb[0].mxu0
  %v4969 = vadd.f32 0.0, %v4968
  %v4970 = vpop.f32.mrb[0].mxu0
  %4971 = vmatprep.mubr.f32.mxu0 0.0
  %4972 = vmatmul.mubr.f32.gmra.mrb[0].mxu0 %v4639
  %v4973 = vpop.f32.mrb[0].mxu0
  %v4974 = vadd.f32 0.0, %v4973
  %v4975 = vpop.f32.mrb[0].mxu0
  %4976 = vmatprep.mubr.f32.mxu0 0.0
  %4977 = vmatmul.mubr.f32.gmra.mrb[0].mxu0 %v4642
  %v4978 = vpop.f32.mrb[0].mxu0
  %v4979 = vadd.f32 0.0, %v4978
  %v4980 = vpop.f32.mrb[0].mxu0
  %4981 = vmatprep.mubr.f32.mxu0 0.0
  %4982 = vmatmul.mubr.f32.gmra.mrb[0].mxu0 %v4645
  %v4983 = vpop.f32.mrb[0].mxu0
  %v4984 = vadd.f32 0.0, %v4983
  %v4985 = vpop.f32.mrb[0].mxu0
  %4986 = vmatprep.mubr.f32.mxu0 0.0
  %4987 = vmatmul.mubr.f32.gmra.mrb[0].mxu0 %v4648
  %v4988 = vpop.f32.mrb[0].mxu0
  %v4989 = vadd.f32 0.0, %v4988
  %v4990 = vpop.f32.mrb[0].mxu0
  %4991 = vmatprep.mubr.f32.mxu0 0.0
  %4992 = vmatmul.mubr.f32.gmra.mrb[0].mxu0 %v4651
  %v4993 = vpop.f32.mrb[0].mxu0
  %v4994 = vadd.f32 0.0, %v4993
  %v4995 = vpop.f32.mrb[0].mxu0
  %4996 = vmatprep.mubr.f32.mxu0 0.0
  %4997 = vmatmul.mubr.f32.gmra.mrb[0].mxu0 %v4654
  %v4998 = vpop.f32.mrb[0].mxu0
  %v4999 = vadd.f32 0.0, %v4998
  %v5000 = vpop.f32.mrb[0].mxu0
  %5001 = vmatprep.mubr.f32.mxu0 0.0
  %5002 = vmatmul.mubr.f32.gmra.mrb[0].mxu0 %v4657
  %v5003 = vpop.f32.mrb[0].mxu0
  %v5004 = vadd.f32 0.0, %v5003
  %v5005 = vpop.f32.mrb[0].mxu0
  %5006 = vmatprep.mubr.f32.mxu0 0.0
  %5007 = vmatmul.mubr.f32.gmra.mrb[0].mxu0 %v4660
  %v5008 = vpop.f32.mrb[0].mxu0
  %v5009 = vadd.f32 0.0, %v5008
  %v5010 = vpop.f32.mrb[0].mxu0
  %5011 = vmatprep.mubr.f32.mxu0 0.0
  %5012 = vmatmul.mubr.f32.gmra.mrb[0].mxu0 %v4663
  %v5013 = vpop.f32.mrb[0].mxu0
  %v5014 = vadd.f32 0.0, %v5013
  %v5015 = vpop.f32.mrb[0].mxu0
  %5016 = vmatprep.mubr.f32.mxu0 0.0
  %5017 = vmatmul.mubr.f32.gmra.mrb[0].mxu0 %v4666
  %v5018 = vpop.f32.mrb[0].mxu0
  %v5019 = vadd.f32 0.0, %v5018
  %v5020 = vpop.f32.mrb[0].mxu0
  %5021 = vmatprep.mubr.f32.mxu0 0.0
  %5022 = vmatmul.mubr.f32.gmra.mrb[0].mxu0 %v4669
  %v5023 = vpop.f32.mrb[0].mxu0
  %v5024 = vadd.f32 0.0, %v5023
  %v5025 = vpop.f32.mrb[0].mxu0
  %5026 = vmatprep.mubr.f32.mxu0 0.0
  %5027 = vmatmul.mubr.f32.gmra.mrb[0].mxu0 %v4672
  %v5028 = vpop.f32.mrb[0].mxu0
  %v5029 = vadd.f32 0.0, %v5028
  %v5030 = vpop.f32.mrb[0].mxu0
  %5031 = vmatprep.mubr.f32.mxu0 0.0
  %5032 = vmatmul.mubr.f32.gmra.mrb[0].mxu0 %v4675
  %v5033 = vpop.f32.mrb[0].mxu0
  %v5034 = vadd.f32 0.0, %v5033
  %v5035 = vpop.f32.mrb[0].mxu0
  %5036 = vmatprep.mubr.f32.mxu0 0.0
  %5037 = vmatmul.mubr.f32.gmra.mrb[0].mxu0 %v4678
  %v5038 = vpop.f32.mrb[0].mxu0
  %v5039 = vadd.f32 0.0, %v5038
  %v5040 = vpop.f32.mrb[0].mxu0
  %5041 = vmatprep.mubr.f32.mxu0 0.0
  %5042 = vmatmul.mubr.f32.gmra.mrb[0].mxu0 %v4681
  %v5043 = vpop.f32.mrb[0].mxu0
  %v5044 = vadd.f32 0.0, %v5043
  %v5045 = vpop.f32.mrb[0].mxu0
  %5046 = vmatprep.mubr.f32.mxu0 0.0
  %5047 = vmatmul.mubr.f32.gmra.mrb[0].mxu0 %v4684
  %v5048 = vpop.f32.mrb[0].mxu0
  %v5049 = vadd.f32 0.0, %v5048
  %v5050 = vpop.f32.mrb[0].mxu0
  %5051 = vmatprep.mubr.f32.mxu0 0.0
  %5052 = vmatmul.mubr.f32.gmra.mrb[0].mxu0 %v4687
  %v5053 = vpop.f32.mrb[0].mxu0
  %v5054 = vadd.f32 0.0, %v5053
  %v5055 = vpop.f32.mrb[0].mxu0
  %5056 = vmatprep.mubr.f32.mxu0 0.0
  %5057 = vmatmul.mubr.f32.gmra.mrb[0].mxu0 %v4690
  %v5058 = vpop.f32.mrb[0].mxu0
  %v5059 = vadd.f32 0.0, %v5058
  %v5060 = vpop.f32.mrb[0].mxu0
  %5061 = vmatprep.mubr.f32.mxu0 0.0
  %5062 = vmatmul.mubr.f32.gmra.mrb[0].mxu0 %v4693
  %v5063 = vpop.f32.mrb[0].mxu0
  %v5064 = vadd.f32 0.0, %v5063
  %v5065 = vpop.f32.mrb[0].mxu0
  %5066 = vmatprep.mubr.f32.mxu0 0.0
  %5067 = vmatmul.mubr.f32.gmra.mrb[0].mxu0 %v4696
  %v5068 = vpop.f32.mrb[0].mxu0
  %v5069 = vadd.f32 0.0, %v5068
  %v5070 = vpop.f32.mrb[0].mxu0
  %5071 = vmatprep.mubr.f32.mxu0 0.0
  %5072 = vmatmul.mubr.f32.gmra.mrb[0].mxu0 %v4699
  %v5073 = vpop.f32.mrb[0].mxu0
  %v5074 = vadd.f32 0.0, %v5073
  %v5075 = vpop.f32.mrb[0].mxu0
  %5076 = vmatprep.mubr.f32.mxu0 0.0
  %5077 = vmatmul.mubr.f32.gmra.mrb[0].mxu0 %v4702
  %v5078 = vpop.f32.mrb[0].mxu0
  %v5079 = vadd.f32 0.0, %v5078
  %v5080 = vpop.f32.mrb[0].mxu0
  %5081 = vmatprep.mubr.f32.mxu0 0.0
  %5082 = vmatmul.mubr.f32.gmra.mrb[0].mxu0 %v4705
  %v5083 = vpop.f32.mrb[0].mxu0
  %v5084 = vadd.f32 0.0, %v5083
  %v5085 = vpop.f32.mrb[0].mxu0
  %5086 = vmatprep.mubr.f32.mxu0 0.0
  %5087 = vmatmul.mubr.f32.gmra.mrb[0].mxu0 %v4708
  %v5088 = vpop.f32.mrb[0].mxu0
  %v5089 = vadd.f32 0.0, %v5088
  %v5090 = vpop.f32.mrb[0].mxu0
  %5091 = vmatprep.mubr.f32.mxu0 0.0
  %5092 = vmatmul.mubr.f32.gmra.mrb[0].mxu0 %v4711
  %v5093 = vpop.f32.mrb[0].mxu0
  %v5094 = vadd.f32 0.0, %v5093
  %v5095 = vpop.f32.mrb[0].mxu0
  %5096 = vmatprep.mubr.f32.mxu0 0.0
  %5097 = vmatmul.mubr.f32.gmra.mrb[0].mxu0 %v4714
  %v5098 = vpop.f32.mrb[0].mxu0
  %v5099 = vadd.f32 0.0, %v5098
  %v5100 = vpop.f32.mrb[0].mxu0
  %5101 = vmatprep.mubr.f32.mxu0 0.0
  %5102 = vmatmul.mubr.f32.gmra.mrb[0].mxu0 %v4717
  %v5103 = vpop.f32.mrb[0].mxu0
  %v5104 = vadd.f32 0.0, %v5103
  %v5105 = vpop.f32.mrb[0].mxu0
  %5106 = vdwg.mxu0
  %v5107 = vadd.f32 %v4396, %v4789
  %v5108 = vadd.f32 %v4397, %v4794
  %v5109 = vadd.f32 %v4398, %v4799
  %v5110 = vadd.f32 %v4399, %v4804
  %v5111 = vadd.f32 %v4400, %v4809
  %v5112 = vadd.f32 %v4401, %v4814
  %v5113 = vadd.f32 %v4402, %v4819
  %v5114 = vadd.f32 %v4403, %v4824
  %v5115 = vadd.f32 %v4404, %v4829
  %v5116 = vadd.f32 %v4405, %v4834
  %v5117 = vadd.f32 %v4406, %v4839
  %v5118 = vadd.f32 %v4407, %v4844
  %v5119 = vadd.f32 %v4408, %v4849
  %v5120 = vadd.f32 %v4409, %v4854
  %v5121 = vadd.f32 %v4410, %v4859
  %v5122 = vadd.f32 %v4411, %v4864
  %v5123 = vadd.f32 %v4412, %v4869
  %v5124 = vadd.f32 %v4413, %v4874
  %v5125 = vadd.f32 %v4414, %v4879
  %v5126 = vadd.f32 %v4415, %v4884
  %v5127 = vadd.f32 %v4416, %v4889
  %v5128 = vadd.f32 %v4417, %v4894
  %v5129 = vadd.f32 %v4418, %v4899
  %v5130 = vadd.f32 %v4419, %v4904
  %v5131 = vadd.f32 %v4420, %v4909
  %v5132 = vadd.f32 %v4421, %v4914
  %v5133 = vadd.f32 %v4422, %v4919
  %v5134 = vadd.f32 %v4423, %v4924
  %v5135 = vadd.f32 %v4424, %v4929
  %v5136 = vadd.f32 %v4425, %v4934
  %v5137 = vadd.f32 %v4426, %v4939
  %v5138 = vadd.f32 %v4427, %v4944
  %v5139 = vadd.f32 %v4428, %v4949
  %v5140 = vadd.f32 %v4429, %v4954
  %v5141 = vadd.f32 %v4430, %v4959
  %v5142 = vadd.f32 %v4431, %v4964
  %v5143 = vadd.f32 %v4432, %v4969
  %v5144 = vadd.f32 %v4433, %v4974
  %v5145 = vadd.f32 %v4434, %v4979
  %v5146 = vadd.f32 %v4435, %v4984
  %v5147 = vadd.f32 %v4436, %v4989
  %v5148 = vadd.f32 %v4437, %v4994
  %v5149 = vadd.f32 %v4438, %v4999
  %v5150 = vadd.f32 %v4439, %v5004
  %v5151 = vadd.f32 %v4440, %v5009
  %v5152 = vadd.f32 %v4441, %v5014
  %v5153 = vadd.f32 %v4442, %v5019
  %v5154 = vadd.f32 %v4443, %v5024
  %v5155 = vadd.f32 %v4444, %v5029
  %v5156 = vadd.f32 %v4445, %v5034
  %v5157 = vadd.f32 %v4446, %v5039
  %v5158 = vadd.f32 %v4447, %v5044
  %v5159 = vadd.f32 %v4448, %v5049
  %v5160 = vadd.f32 %v4449, %v5054
  %v5161 = vadd.f32 %v4450, %v5059
  %v5162 = vadd.f32 %v4451, %v5064
  %v5163 = vadd.f32 %v4452, %v5069
  %v5164 = vadd.f32 %v4453, %v5074
  %v5165 = vadd.f32 %v4454, %v5079
  %v5166 = vadd.f32 %v4455, %v5084
  %v5167 = vadd.f32 %v4456, %v5089
  %v5168 = vadd.f32 %v4457, %v5094
  %v5169 = vadd.f32 %v4458, %v5099
  %v5170 = vadd.f32 %v4459, %v5104
  %v5171 = vld [vmem:[%s4460 + $0x1] sm:$0xff]
  %v5172 = vld [vmem:[%s4460 + $0x9] sm:$0xff]
  %v5173 = vld [vmem:[%s4460 + $0x19] sm:$0xff]
  %v5174 = vld [vmem:[%s4460 + $0x21] sm:$0xff]
  %v5175 = vld [vmem:[%s4460 + $0x31] sm:$0xff]
  %v5176 = vld [vmem:[%s4460 + $0x39] sm:$0xff]
  %v5177 = vld [vmem:[%s4460 + $0x49] sm:$0xff]
  %v5178 = vld [vmem:[%s4460 + $0x51] sm:$0xff]
  %v5179 = vld [vmem:[%s4460 + $0x61] sm:$0xff]
  %v5180 = vld [vmem:[%s4460 + $0x69] sm:$0xff]
  %v5181 = vld [vmem:[%s4460 + $0x79] sm:$0xff]
  %v5182 = vld [vmem:[%s4460 + $0x81] sm:$0xff]
  %v5183 = vld [vmem:[%s4460 + $0x91] sm:$0xff]
  %v5184 = vld [vmem:[%s4460 + $0x99] sm:$0xff]
  %v5185 = vld [vmem:[%s4460 + $0xa9] sm:$0xff]
  %v5186 = vld [vmem:[%s4460 + $0xb1] sm:$0xff]
  %v5187 = vld [vmem:[%s4460 + $0xc1] sm:$0xff]
  %v5188 = vld [vmem:[%s4460 + $0xc9] sm:$0xff]
  %v5189 = vld [vmem:[%s4460 + $0xd9] sm:$0xff]
  %v5190 = vld [vmem:[%s4460 + $0xe1] sm:$0xff]
  %v5191 = vld [vmem:[%s4460 + $0xf1] sm:$0xff]
  %v5192 = vld [vmem:[%s4460 + $0xf9] sm:$0xff]
  %v5193 = vld [vmem:[%s4460 + $0x109] sm:$0xff]
  %v5194 = vld [vmem:[%s4460 + $0x111] sm:$0xff]
  %v5195 = vld [vmem:[%s4460 + $0x121] sm:$0xff]
  %v5196 = vld [vmem:[%s4460 + $0x129] sm:$0xff]
  %v5197 = vld [vmem:[%s4460 + $0x139] sm:$0xff]
  %v5198 = vld [vmem:[%s4460 + $0x141] sm:$0xff]
  %v5199 = vld [vmem:[%s4460 + $0x151] sm:$0xff]
  %v5200 = vld [vmem:[%s4460 + $0x159] sm:$0xff]
  %v5201 = vld [vmem:[%s4460 + $0x169] sm:$0xff]
  %v5202 = vld [vmem:[%s4460 + $0x171] sm:$0xff]
  %v5203 = vld [vmem:[%s4460 + $0x1b1] sm:$0xff]
  %v5204 = vld [vmem:[%s4460 + $0x1b9] sm:$0xff]
  %v5205 = vld [vmem:[%s4460 + $0x1c9] sm:$0xff]
  %v5206 = vld [vmem:[%s4460 + $0x1d1] sm:$0xff]
  %v5207 = vld [vmem:[%s4460 + $0x1e1] sm:$0xff]
  %v5208 = vld [vmem:[%s4460 + $0x1e9] sm:$0xff]
  %v5209 = vld [vmem:[%s4460 + $0x1f9] sm:$0xff]
  %v5210 = vld [vmem:[%s4460 + $0x201] sm:$0xff]
  %v5211 = vld [vmem:[%s4460 + $0x211] sm:$0xff]
  %v5212 = vld [vmem:[%s4460 + $0x219] sm:$0xff]
  %v5213 = vld [vmem:[%s4460 + $0x229] sm:$0xff]
  %v5214 = vld [vmem:[%s4460 + $0x231] sm:$0xff]
  %v5215 = vld [vmem:[%s4460 + $0x241] sm:$0xff]
  %v5216 = vld [vmem:[%s4460 + $0x249] sm:$0xff]
  %v5217 = vld [vmem:[%s4460 + $0x259] sm:$0xff]
  %v5218 = vld [vmem:[%s4460 + $0x261] sm:$0xff]
  %v5219 = vld [vmem:[%s4460 + $0x271] sm:$0xff]
  %v5220 = vld [vmem:[%s4460 + $0x279] sm:$0xff]
  %v5221 = vld [vmem:[%s4460 + $0x289] sm:$0xff]
  %v5222 = vld [vmem:[%s4460 + $0x291] sm:$0xff]
  %v5223 = vld [vmem:[%s4460 + $0x2a1] sm:$0xff]
  %v5224 = vld [vmem:[%s4460 + $0x2a9] sm:$0xff]
  %v5225 = vld [vmem:[%s4460 + $0x2b9] sm:$0xff]
  %v5226 = vld [vmem:[%s4460 + $0x2c1] sm:$0xff]
  %v5227 = vld [vmem:[%s4460 + $0x2d1] sm:$0xff]
  %v5228 = vld [vmem:[%s4460 + $0x2d9] sm:$0xff]
  %v5229 = vld [vmem:[%s4460 + $0x2e9] sm:$0xff]
  %v5230 = vld [vmem:[%s4460 + $0x2f1] sm:$0xff]
  %v5231 = vld [vmem:[%s4460 + $0x301] sm:$0xff]
  %v5232 = vld [vmem:[%s4460 + $0x309] sm:$0xff]
  %v5233 = vld [vmem:[%s4460 + $0x319] sm:$0xff]
  %v5234 = vld [vmem:[%s4460 + $0x321] sm:$0xff]
  %s5235 = scalar_lea.vmem %s1, 28
  %v5236 = vld [vmem:[%s5235] sm:$0xf]
  %v5238 = vsel %vm26, %v5171, 0
  %v5241 = vsel %vm26, %v5172, 0
  %v5244 = vsel %vm26, %v5173, 0
  %v5247 = vsel %vm26, %v5174, 0
  %v5250 = vsel %vm26, %v5175, 0
  %v5253 = vsel %vm26, %v5176, 0
  %v5256 = vsel %vm26, %v5177, 0
  %v5259 = vsel %vm26, %v5178, 0
  %v5262 = vsel %vm26, %v5179, 0
  %v5265 = vsel %vm26, %v5180, 0
  %v5268 = vsel %vm26, %v5181, 0
  %v5271 = vsel %vm26, %v5182, 0
  %v5274 = vsel %vm26, %v5183, 0
  %v5277 = vsel %vm26, %v5184, 0
  %v5280 = vsel %vm26, %v5185, 0
  %v5283 = vsel %vm26, %v5186, 0
  %v5286 = vsel %vm26, %v5187, 0
  %v5289 = vsel %vm26, %v5188, 0
  %v5292 = vsel %vm26, %v5189, 0
  %v5295 = vsel %vm26, %v5190, 0
  %v5298 = vsel %vm26, %v5191, 0
  %v5301 = vsel %vm26, %v5192, 0
  %v5304 = vsel %vm26, %v5193, 0
  %v5307 = vsel %vm26, %v5194, 0
  %v5310 = vsel %vm26, %v5195, 0
  %v5313 = vsel %vm26, %v5196, 0
  %v5316 = vsel %vm26, %v5197, 0
  %v5319 = vsel %vm26, %v5198, 0
  %v5322 = vsel %vm26, %v5199, 0
  %v5325 = vsel %vm26, %v5200, 0
  %v5328 = vsel %vm26, %v5201, 0
  %v5331 = vsel %vm26, %v5202, 0
  %v5334 = vsel %vm26, %v5203, 0
  %v5337 = vsel %vm26, %v5204, 0
  %v5340 = vsel %vm26, %v5205, 0
  %v5343 = vsel %vm26, %v5206, 0
  %v5346 = vsel %vm26, %v5207, 0
  %v5349 = vsel %vm26, %v5208, 0
  %v5352 = vsel %vm26, %v5209, 0
  %v5355 = vsel %vm26, %v5210, 0
  %v5358 = vsel %vm26, %v5211, 0
  %v5361 = vsel %vm26, %v5212, 0
  %v5364 = vsel %vm26, %v5213, 0
  %v5367 = vsel %vm26, %v5214, 0
  %v5370 = vsel %vm26, %v5215, 0
  %v5373 = vsel %vm26, %v5216, 0
  %v5376 = vsel %vm26, %v5217, 0
  %v5379 = vsel %vm26, %v5218, 0
  %v5382 = vsel %vm26, %v5219, 0
  %v5385 = vsel %vm26, %v5220, 0
  %v5388 = vsel %vm26, %v5221, 0
  %v5391 = vsel %vm26, %v5222, 0
  %v5394 = vsel %vm26, %v5223, 0
  %v5397 = vsel %vm26, %v5224, 0
  %v5400 = vsel %vm26, %v5225, 0
  %v5403 = vsel %vm26, %v5226, 0
  %v5406 = vsel %vm26, %v5227, 0
  %v5409 = vsel %vm26, %v5228, 0
  %v5412 = vsel %vm26, %v5229, 0
  %v5415 = vsel %vm26, %v5230, 0
  %v5418 = vsel %vm26, %v5231, 0
  %v5421 = vsel %vm26, %v5232, 0
  %v5424 = vsel %vm26, %v5233, 0
  %v5427 = vsel %vm26, %v5234, 0
  %v5430 = vsel %vm651, %v5236, 0
  %5432 = vmatprep.subr.mxu0 0.0
  %5433 = vmatpush1.msra.mxu0 %v5430
  %5434 = vmatprep.subr.mxu0 0.0
  %5435 = vmatpush1.msra.mxu0 0.0
  %5436 = vmatprep.subr.mxu0 0.0
  %5437 = vmatpush1.msra.mxu0 0.0
  %5438 = vmatprep.subr.mxu0 0.0
  %5439 = vmatpush1.msra.mxu0 0.0
  %5440 = vmatprep.subr.mxu0 0.0
  %5441 = vmatpush1.msra.mxu0 0.0
  %5442 = vmatprep.subr.mxu0 0.0
  %5443 = vmatpush1.msra.mxu0 0.0
  %5444 = vmatprep.subr.mxu0 0.0
  %5445 = vmatpush1.msra.mxu0 0.0
  %5446 = vmatprep.subr.mxu0 0.0
  %5447 = vmatpush1.msra.mxu0 0.0
  %5448 = vmatprep.subr.mxu0 0.0
  %5449 = vmatpush1.msra.mxu0 0.0
  %5450 = vmatprep.subr.mxu0 0.0
  %5451 = vmatpush1.msra.mxu0 0.0
  %5452 = vmatprep.subr.mxu0 0.0
  %5453 = vmatpush1.msra.mxu0 0.0
  %5454 = vmatprep.subr.mxu0 0.0
  %5455 = vmatpush1.msra.mxu0 0.0
  %5456 = vmatprep.subr.mxu0 0.0
  %5457 = vmatpush1.msra.mxu0 0.0
  %5458 = vmatprep.subr.mxu0 0.0
  %5459 = vmatpush1.msra.mxu0 0.0
  %5460 = vmatprep.subr.mxu0 0.0
  %5461 = vmatpush1.msra.mxu0 0.0
  %5462 = vmatprep.subr.mxu0 0.0
  %5463 = vmatpush1.msra.mxu0 0.0
  %5464 = vmatprep.subr.mxu0 0.0
  %5465 = vmatpush1.msra.mxu0 0.0
  %5466 = vmatprep.subr.mxu0 0.0
  %5467 = vmatpush1.msra.mxu0 0.0
  %5468 = vmatprep.subr.mxu0 0.0
  %5469 = vmatpush1.msra.mxu0 0.0
  %5470 = vmatprep.subr.mxu0 0.0
  %5471 = vmatpush1.msra.mxu0 0.0
  %5472 = vmatprep.subr.mxu0 0.0
  %5473 = vmatpush1.msra.mxu0 0.0
  %5474 = vmatprep.subr.mxu0 0.0
  %5475 = vmatpush1.msra.mxu0 0.0
  %5476 = vmatprep.subr.mxu0 0.0
  %5477 = vmatpush1.msra.mxu0 0.0
  %5478 = vmatprep.subr.mxu0 0.0
  %5479 = vmatpush1.msra.mxu0 0.0
  %5480 = vmatprep.subr.mxu0 0.0
  %5481 = vmatpush1.msra.mxu0 0.0
  %5482 = vmatprep.subr.mxu0 0.0
  %5483 = vmatpush1.msra.mxu0 0.0
  %5484 = vmatprep.subr.mxu0 0.0
  %5485 = vmatpush1.msra.mxu0 0.0
  %5486 = vmatprep.subr.mxu0 0.0
  %5487 = vmatpush1.msra.mxu0 0.0
  %5488 = vmatprep.subr.mxu0 0.0
  %5489 = vmatpush1.msra.mxu0 0.0
  %5490 = vmatprep.subr.mxu0 0.0
  %5491 = vmatpush1.msra.mxu0 0.0
  %5492 = vmatprep.subr.mxu0 0.0
  %5493 = vmatpush1.msra.mxu0 0.0
  %5494 = vmatprep.subr.mxu0 0.0
  %5495 = vmatpush1.msra.mxu0 0.0
  %5496 = vmatprep.mubr.f32.mxu0 0.0
  %5497 = vmatmul.mubr.f32.gmra.mrb[0].mxu0 %v5238
  %v5498 = vpop.f32.mrb[0].mxu0
  %v5499 = vadd.f32 0.0, %v5498
  %v5500 = vpop.f32.mrb[0].mxu0
  %5501 = vmatprep.mubr.f32.mxu0 0.0
  %5502 = vmatmul.mubr.f32.gmra.mrb[0].mxu0 %v5241
  %v5503 = vpop.f32.mrb[0].mxu0
  %v5504 = vadd.f32 0.0, %v5503
  %v5505 = vpop.f32.mrb[0].mxu0
  %5506 = vmatprep.mubr.f32.mxu0 0.0
  %5507 = vmatmul.mubr.f32.gmra.mrb[0].mxu0 %v5244
  %v5508 = vpop.f32.mrb[0].mxu0
  %v5509 = vadd.f32 0.0, %v5508
  %v5510 = vpop.f32.mrb[0].mxu0
  %5511 = vmatprep.mubr.f32.mxu0 0.0
  %5512 = vmatmul.mubr.f32.gmra.mrb[0].mxu0 %v5247
  %v5513 = vpop.f32.mrb[0].mxu0
  %v5514 = vadd.f32 0.0, %v5513
  %v5515 = vpop.f32.mrb[0].mxu0
  %5516 = vmatprep.mubr.f32.mxu0 0.0
  %5517 = vmatmul.mubr.f32.gmra.mrb[0].mxu0 %v5250
  %v5518 = vpop.f32.mrb[0].mxu0
  %v5519 = vadd.f32 0.0, %v5518
  %v5520 = vpop.f32.mrb[0].mxu0
  %5521 = vmatprep.mubr.f32.mxu0 0.0
  %5522 = vmatmul.mubr.f32.gmra.mrb[0].mxu0 %v5253
  %v5523 = vpop.f32.mrb[0].mxu0
  %v5524 = vadd.f32 0.0, %v5523
  %v5525 = vpop.f32.mrb[0].mxu0
  %5526 = vmatprep.mubr.f32.mxu0 0.0
  %5527 = vmatmul.mubr.f32.gmra.mrb[0].mxu0 %v5256
  %v5528 = vpop.f32.mrb[0].mxu0
  %v5529 = vadd.f32 0.0, %v5528
  %v5530 = vpop.f32.mrb[0].mxu0
  %5531 = vmatprep.mubr.f32.mxu0 0.0
  %5532 = vmatmul.mubr.f32.gmra.mrb[0].mxu0 %v5259
  %v5533 = vpop.f32.mrb[0].mxu0
  %v5534 = vadd.f32 0.0, %v5533
  %v5535 = vpop.f32.mrb[0].mxu0
  %5536 = vmatprep.mubr.f32.mxu0 0.0
  %5537 = vmatmul.mubr.f32.gmra.mrb[0].mxu0 %v5262
  %v5538 = vpop.f32.mrb[0].mxu0
  %v5539 = vadd.f32 0.0, %v5538
  %v5540 = vpop.f32.mrb[0].mxu0
  %5541 = vmatprep.mubr.f32.mxu0 0.0
  %5542 = vmatmul.mubr.f32.gmra.mrb[0].mxu0 %v5265
  %v5543 = vpop.f32.mrb[0].mxu0
  %v5544 = vadd.f32 0.0, %v5543
  %v5545 = vpop.f32.mrb[0].mxu0
  %5546 = vmatprep.mubr.f32.mxu0 0.0
  %5547 = vmatmul.mubr.f32.gmra.mrb[0].mxu0 %v5268
  %v5548 = vpop.f32.mrb[0].mxu0
  %v5549 = vadd.f32 0.0, %v5548
  %v5550 = vpop.f32.mrb[0].mxu0
  %5551 = vmatprep.mubr.f32.mxu0 0.0
  %5552 = vmatmul.mubr.f32.gmra.mrb[0].mxu0 %v5271
  %v5553 = vpop.f32.mrb[0].mxu0
  %v5554 = vadd.f32 0.0, %v5553
  %v5555 = vpop.f32.mrb[0].mxu0
  %5556 = vmatprep.mubr.f32.mxu0 0.0
  %5557 = vmatmul.mubr.f32.gmra.mrb[0].mxu0 %v5274
  %v5558 = vpop.f32.mrb[0].mxu0
  %v5559 = vadd.f32 0.0, %v5558
  %v5560 = vpop.f32.mrb[0].mxu0
  %5561 = vmatprep.mubr.f32.mxu0 0.0
  %5562 = vmatmul.mubr.f32.gmra.mrb[0].mxu0 %v5277
  %v5563 = vpop.f32.mrb[0].mxu0
  %v5564 = vadd.f32 0.0, %v5563
  %v5565 = vpop.f32.mrb[0].mxu0
  %5566 = vmatprep.mubr.f32.mxu0 0.0
  %5567 = vmatmul.mubr.f32.gmra.mrb[0].mxu0 %v5280
  %v5568 = vpop.f32.mrb[0].mxu0
  %v5569 = vadd.f32 0.0, %v5568
  %v5570 = vpop.f32.mrb[0].mxu0
  %5571 = vmatprep.mubr.f32.mxu0 0.0
  %5572 = vmatmul.mubr.f32.gmra.mrb[0].mxu0 %v5283
  %v5573 = vpop.f32.mrb[0].mxu0
  %v5574 = vadd.f32 0.0, %v5573
  %v5575 = vpop.f32.mrb[0].mxu0
  %5576 = vmatprep.mubr.f32.mxu0 0.0
  %5577 = vmatmul.mubr.f32.gmra.mrb[0].mxu0 %v5286
  %v5578 = vpop.f32.mrb[0].mxu0
  %v5579 = vadd.f32 0.0, %v5578
  %v5580 = vpop.f32.mrb[0].mxu0
  %5581 = vmatprep.mubr.f32.mxu0 0.0
  %5582 = vmatmul.mubr.f32.gmra.mrb[0].mxu0 %v5289
  %v5583 = vpop.f32.mrb[0].mxu0
  %v5584 = vadd.f32 0.0, %v5583
  %v5585 = vpop.f32.mrb[0].mxu0
  %5586 = vmatprep.mubr.f32.mxu0 0.0
  %5587 = vmatmul.mubr.f32.gmra.mrb[0].mxu0 %v5292
  %v5588 = vpop.f32.mrb[0].mxu0
  %v5589 = vadd.f32 0.0, %v5588
  %v5590 = vpop.f32.mrb[0].mxu0
  %5591 = vmatprep.mubr.f32.mxu0 0.0
  %5592 = vmatmul.mubr.f32.gmra.mrb[0].mxu0 %v5295
  %v5593 = vpop.f32.mrb[0].mxu0
  %v5594 = vadd.f32 0.0, %v5593
  %v5595 = vpop.f32.mrb[0].mxu0
  %5596 = vmatprep.mubr.f32.mxu0 0.0
  %5597 = vmatmul.mubr.f32.gmra.mrb[0].mxu0 %v5298
  %v5598 = vpop.f32.mrb[0].mxu0
  %v5599 = vadd.f32 0.0, %v5598
  %v5600 = vpop.f32.mrb[0].mxu0
  %5601 = vmatprep.mubr.f32.mxu0 0.0
  %5602 = vmatmul.mubr.f32.gmra.mrb[0].mxu0 %v5301
  %v5603 = vpop.f32.mrb[0].mxu0
  %v5604 = vadd.f32 0.0, %v5603
  %v5605 = vpop.f32.mrb[0].mxu0
  %5606 = vmatprep.mubr.f32.mxu0 0.0
  %5607 = vmatmul.mubr.f32.gmra.mrb[0].mxu0 %v5304
  %v5608 = vpop.f32.mrb[0].mxu0
  %v5609 = vadd.f32 0.0, %v5608
  %v5610 = vpop.f32.mrb[0].mxu0
  %5611 = vmatprep.mubr.f32.mxu0 0.0
  %5612 = vmatmul.mubr.f32.gmra.mrb[0].mxu0 %v5307
  %v5613 = vpop.f32.mrb[0].mxu0
  %v5614 = vadd.f32 0.0, %v5613
  %v5615 = vpop.f32.mrb[0].mxu0
  %5616 = vmatprep.mubr.f32.mxu0 0.0
  %5617 = vmatmul.mubr.f32.gmra.mrb[0].mxu0 %v5310
  %v5618 = vpop.f32.mrb[0].mxu0
  %v5619 = vadd.f32 0.0, %v5618
  %v5620 = vpop.f32.mrb[0].mxu0
  %5621 = vmatprep.mubr.f32.mxu0 0.0
  %5622 = vmatmul.mubr.f32.gmra.mrb[0].mxu0 %v5313
  %v5623 = vpop.f32.mrb[0].mxu0
  %v5624 = vadd.f32 0.0, %v5623
  %v5625 = vpop.f32.mrb[0].mxu0
  %5626 = vmatprep.mubr.f32.mxu0 0.0
  %5627 = vmatmul.mubr.f32.gmra.mrb[0].mxu0 %v5316
  %v5628 = vpop.f32.mrb[0].mxu0
  %v5629 = vadd.f32 0.0, %v5628
  %v5630 = vpop.f32.mrb[0].mxu0
  %5631 = vmatprep.mubr.f32.mxu0 0.0
  %5632 = vmatmul.mubr.f32.gmra.mrb[0].mxu0 %v5319
  %v5633 = vpop.f32.mrb[0].mxu0
  %v5634 = vadd.f32 0.0, %v5633
  %v5635 = vpop.f32.mrb[0].mxu0
  %5636 = vmatprep.mubr.f32.mxu0 0.0
  %5637 = vmatmul.mubr.f32.gmra.mrb[0].mxu0 %v5322
  %v5638 = vpop.f32.mrb[0].mxu0
  %v5639 = vadd.f32 0.0, %v5638
  %v5640 = vpop.f32.mrb[0].mxu0
  %5641 = vmatprep.mubr.f32.mxu0 0.0
  %5642 = vmatmul.mubr.f32.gmra.mrb[0].mxu0 %v5325
  %v5643 = vpop.f32.mrb[0].mxu0
  %v5644 = vadd.f32 0.0, %v5643
  %v5645 = vpop.f32.mrb[0].mxu0
  %5646 = vmatprep.mubr.f32.mxu0 0.0
  %5647 = vmatmul.mubr.f32.gmra.mrb[0].mxu0 %v5328
  %v5648 = vpop.f32.mrb[0].mxu0
  %v5649 = vadd.f32 0.0, %v5648
  %v5650 = vpop.f32.mrb[0].mxu0
  %5651 = vmatprep.mubr.f32.mxu0 0.0
  %5652 = vmatmul.mubr.f32.gmra.mrb[0].mxu0 %v5331
  %v5653 = vpop.f32.mrb[0].mxu0
  %v5654 = vadd.f32 0.0, %v5653
  %v5655 = vpop.f32.mrb[0].mxu0
  %5656 = vmatprep.mubr.f32.mxu0 0.0
  %5657 = vmatmul.mubr.f32.gmra.mrb[0].mxu0 %v5334
  %v5658 = vpop.f32.mrb[0].mxu0
  %v5659 = vadd.f32 0.0, %v5658
  %v5660 = vpop.f32.mrb[0].mxu0
  %5661 = vmatprep.mubr.f32.mxu0 0.0
  %5662 = vmatmul.mubr.f32.gmra.mrb[0].mxu0 %v5337
  %v5663 = vpop.f32.mrb[0].mxu0
  %v5664 = vadd.f32 0.0, %v5663
  %v5665 = vpop.f32.mrb[0].mxu0
  %5666 = vmatprep.mubr.f32.mxu0 0.0
  %5667 = vmatmul.mubr.f32.gmra.mrb[0].mxu0 %v5340
  %v5668 = vpop.f32.mrb[0].mxu0
  %v5669 = vadd.f32 0.0, %v5668
  %v5670 = vpop.f32.mrb[0].mxu0
  %5671 = vmatprep.mubr.f32.mxu0 0.0
  %5672 = vmatmul.mubr.f32.gmra.mrb[0].mxu0 %v5343
  %v5673 = vpop.f32.mrb[0].mxu0
  %v5674 = vadd.f32 0.0, %v5673
  %v5675 = vpop.f32.mrb[0].mxu0
  %5676 = vmatprep.mubr.f32.mxu0 0.0
  %5677 = vmatmul.mubr.f32.gmra.mrb[0].mxu0 %v5346
  %v5678 = vpop.f32.mrb[0].mxu0
  %v5679 = vadd.f32 0.0, %v5678
  %v5680 = vpop.f32.mrb[0].mxu0
  %5681 = vmatprep.mubr.f32.mxu0 0.0
  %5682 = vmatmul.mubr.f32.gmra.mrb[0].mxu0 %v5349
  %v5683 = vpop.f32.mrb[0].mxu0
  %v5684 = vadd.f32 0.0, %v5683
  %v5685 = vpop.f32.mrb[0].mxu0
  %5686 = vmatprep.mubr.f32.mxu0 0.0
  %5687 = vmatmul.mubr.f32.gmra.mrb[0].mxu0 %v5352
  %v5688 = vpop.f32.mrb[0].mxu0
  %v5689 = vadd.f32 0.0, %v5688
  %v5690 = vpop.f32.mrb[0].mxu0
  %5691 = vmatprep.mubr.f32.mxu0 0.0
  %5692 = vmatmul.mubr.f32.gmra.mrb[0].mxu0 %v5355
  %v5693 = vpop.f32.mrb[0].mxu0
  %v5694 = vadd.f32 0.0, %v5693
  %v5695 = vpop.f32.mrb[0].mxu0
  %5696 = vmatprep.mubr.f32.mxu0 0.0
  %5697 = vmatmul.mubr.f32.gmra.mrb[0].mxu0 %v5358
  %v5698 = vpop.f32.mrb[0].mxu0
  %v5699 = vadd.f32 0.0, %v5698
  %v5700 = vpop.f32.mrb[0].mxu0
  %5701 = vmatprep.mubr.f32.mxu0 0.0
  %5702 = vmatmul.mubr.f32.gmra.mrb[0].mxu0 %v5361
  %v5703 = vpop.f32.mrb[0].mxu0
  %v5704 = vadd.f32 0.0, %v5703
  %v5705 = vpop.f32.mrb[0].mxu0
  %5706 = vmatprep.mubr.f32.mxu0 0.0
  %5707 = vmatmul.mubr.f32.gmra.mrb[0].mxu0 %v5364
  %v5708 = vpop.f32.mrb[0].mxu0
  %v5709 = vadd.f32 0.0, %v5708
  %v5710 = vpop.f32.mrb[0].mxu0
  %5711 = vmatprep.mubr.f32.mxu0 0.0
  %5712 = vmatmul.mubr.f32.gmra.mrb[0].mxu0 %v5367
  %v5713 = vpop.f32.mrb[0].mxu0
  %v5714 = vadd.f32 0.0, %v5713
  %v5715 = vpop.f32.mrb[0].mxu0
  %5716 = vmatprep.mubr.f32.mxu0 0.0
  %5717 = vmatmul.mubr.f32.gmra.mrb[0].mxu0 %v5370
  %v5718 = vpop.f32.mrb[0].mxu0
  %v5719 = vadd.f32 0.0, %v5718
  %v5720 = vpop.f32.mrb[0].mxu0
  %5721 = vmatprep.mubr.f32.mxu0 0.0
  %5722 = vmatmul.mubr.f32.gmra.mrb[0].mxu0 %v5373
  %v5723 = vpop.f32.mrb[0].mxu0
  %v5724 = vadd.f32 0.0, %v5723
  %v5725 = vpop.f32.mrb[0].mxu0
  %5726 = vmatprep.mubr.f32.mxu0 0.0
  %5727 = vmatmul.mubr.f32.gmra.mrb[0].mxu0 %v5376
  %v5728 = vpop.f32.mrb[0].mxu0
  %v5729 = vadd.f32 0.0, %v5728
  %v5730 = vpop.f32.mrb[0].mxu0
  %5731 = vmatprep.mubr.f32.mxu0 0.0
  %5732 = vmatmul.mubr.f32.gmra.mrb[0].mxu0 %v5379
  %v5733 = vpop.f32.mrb[0].mxu0
  %v5734 = vadd.f32 0.0, %v5733
  %v5735 = vpop.f32.mrb[0].mxu0
  %5736 = vmatprep.mubr.f32.mxu0 0.0
  %5737 = vmatmul.mubr.f32.gmra.mrb[0].mxu0 %v5382
  %v5738 = vpop.f32.mrb[0].mxu0
  %v5739 = vadd.f32 0.0, %v5738
  %v5740 = vpop.f32.mrb[0].mxu0
  %5741 = vmatprep.mubr.f32.mxu0 0.0
  %5742 = vmatmul.mubr.f32.gmra.mrb[0].mxu0 %v5385
  %v5743 = vpop.f32.mrb[0].mxu0
  %v5744 = vadd.f32 0.0, %v5743
  %v5745 = vpop.f32.mrb[0].mxu0
  %5746 = vmatprep.mubr.f32.mxu0 0.0
  %5747 = vmatmul.mubr.f32.gmra.mrb[0].mxu0 %v5388
  %v5748 = vpop.f32.mrb[0].mxu0
  %v5749 = vadd.f32 0.0, %v5748
  %v5750 = vpop.f32.mrb[0].mxu0
  %5751 = vmatprep.mubr.f32.mxu0 0.0
  %5752 = vmatmul.mubr.f32.gmra.mrb[0].mxu0 %v5391
  %v5753 = vpop.f32.mrb[0].mxu0
  %v5754 = vadd.f32 0.0, %v5753
  %v5755 = vpop.f32.mrb[0].mxu0
  %5756 = vmatprep.mubr.f32.mxu0 0.0
  %5757 = vmatmul.mubr.f32.gmra.mrb[0].mxu0 %v5394
  %v5758 = vpop.f32.mrb[0].mxu0
  %v5759 = vadd.f32 0.0, %v5758
  %v5760 = vpop.f32.mrb[0].mxu0
  %5761 = vmatprep.mubr.f32.mxu0 0.0
  %5762 = vmatmul.mubr.f32.gmra.mrb[0].mxu0 %v5397
  %v5763 = vpop.f32.mrb[0].mxu0
  %v5764 = vadd.f32 0.0, %v5763
  %v5765 = vpop.f32.mrb[0].mxu0
  %5766 = vmatprep.mubr.f32.mxu0 0.0
  %5767 = vmatmul.mubr.f32.gmra.mrb[0].mxu0 %v5400
  %v5768 = vpop.f32.mrb[0].mxu0
  %v5769 = vadd.f32 0.0, %v5768
  %v5770 = vpop.f32.mrb[0].mxu0
  %5771 = vmatprep.mubr.f32.mxu0 0.0
  %5772 = vmatmul.mubr.f32.gmra.mrb[0].mxu0 %v5403
  %v5773 = vpop.f32.mrb[0].mxu0
  %v5774 = vadd.f32 0.0, %v5773
  %v5775 = vpop.f32.mrb[0].mxu0
  %5776 = vmatprep.mubr.f32.mxu0 0.0
  %5777 = vmatmul.mubr.f32.gmra.mrb[0].mxu0 %v5406
  %v5778 = vpop.f32.mrb[0].mxu0
  %v5779 = vadd.f32 0.0, %v5778
  %v5780 = vpop.f32.mrb[0].mxu0
  %5781 = vmatprep.mubr.f32.mxu0 0.0
  %5782 = vmatmul.mubr.f32.gmra.mrb[0].mxu0 %v5409
  %v5783 = vpop.f32.mrb[0].mxu0
  %v5784 = vadd.f32 0.0, %v5783
  %v5785 = vpop.f32.mrb[0].mxu0
  %5786 = vmatprep.mubr.f32.mxu0 0.0
  %5787 = vmatmul.mubr.f32.gmra.mrb[0].mxu0 %v5412
  %v5788 = vpop.f32.mrb[0].mxu0
  %v5789 = vadd.f32 0.0, %v5788
  %v5790 = vpop.f32.mrb[0].mxu0
  %5791 = vmatprep.mubr.f32.mxu0 0.0
  %5792 = vmatmul.mubr.f32.gmra.mrb[0].mxu0 %v5415
  %v5793 = vpop.f32.mrb[0].mxu0
  %v5794 = vadd.f32 0.0, %v5793
  %v5795 = vpop.f32.mrb[0].mxu0
  %5796 = vmatprep.mubr.f32.mxu0 0.0
  %5797 = vmatmul.mubr.f32.gmra.mrb[0].mxu0 %v5418
  %v5798 = vpop.f32.mrb[0].mxu0
  %v5799 = vadd.f32 0.0, %v5798
  %v5800 = vpop.f32.mrb[0].mxu0
  %5801 = vmatprep.mubr.f32.mxu0 0.0
  %5802 = vmatmul.mubr.f32.gmra.mrb[0].mxu0 %v5421
  %v5803 = vpop.f32.mrb[0].mxu0
  %v5804 = vadd.f32 0.0, %v5803
  %v5805 = vpop.f32.mrb[0].mxu0
  %5806 = vmatprep.mubr.f32.mxu0 0.0
  %5807 = vmatmul.mubr.f32.gmra.mrb[0].mxu0 %v5424
  %v5808 = vpop.f32.mrb[0].mxu0
  %v5809 = vadd.f32 0.0, %v5808
  %v5810 = vpop.f32.mrb[0].mxu0
  %5811 = vmatprep.mubr.f32.mxu0 0.0
  %5812 = vmatmul.mubr.f32.gmra.mrb[0].mxu0 %v5427
  %v5813 = vpop.f32.mrb[0].mxu0
  %v5814 = vadd.f32 0.0, %v5813
  %v5815 = vpop.f32.mrb[0].mxu0
  %5816 = vdwg.mxu0
  %v5817 = vadd.f32 %v5107, %v5499
  %v5818 = vadd.f32 %v5108, %v5504
  %v5819 = vadd.f32 %v5109, %v5509
  %v5820 = vadd.f32 %v5110, %v5514
  %v5821 = vadd.f32 %v5111, %v5519
  %v5822 = vadd.f32 %v5112, %v5524
  %v5823 = vadd.f32 %v5113, %v5529
  %v5824 = vadd.f32 %v5114, %v5534
  %v5825 = vadd.f32 %v5115, %v5539
  %v5826 = vadd.f32 %v5116, %v5544
  %v5827 = vadd.f32 %v5117, %v5549
  %v5828 = vadd.f32 %v5118, %v5554
  %v5829 = vadd.f32 %v5119, %v5559
  %v5830 = vadd.f32 %v5120, %v5564
  %v5831 = vadd.f32 %v5121, %v5569
  %v5832 = vadd.f32 %v5122, %v5574
  %v5833 = vadd.f32 %v5123, %v5579
  %v5834 = vadd.f32 %v5124, %v5584
  %v5835 = vadd.f32 %v5125, %v5589
  %v5836 = vadd.f32 %v5126, %v5594
  %v5837 = vadd.f32 %v5127, %v5599
  %v5838 = vadd.f32 %v5128, %v5604
  %v5839 = vadd.f32 %v5129, %v5609
  %v5840 = vadd.f32 %v5130, %v5614
  %v5841 = vadd.f32 %v5131, %v5619
  %v5842 = vadd.f32 %v5132, %v5624
  %v5843 = vadd.f32 %v5133, %v5629
  %v5844 = vadd.f32 %v5134, %v5634
  %v5845 = vadd.f32 %v5135, %v5639
  %v5846 = vadd.f32 %v5136, %v5644
  %v5847 = vadd.f32 %v5137, %v5649
  %v5848 = vadd.f32 %v5138, %v5654
  %v5849 = vadd.f32 %v5139, %v5659
  %v5850 = vadd.f32 %v5140, %v5664
  %v5851 = vadd.f32 %v5141, %v5669
  %v5852 = vadd.f32 %v5142, %v5674
  %v5853 = vadd.f32 %v5143, %v5679
  %v5854 = vadd.f32 %v5144, %v5684
  %v5855 = vadd.f32 %v5145, %v5689
  %v5856 = vadd.f32 %v5146, %v5694
  %v5857 = vadd.f32 %v5147, %v5699
  %v5858 = vadd.f32 %v5148, %v5704
  %v5859 = vadd.f32 %v5149, %v5709
  %v5860 = vadd.f32 %v5150, %v5714
  %v5861 = vadd.f32 %v5151, %v5719
  %v5862 = vadd.f32 %v5152, %v5724
  %v5863 = vadd.f32 %v5153, %v5729
  %v5864 = vadd.f32 %v5154, %v5734
  %v5865 = vadd.f32 %v5155, %v5739
  %v5866 = vadd.f32 %v5156, %v5744
  %v5867 = vadd.f32 %v5157, %v5749
  %v5868 = vadd.f32 %v5158, %v5754
  %v5869 = vadd.f32 %v5159, %v5759
  %v5870 = vadd.f32 %v5160, %v5764
  %v5871 = vadd.f32 %v5161, %v5769
  %v5872 = vadd.f32 %v5162, %v5774
  %v5873 = vadd.f32 %v5163, %v5779
  %v5874 = vadd.f32 %v5164, %v5784
  %v5875 = vadd.f32 %v5165, %v5789
  %v5876 = vadd.f32 %v5166, %v5794
  %v5877 = vadd.f32 %v5167, %v5799
  %v5878 = vadd.f32 %v5168, %v5804
  %v5879 = vadd.f32 %v5169, %v5809
  %v5880 = vadd.f32 %v5170, %v5814
  %v5881 = vld [vmem:[%s4460 + $0x2] sm:$0xff]
  %v5882 = vld [vmem:[%s4460 + $0xa] sm:$0xff]
  %v5883 = vld [vmem:[%s4460 + $0x1a] sm:$0xff]
  %v5884 = vld [vmem:[%s4460 + $0x22] sm:$0xff]
  %v5885 = vld [vmem:[%s4460 + $0x32] sm:$0xff]
  %v5886 = vld [vmem:[%s4460 + $0x3a] sm:$0xff]
  %v5887 = vld [vmem:[%s4460 + $0x4a] sm:$0xff]
  %v5888 = vld [vmem:[%s4460 + $0x52] sm:$0xff]
  %v5889 = vld [vmem:[%s4460 + $0x62] sm:$0xff]
  %v5890 = vld [vmem:[%s4460 + $0x6a] sm:$0xff]
  %v5891 = vld [vmem:[%s4460 + $0x7a] sm:$0xff]
  %v5892 = vld [vmem:[%s4460 + $0x82] sm:$0xff]
  %v5893 = vld [vmem:[%s4460 + $0x92] sm:$0xff]
  %v5894 = vld [vmem:[%s4460 + $0x9a] sm:$0xff]
  %v5895 = vld [vmem:[%s4460 + $0xaa] sm:$0xff]
  %v5896 = vld [vmem:[%s4460 + $0xb2] sm:$0xff]
  %v5897 = vld [vmem:[%s4460 + $0xc2] sm:$0xff]
  %v5898 = vld [vmem:[%s4460 + $0xca] sm:$0xff]
  %v5899 = vld [vmem:[%s4460 + $0xda] sm:$0xff]
  %v5900 = vld [vmem:[%s4460 + $0xe2] sm:$0xff]
  %v5901 = vld [vmem:[%s4460 + $0xf2] sm:$0xff]
  %v5902 = vld [vmem:[%s4460 + $0xfa] sm:$0xff]
  %v5903 = vld [vmem:[%s4460 + $0x10a] sm:$0xff]
  %v5904 = vld [vmem:[%s4460 + $0x112] sm:$0xff]
  %v5905 = vld [vmem:[%s4460 + $0x122] sm:$0xff]
  %v5906 = vld [vmem:[%s4460 + $0x12a] sm:$0xff]
  %v5907 = vld [vmem:[%s4460 + $0x13a] sm:$0xff]
  %v5908 = vld [vmem:[%s4460 + $0x142] sm:$0xff]
  %v5909 = vld [vmem:[%s4460 + $0x152] sm:$0xff]
  %v5910 = vld [vmem:[%s4460 + $0x15a] sm:$0xff]
  %v5911 = vld [vmem:[%s4460 + $0x16a] sm:$0xff]
  %v5912 = vld [vmem:[%s4460 + $0x172] sm:$0xff]
  %v5913 = vld [vmem:[%s4460 + $0x1b2] sm:$0xff]
  %v5914 = vld [vmem:[%s4460 + $0x1ba] sm:$0xff]
  %v5915 = vld [vmem:[%s4460 + $0x1ca] sm:$0xff]
  %v5916 = vld [vmem:[%s4460 + $0x1d2] sm:$0xff]
  %v5917 = vld [vmem:[%s4460 + $0x1e2] sm:$0xff]
  %v5918 = vld [vmem:[%s4460 + $0x1ea] sm:$0xff]
  %v5919 = vld [vmem:[%s4460 + $0x1fa] sm:$0xff]
  %v5920 = vld [vmem:[%s4460 + $0x202] sm:$0xff]
  %v5921 = vld [vmem:[%s4460 + $0x212] sm:$0xff]
  %v5922 = vld [vmem:[%s4460 + $0x21a] sm:$0xff]
  %v5923 = vld [vmem:[%s4460 + $0x22a] sm:$0xff]
  %v5924 = vld [vmem:[%s4460 + $0x232] sm:$0xff]
  %v5925 = vld [vmem:[%s4460 + $0x242] sm:$0xff]
  %v5926 = vld [vmem:[%s4460 + $0x24a] sm:$0xff]
  %v5927 = vld [vmem:[%s4460 + $0x25a] sm:$0xff]
  %v5928 = vld [vmem:[%s4460 + $0x262] sm:$0xff]
  %v5929 = vld [vmem:[%s4460 + $0x272] sm:$0xff]
  %v5930 = vld [vmem:[%s4460 + $0x27a] sm:$0xff]
  %v5931 = vld [vmem:[%s4460 + $0x28a] sm:$0xff]
  %v5932 = vld [vmem:[%s4460 + $0x292] sm:$0xff]
  %v5933 = vld [vmem:[%s4460 + $0x2a2] sm:$0xff]
  %v5934 = vld [vmem:[%s4460 + $0x2aa] sm:$0xff]
  %v5935 = vld [vmem:[%s4460 + $0x2ba] sm:$0xff]
  %v5936 = vld [vmem:[%s4460 + $0x2c2] sm:$0xff]
  %v5937 = vld [vmem:[%s4460 + $0x2d2] sm:$0xff]
  %v5938 = vld [vmem:[%s4460 + $0x2da] sm:$0xff]
  %v5939 = vld [vmem:[%s4460 + $0x2ea] sm:$0xff]
  %v5940 = vld [vmem:[%s4460 + $0x2f2] sm:$0xff]
  %v5941 = vld [vmem:[%s4460 + $0x302] sm:$0xff]
  %v5942 = vld [vmem:[%s4460 + $0x30a] sm:$0xff]
  %v5943 = vld [vmem:[%s4460 + $0x31a] sm:$0xff]
  %v5944 = vld [vmem:[%s4460 + $0x322] sm:$0xff]
  %s5945 = scalar_lea.vmem %s1, 32
  %v5946 = vld [vmem:[%s5945] sm:$0xf]
  %v5948 = vsel %vm26, %v5881, 0
  %v5951 = vsel %vm26, %v5882, 0
  %v5954 = vsel %vm26, %v5883, 0
  %v5957 = vsel %vm26, %v5884, 0
  %v5960 = vsel %vm26, %v5885, 0
  %v5963 = vsel %vm26, %v5886, 0
  %v5966 = vsel %vm26, %v5887, 0
  %v5969 = vsel %vm26, %v5888, 0
  %v5972 = vsel %vm26, %v5889, 0
  %v5975 = vsel %vm26, %v5890, 0
  %v5978 = vsel %vm26, %v5891, 0
  %v5981 = vsel %vm26, %v5892, 0
  %v5984 = vsel %vm26, %v5893, 0
  %v5987 = vsel %vm26, %v5894, 0
  %v5990 = vsel %vm26, %v5895, 0
  %v5993 = vsel %vm26, %v5896, 0
  %v5996 = vsel %vm26, %v5897, 0
  %v5999 = vsel %vm26, %v5898, 0
  %v6002 = vsel %vm26, %v5899, 0
  %v6005 = vsel %vm26, %v5900, 0
  %v6008 = vsel %vm26, %v5901, 0
  %v6011 = vsel %vm26, %v5902, 0
  %v6014 = vsel %vm26, %v5903, 0
  %v6017 = vsel %vm26, %v5904, 0
  %v6020 = vsel %vm26, %v5905, 0
  %v6023 = vsel %vm26, %v5906, 0
  %v6026 = vsel %vm26, %v5907, 0
  %v6029 = vsel %vm26, %v5908, 0
  %v6032 = vsel %vm26, %v5909, 0
  %v6035 = vsel %vm26, %v5910, 0
  %v6038 = vsel %vm26, %v5911, 0
  %v6041 = vsel %vm26, %v5912, 0
  %v6044 = vsel %vm26, %v5913, 0
  %v6047 = vsel %vm26, %v5914, 0
  %v6050 = vsel %vm26, %v5915, 0
  %v6053 = vsel %vm26, %v5916, 0
  %v6056 = vsel %vm26, %v5917, 0
  %v6059 = vsel %vm26, %v5918, 0
  %v6062 = vsel %vm26, %v5919, 0
  %v6065 = vsel %vm26, %v5920, 0
  %v6068 = vsel %vm26, %v5921, 0
  %v6071 = vsel %vm26, %v5922, 0
  %v6074 = vsel %vm26, %v5923, 0
  %v6077 = vsel %vm26, %v5924, 0
  %v6080 = vsel %vm26, %v5925, 0
  %v6083 = vsel %vm26, %v5926, 0
  %v6086 = vsel %vm26, %v5927, 0
  %v6089 = vsel %vm26, %v5928, 0
  %v6092 = vsel %vm26, %v5929, 0
  %v6095 = vsel %vm26, %v5930, 0
  %v6098 = vsel %vm26, %v5931, 0
  %v6101 = vsel %vm26, %v5932, 0
  %v6104 = vsel %vm26, %v5933, 0
  %v6107 = vsel %vm26, %v5934, 0
  %v6110 = vsel %vm26, %v5935, 0
  %v6113 = vsel %vm26, %v5936, 0
  %v6116 = vsel %vm26, %v5937, 0
  %v6119 = vsel %vm26, %v5938, 0
  %v6122 = vsel %vm26, %v5939, 0
  %v6125 = vsel %vm26, %v5940, 0
  %v6128 = vsel %vm26, %v5941, 0
  %v6131 = vsel %vm26, %v5942, 0
  %v6134 = vsel %vm26, %v5943, 0
  %v6137 = vsel %vm26, %v5944, 0
  %v6140 = vsel %vm651, %v5946, 0
  %6142 = vmatprep.subr.mxu0 0.0
  %6143 = vmatpush1.msra.mxu0 %v6140
  %6144 = vmatprep.subr.mxu0 0.0
  %6145 = vmatpush1.msra.mxu0 0.0
  %6146 = vmatprep.subr.mxu0 0.0
  %6147 = vmatpush1.msra.mxu0 0.0
  %6148 = vmatprep.subr.mxu0 0.0
  %6149 = vmatpush1.msra.mxu0 0.0
  %6150 = vmatprep.subr.mxu0 0.0
  %6151 = vmatpush1.msra.mxu0 0.0
  %6152 = vmatprep.subr.mxu0 0.0
  %6153 = vmatpush1.msra.mxu0 0.0
  %6154 = vmatprep.subr.mxu0 0.0
  %6155 = vmatpush1.msra.mxu0 0.0
  %6156 = vmatprep.subr.mxu0 0.0
  %6157 = vmatpush1.msra.mxu0 0.0
  %6158 = vmatprep.subr.mxu0 0.0
  %6159 = vmatpush1.msra.mxu0 0.0
  %6160 = vmatprep.subr.mxu0 0.0
  %6161 = vmatpush1.msra.mxu0 0.0
  %6162 = vmatprep.subr.mxu0 0.0
  %6163 = vmatpush1.msra.mxu0 0.0
  %6164 = vmatprep.subr.mxu0 0.0
  %6165 = vmatpush1.msra.mxu0 0.0
  %6166 = vmatprep.subr.mxu0 0.0
  %6167 = vmatpush1.msra.mxu0 0.0
  %6168 = vmatprep.subr.mxu0 0.0
  %6169 = vmatpush1.msra.mxu0 0.0
  %6170 = vmatprep.subr.mxu0 0.0
  %6171 = vmatpush1.msra.mxu0 0.0
  %6172 = vmatprep.subr.mxu0 0.0
  %6173 = vmatpush1.msra.mxu0 0.0
  %6174 = vmatprep.subr.mxu0 0.0
  %6175 = vmatpush1.msra.mxu0 0.0
  %6176 = vmatprep.subr.mxu0 0.0
  %6177 = vmatpush1.msra.mxu0 0.0
  %6178 = vmatprep.subr.mxu0 0.0
  %6179 = vmatpush1.msra.mxu0 0.0
  %6180 = vmatprep.subr.mxu0 0.0
  %6181 = vmatpush1.msra.mxu0 0.0
  %6182 = vmatprep.subr.mxu0 0.0
  %6183 = vmatpush1.msra.mxu0 0.0
  %6184 = vmatprep.subr.mxu0 0.0
  %6185 = vmatpush1.msra.mxu0 0.0
  %6186 = vmatprep.subr.mxu0 0.0
  %6187 = vmatpush1.msra.mxu0 0.0
  %6188 = vmatprep.subr.mxu0 0.0
  %6189 = vmatpush1.msra.mxu0 0.0
  %6190 = vmatprep.subr.mxu0 0.0
  %6191 = vmatpush1.msra.mxu0 0.0
  %6192 = vmatprep.subr.mxu0 0.0
  %6193 = vmatpush1.msra.mxu0 0.0
  %6194 = vmatprep.subr.mxu0 0.0
  %6195 = vmatpush1.msra.mxu0 0.0
  %6196 = vmatprep.subr.mxu0 0.0
  %6197 = vmatpush1.msra.mxu0 0.0
  %6198 = vmatprep.subr.mxu0 0.0
  %6199 = vmatpush1.msra.mxu0 0.0
  %6200 = vmatprep.subr.mxu0 0.0
  %6201 = vmatpush1.msra.mxu0 0.0
  %6202 = vmatprep.subr.mxu0 0.0
  %6203 = vmatpush1.msra.mxu0 0.0
  %6204 = vmatprep.subr.mxu0 0.0
  %6205 = vmatpush1.msra.mxu0 0.0
  %6206 = vmatprep.mubr.f32.mxu0 0.0
  %6207 = vmatmul.mubr.f32.gmra.mrb[0].mxu0 %v5948
  %v6208 = vpop.f32.mrb[0].mxu0
  %v6209 = vadd.f32 0.0, %v6208
  %v6210 = vpop.f32.mrb[0].mxu0
  %6211 = vmatprep.mubr.f32.mxu0 0.0
  %6212 = vmatmul.mubr.f32.gmra.mrb[0].mxu0 %v5951
  %v6213 = vpop.f32.mrb[0].mxu0
  %v6214 = vadd.f32 0.0, %v6213
  %v6215 = vpop.f32.mrb[0].mxu0
  %6216 = vmatprep.mubr.f32.mxu0 0.0
  %6217 = vmatmul.mubr.f32.gmra.mrb[0].mxu0 %v5954
  %v6218 = vpop.f32.mrb[0].mxu0
  %v6219 = vadd.f32 0.0, %v6218
  %v6220 = vpop.f32.mrb[0].mxu0
  %6221 = vmatprep.mubr.f32.mxu0 0.0
  %6222 = vmatmul.mubr.f32.gmra.mrb[0].mxu0 %v5957
  %v6223 = vpop.f32.mrb[0].mxu0
  %v6224 = vadd.f32 0.0, %v6223
  %v6225 = vpop.f32.mrb[0].mxu0
  %6226 = vmatprep.mubr.f32.mxu0 0.0
  %6227 = vmatmul.mubr.f32.gmra.mrb[0].mxu0 %v5960
  %v6228 = vpop.f32.mrb[0].mxu0
  %v6229 = vadd.f32 0.0, %v6228
  %v6230 = vpop.f32.mrb[0].mxu0
  %6231 = vmatprep.mubr.f32.mxu0 0.0
  %6232 = vmatmul.mubr.f32.gmra.mrb[0].mxu0 %v5963
  %v6233 = vpop.f32.mrb[0].mxu0
  %v6234 = vadd.f32 0.0, %v6233
  %v6235 = vpop.f32.mrb[0].mxu0
  %6236 = vmatprep.mubr.f32.mxu0 0.0
  %6237 = vmatmul.mubr.f32.gmra.mrb[0].mxu0 %v5966
  %v6238 = vpop.f32.mrb[0].mxu0
  %v6239 = vadd.f32 0.0, %v6238
  %v6240 = vpop.f32.mrb[0].mxu0
  %6241 = vmatprep.mubr.f32.mxu0 0.0
  %6242 = vmatmul.mubr.f32.gmra.mrb[0].mxu0 %v5969
  %v6243 = vpop.f32.mrb[0].mxu0
  %v6244 = vadd.f32 0.0, %v6243
  %v6245 = vpop.f32.mrb[0].mxu0
  %6246 = vmatprep.mubr.f32.mxu0 0.0
  %6247 = vmatmul.mubr.f32.gmra.mrb[0].mxu0 %v5972
  %v6248 = vpop.f32.mrb[0].mxu0
  %v6249 = vadd.f32 0.0, %v6248
  %v6250 = vpop.f32.mrb[0].mxu0
  %6251 = vmatprep.mubr.f32.mxu0 0.0
  %6252 = vmatmul.mubr.f32.gmra.mrb[0].mxu0 %v5975
  %v6253 = vpop.f32.mrb[0].mxu0
  %v6254 = vadd.f32 0.0, %v6253
  %v6255 = vpop.f32.mrb[0].mxu0
  %6256 = vmatprep.mubr.f32.mxu0 0.0
  %6257 = vmatmul.mubr.f32.gmra.mrb[0].mxu0 %v5978
  %v6258 = vpop.f32.mrb[0].mxu0
  %v6259 = vadd.f32 0.0, %v6258
  %v6260 = vpop.f32.mrb[0].mxu0
  %6261 = vmatprep.mubr.f32.mxu0 0.0
  %6262 = vmatmul.mubr.f32.gmra.mrb[0].mxu0 %v5981
  %v6263 = vpop.f32.mrb[0].mxu0
  %v6264 = vadd.f32 0.0, %v6263
  %v6265 = vpop.f32.mrb[0].mxu0
  %6266 = vmatprep.mubr.f32.mxu0 0.0
  %6267 = vmatmul.mubr.f32.gmra.mrb[0].mxu0 %v5984
  %v6268 = vpop.f32.mrb[0].mxu0
  %v6269 = vadd.f32 0.0, %v6268
  %v6270 = vpop.f32.mrb[0].mxu0
  %6271 = vmatprep.mubr.f32.mxu0 0.0
  %6272 = vmatmul.mubr.f32.gmra.mrb[0].mxu0 %v5987
  %v6273 = vpop.f32.mrb[0].mxu0
  %v6274 = vadd.f32 0.0, %v6273
  %v6275 = vpop.f32.mrb[0].mxu0
  %6276 = vmatprep.mubr.f32.mxu0 0.0
  %6277 = vmatmul.mubr.f32.gmra.mrb[0].mxu0 %v5990
  %v6278 = vpop.f32.mrb[0].mxu0
  %v6279 = vadd.f32 0.0, %v6278
  %v6280 = vpop.f32.mrb[0].mxu0
  %6281 = vmatprep.mubr.f32.mxu0 0.0
  %6282 = vmatmul.mubr.f32.gmra.mrb[0].mxu0 %v5993
  %v6283 = vpop.f32.mrb[0].mxu0
  %v6284 = vadd.f32 0.0, %v6283
  %v6285 = vpop.f32.mrb[0].mxu0
  %6286 = vmatprep.mubr.f32.mxu0 0.0
  %6287 = vmatmul.mubr.f32.gmra.mrb[0].mxu0 %v5996
  %v6288 = vpop.f32.mrb[0].mxu0
  %v6289 = vadd.f32 0.0, %v6288
  %v6290 = vpop.f32.mrb[0].mxu0
  %6291 = vmatprep.mubr.f32.mxu0 0.0
  %6292 = vmatmul.mubr.f32.gmra.mrb[0].mxu0 %v5999
  %v6293 = vpop.f32.mrb[0].mxu0
  %v6294 = vadd.f32 0.0, %v6293
  %v6295 = vpop.f32.mrb[0].mxu0
  %6296 = vmatprep.mubr.f32.mxu0 0.0
  %6297 = vmatmul.mubr.f32.gmra.mrb[0].mxu0 %v6002
  %v6298 = vpop.f32.mrb[0].mxu0
  %v6299 = vadd.f32 0.0, %v6298
  %v6300 = vpop.f32.mrb[0].mxu0
  %6301 = vmatprep.mubr.f32.mxu0 0.0
  %6302 = vmatmul.mubr.f32.gmra.mrb[0].mxu0 %v6005
  %v6303 = vpop.f32.mrb[0].mxu0
  %v6304 = vadd.f32 0.0, %v6303
  %v6305 = vpop.f32.mrb[0].mxu0
  %6306 = vmatprep.mubr.f32.mxu0 0.0
  %6307 = vmatmul.mubr.f32.gmra.mrb[0].mxu0 %v6008
  %v6308 = vpop.f32.mrb[0].mxu0
  %v6309 = vadd.f32 0.0, %v6308
  %v6310 = vpop.f32.mrb[0].mxu0
  %6311 = vmatprep.mubr.f32.mxu0 0.0
  %6312 = vmatmul.mubr.f32.gmra.mrb[0].mxu0 %v6011
  %v6313 = vpop.f32.mrb[0].mxu0
  %v6314 = vadd.f32 0.0, %v6313
  %v6315 = vpop.f32.mrb[0].mxu0
  %6316 = vmatprep.mubr.f32.mxu0 0.0
  %6317 = vmatmul.mubr.f32.gmra.mrb[0].mxu0 %v6014
  %v6318 = vpop.f32.mrb[0].mxu0
  %v6319 = vadd.f32 0.0, %v6318
  %v6320 = vpop.f32.mrb[0].mxu0
  %6321 = vmatprep.mubr.f32.mxu0 0.0
  %6322 = vmatmul.mubr.f32.gmra.mrb[0].mxu0 %v6017
  %v6323 = vpop.f32.mrb[0].mxu0
  %v6324 = vadd.f32 0.0, %v6323
  %v6325 = vpop.f32.mrb[0].mxu0
  %6326 = vmatprep.mubr.f32.mxu0 0.0
  %6327 = vmatmul.mubr.f32.gmra.mrb[0].mxu0 %v6020
  %v6328 = vpop.f32.mrb[0].mxu0
  %v6329 = vadd.f32 0.0, %v6328
  %v6330 = vpop.f32.mrb[0].mxu0
  %6331 = vmatprep.mubr.f32.mxu0 0.0
  %6332 = vmatmul.mubr.f32.gmra.mrb[0].mxu0 %v6023
  %v6333 = vpop.f32.mrb[0].mxu0
  %v6334 = vadd.f32 0.0, %v6333
  %v6335 = vpop.f32.mrb[0].mxu0
  %6336 = vmatprep.mubr.f32.mxu0 0.0
  %6337 = vmatmul.mubr.f32.gmra.mrb[0].mxu0 %v6026
  %v6338 = vpop.f32.mrb[0].mxu0
  %v6339 = vadd.f32 0.0, %v6338
  %v6340 = vpop.f32.mrb[0].mxu0
  %6341 = vmatprep.mubr.f32.mxu0 0.0
  %6342 = vmatmul.mubr.f32.gmra.mrb[0].mxu0 %v6029
  %v6343 = vpop.f32.mrb[0].mxu0
  %v6344 = vadd.f32 0.0, %v6343
  %v6345 = vpop.f32.mrb[0].mxu0
  %6346 = vmatprep.mubr.f32.mxu0 0.0
  %6347 = vmatmul.mubr.f32.gmra.mrb[0].mxu0 %v6032
  %v6348 = vpop.f32.mrb[0].mxu0
  %v6349 = vadd.f32 0.0, %v6348
  %v6350 = vpop.f32.mrb[0].mxu0
  %6351 = vmatprep.mubr.f32.mxu0 0.0
  %6352 = vmatmul.mubr.f32.gmra.mrb[0].mxu0 %v6035
  %v6353 = vpop.f32.mrb[0].mxu0
  %v6354 = vadd.f32 0.0, %v6353
  %v6355 = vpop.f32.mrb[0].mxu0
  %6356 = vmatprep.mubr.f32.mxu0 0.0
  %6357 = vmatmul.mubr.f32.gmra.mrb[0].mxu0 %v6038
  %v6358 = vpop.f32.mrb[0].mxu0
  %v6359 = vadd.f32 0.0, %v6358
  %v6360 = vpop.f32.mrb[0].mxu0
  %6361 = vmatprep.mubr.f32.mxu0 0.0
  %6362 = vmatmul.mubr.f32.gmra.mrb[0].mxu0 %v6041
  %v6363 = vpop.f32.mrb[0].mxu0
  %v6364 = vadd.f32 0.0, %v6363
  %v6365 = vpop.f32.mrb[0].mxu0
  %6366 = vmatprep.mubr.f32.mxu0 0.0
  %6367 = vmatmul.mubr.f32.gmra.mrb[0].mxu0 %v6044
  %v6368 = vpop.f32.mrb[0].mxu0
  %v6369 = vadd.f32 0.0, %v6368
  %v6370 = vpop.f32.mrb[0].mxu0
  %6371 = vmatprep.mubr.f32.mxu0 0.0
  %6372 = vmatmul.mubr.f32.gmra.mrb[0].mxu0 %v6047
  %v6373 = vpop.f32.mrb[0].mxu0
  %v6374 = vadd.f32 0.0, %v6373
  %v6375 = vpop.f32.mrb[0].mxu0
  %6376 = vmatprep.mubr.f32.mxu0 0.0
  %6377 = vmatmul.mubr.f32.gmra.mrb[0].mxu0 %v6050
  %v6378 = vpop.f32.mrb[0].mxu0
  %v6379 = vadd.f32 0.0, %v6378
  %v6380 = vpop.f32.mrb[0].mxu0
  %6381 = vmatprep.mubr.f32.mxu0 0.0
  %6382 = vmatmul.mubr.f32.gmra.mrb[0].mxu0 %v6053
  %v6383 = vpop.f32.mrb[0].mxu0
  %v6384 = vadd.f32 0.0, %v6383
  %v6385 = vpop.f32.mrb[0].mxu0
  %6386 = vmatprep.mubr.f32.mxu0 0.0
  %6387 = vmatmul.mubr.f32.gmra.mrb[0].mxu0 %v6056
  %v6388 = vpop.f32.mrb[0].mxu0
  %v6389 = vadd.f32 0.0, %v6388
  %v6390 = vpop.f32.mrb[0].mxu0
  %6391 = vmatprep.mubr.f32.mxu0 0.0
  %6392 = vmatmul.mubr.f32.gmra.mrb[0].mxu0 %v6059
  %v6393 = vpop.f32.mrb[0].mxu0
  %v6394 = vadd.f32 0.0, %v6393
  %v6395 = vpop.f32.mrb[0].mxu0
  %6396 = vmatprep.mubr.f32.mxu0 0.0
  %6397 = vmatmul.mubr.f32.gmra.mrb[0].mxu0 %v6062
  %v6398 = vpop.f32.mrb[0].mxu0
  %v6399 = vadd.f32 0.0, %v6398
  %v6400 = vpop.f32.mrb[0].mxu0
  %6401 = vmatprep.mubr.f32.mxu0 0.0
  %6402 = vmatmul.mubr.f32.gmra.mrb[0].mxu0 %v6065
  %v6403 = vpop.f32.mrb[0].mxu0
  %v6404 = vadd.f32 0.0, %v6403
  %v6405 = vpop.f32.mrb[0].mxu0
  %6406 = vmatprep.mubr.f32.mxu0 0.0
  %6407 = vmatmul.mubr.f32.gmra.mrb[0].mxu0 %v6068
  %v6408 = vpop.f32.mrb[0].mxu0
  %v6409 = vadd.f32 0.0, %v6408
  %v6410 = vpop.f32.mrb[0].mxu0
  %6411 = vmatprep.mubr.f32.mxu0 0.0
  %6412 = vmatmul.mubr.f32.gmra.mrb[0].mxu0 %v6071
  %v6413 = vpop.f32.mrb[0].mxu0
  %v6414 = vadd.f32 0.0, %v6413
  %v6415 = vpop.f32.mrb[0].mxu0
  %6416 = vmatprep.mubr.f32.mxu0 0.0
  %6417 = vmatmul.mubr.f32.gmra.mrb[0].mxu0 %v6074
  %v6418 = vpop.f32.mrb[0].mxu0
  %v6419 = vadd.f32 0.0, %v6418
  %v6420 = vpop.f32.mrb[0].mxu0
  %6421 = vmatprep.mubr.f32.mxu0 0.0
  %6422 = vmatmul.mubr.f32.gmra.mrb[0].mxu0 %v6077
  %v6423 = vpop.f32.mrb[0].mxu0
  %v6424 = vadd.f32 0.0, %v6423
  %v6425 = vpop.f32.mrb[0].mxu0
  %6426 = vmatprep.mubr.f32.mxu0 0.0
  %6427 = vmatmul.mubr.f32.gmra.mrb[0].mxu0 %v6080
  %v6428 = vpop.f32.mrb[0].mxu0
  %v6429 = vadd.f32 0.0, %v6428
  %v6430 = vpop.f32.mrb[0].mxu0
  %6431 = vmatprep.mubr.f32.mxu0 0.0
  %6432 = vmatmul.mubr.f32.gmra.mrb[0].mxu0 %v6083
  %v6433 = vpop.f32.mrb[0].mxu0
  %v6434 = vadd.f32 0.0, %v6433
  %v6435 = vpop.f32.mrb[0].mxu0
  %6436 = vmatprep.mubr.f32.mxu0 0.0
  %6437 = vmatmul.mubr.f32.gmra.mrb[0].mxu0 %v6086
  %v6438 = vpop.f32.mrb[0].mxu0
  %v6439 = vadd.f32 0.0, %v6438
  %v6440 = vpop.f32.mrb[0].mxu0
  %6441 = vmatprep.mubr.f32.mxu0 0.0
  %6442 = vmatmul.mubr.f32.gmra.mrb[0].mxu0 %v6089
  %v6443 = vpop.f32.mrb[0].mxu0
  %v6444 = vadd.f32 0.0, %v6443
  %v6445 = vpop.f32.mrb[0].mxu0
  %6446 = vmatprep.mubr.f32.mxu0 0.0
  %6447 = vmatmul.mubr.f32.gmra.mrb[0].mxu0 %v6092
  %v6448 = vpop.f32.mrb[0].mxu0
  %v6449 = vadd.f32 0.0, %v6448
  %v6450 = vpop.f32.mrb[0].mxu0
  %6451 = vmatprep.mubr.f32.mxu0 0.0
  %6452 = vmatmul.mubr.f32.gmra.mrb[0].mxu0 %v6095
  %v6453 = vpop.f32.mrb[0].mxu0
  %v6454 = vadd.f32 0.0, %v6453
  %v6455 = vpop.f32.mrb[0].mxu0
  %6456 = vmatprep.mubr.f32.mxu0 0.0
  %6457 = vmatmul.mubr.f32.gmra.mrb[0].mxu0 %v6098
  %v6458 = vpop.f32.mrb[0].mxu0
  %v6459 = vadd.f32 0.0, %v6458
  %v6460 = vpop.f32.mrb[0].mxu0
  %6461 = vmatprep.mubr.f32.mxu0 0.0
  %6462 = vmatmul.mubr.f32.gmra.mrb[0].mxu0 %v6101
  %v6463 = vpop.f32.mrb[0].mxu0
  %v6464 = vadd.f32 0.0, %v6463
  %v6465 = vpop.f32.mrb[0].mxu0
  %6466 = vmatprep.mubr.f32.mxu0 0.0
  %6467 = vmatmul.mubr.f32.gmra.mrb[0].mxu0 %v6104
  %v6468 = vpop.f32.mrb[0].mxu0
  %v6469 = vadd.f32 0.0, %v6468
  %v6470 = vpop.f32.mrb[0].mxu0
  %6471 = vmatprep.mubr.f32.mxu0 0.0
  %6472 = vmatmul.mubr.f32.gmra.mrb[0].mxu0 %v6107
  %v6473 = vpop.f32.mrb[0].mxu0
  %v6474 = vadd.f32 0.0, %v6473
  %v6475 = vpop.f32.mrb[0].mxu0
  %6476 = vmatprep.mubr.f32.mxu0 0.0
  %6477 = vmatmul.mubr.f32.gmra.mrb[0].mxu0 %v6110
  %v6478 = vpop.f32.mrb[0].mxu0
  %v6479 = vadd.f32 0.0, %v6478
  %v6480 = vpop.f32.mrb[0].mxu0
  %6481 = vmatprep.mubr.f32.mxu0 0.0
  %6482 = vmatmul.mubr.f32.gmra.mrb[0].mxu0 %v6113
  %v6483 = vpop.f32.mrb[0].mxu0
  %v6484 = vadd.f32 0.0, %v6483
  %v6485 = vpop.f32.mrb[0].mxu0
  %6486 = vmatprep.mubr.f32.mxu0 0.0
  %6487 = vmatmul.mubr.f32.gmra.mrb[0].mxu0 %v6116
  %v6488 = vpop.f32.mrb[0].mxu0
  %v6489 = vadd.f32 0.0, %v6488
  %v6490 = vpop.f32.mrb[0].mxu0
  %6491 = vmatprep.mubr.f32.mxu0 0.0
  %6492 = vmatmul.mubr.f32.gmra.mrb[0].mxu0 %v6119
  %v6493 = vpop.f32.mrb[0].mxu0
  %v6494 = vadd.f32 0.0, %v6493
  %v6495 = vpop.f32.mrb[0].mxu0
  %6496 = vmatprep.mubr.f32.mxu0 0.0
  %6497 = vmatmul.mubr.f32.gmra.mrb[0].mxu0 %v6122
  %v6498 = vpop.f32.mrb[0].mxu0
  %v6499 = vadd.f32 0.0, %v6498
  %v6500 = vpop.f32.mrb[0].mxu0
  %6501 = vmatprep.mubr.f32.mxu0 0.0
  %6502 = vmatmul.mubr.f32.gmra.mrb[0].mxu0 %v6125
  %v6503 = vpop.f32.mrb[0].mxu0
  %v6504 = vadd.f32 0.0, %v6503
  %v6505 = vpop.f32.mrb[0].mxu0
  %6506 = vmatprep.mubr.f32.mxu0 0.0
  %6507 = vmatmul.mubr.f32.gmra.mrb[0].mxu0 %v6128
  %v6508 = vpop.f32.mrb[0].mxu0
  %v6509 = vadd.f32 0.0, %v6508
  %v6510 = vpop.f32.mrb[0].mxu0
  %6511 = vmatprep.mubr.f32.mxu0 0.0
  %6512 = vmatmul.mubr.f32.gmra.mrb[0].mxu0 %v6131
  %v6513 = vpop.f32.mrb[0].mxu0
  %v6514 = vadd.f32 0.0, %v6513
  %v6515 = vpop.f32.mrb[0].mxu0
  %6516 = vmatprep.mubr.f32.mxu0 0.0
  %6517 = vmatmul.mubr.f32.gmra.mrb[0].mxu0 %v6134
  %v6518 = vpop.f32.mrb[0].mxu0
  %v6519 = vadd.f32 0.0, %v6518
  %v6520 = vpop.f32.mrb[0].mxu0
  %6521 = vmatprep.mubr.f32.mxu0 0.0
  %6522 = vmatmul.mubr.f32.gmra.mrb[0].mxu0 %v6137
  %v6523 = vpop.f32.mrb[0].mxu0
  %v6524 = vadd.f32 0.0, %v6523
  %v6525 = vpop.f32.mrb[0].mxu0
  %6526 = vdwg.mxu0
  %v6527 = vadd.f32 %v5817, %v6209
  %v6528 = vadd.f32 %v5818, %v6214
  %v6529 = vadd.f32 %v5819, %v6219
  %v6530 = vadd.f32 %v5820, %v6224
  %v6531 = vadd.f32 %v5821, %v6229
  %v6532 = vadd.f32 %v5822, %v6234
  %v6533 = vadd.f32 %v5823, %v6239
  %v6534 = vadd.f32 %v5824, %v6244
  %v6535 = vadd.f32 %v5825, %v6249
  %v6536 = vadd.f32 %v5826, %v6254
  %v6537 = vadd.f32 %v5827, %v6259
  %v6538 = vadd.f32 %v5828, %v6264
  %v6539 = vadd.f32 %v5829, %v6269
  %v6540 = vadd.f32 %v5830, %v6274
  %v6541 = vadd.f32 %v5831, %v6279
  %v6542 = vadd.f32 %v5832, %v6284
  %v6543 = vadd.f32 %v5833, %v6289
  %v6544 = vadd.f32 %v5834, %v6294
  %v6545 = vadd.f32 %v5835, %v6299
  %v6546 = vadd.f32 %v5836, %v6304
  %v6547 = vadd.f32 %v5837, %v6309
  %v6548 = vadd.f32 %v5838, %v6314
  %v6549 = vadd.f32 %v5839, %v6319
  %v6550 = vadd.f32 %v5840, %v6324
  %v6551 = vadd.f32 %v5841, %v6329
  %v6552 = vadd.f32 %v5842, %v6334
  %v6553 = vadd.f32 %v5843, %v6339
  %v6554 = vadd.f32 %v5844, %v6344
  %v6555 = vadd.f32 %v5845, %v6349
  %v6556 = vadd.f32 %v5846, %v6354
  %v6557 = vadd.f32 %v5847, %v6359
  %v6558 = vadd.f32 %v5848, %v6364
  %v6559 = vadd.f32 %v5849, %v6369
  %v6560 = vadd.f32 %v5850, %v6374
  %v6561 = vadd.f32 %v5851, %v6379
  %v6562 = vadd.f32 %v5852, %v6384
  %v6563 = vadd.f32 %v5853, %v6389
  %v6564 = vadd.f32 %v5854, %v6394
  %v6565 = vadd.f32 %v5855, %v6399
  %v6566 = vadd.f32 %v5856, %v6404
  %v6567 = vadd.f32 %v5857, %v6409
  %v6568 = vadd.f32 %v5858, %v6414
  %v6569 = vadd.f32 %v5859, %v6419
  %v6570 = vadd.f32 %v5860, %v6424
  %v6571 = vadd.f32 %v5861, %v6429
  %v6572 = vadd.f32 %v5862, %v6434
  %v6573 = vadd.f32 %v5863, %v6439
  %v6574 = vadd.f32 %v5864, %v6444
  %v6575 = vadd.f32 %v5865, %v6449
  %v6576 = vadd.f32 %v5866, %v6454
  %v6577 = vadd.f32 %v5867, %v6459
  %v6578 = vadd.f32 %v5868, %v6464
  %v6579 = vadd.f32 %v5869, %v6469
  %v6580 = vadd.f32 %v5870, %v6474
  %v6581 = vadd.f32 %v5871, %v6479
  %v6582 = vadd.f32 %v5872, %v6484
  %v6583 = vadd.f32 %v5873, %v6489
  %v6584 = vadd.f32 %v5874, %v6494
  %v6585 = vadd.f32 %v5875, %v6499
  %v6586 = vadd.f32 %v5876, %v6504
  %v6587 = vadd.f32 %v5877, %v6509
  %v6588 = vadd.f32 %v5878, %v6514
  %v6589 = vadd.f32 %v5879, %v6519
  %v6590 = vadd.f32 %v5880, %v6524
  %v6591 = vld [vmem:[%s2] sm:$0x1]
  %v6593 = vlaneseq
  %v6594 = vshrl.u32 %v6593, 7
  %v6595 = vsub.s32 0, %v6594
  %v6596 = vrot.slane %v6591, %v6595
  %v6598 = vmul.f32 %v6527, %v6596
  %v6599 = vmul.f32 %v6528, %v6596
  %v6600 = vmul.f32 %v6529, %v6596
  %v6601 = vmul.f32 %v6530, %v6596
  %v6602 = vmul.f32 %v6531, %v6596
  %v6603 = vmul.f32 %v6532, %v6596
  %v6604 = vmul.f32 %v6533, %v6596
  %v6605 = vmul.f32 %v6534, %v6596
  %v6606 = vmul.f32 %v6535, %v6596
  %v6607 = vmul.f32 %v6536, %v6596
  %v6608 = vmul.f32 %v6537, %v6596
  %v6609 = vmul.f32 %v6538, %v6596
  %v6610 = vmul.f32 %v6539, %v6596
  %v6611 = vmul.f32 %v6540, %v6596
  %v6612 = vmul.f32 %v6541, %v6596
  %v6613 = vmul.f32 %v6542, %v6596
  %v6614 = vmul.f32 %v6543, %v6596
  %v6615 = vmul.f32 %v6544, %v6596
  %v6616 = vmul.f32 %v6545, %v6596
  %v6617 = vmul.f32 %v6546, %v6596
  %v6618 = vmul.f32 %v6547, %v6596
  %v6619 = vmul.f32 %v6548, %v6596
  %v6620 = vmul.f32 %v6549, %v6596
  %v6621 = vmul.f32 %v6550, %v6596
  %v6622 = vmul.f32 %v6551, %v6596
  %v6623 = vmul.f32 %v6552, %v6596
  %v6624 = vmul.f32 %v6553, %v6596
  %v6625 = vmul.f32 %v6554, %v6596
  %v6626 = vmul.f32 %v6555, %v6596
  %v6627 = vmul.f32 %v6556, %v6596
  %v6628 = vmul.f32 %v6557, %v6596
  %v6629 = vmul.f32 %v6558, %v6596
  %v6630 = vmul.f32 %v6559, %v6596
  %v6631 = vmul.f32 %v6560, %v6596
  %v6632 = vmul.f32 %v6561, %v6596
  %v6633 = vmul.f32 %v6562, %v6596
  %v6634 = vmul.f32 %v6563, %v6596
  %v6635 = vmul.f32 %v6564, %v6596
  %v6636 = vmul.f32 %v6565, %v6596
  %v6637 = vmul.f32 %v6566, %v6596
  %v6638 = vmul.f32 %v6567, %v6596
  %v6639 = vmul.f32 %v6568, %v6596
  %v6640 = vmul.f32 %v6569, %v6596
  %v6641 = vmul.f32 %v6570, %v6596
  %v6642 = vmul.f32 %v6571, %v6596
  %v6643 = vmul.f32 %v6572, %v6596
  %v6644 = vmul.f32 %v6573, %v6596
  %v6645 = vmul.f32 %v6574, %v6596
  %v6646 = vmul.f32 %v6575, %v6596
  %v6647 = vmul.f32 %v6576, %v6596
  %v6648 = vmul.f32 %v6577, %v6596
  %v6649 = vmul.f32 %v6578, %v6596
  %v6650 = vmul.f32 %v6579, %v6596
  %v6651 = vmul.f32 %v6580, %v6596
  %v6652 = vmul.f32 %v6581, %v6596
  %v6653 = vmul.f32 %v6582, %v6596
  %v6654 = vmul.f32 %v6583, %v6596
  %v6655 = vmul.f32 %v6584, %v6596
  %v6656 = vmul.f32 %v6585, %v6596
  %v6657 = vmul.f32 %v6586, %v6596
  %v6658 = vmul.f32 %v6587, %v6596
  %v6659 = vmul.f32 %v6588, %v6596
  %v6660 = vmul.f32 %v6589, %v6596
  %v6661 = vmul.f32 %v6590, %v6596
  %v6662 = vld [vmem:[%s3] sm:$0x1]
  %v6664 = vlaneseq
  %v6665 = vshrl.u32 %v6664, 7
  %v6666 = vsub.s32 0, %v6665
  %v6667 = vrot.slane %v6662, %v6666
  %v6669 = vadd.f32 %v6598, %v6667
  %v6670 = vadd.f32 %v6599, %v6667
  %v6671 = vadd.f32 %v6600, %v6667
  %v6672 = vadd.f32 %v6601, %v6667
  %v6673 = vadd.f32 %v6602, %v6667
  %v6674 = vadd.f32 %v6603, %v6667
  %v6675 = vadd.f32 %v6604, %v6667
  %v6676 = vadd.f32 %v6605, %v6667
  %v6677 = vadd.f32 %v6606, %v6667
  %v6678 = vadd.f32 %v6607, %v6667
  %v6679 = vadd.f32 %v6608, %v6667
  %v6680 = vadd.f32 %v6609, %v6667
  %v6681 = vadd.f32 %v6610, %v6667
  %v6682 = vadd.f32 %v6611, %v6667
  %v6683 = vadd.f32 %v6612, %v6667
  %v6684 = vadd.f32 %v6613, %v6667
  %v6685 = vadd.f32 %v6614, %v6667
  %v6686 = vadd.f32 %v6615, %v6667
  %v6687 = vadd.f32 %v6616, %v6667
  %v6688 = vadd.f32 %v6617, %v6667
  %v6689 = vadd.f32 %v6618, %v6667
  %v6690 = vadd.f32 %v6619, %v6667
  %v6691 = vadd.f32 %v6620, %v6667
  %v6692 = vadd.f32 %v6621, %v6667
  %v6693 = vadd.f32 %v6622, %v6667
  %v6694 = vadd.f32 %v6623, %v6667
  %v6695 = vadd.f32 %v6624, %v6667
  %v6696 = vadd.f32 %v6625, %v6667
  %v6697 = vadd.f32 %v6626, %v6667
  %v6698 = vadd.f32 %v6627, %v6667
  %v6699 = vadd.f32 %v6628, %v6667
  %v6700 = vadd.f32 %v6629, %v6667
  %v6701 = vadd.f32 %v6630, %v6667
  %v6702 = vadd.f32 %v6631, %v6667
  %v6703 = vadd.f32 %v6632, %v6667
  %v6704 = vadd.f32 %v6633, %v6667
  %v6705 = vadd.f32 %v6634, %v6667
  %v6706 = vadd.f32 %v6635, %v6667
  %v6707 = vadd.f32 %v6636, %v6667
  %v6708 = vadd.f32 %v6637, %v6667
  %v6709 = vadd.f32 %v6638, %v6667
  %v6710 = vadd.f32 %v6639, %v6667
  %v6711 = vadd.f32 %v6640, %v6667
  %v6712 = vadd.f32 %v6641, %v6667
  %v6713 = vadd.f32 %v6642, %v6667
  %v6714 = vadd.f32 %v6643, %v6667
  %v6715 = vadd.f32 %v6644, %v6667
  %v6716 = vadd.f32 %v6645, %v6667
  %v6717 = vadd.f32 %v6646, %v6667
  %v6718 = vadd.f32 %v6647, %v6667
  %v6719 = vadd.f32 %v6648, %v6667
  %v6720 = vadd.f32 %v6649, %v6667
  %v6721 = vadd.f32 %v6650, %v6667
  %v6722 = vadd.f32 %v6651, %v6667
  %v6723 = vadd.f32 %v6652, %v6667
  %v6724 = vadd.f32 %v6653, %v6667
  %v6725 = vadd.f32 %v6654, %v6667
  %v6726 = vadd.f32 %v6655, %v6667
  %v6727 = vadd.f32 %v6656, %v6667
  %v6728 = vadd.f32 %v6657, %v6667
  %v6729 = vadd.f32 %v6658, %v6667
  %v6730 = vadd.f32 %v6659, %v6667
  %v6731 = vadd.f32 %v6660, %v6667
  %v6732 = vadd.f32 %v6661, %v6667
  %v6733 = vmax.f32 %v6669, 0.0
  %v6734 = vmax.f32 %v6670, 0.0
  %v6735 = vmax.f32 %v6671, 0.0
  %v6736 = vmax.f32 %v6672, 0.0
  %v6737 = vmax.f32 %v6673, 0.0
  %v6738 = vmax.f32 %v6674, 0.0
  %v6739 = vmax.f32 %v6675, 0.0
  %v6740 = vmax.f32 %v6676, 0.0
  %v6741 = vmax.f32 %v6677, 0.0
  %v6742 = vmax.f32 %v6678, 0.0
  %v6743 = vmax.f32 %v6679, 0.0
  %v6744 = vmax.f32 %v6680, 0.0
  %v6745 = vmax.f32 %v6681, 0.0
  %v6746 = vmax.f32 %v6682, 0.0
  %v6747 = vmax.f32 %v6683, 0.0
  %v6748 = vmax.f32 %v6684, 0.0
  %v6749 = vmax.f32 %v6685, 0.0
  %v6750 = vmax.f32 %v6686, 0.0
  %v6751 = vmax.f32 %v6687, 0.0
  %v6752 = vmax.f32 %v6688, 0.0
  %v6753 = vmax.f32 %v6689, 0.0
  %v6754 = vmax.f32 %v6690, 0.0
  %v6755 = vmax.f32 %v6691, 0.0
  %v6756 = vmax.f32 %v6692, 0.0
  %v6757 = vmax.f32 %v6693, 0.0
  %v6758 = vmax.f32 %v6694, 0.0
  %v6759 = vmax.f32 %v6695, 0.0
  %v6760 = vmax.f32 %v6696, 0.0
  %v6761 = vmax.f32 %v6697, 0.0
  %v6762 = vmax.f32 %v6698, 0.0
  %v6763 = vmax.f32 %v6699, 0.0
  %v6764 = vmax.f32 %v6700, 0.0
  %v6765 = vmax.f32 %v6701, 0.0
  %v6766 = vmax.f32 %v6702, 0.0
  %v6767 = vmax.f32 %v6703, 0.0
  %v6768 = vmax.f32 %v6704, 0.0
  %v6769 = vmax.f32 %v6705, 0.0
  %v6770 = vmax.f32 %v6706, 0.0
  %v6771 = vmax.f32 %v6707, 0.0
  %v6772 = vmax.f32 %v6708, 0.0
  %v6773 = vmax.f32 %v6709, 0.0
  %v6774 = vmax.f32 %v6710, 0.0
  %v6775 = vmax.f32 %v6711, 0.0
  %v6776 = vmax.f32 %v6712, 0.0
  %v6777 = vmax.f32 %v6713, 0.0
  %v6778 = vmax.f32 %v6714, 0.0
  %v6779 = vmax.f32 %v6715, 0.0
  %v6780 = vmax.f32 %v6716, 0.0
  %v6781 = vmax.f32 %v6717, 0.0
  %v6782 = vmax.f32 %v6718, 0.0
  %v6783 = vmax.f32 %v6719, 0.0
  %v6784 = vmax.f32 %v6720, 0.0
  %v6785 = vmax.f32 %v6721, 0.0
  %v6786 = vmax.f32 %v6722, 0.0
  %v6787 = vmax.f32 %v6723, 0.0
  %v6788 = vmax.f32 %v6724, 0.0
  %v6789 = vmax.f32 %v6725, 0.0
  %v6790 = vmax.f32 %v6726, 0.0
  %v6791 = vmax.f32 %v6727, 0.0
  %v6792 = vmax.f32 %v6728, 0.0
  %v6793 = vmax.f32 %v6729, 0.0
  %v6794 = vmax.f32 %v6730, 0.0
  %v6795 = vmax.f32 %v6731, 0.0
  %v6796 = vmax.f32 %v6732, 0.0
  %s6797 = scalar_lea.vmem [#allocation3], 24
  %6798 = vst.msk [vmem:[%s6797 + $0x1] sm:$0xff] %vm26, %v6733
  %6799 = vst.msk [vmem:[%s6797 + $0x9] sm:$0xff] %vm26, %v6734
  %6800 = vst.msk [vmem:[%s6797 + $0x19] sm:$0xff] %vm26, %v6735
  %6801 = vst.msk [vmem:[%s6797 + $0x21] sm:$0xff] %vm26, %v6736
  %6802 = vst.msk [vmem:[%s6797 + $0x31] sm:$0xff] %vm26, %v6737
  %6803 = vst.msk [vmem:[%s6797 + $0x39] sm:$0xff] %vm26, %v6738
  %6804 = vst.msk [vmem:[%s6797 + $0x49] sm:$0xff] %vm26, %v6739
  %6805 = vst.msk [vmem:[%s6797 + $0x51] sm:$0xff] %vm26, %v6740
  %6806 = vst.msk [vmem:[%s6797 + $0x61] sm:$0xff] %vm26, %v6741
  %6807 = vst.msk [vmem:[%s6797 + $0x69] sm:$0xff] %vm26, %v6742
  %6808 = vst.msk [vmem:[%s6797 + $0x79] sm:$0xff] %vm26, %v6743
  %6809 = vst.msk [vmem:[%s6797 + $0x81] sm:$0xff] %vm26, %v6744
  %6810 = vst.msk [vmem:[%s6797 + $0x91] sm:$0xff] %vm26, %v6745
  %6811 = vst.msk [vmem:[%s6797 + $0x99] sm:$0xff] %vm26, %v6746
  %6812 = vst.msk [vmem:[%s6797 + $0xa9] sm:$0xff] %vm26, %v6747
  %6813 = vst.msk [vmem:[%s6797 + $0xb1] sm:$0xff] %vm26, %v6748
  %6814 = vst.msk [vmem:[%s6797 + $0xc1] sm:$0xff] %vm26, %v6749
  %6815 = vst.msk [vmem:[%s6797 + $0xc9] sm:$0xff] %vm26, %v6750
  %6816 = vst.msk [vmem:[%s6797 + $0xd9] sm:$0xff] %vm26, %v6751
  %6817 = vst.msk [vmem:[%s6797 + $0xe1] sm:$0xff] %vm26, %v6752
  %6818 = vst.msk [vmem:[%s6797 + $0xf1] sm:$0xff] %vm26, %v6753
  %6819 = vst.msk [vmem:[%s6797 + $0xf9] sm:$0xff] %vm26, %v6754
  %6820 = vst.msk [vmem:[%s6797 + $0x109] sm:$0xff] %vm26, %v6755
  %6821 = vst.msk [vmem:[%s6797 + $0x111] sm:$0xff] %vm26, %v6756
  %6822 = vst.msk [vmem:[%s6797 + $0x121] sm:$0xff] %vm26, %v6757
  %6823 = vst.msk [vmem:[%s6797 + $0x129] sm:$0xff] %vm26, %v6758
  %6824 = vst.msk [vmem:[%s6797 + $0x139] sm:$0xff] %vm26, %v6759
  %6825 = vst.msk [vmem:[%s6797 + $0x141] sm:$0xff] %vm26, %v6760
  %6826 = vst.msk [vmem:[%s6797 + $0x151] sm:$0xff] %vm26, %v6761
  %6827 = vst.msk [vmem:[%s6797 + $0x159] sm:$0xff] %vm26, %v6762
  %6828 = vst.msk [vmem:[%s6797 + $0x169] sm:$0xff] %vm26, %v6763
  %6829 = vst.msk [vmem:[%s6797 + $0x171] sm:$0xff] %vm26, %v6764
  %6830 = vst.msk [vmem:[%s6797 + $0x1b1] sm:$0xff] %vm26, %v6765
  %6831 = vst.msk [vmem:[%s6797 + $0x1b9] sm:$0xff] %vm26, %v6766
  %6832 = vst.msk [vmem:[%s6797 + $0x1c9] sm:$0xff] %vm26, %v6767
  %6833 = vst.msk [vmem:[%s6797 + $0x1d1] sm:$0xff] %vm26, %v6768
  %6834 = vst.msk [vmem:[%s6797 + $0x1e1] sm:$0xff] %vm26, %v6769
  %6835 = vst.msk [vmem:[%s6797 + $0x1e9] sm:$0xff] %vm26, %v6770
  %6836 = vst.msk [vmem:[%s6797 + $0x1f9] sm:$0xff] %vm26, %v6771
  %6837 = vst.msk [vmem:[%s6797 + $0x201] sm:$0xff] %vm26, %v6772
  %6838 = vst.msk [vmem:[%s6797 + $0x211] sm:$0xff] %vm26, %v6773
  %6839 = vst.msk [vmem:[%s6797 + $0x219] sm:$0xff] %vm26, %v6774
  %6840 = vst.msk [vmem:[%s6797 + $0x229] sm:$0xff] %vm26, %v6775
  %6841 = vst.msk [vmem:[%s6797 + $0x231] sm:$0xff] %vm26, %v6776
  %6842 = vst.msk [vmem:[%s6797 + $0x241] sm:$0xff] %vm26, %v6777
  %6843 = vst.msk [vmem:[%s6797 + $0x249] sm:$0xff] %vm26, %v6778
  %6844 = vst.msk [vmem:[%s6797 + $0x259] sm:$0xff] %vm26, %v6779
  %6845 = vst.msk [vmem:[%s6797 + $0x261] sm:$0xff] %vm26, %v6780
  %6846 = vst.msk [vmem:[%s6797 + $0x271] sm:$0xff] %vm26, %v6781
  %6847 = vst.msk [vmem:[%s6797 + $0x279] sm:$0xff] %vm26, %v6782
  %6848 = vst.msk [vmem:[%s6797 + $0x289] sm:$0xff] %vm26, %v6783
  %6849 = vst.msk [vmem:[%s6797 + $0x291] sm:$0xff] %vm26, %v6784
  %6850 = vst.msk [vmem:[%s6797 + $0x2a1] sm:$0xff] %vm26, %v6785
  %6851 = vst.msk [vmem:[%s6797 + $0x2a9] sm:$0xff] %vm26, %v6786
  %6852 = vst.msk [vmem:[%s6797 + $0x2b9] sm:$0xff] %vm26, %v6787
  %6853 = vst.msk [vmem:[%s6797 + $0x2c1] sm:$0xff] %vm26, %v6788
  %6854 = vst.msk [vmem:[%s6797 + $0x2d1] sm:$0xff] %vm26, %v6789
  %6855 = vst.msk [vmem:[%s6797 + $0x2d9] sm:$0xff] %vm26, %v6790
  %6856 = vst.msk [vmem:[%s6797 + $0x2e9] sm:$0xff] %vm26, %v6791
  %6857 = vst.msk [vmem:[%s6797 + $0x2f1] sm:$0xff] %vm26, %v6792
  %6858 = vst.msk [vmem:[%s6797 + $0x301] sm:$0xff] %vm26, %v6793
  %6859 = vst.msk [vmem:[%s6797 + $0x309] sm:$0xff] %vm26, %v6794
  %6860 = vst.msk [vmem:[%s6797 + $0x319] sm:$0xff] %vm26, %v6795
  %6861 = vst.msk [vmem:[%s6797 + $0x321] sm:$0xff] %vm26, %v6796
  %v6862 = vld [vmem:[#allocation3] sm:$0xff]
  %v6863 = vld [vmem:[#allocation3 + $0x8] sm:$0xff]
  %v6864 = vld [vmem:[#allocation3 + $0x18] sm:$0xff]
  %v6865 = vld [vmem:[#allocation3 + $0x20] sm:$0xff]
  %v6866 = vld [vmem:[#allocation3 + $0x30] sm:$0xff]
  %v6867 = vld [vmem:[#allocation3 + $0x38] sm:$0xff]
  %v6868 = vld [vmem:[#allocation3 + $0x48] sm:$0xff]
  %v6869 = vld [vmem:[#allocation3 + $0x50] sm:$0xff]
  %v6870 = vld [vmem:[#allocation3 + $0x60] sm:$0xff]
  %v6871 = vld [vmem:[#allocation3 + $0x68] sm:$0xff]
  %v6872 = vld [vmem:[#allocation3 + $0x78] sm:$0xff]
  %v6873 = vld [vmem:[#allocation3 + $0x80] sm:$0xff]
  %v6874 = vld [vmem:[#allocation3 + $0x90] sm:$0xff]
  %v6875 = vld [vmem:[#allocation3 + $0x98] sm:$0xff]
  %v6876 = vld [vmem:[#allocation3 + $0xa8] sm:$0xff]
  %v6877 = vld [vmem:[#allocation3 + $0xb0] sm:$0xff]
  %v6878 = vld [vmem:[#allocation3 + $0xc0] sm:$0xff]
  %v6879 = vld [vmem:[#allocation3 + $0xc8] sm:$0xff]
  %v6880 = vld [vmem:[#allocation3 + $0xd8] sm:$0xff]
  %v6881 = vld [vmem:[#allocation3 + $0xe0] sm:$0xff]
  %v6882 = vld [vmem:[#allocation3 + $0xf0] sm:$0xff]
  %v6883 = vld [vmem:[#allocation3 + $0xf8] sm:$0xff]
  %v6884 = vld [vmem:[#allocation3 + $0x108] sm:$0xff]
  %v6885 = vld [vmem:[#allocation3 + $0x110] sm:$0xff]
  %v6886 = vld [vmem:[#allocation3 + $0x120] sm:$0xff]
  %v6887 = vld [vmem:[#allocation3 + $0x128] sm:$0xff]
  %v6888 = vld [vmem:[#allocation3 + $0x138] sm:$0xff]
  %v6889 = vld [vmem:[#allocation3 + $0x140] sm:$0xff]
  %v6890 = vld [vmem:[#allocation3 + $0x150] sm:$0xff]
  %v6891 = vld [vmem:[#allocation3 + $0x158] sm:$0xff]
  %v6892 = vld [vmem:[#allocation3 + $0x168] sm:$0xff]
  %v6893 = vld [vmem:[#allocation3 + $0x170] sm:$0xff]
  %v6894 = vld [vmem:[#allocation3 + $0x1b0] sm:$0xff]
  %v6895 = vld [vmem:[#allocation3 + $0x1b8] sm:$0xff]
  %v6896 = vld [vmem:[#allocation3 + $0x1c8] sm:$0xff]
  %v6897 = vld [vmem:[#allocation3 + $0x1d0] sm:$0xff]
  %v6898 = vld [vmem:[#allocation3 + $0x1e0] sm:$0xff]
  %v6899 = vld [vmem:[#allocation3 + $0x1e8] sm:$0xff]
  %v6900 = vld [vmem:[#allocation3 + $0x1f8] sm:$0xff]
  %v6901 = vld [vmem:[#allocation3 + $0x200] sm:$0xff]
  %v6902 = vld [vmem:[#allocation3 + $0x210] sm:$0xff]
  %v6903 = vld [vmem:[#allocation3 + $0x218] sm:$0xff]
  %v6904 = vld [vmem:[#allocation3 + $0x228] sm:$0xff]
  %v6905 = vld [vmem:[#allocation3 + $0x230] sm:$0xff]
  %v6906 = vld [vmem:[#allocation3 + $0x240] sm:$0xff]
  %v6907 = vld [vmem:[#allocation3 + $0x248] sm:$0xff]
  %v6908 = vld [vmem:[#allocation3 + $0x258] sm:$0xff]
  %v6909 = vld [vmem:[#allocation3 + $0x260] sm:$0xff]
  %v6910 = vld [vmem:[#allocation3 + $0x270] sm:$0xff]
  %v6911 = vld [vmem:[#allocation3 + $0x278] sm:$0xff]
  %v6912 = vld [vmem:[#allocation3 + $0x288] sm:$0xff]
  %v6913 = vld [vmem:[#allocation3 + $0x290] sm:$0xff]
  %v6914 = vld [vmem:[#allocation3 + $0x2a0] sm:$0xff]
  %v6915 = vld [vmem:[#allocation3 + $0x2a8] sm:$0xff]
  %v6916 = vld [vmem:[#allocation3 + $0x2b8] sm:$0xff]
  %v6917 = vld [vmem:[#allocation3 + $0x2c0] sm:$0xff]
  %v6918 = vld [vmem:[#allocation3 + $0x2d0] sm:$0xff]
  %v6919 = vld [vmem:[#allocation3 + $0x2d8] sm:$0xff]
  %v6920 = vld [vmem:[#allocation3 + $0x2e8] sm:$0xff]
  %v6921 = vld [vmem:[#allocation3 + $0x2f0] sm:$0xff]
  %v6922 = vld [vmem:[#allocation3 + $0x300] sm:$0xff]
  %v6923 = vld [vmem:[#allocation3 + $0x308] sm:$0xff]
  %v6924 = vld [vmem:[#allocation3 + $0x318] sm:$0xff]
  %v6925 = vld [vmem:[#allocation3 + $0x320] sm:$0xff]
  %v6926 = vld [vmem:[%s4] sm:$0xf]
  %v6927 = vld [vmem:[#allocation3 + $0x1] sm:$0xff]
  %v6928 = vld [vmem:[#allocation3 + $0x9] sm:$0xff]
  %v6929 = vld [vmem:[#allocation3 + $0x19] sm:$0xff]
  %v6930 = vld [vmem:[#allocation3 + $0x21] sm:$0xff]
  %v6931 = vld [vmem:[#allocation3 + $0x31] sm:$0xff]
  %v6932 = vld [vmem:[#allocation3 + $0x39] sm:$0xff]
  %v6933 = vld [vmem:[#allocation3 + $0x49] sm:$0xff]
  %v6934 = vld [vmem:[#allocation3 + $0x51] sm:$0xff]
  %v6935 = vld [vmem:[#allocation3 + $0x61] sm:$0xff]
  %v6936 = vld [vmem:[#allocation3 + $0x69] sm:$0xff]
  %v6937 = vld [vmem:[#allocation3 + $0x79] sm:$0xff]
  %v6938 = vld [vmem:[#allocation3 + $0x81] sm:$0xff]
  %v6939 = vld [vmem:[#allocation3 + $0x91] sm:$0xff]
  %v6940 = vld [vmem:[#allocation3 + $0x99] sm:$0xff]
  %v6941 = vld [vmem:[#allocation3 + $0xa9] sm:$0xff]
  %v6942 = vld [vmem:[#allocation3 + $0xb1] sm:$0xff]
  %v6943 = vld [vmem:[#allocation3 + $0xc1] sm:$0xff]
  %v6944 = vld [vmem:[#allocation3 + $0xc9] sm:$0xff]
  %v6945 = vld [vmem:[#allocation3 + $0xd9] sm:$0xff]
  %v6946 = vld [vmem:[#allocation3 + $0xe1] sm:$0xff]
  %v6947 = vld [vmem:[#allocation3 + $0xf1] sm:$0xff]
  %v6948 = vld [vmem:[#allocation3 + $0xf9] sm:$0xff]
  %v6949 = vld [vmem:[#allocation3 + $0x109] sm:$0xff]
  %v6950 = vld [vmem:[#allocation3 + $0x111] sm:$0xff]
  %v6951 = vld [vmem:[#allocation3 + $0x121] sm:$0xff]
  %v6952 = vld [vmem:[#allocation3 + $0x129] sm:$0xff]
  %v6953 = vld [vmem:[#allocation3 + $0x139] sm:$0xff]
  %v6954 = vld [vmem:[#allocation3 + $0x141] sm:$0xff]
  %v6955 = vld [vmem:[#allocation3 + $0x151] sm:$0xff]
  %v6956 = vld [vmem:[#allocation3 + $0x159] sm:$0xff]
  %v6957 = vld [vmem:[#allocation3 + $0x169] sm:$0xff]
  %v6958 = vld [vmem:[#allocation3 + $0x171] sm:$0xff]
  %v6959 = vld [vmem:[#allocation3 + $0x1b1] sm:$0xff]
  %v6960 = vld [vmem:[#allocation3 + $0x1b9] sm:$0xff]
  %v6961 = vld [vmem:[#allocation3 + $0x1c9] sm:$0xff]
  %v6962 = vld [vmem:[#allocation3 + $0x1d1] sm:$0xff]
  %v6963 = vld [vmem:[#allocation3 + $0x1e1] sm:$0xff]
  %v6964 = vld [vmem:[#allocation3 + $0x1e9] sm:$0xff]
  %v6965 = vld [vmem:[#allocation3 + $0x1f9] sm:$0xff]
  %v6966 = vld [vmem:[#allocation3 + $0x201] sm:$0xff]
  %v6967 = vld [vmem:[#allocation3 + $0x211] sm:$0xff]
  %v6968 = vld [vmem:[#allocation3 + $0x219] sm:$0xff]
  %v6969 = vld [vmem:[#allocation3 + $0x229] sm:$0xff]
  %v6970 = vld [vmem:[#allocation3 + $0x231] sm:$0xff]
  %v6971 = vld [vmem:[#allocation3 + $0x241] sm:$0xff]
  %v6972 = vld [vmem:[#allocation3 + $0x249] sm:$0xff]
  %v6973 = vld [vmem:[#allocation3 + $0x259] sm:$0xff]
  %v6974 = vld [vmem:[#allocation3 + $0x261] sm:$0xff]
  %v6975 = vld [vmem:[#allocation3 + $0x271] sm:$0xff]
  %v6976 = vld [vmem:[#allocation3 + $0x279] sm:$0xff]
  %v6977 = vld [vmem:[#allocation3 + $0x289] sm:$0xff]
  %v6978 = vld [vmem:[#allocation3 + $0x291] sm:$0xff]
  %v6979 = vld [vmem:[#allocation3 + $0x2a1] sm:$0xff]
  %v6980 = vld [vmem:[#allocation3 + $0x2a9] sm:$0xff]
  %v6981 = vld [vmem:[#allocation3 + $0x2b9] sm:$0xff]
  %v6982 = vld [vmem:[#allocation3 + $0x2c1] sm:$0xff]
  %v6983 = vld [vmem:[#allocation3 + $0x2d1] sm:$0xff]
  %v6984 = vld [vmem:[#allocation3 + $0x2d9] sm:$0xff]
  %v6985 = vld [vmem:[#allocation3 + $0x2e9] sm:$0xff]
  %v6986 = vld [vmem:[#allocation3 + $0x2f1] sm:$0xff]
  %v6987 = vld [vmem:[#allocation3 + $0x301] sm:$0xff]
  %v6988 = vld [vmem:[#allocation3 + $0x309] sm:$0xff]
  %v6989 = vld [vmem:[#allocation3 + $0x319] sm:$0xff]
  %v6990 = vld [vmem:[#allocation3 + $0x321] sm:$0xff]
  %s6991 = scalar_lea.vmem %s4, 4
  %v6992 = vld [vmem:[%s6991] sm:$0xf]
  %v6994 = vsel %vm26, %v6927, 0
  %v6997 = vsel %vm26, %v6928, 0
  %v7000 = vsel %vm26, %v6929, 0
  %v7003 = vsel %vm26, %v6930, 0
  %v7006 = vsel %vm26, %v6931, 0
  %v7009 = vsel %vm26, %v6932, 0
  %v7012 = vsel %vm26, %v6933, 0
  %v7015 = vsel %vm26, %v6934, 0
  %v7018 = vsel %vm26, %v6935, 0
  %v7021 = vsel %vm26, %v6936, 0
  %v7024 = vsel %vm26, %v6937, 0
  %v7027 = vsel %vm26, %v6938, 0
  %v7030 = vsel %vm26, %v6939, 0
  %v7033 = vsel %vm26, %v6940, 0
  %v7036 = vsel %vm26, %v6941, 0
  %v7039 = vsel %vm26, %v6942, 0
  %v7042 = vsel %vm26, %v6943, 0
  %v7045 = vsel %vm26, %v6944, 0
  %v7048 = vsel %vm26, %v6945, 0
  %v7051 = vsel %vm26, %v6946, 0
  %v7054 = vsel %vm26, %v6947, 0
  %v7057 = vsel %vm26, %v6948, 0
  %v7060 = vsel %vm26, %v6949, 0
  %v7063 = vsel %vm26, %v6950, 0
  %v7066 = vsel %vm26, %v6951, 0
  %v7069 = vsel %vm26, %v6952, 0
  %v7072 = vsel %vm26, %v6953, 0
  %v7075 = vsel %vm26, %v6954, 0
  %v7078 = vsel %vm26, %v6955, 0
  %v7081 = vsel %vm26, %v6956, 0
  %v7084 = vsel %vm26, %v6957, 0
  %v7087 = vsel %vm26, %v6958, 0
  %v7090 = vsel %vm26, %v6959, 0
  %v7093 = vsel %vm26, %v6960, 0
  %v7096 = vsel %vm26, %v6961, 0
  %v7099 = vsel %vm26, %v6962, 0
  %v7102 = vsel %vm26, %v6963, 0
  %v7105 = vsel %vm26, %v6964, 0
  %v7108 = vsel %vm26, %v6965, 0
  %v7111 = vsel %vm26, %v6966, 0
  %v7114 = vsel %vm26, %v6967, 0
  %v7117 = vsel %vm26, %v6968, 0
  %v7120 = vsel %vm26, %v6969, 0
  %v7123 = vsel %vm26, %v6970, 0
  %v7126 = vsel %vm26, %v6971, 0
  %v7129 = vsel %vm26, %v6972, 0
  %v7132 = vsel %vm26, %v6973, 0
  %v7135 = vsel %vm26, %v6974, 0
  %v7138 = vsel %vm26, %v6975, 0
  %v7141 = vsel %vm26, %v6976, 0
  %v7144 = vsel %vm26, %v6977, 0
  %v7147 = vsel %vm26, %v6978, 0
  %v7150 = vsel %vm26, %v6979, 0
  %v7153 = vsel %vm26, %v6980, 0
  %v7156 = vsel %vm26, %v6981, 0
  %v7159 = vsel %vm26, %v6982, 0
  %v7162 = vsel %vm26, %v6983, 0
  %v7165 = vsel %vm26, %v6984, 0
  %v7168 = vsel %vm26, %v6985, 0
  %v7171 = vsel %vm26, %v6986, 0
  %v7174 = vsel %vm26, %v6987, 0
  %v7177 = vsel %vm26, %v6988, 0
  %v7180 = vsel %vm26, %v6989, 0
  %v7183 = vsel %vm26, %v6990, 0
  %v7186 = vsel %vm651, %v6992, 0
  %7188 = vmatprep.subr.mxu0 0.0
  %7189 = vmatpush1.msra.mxu0 %v7186
  %7190 = vmatprep.subr.mxu0 0.0
  %7191 = vmatpush1.msra.mxu0 0.0
  %7192 = vmatprep.subr.mxu0 0.0
  %7193 = vmatpush1.msra.mxu0 0.0
  %7194 = vmatprep.subr.mxu0 0.0
  %7195 = vmatpush1.msra.mxu0 0.0
  %7196 = vmatprep.subr.mxu0 0.0
  %7197 = vmatpush1.msra.mxu0 0.0
  %7198 = vmatprep.subr.mxu0 0.0
  %7199 = vmatpush1.msra.mxu0 0.0
  %7200 = vmatprep.subr.mxu0 0.0
  %7201 = vmatpush1.msra.mxu0 0.0
  %7202 = vmatprep.subr.mxu0 0.0
  %7203 = vmatpush1.msra.mxu0 0.0
  %7204 = vmatprep.subr.mxu0 0.0
  %7205 = vmatpush1.msra.mxu0 0.0
  %7206 = vmatprep.subr.mxu0 0.0
  %7207 = vmatpush1.msra.mxu0 0.0
  %7208 = vmatprep.subr.mxu0 0.0
  %7209 = vmatpush1.msra.mxu0 0.0
  %7210 = vmatprep.subr.mxu0 0.0
  %7211 = vmatpush1.msra.mxu0 0.0
  %7212 = vmatprep.subr.mxu0 0.0
  %7213 = vmatpush1.msra.mxu0 0.0
  %7214 = vmatprep.subr.mxu0 0.0
  %7215 = vmatpush1.msra.mxu0 0.0
  %7216 = vmatprep.subr.mxu0 0.0
  %7217 = vmatpush1.msra.mxu0 0.0
  %7218 = vmatprep.subr.mxu0 0.0
  %7219 = vmatpush1.msra.mxu0 0.0
  %7220 = vmatprep.subr.mxu0 0.0
  %7221 = vmatpush1.msra.mxu0 0.0
  %7222 = vmatprep.subr.mxu0 0.0
  %7223 = vmatpush1.msra.mxu0 0.0
  %7224 = vmatprep.subr.mxu0 0.0
  %7225 = vmatpush1.msra.mxu0 0.0
  %7226 = vmatprep.subr.mxu0 0.0
  %7227 = vmatpush1.msra.mxu0 0.0
  %7228 = vmatprep.subr.mxu0 0.0
  %7229 = vmatpush1.msra.mxu0 0.0
  %7230 = vmatprep.subr.mxu0 0.0
  %7231 = vmatpush1.msra.mxu0 0.0
  %7232 = vmatprep.subr.mxu0 0.0
  %7233 = vmatpush1.msra.mxu0 0.0
  %7234 = vmatprep.subr.mxu0 0.0
  %7235 = vmatpush1.msra.mxu0 0.0
  %7236 = vmatprep.subr.mxu0 0.0
  %7237 = vmatpush1.msra.mxu0 0.0
  %7238 = vmatprep.subr.mxu0 0.0
  %7239 = vmatpush1.msra.mxu0 0.0
  %7240 = vmatprep.subr.mxu0 0.0
  %7241 = vmatpush1.msra.mxu0 0.0
  %7242 = vmatprep.subr.mxu0 0.0
  %7243 = vmatpush1.msra.mxu0 0.0
  %7244 = vmatprep.subr.mxu0 0.0
  %7245 = vmatpush1.msra.mxu0 0.0
  %7246 = vmatprep.subr.mxu0 0.0
  %7247 = vmatpush1.msra.mxu0 0.0
  %7248 = vmatprep.subr.mxu0 0.0
  %7249 = vmatpush1.msra.mxu0 0.0
  %7250 = vmatprep.subr.mxu0 0.0
  %7251 = vmatpush1.msra.mxu0 0.0
  %7252 = vmatprep.mubr.f32.mxu0 0.0
  %7253 = vmatmul.mubr.f32.gmra.mrb[0].mxu0 %v6994
  %v7254 = vpop.f32.mrb[0].mxu0
  %v7255 = vadd.f32 0.0, %v7254
  %v7256 = vpop.f32.mrb[0].mxu0
  %7257 = vmatprep.mubr.f32.mxu0 0.0
  %7258 = vmatmul.mubr.f32.gmra.mrb[0].mxu0 %v6997
  %v7259 = vpop.f32.mrb[0].mxu0
  %v7260 = vadd.f32 0.0, %v7259
  %v7261 = vpop.f32.mrb[0].mxu0
  %7262 = vmatprep.mubr.f32.mxu0 0.0
  %7263 = vmatmul.mubr.f32.gmra.mrb[0].mxu0 %v7000
  %v7264 = vpop.f32.mrb[0].mxu0
  %v7265 = vadd.f32 0.0, %v7264
  %v7266 = vpop.f32.mrb[0].mxu0
  %7267 = vmatprep.mubr.f32.mxu0 0.0
  %7268 = vmatmul.mubr.f32.gmra.mrb[0].mxu0 %v7003
  %v7269 = vpop.f32.mrb[0].mxu0
  %v7270 = vadd.f32 0.0, %v7269
  %v7271 = vpop.f32.mrb[0].mxu0
  %7272 = vmatprep.mubr.f32.mxu0 0.0
  %7273 = vmatmul.mubr.f32.gmra.mrb[0].mxu0 %v7006
  %v7274 = vpop.f32.mrb[0].mxu0
  %v7275 = vadd.f32 0.0, %v7274
  %v7276 = vpop.f32.mrb[0].mxu0
  %7277 = vmatprep.mubr.f32.mxu0 0.0
  %7278 = vmatmul.mubr.f32.gmra.mrb[0].mxu0 %v7009
  %v7279 = vpop.f32.mrb[0].mxu0
  %v7280 = vadd.f32 0.0, %v7279
  %v7281 = vpop.f32.mrb[0].mxu0
  %7282 = vmatprep.mubr.f32.mxu0 0.0
  %7283 = vmatmul.mubr.f32.gmra.mrb[0].mxu0 %v7012
  %v7284 = vpop.f32.mrb[0].mxu0
  %v7285 = vadd.f32 0.0, %v7284
  %v7286 = vpop.f32.mrb[0].mxu0
  %7287 = vmatprep.mubr.f32.mxu0 0.0
  %7288 = vmatmul.mubr.f32.gmra.mrb[0].mxu0 %v7015
  %v7289 = vpop.f32.mrb[0].mxu0
  %v7290 = vadd.f32 0.0, %v7289
  %v7291 = vpop.f32.mrb[0].mxu0
  %7292 = vmatprep.mubr.f32.mxu0 0.0
  %7293 = vmatmul.mubr.f32.gmra.mrb[0].mxu0 %v7018
  %v7294 = vpop.f32.mrb[0].mxu0
  %v7295 = vadd.f32 0.0, %v7294
  %v7296 = vpop.f32.mrb[0].mxu0
  %7297 = vmatprep.mubr.f32.mxu0 0.0
  %7298 = vmatmul.mubr.f32.gmra.mrb[0].mxu0 %v7021
  %v7299 = vpop.f32.mrb[0].mxu0
  %v7300 = vadd.f32 0.0, %v7299
  %v7301 = vpop.f32.mrb[0].mxu0
  %7302 = vmatprep.mubr.f32.mxu0 0.0
  %7303 = vmatmul.mubr.f32.gmra.mrb[0].mxu0 %v7024
  %v7304 = vpop.f32.mrb[0].mxu0
  %v7305 = vadd.f32 0.0, %v7304
  %v7306 = vpop.f32.mrb[0].mxu0
  %7307 = vmatprep.mubr.f32.mxu0 0.0
  %7308 = vmatmul.mubr.f32.gmra.mrb[0].mxu0 %v7027
  %v7309 = vpop.f32.mrb[0].mxu0
  %v7310 = vadd.f32 0.0, %v7309
  %v7311 = vpop.f32.mrb[0].mxu0
  %7312 = vmatprep.mubr.f32.mxu0 0.0
  %7313 = vmatmul.mubr.f32.gmra.mrb[0].mxu0 %v7030
  %v7314 = vpop.f32.mrb[0].mxu0
  %v7315 = vadd.f32 0.0, %v7314
  %v7316 = vpop.f32.mrb[0].mxu0
  %7317 = vmatprep.mubr.f32.mxu0 0.0
  %7318 = vmatmul.mubr.f32.gmra.mrb[0].mxu0 %v7033
  %v7319 = vpop.f32.mrb[0].mxu0
  %v7320 = vadd.f32 0.0, %v7319
  %v7321 = vpop.f32.mrb[0].mxu0
  %7322 = vmatprep.mubr.f32.mxu0 0.0
  %7323 = vmatmul.mubr.f32.gmra.mrb[0].mxu0 %v7036
  %v7324 = vpop.f32.mrb[0].mxu0
  %v7325 = vadd.f32 0.0, %v7324
  %v7326 = vpop.f32.mrb[0].mxu0
  %7327 = vmatprep.mubr.f32.mxu0 0.0
  %7328 = vmatmul.mubr.f32.gmra.mrb[0].mxu0 %v7039
  %v7329 = vpop.f32.mrb[0].mxu0
  %v7330 = vadd.f32 0.0, %v7329
  %v7331 = vpop.f32.mrb[0].mxu0
  %7332 = vmatprep.mubr.f32.mxu0 0.0
  %7333 = vmatmul.mubr.f32.gmra.mrb[0].mxu0 %v7042
  %v7334 = vpop.f32.mrb[0].mxu0
  %v7335 = vadd.f32 0.0, %v7334
  %v7336 = vpop.f32.mrb[0].mxu0
  %7337 = vmatprep.mubr.f32.mxu0 0.0
  %7338 = vmatmul.mubr.f32.gmra.mrb[0].mxu0 %v7045
  %v7339 = vpop.f32.mrb[0].mxu0
  %v7340 = vadd.f32 0.0, %v7339
  %v7341 = vpop.f32.mrb[0].mxu0
  %7342 = vmatprep.mubr.f32.mxu0 0.0
  %7343 = vmatmul.mubr.f32.gmra.mrb[0].mxu0 %v7048
  %v7344 = vpop.f32.mrb[0].mxu0
  %v7345 = vadd.f32 0.0, %v7344
  %v7346 = vpop.f32.mrb[0].mxu0
  %7347 = vmatprep.mubr.f32.mxu0 0.0
  %7348 = vmatmul.mubr.f32.gmra.mrb[0].mxu0 %v7051
  %v7349 = vpop.f32.mrb[0].mxu0
  %v7350 = vadd.f32 0.0, %v7349
  %v7351 = vpop.f32.mrb[0].mxu0
  %7352 = vmatprep.mubr.f32.mxu0 0.0
  %7353 = vmatmul.mubr.f32.gmra.mrb[0].mxu0 %v7054
  %v7354 = vpop.f32.mrb[0].mxu0
  %v7355 = vadd.f32 0.0, %v7354
  %v7356 = vpop.f32.mrb[0].mxu0
  %7357 = vmatprep.mubr.f32.mxu0 0.0
  %7358 = vmatmul.mubr.f32.gmra.mrb[0].mxu0 %v7057
  %v7359 = vpop.f32.mrb[0].mxu0
  %v7360 = vadd.f32 0.0, %v7359
  %v7361 = vpop.f32.mrb[0].mxu0
  %7362 = vmatprep.mubr.f32.mxu0 0.0
  %7363 = vmatmul.mubr.f32.gmra.mrb[0].mxu0 %v7060
  %v7364 = vpop.f32.mrb[0].mxu0
  %v7365 = vadd.f32 0.0, %v7364
  %v7366 = vpop.f32.mrb[0].mxu0
  %7367 = vmatprep.mubr.f32.mxu0 0.0
  %7368 = vmatmul.mubr.f32.gmra.mrb[0].mxu0 %v7063
  %v7369 = vpop.f32.mrb[0].mxu0
  %v7370 = vadd.f32 0.0, %v7369
  %v7371 = vpop.f32.mrb[0].mxu0
  %7372 = vmatprep.mubr.f32.mxu0 0.0
  %7373 = vmatmul.mubr.f32.gmra.mrb[0].mxu0 %v7066
  %v7374 = vpop.f32.mrb[0].mxu0
  %v7375 = vadd.f32 0.0, %v7374
  %v7376 = vpop.f32.mrb[0].mxu0
  %7377 = vmatprep.mubr.f32.mxu0 0.0
  %7378 = vmatmul.mubr.f32.gmra.mrb[0].mxu0 %v7069
  %v7379 = vpop.f32.mrb[0].mxu0
  %v7380 = vadd.f32 0.0, %v7379
  %v7381 = vpop.f32.mrb[0].mxu0
  %7382 = vmatprep.mubr.f32.mxu0 0.0
  %7383 = vmatmul.mubr.f32.gmra.mrb[0].mxu0 %v7072
  %v7384 = vpop.f32.mrb[0].mxu0
  %v7385 = vadd.f32 0.0, %v7384
  %v7386 = vpop.f32.mrb[0].mxu0
  %7387 = vmatprep.mubr.f32.mxu0 0.0
  %7388 = vmatmul.mubr.f32.gmra.mrb[0].mxu0 %v7075
  %v7389 = vpop.f32.mrb[0].mxu0
  %v7390 = vadd.f32 0.0, %v7389
  %v7391 = vpop.f32.mrb[0].mxu0
  %7392 = vmatprep.mubr.f32.mxu0 0.0
  %7393 = vmatmul.mubr.f32.gmra.mrb[0].mxu0 %v7078
  %v7394 = vpop.f32.mrb[0].mxu0
  %v7395 = vadd.f32 0.0, %v7394
  %v7396 = vpop.f32.mrb[0].mxu0
  %7397 = vmatprep.mubr.f32.mxu0 0.0
  %7398 = vmatmul.mubr.f32.gmra.mrb[0].mxu0 %v7081
  %v7399 = vpop.f32.mrb[0].mxu0
  %v7400 = vadd.f32 0.0, %v7399
  %v7401 = vpop.f32.mrb[0].mxu0
  %7402 = vmatprep.mubr.f32.mxu0 0.0
  %7403 = vmatmul.mubr.f32.gmra.mrb[0].mxu0 %v7084
  %v7404 = vpop.f32.mrb[0].mxu0
  %v7405 = vadd.f32 0.0, %v7404
  %v7406 = vpop.f32.mrb[0].mxu0
  %7407 = vmatprep.mubr.f32.mxu0 0.0
  %7408 = vmatmul.mubr.f32.gmra.mrb[0].mxu0 %v7087
  %v7409 = vpop.f32.mrb[0].mxu0
  %v7410 = vadd.f32 0.0, %v7409
  %v7411 = vpop.f32.mrb[0].mxu0
  %7412 = vmatprep.mubr.f32.mxu0 0.0
  %7413 = vmatmul.mubr.f32.gmra.mrb[0].mxu0 %v7090
  %v7414 = vpop.f32.mrb[0].mxu0
  %v7415 = vadd.f32 0.0, %v7414
  %v7416 = vpop.f32.mrb[0].mxu0
  %7417 = vmatprep.mubr.f32.mxu0 0.0
  %7418 = vmatmul.mubr.f32.gmra.mrb[0].mxu0 %v7093
  %v7419 = vpop.f32.mrb[0].mxu0
  %v7420 = vadd.f32 0.0, %v7419
  %v7421 = vpop.f32.mrb[0].mxu0
  %7422 = vmatprep.mubr.f32.mxu0 0.0
  %7423 = vmatmul.mubr.f32.gmra.mrb[0].mxu0 %v7096
  %v7424 = vpop.f32.mrb[0].mxu0
  %v7425 = vadd.f32 0.0, %v7424
  %v7426 = vpop.f32.mrb[0].mxu0
  %7427 = vmatprep.mubr.f32.mxu0 0.0
  %7428 = vmatmul.mubr.f32.gmra.mrb[0].mxu0 %v7099
  %v7429 = vpop.f32.mrb[0].mxu0
  %v7430 = vadd.f32 0.0, %v7429
  %v7431 = vpop.f32.mrb[0].mxu0
  %7432 = vmatprep.mubr.f32.mxu0 0.0
  %7433 = vmatmul.mubr.f32.gmra.mrb[0].mxu0 %v7102
  %v7434 = vpop.f32.mrb[0].mxu0
  %v7435 = vadd.f32 0.0, %v7434
  %v7436 = vpop.f32.mrb[0].mxu0
  %7437 = vmatprep.mubr.f32.mxu0 0.0
  %7438 = vmatmul.mubr.f32.gmra.mrb[0].mxu0 %v7105
  %v7439 = vpop.f32.mrb[0].mxu0
  %v7440 = vadd.f32 0.0, %v7439
  %v7441 = vpop.f32.mrb[0].mxu0
  %7442 = vmatprep.mubr.f32.mxu0 0.0
  %7443 = vmatmul.mubr.f32.gmra.mrb[0].mxu0 %v7108
  %v7444 = vpop.f32.mrb[0].mxu0
  %v7445 = vadd.f32 0.0, %v7444
  %v7446 = vpop.f32.mrb[0].mxu0
  %7447 = vmatprep.mubr.f32.mxu0 0.0
  %7448 = vmatmul.mubr.f32.gmra.mrb[0].mxu0 %v7111
  %v7449 = vpop.f32.mrb[0].mxu0
  %v7450 = vadd.f32 0.0, %v7449
  %v7451 = vpop.f32.mrb[0].mxu0
  %7452 = vmatprep.mubr.f32.mxu0 0.0
  %7453 = vmatmul.mubr.f32.gmra.mrb[0].mxu0 %v7114
  %v7454 = vpop.f32.mrb[0].mxu0
  %v7455 = vadd.f32 0.0, %v7454
  %v7456 = vpop.f32.mrb[0].mxu0
  %7457 = vmatprep.mubr.f32.mxu0 0.0
  %7458 = vmatmul.mubr.f32.gmra.mrb[0].mxu0 %v7117
  %v7459 = vpop.f32.mrb[0].mxu0
  %v7460 = vadd.f32 0.0, %v7459
  %v7461 = vpop.f32.mrb[0].mxu0
  %7462 = vmatprep.mubr.f32.mxu0 0.0
  %7463 = vmatmul.mubr.f32.gmra.mrb[0].mxu0 %v7120
  %v7464 = vpop.f32.mrb[0].mxu0
  %v7465 = vadd.f32 0.0, %v7464
  %v7466 = vpop.f32.mrb[0].mxu0
  %7467 = vmatprep.mubr.f32.mxu0 0.0
  %7468 = vmatmul.mubr.f32.gmra.mrb[0].mxu0 %v7123
  %v7469 = vpop.f32.mrb[0].mxu0
  %v7470 = vadd.f32 0.0, %v7469
  %v7471 = vpop.f32.mrb[0].mxu0
  %7472 = vmatprep.mubr.f32.mxu0 0.0
  %7473 = vmatmul.mubr.f32.gmra.mrb[0].mxu0 %v7126
  %v7474 = vpop.f32.mrb[0].mxu0
  %v7475 = vadd.f32 0.0, %v7474
  %v7476 = vpop.f32.mrb[0].mxu0
  %7477 = vmatprep.mubr.f32.mxu0 0.0
  %7478 = vmatmul.mubr.f32.gmra.mrb[0].mxu0 %v7129
  %v7479 = vpop.f32.mrb[0].mxu0
  %v7480 = vadd.f32 0.0, %v7479
  %v7481 = vpop.f32.mrb[0].mxu0
  %7482 = vmatprep.mubr.f32.mxu0 0.0
  %7483 = vmatmul.mubr.f32.gmra.mrb[0].mxu0 %v7132
  %v7484 = vpop.f32.mrb[0].mxu0
  %v7485 = vadd.f32 0.0, %v7484
  %v7486 = vpop.f32.mrb[0].mxu0
  %7487 = vmatprep.mubr.f32.mxu0 0.0
  %7488 = vmatmul.mubr.f32.gmra.mrb[0].mxu0 %v7135
  %v7489 = vpop.f32.mrb[0].mxu0
  %v7490 = vadd.f32 0.0, %v7489
  %v7491 = vpop.f32.mrb[0].mxu0
  %7492 = vmatprep.mubr.f32.mxu0 0.0
  %7493 = vmatmul.mubr.f32.gmra.mrb[0].mxu0 %v7138
  %v7494 = vpop.f32.mrb[0].mxu0
  %v7495 = vadd.f32 0.0, %v7494
  %v7496 = vpop.f32.mrb[0].mxu0
  %7497 = vmatprep.mubr.f32.mxu0 0.0
  %7498 = vmatmul.mubr.f32.gmra.mrb[0].mxu0 %v7141
  %v7499 = vpop.f32.mrb[0].mxu0
  %v7500 = vadd.f32 0.0, %v7499
  %v7501 = vpop.f32.mrb[0].mxu0
  %7502 = vmatprep.mubr.f32.mxu0 0.0
  %7503 = vmatmul.mubr.f32.gmra.mrb[0].mxu0 %v7144
  %v7504 = vpop.f32.mrb[0].mxu0
  %v7505 = vadd.f32 0.0, %v7504
  %v7506 = vpop.f32.mrb[0].mxu0
  %7507 = vmatprep.mubr.f32.mxu0 0.0
  %7508 = vmatmul.mubr.f32.gmra.mrb[0].mxu0 %v7147
  %v7509 = vpop.f32.mrb[0].mxu0
  %v7510 = vadd.f32 0.0, %v7509
  %v7511 = vpop.f32.mrb[0].mxu0
  %7512 = vmatprep.mubr.f32.mxu0 0.0
  %7513 = vmatmul.mubr.f32.gmra.mrb[0].mxu0 %v7150
  %v7514 = vpop.f32.mrb[0].mxu0
  %v7515 = vadd.f32 0.0, %v7514
  %v7516 = vpop.f32.mrb[0].mxu0
  %7517 = vmatprep.mubr.f32.mxu0 0.0
  %7518 = vmatmul.mubr.f32.gmra.mrb[0].mxu0 %v7153
  %v7519 = vpop.f32.mrb[0].mxu0
  %v7520 = vadd.f32 0.0, %v7519
  %v7521 = vpop.f32.mrb[0].mxu0
  %7522 = vmatprep.mubr.f32.mxu0 0.0
  %7523 = vmatmul.mubr.f32.gmra.mrb[0].mxu0 %v7156
  %v7524 = vpop.f32.mrb[0].mxu0
  %v7525 = vadd.f32 0.0, %v7524
  %v7526 = vpop.f32.mrb[0].mxu0
  %7527 = vmatprep.mubr.f32.mxu0 0.0
  %7528 = vmatmul.mubr.f32.gmra.mrb[0].mxu0 %v7159
  %v7529 = vpop.f32.mrb[0].mxu0
  %v7530 = vadd.f32 0.0, %v7529
  %v7531 = vpop.f32.mrb[0].mxu0
  %7532 = vmatprep.mubr.f32.mxu0 0.0
  %7533 = vmatmul.mubr.f32.gmra.mrb[0].mxu0 %v7162
  %v7534 = vpop.f32.mrb[0].mxu0
  %v7535 = vadd.f32 0.0, %v7534
  %v7536 = vpop.f32.mrb[0].mxu0
  %7537 = vmatprep.mubr.f32.mxu0 0.0
  %7538 = vmatmul.mubr.f32.gmra.mrb[0].mxu0 %v7165
  %v7539 = vpop.f32.mrb[0].mxu0
  %v7540 = vadd.f32 0.0, %v7539
  %v7541 = vpop.f32.mrb[0].mxu0
  %7542 = vmatprep.mubr.f32.mxu0 0.0
  %7543 = vmatmul.mubr.f32.gmra.mrb[0].mxu0 %v7168
  %v7544 = vpop.f32.mrb[0].mxu0
  %v7545 = vadd.f32 0.0, %v7544
  %v7546 = vpop.f32.mrb[0].mxu0
  %7547 = vmatprep.mubr.f32.mxu0 0.0
  %7548 = vmatmul.mubr.f32.gmra.mrb[0].mxu0 %v7171
  %v7549 = vpop.f32.mrb[0].mxu0
  %v7550 = vadd.f32 0.0, %v7549
  %v7551 = vpop.f32.mrb[0].mxu0
  %7552 = vmatprep.mubr.f32.mxu0 0.0
  %7553 = vmatmul.mubr.f32.gmra.mrb[0].mxu0 %v7174
  %v7554 = vpop.f32.mrb[0].mxu0
  %v7555 = vadd.f32 0.0, %v7554
  %v7556 = vpop.f32.mrb[0].mxu0
  %7557 = vmatprep.mubr.f32.mxu0 0.0
  %7558 = vmatmul.mubr.f32.gmra.mrb[0].mxu0 %v7177
  %v7559 = vpop.f32.mrb[0].mxu0
  %v7560 = vadd.f32 0.0, %v7559
  %v7561 = vpop.f32.mrb[0].mxu0
  %7562 = vmatprep.mubr.f32.mxu0 0.0
  %7563 = vmatmul.mubr.f32.gmra.mrb[0].mxu0 %v7180
  %v7564 = vpop.f32.mrb[0].mxu0
  %v7565 = vadd.f32 0.0, %v7564
  %v7566 = vpop.f32.mrb[0].mxu0
  %7567 = vmatprep.mubr.f32.mxu0 0.0
  %7568 = vmatmul.mubr.f32.gmra.mrb[0].mxu0 %v7183
  %v7569 = vpop.f32.mrb[0].mxu0
  %v7570 = vadd.f32 0.0, %v7569
  %v7571 = vpop.f32.mrb[0].mxu0
  %7572 = vdwg.mxu0
  %v7574 = vsel %vm26, %v6862, 0
  %v7577 = vsel %vm26, %v6863, 0
  %v7580 = vsel %vm26, %v6864, 0
  %v7583 = vsel %vm26, %v6865, 0
  %v7586 = vsel %vm26, %v6866, 0
  %v7589 = vsel %vm26, %v6867, 0
  %v7592 = vsel %vm26, %v6868, 0
  %v7595 = vsel %vm26, %v6869, 0
  %v7598 = vsel %vm26, %v6870, 0
  %v7601 = vsel %vm26, %v6871, 0
  %v7604 = vsel %vm26, %v6872, 0
  %v7607 = vsel %vm26, %v6873, 0
  %v7610 = vsel %vm26, %v6874, 0
  %v7613 = vsel %vm26, %v6875, 0
  %v7616 = vsel %vm26, %v6876, 0
  %v7619 = vsel %vm26, %v6877, 0
  %v7622 = vsel %vm26, %v6878, 0
  %v7625 = vsel %vm26, %v6879, 0
  %v7628 = vsel %vm26, %v6880, 0
  %v7631 = vsel %vm26, %v6881, 0
  %v7634 = vsel %vm26, %v6882, 0
  %v7637 = vsel %vm26, %v6883, 0
  %v7640 = vsel %vm26, %v6884, 0
  %v7643 = vsel %vm26, %v6885, 0
  %v7646 = vsel %vm26, %v6886, 0
  %v7649 = vsel %vm26, %v6887, 0
  %v7652 = vsel %vm26, %v6888, 0
  %v7655 = vsel %vm26, %v6889, 0
  %v7658 = vsel %vm26, %v6890, 0
  %v7661 = vsel %vm26, %v6891, 0
  %v7664 = vsel %vm26, %v6892, 0
  %v7667 = vsel %vm26, %v6893, 0
  %v7670 = vsel %vm26, %v6894, 0
  %v7673 = vsel %vm26, %v6895, 0
  %v7676 = vsel %vm26, %v6896, 0
  %v7679 = vsel %vm26, %v6897, 0
  %v7682 = vsel %vm26, %v6898, 0
  %v7685 = vsel %vm26, %v6899, 0
  %v7688 = vsel %vm26, %v6900, 0
  %v7691 = vsel %vm26, %v6901, 0
  %v7694 = vsel %vm26, %v6902, 0
  %v7697 = vsel %vm26, %v6903, 0
  %v7700 = vsel %vm26, %v6904, 0
  %v7703 = vsel %vm26, %v6905, 0
  %v7706 = vsel %vm26, %v6906, 0
  %v7709 = vsel %vm26, %v6907, 0
  %v7712 = vsel %vm26, %v6908, 0
  %v7715 = vsel %vm26, %v6909, 0
  %v7718 = vsel %vm26, %v6910, 0
  %v7721 = vsel %vm26, %v6911, 0
  %v7724 = vsel %vm26, %v6912, 0
  %v7727 = vsel %vm26, %v6913, 0
  %v7730 = vsel %vm26, %v6914, 0
  %v7733 = vsel %vm26, %v6915, 0
  %v7736 = vsel %vm26, %v6916, 0
  %v7739 = vsel %vm26, %v6917, 0
  %v7742 = vsel %vm26, %v6918, 0
  %v7745 = vsel %vm26, %v6919, 0
  %v7748 = vsel %vm26, %v6920, 0
  %v7751 = vsel %vm26, %v6921, 0
  %v7754 = vsel %vm26, %v6922, 0
  %v7757 = vsel %vm26, %v6923, 0
  %v7760 = vsel %vm26, %v6924, 0
  %v7763 = vsel %vm26, %v6925, 0
  %v7766 = vsel %vm651, %v6926, 0
  %7768 = vmatprep.subr.mxu0 0.0
  %7769 = vmatpush1.msra.mxu0 %v7766
  %7770 = vmatprep.subr.mxu0 0.0
  %7771 = vmatpush1.msra.mxu0 0.0
  %7772 = vmatprep.subr.mxu0 0.0
  %7773 = vmatpush1.msra.mxu0 0.0
  %7774 = vmatprep.subr.mxu0 0.0
  %7775 = vmatpush1.msra.mxu0 0.0
  %7776 = vmatprep.subr.mxu0 0.0
  %7777 = vmatpush1.msra.mxu0 0.0
  %7778 = vmatprep.subr.mxu0 0.0
  %7779 = vmatpush1.msra.mxu0 0.0
  %7780 = vmatprep.subr.mxu0 0.0
  %7781 = vmatpush1.msra.mxu0 0.0
  %7782 = vmatprep.subr.mxu0 0.0
  %7783 = vmatpush1.msra.mxu0 0.0
  %7784 = vmatprep.subr.mxu0 0.0
  %7785 = vmatpush1.msra.mxu0 0.0
  %7786 = vmatprep.subr.mxu0 0.0
  %7787 = vmatpush1.msra.mxu0 0.0
  %7788 = vmatprep.subr.mxu0 0.0
  %7789 = vmatpush1.msra.mxu0 0.0
  %7790 = vmatprep.subr.mxu0 0.0
  %7791 = vmatpush1.msra.mxu0 0.0
  %7792 = vmatprep.subr.mxu0 0.0
  %7793 = vmatpush1.msra.mxu0 0.0
  %7794 = vmatprep.subr.mxu0 0.0
  %7795 = vmatpush1.msra.mxu0 0.0
  %7796 = vmatprep.subr.mxu0 0.0
  %7797 = vmatpush1.msra.mxu0 0.0
  %7798 = vmatprep.subr.mxu0 0.0
  %7799 = vmatpush1.msra.mxu0 0.0
  %7800 = vmatprep.subr.mxu0 0.0
  %7801 = vmatpush1.msra.mxu0 0.0
  %7802 = vmatprep.subr.mxu0 0.0
  %7803 = vmatpush1.msra.mxu0 0.0
  %7804 = vmatprep.subr.mxu0 0.0
  %7805 = vmatpush1.msra.mxu0 0.0
  %7806 = vmatprep.subr.mxu0 0.0
  %7807 = vmatpush1.msra.mxu0 0.0
  %7808 = vmatprep.subr.mxu0 0.0
  %7809 = vmatpush1.msra.mxu0 0.0
  %7810 = vmatprep.subr.mxu0 0.0
  %7811 = vmatpush1.msra.mxu0 0.0
  %7812 = vmatprep.subr.mxu0 0.0
  %7813 = vmatpush1.msra.mxu0 0.0
  %7814 = vmatprep.subr.mxu0 0.0
  %7815 = vmatpush1.msra.mxu0 0.0
  %7816 = vmatprep.subr.mxu0 0.0
  %7817 = vmatpush1.msra.mxu0 0.0
  %7818 = vmatprep.subr.mxu0 0.0
  %7819 = vmatpush1.msra.mxu0 0.0
  %7820 = vmatprep.subr.mxu0 0.0
  %7821 = vmatpush1.msra.mxu0 0.0
  %7822 = vmatprep.subr.mxu0 0.0
  %7823 = vmatpush1.msra.mxu0 0.0
  %7824 = vmatprep.subr.mxu0 0.0
  %7825 = vmatpush1.msra.mxu0 0.0
  %7826 = vmatprep.subr.mxu0 0.0
  %7827 = vmatpush1.msra.mxu0 0.0
  %7828 = vmatprep.subr.mxu0 0.0
  %7829 = vmatpush1.msra.mxu0 0.0
  %7830 = vmatprep.subr.mxu0 0.0
  %7831 = vmatpush1.msra.mxu0 0.0
  %7832 = vmatprep.mubr.f32.mxu0 0.0
  %7833 = vmatmul.mubr.f32.gmra.mrb[0].mxu0 %v7574
  %v7834 = vpop.f32.mrb[0].mxu0
  %v7835 = vadd.f32 %v7255, %v7834
  %v7836 = vpop.f32.mrb[0].mxu0
  %7837 = vmatprep.mubr.f32.mxu0 0.0
  %7838 = vmatmul.mubr.f32.gmra.mrb[0].mxu0 %v7577
  %v7839 = vpop.f32.mrb[0].mxu0
  %v7840 = vadd.f32 %v7260, %v7839
  %v7841 = vpop.f32.mrb[0].mxu0
  %7842 = vmatprep.mubr.f32.mxu0 0.0
  %7843 = vmatmul.mubr.f32.gmra.mrb[0].mxu0 %v7580
  %v7844 = vpop.f32.mrb[0].mxu0
  %v7845 = vadd.f32 %v7265, %v7844
  %v7846 = vpop.f32.mrb[0].mxu0
  %7847 = vmatprep.mubr.f32.mxu0 0.0
  %7848 = vmatmul.mubr.f32.gmra.mrb[0].mxu0 %v7583
  %v7849 = vpop.f32.mrb[0].mxu0
  %v7850 = vadd.f32 %v7270, %v7849
  %v7851 = vpop.f32.mrb[0].mxu0
  %7852 = vmatprep.mubr.f32.mxu0 0.0
  %7853 = vmatmul.mubr.f32.gmra.mrb[0].mxu0 %v7586
  %v7854 = vpop.f32.mrb[0].mxu0
  %v7855 = vadd.f32 %v7275, %v7854
  %v7856 = vpop.f32.mrb[0].mxu0
  %7857 = vmatprep.mubr.f32.mxu0 0.0
  %7858 = vmatmul.mubr.f32.gmra.mrb[0].mxu0 %v7589
  %v7859 = vpop.f32.mrb[0].mxu0
  %v7860 = vadd.f32 %v7280, %v7859
  %v7861 = vpop.f32.mrb[0].mxu0
  %7862 = vmatprep.mubr.f32.mxu0 0.0
  %7863 = vmatmul.mubr.f32.gmra.mrb[0].mxu0 %v7592
  %v7864 = vpop.f32.mrb[0].mxu0
  %v7865 = vadd.f32 %v7285, %v7864
  %v7866 = vpop.f32.mrb[0].mxu0
  %7867 = vmatprep.mubr.f32.mxu0 0.0
  %7868 = vmatmul.mubr.f32.gmra.mrb[0].mxu0 %v7595
  %v7869 = vpop.f32.mrb[0].mxu0
  %v7870 = vadd.f32 %v7290, %v7869
  %v7871 = vpop.f32.mrb[0].mxu0
  %7872 = vmatprep.mubr.f32.mxu0 0.0
  %7873 = vmatmul.mubr.f32.gmra.mrb[0].mxu0 %v7598
  %v7874 = vpop.f32.mrb[0].mxu0
  %v7875 = vadd.f32 %v7295, %v7874
  %v7876 = vpop.f32.mrb[0].mxu0
  %7877 = vmatprep.mubr.f32.mxu0 0.0
  %7878 = vmatmul.mubr.f32.gmra.mrb[0].mxu0 %v7601
  %v7879 = vpop.f32.mrb[0].mxu0
  %v7880 = vadd.f32 %v7300, %v7879
  %v7881 = vpop.f32.mrb[0].mxu0
  %7882 = vmatprep.mubr.f32.mxu0 0.0
  %7883 = vmatmul.mubr.f32.gmra.mrb[0].mxu0 %v7604
  %v7884 = vpop.f32.mrb[0].mxu0
  %v7885 = vadd.f32 %v7305, %v7884
  %v7886 = vpop.f32.mrb[0].mxu0
  %7887 = vmatprep.mubr.f32.mxu0 0.0
  %7888 = vmatmul.mubr.f32.gmra.mrb[0].mxu0 %v7607
  %v7889 = vpop.f32.mrb[0].mxu0
  %v7890 = vadd.f32 %v7310, %v7889
  %v7891 = vpop.f32.mrb[0].mxu0
  %7892 = vmatprep.mubr.f32.mxu0 0.0
  %7893 = vmatmul.mubr.f32.gmra.mrb[0].mxu0 %v7610
  %v7894 = vpop.f32.mrb[0].mxu0
  %v7895 = vadd.f32 %v7315, %v7894
  %v7896 = vpop.f32.mrb[0].mxu0
  %7897 = vmatprep.mubr.f32.mxu0 0.0
  %7898 = vmatmul.mubr.f32.gmra.mrb[0].mxu0 %v7613
  %v7899 = vpop.f32.mrb[0].mxu0
  %v7900 = vadd.f32 %v7320, %v7899
  %v7901 = vpop.f32.mrb[0].mxu0
  %7902 = vmatprep.mubr.f32.mxu0 0.0
  %7903 = vmatmul.mubr.f32.gmra.mrb[0].mxu0 %v7616
  %v7904 = vpop.f32.mrb[0].mxu0
  %v7905 = vadd.f32 %v7325, %v7904
  %v7906 = vpop.f32.mrb[0].mxu0
  %7907 = vmatprep.mubr.f32.mxu0 0.0
  %7908 = vmatmul.mubr.f32.gmra.mrb[0].mxu0 %v7619
  %v7909 = vpop.f32.mrb[0].mxu0
  %v7910 = vadd.f32 %v7330, %v7909
  %v7911 = vpop.f32.mrb[0].mxu0
  %7912 = vmatprep.mubr.f32.mxu0 0.0
  %7913 = vmatmul.mubr.f32.gmra.mrb[0].mxu0 %v7622
  %v7914 = vpop.f32.mrb[0].mxu0
  %v7915 = vadd.f32 %v7335, %v7914
  %v7916 = vpop.f32.mrb[0].mxu0
  %7917 = vmatprep.mubr.f32.mxu0 0.0
  %7918 = vmatmul.mubr.f32.gmra.mrb[0].mxu0 %v7625
  %v7919 = vpop.f32.mrb[0].mxu0
  %v7920 = vadd.f32 %v7340, %v7919
  %v7921 = vpop.f32.mrb[0].mxu0
  %7922 = vmatprep.mubr.f32.mxu0 0.0
  %7923 = vmatmul.mubr.f32.gmra.mrb[0].mxu0 %v7628
  %v7924 = vpop.f32.mrb[0].mxu0
  %v7925 = vadd.f32 %v7345, %v7924
  %v7926 = vpop.f32.mrb[0].mxu0
  %7927 = vmatprep.mubr.f32.mxu0 0.0
  %7928 = vmatmul.mubr.f32.gmra.mrb[0].mxu0 %v7631
  %v7929 = vpop.f32.mrb[0].mxu0
  %v7930 = vadd.f32 %v7350, %v7929
  %v7931 = vpop.f32.mrb[0].mxu0
  %7932 = vmatprep.mubr.f32.mxu0 0.0
  %7933 = vmatmul.mubr.f32.gmra.mrb[0].mxu0 %v7634
  %v7934 = vpop.f32.mrb[0].mxu0
  %v7935 = vadd.f32 %v7355, %v7934
  %v7936 = vpop.f32.mrb[0].mxu0
  %7937 = vmatprep.mubr.f32.mxu0 0.0
  %7938 = vmatmul.mubr.f32.gmra.mrb[0].mxu0 %v7637
  %v7939 = vpop.f32.mrb[0].mxu0
  %v7940 = vadd.f32 %v7360, %v7939
  %v7941 = vpop.f32.mrb[0].mxu0
  %7942 = vmatprep.mubr.f32.mxu0 0.0
  %7943 = vmatmul.mubr.f32.gmra.mrb[0].mxu0 %v7640
  %v7944 = vpop.f32.mrb[0].mxu0
  %v7945 = vadd.f32 %v7365, %v7944
  %v7946 = vpop.f32.mrb[0].mxu0
  %7947 = vmatprep.mubr.f32.mxu0 0.0
  %7948 = vmatmul.mubr.f32.gmra.mrb[0].mxu0 %v7643
  %v7949 = vpop.f32.mrb[0].mxu0
  %v7950 = vadd.f32 %v7370, %v7949
  %v7951 = vpop.f32.mrb[0].mxu0
  %7952 = vmatprep.mubr.f32.mxu0 0.0
  %7953 = vmatmul.mubr.f32.gmra.mrb[0].mxu0 %v7646
  %v7954 = vpop.f32.mrb[0].mxu0
  %v7955 = vadd.f32 %v7375, %v7954
  %v7956 = vpop.f32.mrb[0].mxu0
  %7957 = vmatprep.mubr.f32.mxu0 0.0
  %7958 = vmatmul.mubr.f32.gmra.mrb[0].mxu0 %v7649
  %v7959 = vpop.f32.mrb[0].mxu0
  %v7960 = vadd.f32 %v7380, %v7959
  %v7961 = vpop.f32.mrb[0].mxu0
  %7962 = vmatprep.mubr.f32.mxu0 0.0
  %7963 = vmatmul.mubr.f32.gmra.mrb[0].mxu0 %v7652
  %v7964 = vpop.f32.mrb[0].mxu0
  %v7965 = vadd.f32 %v7385, %v7964
  %v7966 = vpop.f32.mrb[0].mxu0
  %7967 = vmatprep.mubr.f32.mxu0 0.0
  %7968 = vmatmul.mubr.f32.gmra.mrb[0].mxu0 %v7655
  %v7969 = vpop.f32.mrb[0].mxu0
  %v7970 = vadd.f32 %v7390, %v7969
  %v7971 = vpop.f32.mrb[0].mxu0
  %7972 = vmatprep.mubr.f32.mxu0 0.0
  %7973 = vmatmul.mubr.f32.gmra.mrb[0].mxu0 %v7658
  %v7974 = vpop.f32.mrb[0].mxu0
  %v7975 = vadd.f32 %v7395, %v7974
  %v7976 = vpop.f32.mrb[0].mxu0
  %7977 = vmatprep.mubr.f32.mxu0 0.0
  %7978 = vmatmul.mubr.f32.gmra.mrb[0].mxu0 %v7661
  %v7979 = vpop.f32.mrb[0].mxu0
  %v7980 = vadd.f32 %v7400, %v7979
  %v7981 = vpop.f32.mrb[0].mxu0
  %7982 = vmatprep.mubr.f32.mxu0 0.0
  %7983 = vmatmul.mubr.f32.gmra.mrb[0].mxu0 %v7664
  %v7984 = vpop.f32.mrb[0].mxu0
  %v7985 = vadd.f32 %v7405, %v7984
  %v7986 = vpop.f32.mrb[0].mxu0
  %7987 = vmatprep.mubr.f32.mxu0 0.0
  %7988 = vmatmul.mubr.f32.gmra.mrb[0].mxu0 %v7667
  %v7989 = vpop.f32.mrb[0].mxu0
  %v7990 = vadd.f32 %v7410, %v7989
  %v7991 = vpop.f32.mrb[0].mxu0
  %7992 = vmatprep.mubr.f32.mxu0 0.0
  %7993 = vmatmul.mubr.f32.gmra.mrb[0].mxu0 %v7670
  %v7994 = vpop.f32.mrb[0].mxu0
  %v7995 = vadd.f32 %v7415, %v7994
  %v7996 = vpop.f32.mrb[0].mxu0
  %7997 = vmatprep.mubr.f32.mxu0 0.0
  %7998 = vmatmul.mubr.f32.gmra.mrb[0].mxu0 %v7673
  %v7999 = vpop.f32.mrb[0].mxu0
  %v8000 = vadd.f32 %v7420, %v7999
  %v8001 = vpop.f32.mrb[0].mxu0
  %8002 = vmatprep.mubr.f32.mxu0 0.0
  %8003 = vmatmul.mubr.f32.gmra.mrb[0].mxu0 %v7676
  %v8004 = vpop.f32.mrb[0].mxu0
  %v8005 = vadd.f32 %v7425, %v8004
  %v8006 = vpop.f32.mrb[0].mxu0
  %8007 = vmatprep.mubr.f32.mxu0 0.0
  %8008 = vmatmul.mubr.f32.gmra.mrb[0].mxu0 %v7679
  %v8009 = vpop.f32.mrb[0].mxu0
  %v8010 = vadd.f32 %v7430, %v8009
  %v8011 = vpop.f32.mrb[0].mxu0
  %8012 = vmatprep.mubr.f32.mxu0 0.0
  %8013 = vmatmul.mubr.f32.gmra.mrb[0].mxu0 %v7682
  %v8014 = vpop.f32.mrb[0].mxu0
  %v8015 = vadd.f32 %v7435, %v8014
  %v8016 = vpop.f32.mrb[0].mxu0
  %8017 = vmatprep.mubr.f32.mxu0 0.0
  %8018 = vmatmul.mubr.f32.gmra.mrb[0].mxu0 %v7685
  %v8019 = vpop.f32.mrb[0].mxu0
  %v8020 = vadd.f32 %v7440, %v8019
  %v8021 = vpop.f32.mrb[0].mxu0
  %8022 = vmatprep.mubr.f32.mxu0 0.0
  %8023 = vmatmul.mubr.f32.gmra.mrb[0].mxu0 %v7688
  %v8024 = vpop.f32.mrb[0].mxu0
  %v8025 = vadd.f32 %v7445, %v8024
  %v8026 = vpop.f32.mrb[0].mxu0
  %8027 = vmatprep.mubr.f32.mxu0 0.0
  %8028 = vmatmul.mubr.f32.gmra.mrb[0].mxu0 %v7691
  %v8029 = vpop.f32.mrb[0].mxu0
  %v8030 = vadd.f32 %v7450, %v8029
  %v8031 = vpop.f32.mrb[0].mxu0
  %8032 = vmatprep.mubr.f32.mxu0 0.0
  %8033 = vmatmul.mubr.f32.gmra.mrb[0].mxu0 %v7694
  %v8034 = vpop.f32.mrb[0].mxu0
  %v8035 = vadd.f32 %v7455, %v8034
  %v8036 = vpop.f32.mrb[0].mxu0
  %8037 = vmatprep.mubr.f32.mxu0 0.0
  %8038 = vmatmul.mubr.f32.gmra.mrb[0].mxu0 %v7697
  %v8039 = vpop.f32.mrb[0].mxu0
  %v8040 = vadd.f32 %v7460, %v8039
  %v8041 = vpop.f32.mrb[0].mxu0
  %8042 = vmatprep.mubr.f32.mxu0 0.0
  %8043 = vmatmul.mubr.f32.gmra.mrb[0].mxu0 %v7700
  %v8044 = vpop.f32.mrb[0].mxu0
  %v8045 = vadd.f32 %v7465, %v8044
  %v8046 = vpop.f32.mrb[0].mxu0
  %8047 = vmatprep.mubr.f32.mxu0 0.0
  %8048 = vmatmul.mubr.f32.gmra.mrb[0].mxu0 %v7703
  %v8049 = vpop.f32.mrb[0].mxu0
  %v8050 = vadd.f32 %v7470, %v8049
  %v8051 = vpop.f32.mrb[0].mxu0
  %8052 = vmatprep.mubr.f32.mxu0 0.0
  %8053 = vmatmul.mubr.f32.gmra.mrb[0].mxu0 %v7706
  %v8054 = vpop.f32.mrb[0].mxu0
  %v8055 = vadd.f32 %v7475, %v8054
  %v8056 = vpop.f32.mrb[0].mxu0
  %8057 = vmatprep.mubr.f32.mxu0 0.0
  %8058 = vmatmul.mubr.f32.gmra.mrb[0].mxu0 %v7709
  %v8059 = vpop.f32.mrb[0].mxu0
  %v8060 = vadd.f32 %v7480, %v8059
  %v8061 = vpop.f32.mrb[0].mxu0
  %8062 = vmatprep.mubr.f32.mxu0 0.0
  %8063 = vmatmul.mubr.f32.gmra.mrb[0].mxu0 %v7712
  %v8064 = vpop.f32.mrb[0].mxu0
  %v8065 = vadd.f32 %v7485, %v8064
  %v8066 = vpop.f32.mrb[0].mxu0
  %8067 = vmatprep.mubr.f32.mxu0 0.0
  %8068 = vmatmul.mubr.f32.gmra.mrb[0].mxu0 %v7715
  %v8069 = vpop.f32.mrb[0].mxu0
  %v8070 = vadd.f32 %v7490, %v8069
  %v8071 = vpop.f32.mrb[0].mxu0
  %8072 = vmatprep.mubr.f32.mxu0 0.0
  %8073 = vmatmul.mubr.f32.gmra.mrb[0].mxu0 %v7718
  %v8074 = vpop.f32.mrb[0].mxu0
  %v8075 = vadd.f32 %v7495, %v8074
  %v8076 = vpop.f32.mrb[0].mxu0
  %8077 = vmatprep.mubr.f32.mxu0 0.0
  %8078 = vmatmul.mubr.f32.gmra.mrb[0].mxu0 %v7721
  %v8079 = vpop.f32.mrb[0].mxu0
  %v8080 = vadd.f32 %v7500, %v8079
  %v8081 = vpop.f32.mrb[0].mxu0
  %8082 = vmatprep.mubr.f32.mxu0 0.0
  %8083 = vmatmul.mubr.f32.gmra.mrb[0].mxu0 %v7724
  %v8084 = vpop.f32.mrb[0].mxu0
  %v8085 = vadd.f32 %v7505, %v8084
  %v8086 = vpop.f32.mrb[0].mxu0
  %8087 = vmatprep.mubr.f32.mxu0 0.0
  %8088 = vmatmul.mubr.f32.gmra.mrb[0].mxu0 %v7727
  %v8089 = vpop.f32.mrb[0].mxu0
  %v8090 = vadd.f32 %v7510, %v8089
  %v8091 = vpop.f32.mrb[0].mxu0
  %8092 = vmatprep.mubr.f32.mxu0 0.0
  %8093 = vmatmul.mubr.f32.gmra.mrb[0].mxu0 %v7730
  %v8094 = vpop.f32.mrb[0].mxu0
  %v8095 = vadd.f32 %v7515, %v8094
  %v8096 = vpop.f32.mrb[0].mxu0
  %8097 = vmatprep.mubr.f32.mxu0 0.0
  %8098 = vmatmul.mubr.f32.gmra.mrb[0].mxu0 %v7733
  %v8099 = vpop.f32.mrb[0].mxu0
  %v8100 = vadd.f32 %v7520, %v8099
  %v8101 = vpop.f32.mrb[0].mxu0
  %8102 = vmatprep.mubr.f32.mxu0 0.0
  %8103 = vmatmul.mubr.f32.gmra.mrb[0].mxu0 %v7736
  %v8104 = vpop.f32.mrb[0].mxu0
  %v8105 = vadd.f32 %v7525, %v8104
  %v8106 = vpop.f32.mrb[0].mxu0
  %8107 = vmatprep.mubr.f32.mxu0 0.0
  %8108 = vmatmul.mubr.f32.gmra.mrb[0].mxu0 %v7739
  %v8109 = vpop.f32.mrb[0].mxu0
  %v8110 = vadd.f32 %v7530, %v8109
  %v8111 = vpop.f32.mrb[0].mxu0
  %8112 = vmatprep.mubr.f32.mxu0 0.0
  %8113 = vmatmul.mubr.f32.gmra.mrb[0].mxu0 %v7742
  %v8114 = vpop.f32.mrb[0].mxu0
  %v8115 = vadd.f32 %v7535, %v8114
  %v8116 = vpop.f32.mrb[0].mxu0
  %8117 = vmatprep.mubr.f32.mxu0 0.0
  %8118 = vmatmul.mubr.f32.gmra.mrb[0].mxu0 %v7745
  %v8119 = vpop.f32.mrb[0].mxu0
  %v8120 = vadd.f32 %v7540, %v8119
  %v8121 = vpop.f32.mrb[0].mxu0
  %8122 = vmatprep.mubr.f32.mxu0 0.0
  %8123 = vmatmul.mubr.f32.gmra.mrb[0].mxu0 %v7748
  %v8124 = vpop.f32.mrb[0].mxu0
  %v8125 = vadd.f32 %v7545, %v8124
  %v8126 = vpop.f32.mrb[0].mxu0
  %8127 = vmatprep.mubr.f32.mxu0 0.0
  %8128 = vmatmul.mubr.f32.gmra.mrb[0].mxu0 %v7751
  %v8129 = vpop.f32.mrb[0].mxu0
  %v8130 = vadd.f32 %v7550, %v8129
  %v8131 = vpop.f32.mrb[0].mxu0
  %8132 = vmatprep.mubr.f32.mxu0 0.0
  %8133 = vmatmul.mubr.f32.gmra.mrb[0].mxu0 %v7754
  %v8134 = vpop.f32.mrb[0].mxu0
  %v8135 = vadd.f32 %v7555, %v8134
  %v8136 = vpop.f32.mrb[0].mxu0
  %8137 = vmatprep.mubr.f32.mxu0 0.0
  %8138 = vmatmul.mubr.f32.gmra.mrb[0].mxu0 %v7757
  %v8139 = vpop.f32.mrb[0].mxu0
  %v8140 = vadd.f32 %v7560, %v8139
  %v8141 = vpop.f32.mrb[0].mxu0
  %8142 = vmatprep.mubr.f32.mxu0 0.0
  %8143 = vmatmul.mubr.f32.gmra.mrb[0].mxu0 %v7760
  %v8144 = vpop.f32.mrb[0].mxu0
  %v8145 = vadd.f32 %v7565, %v8144
  %v8146 = vpop.f32.mrb[0].mxu0
  %8147 = vmatprep.mubr.f32.mxu0 0.0
  %8148 = vmatmul.mubr.f32.gmra.mrb[0].mxu0 %v7763
  %v8149 = vpop.f32.mrb[0].mxu0
  %v8150 = vadd.f32 %v7570, %v8149
  %v8151 = vpop.f32.mrb[0].mxu0
  %8152 = vdwg.mxu0
  %v8153 = vld [vmem:[#allocation3 + $0x2] sm:$0xff]
  %v8154 = vld [vmem:[#allocation3 + $0xa] sm:$0xff]
  %v8155 = vld [vmem:[#allocation3 + $0x1a] sm:$0xff]
  %v8156 = vld [vmem:[#allocation3 + $0x22] sm:$0xff]
  %v8157 = vld [vmem:[#allocation3 + $0x32] sm:$0xff]
  %v8158 = vld [vmem:[#allocation3 + $0x3a] sm:$0xff]
  %v8159 = vld [vmem:[#allocation3 + $0x4a] sm:$0xff]
  %v8160 = vld [vmem:[#allocation3 + $0x52] sm:$0xff]
  %v8161 = vld [vmem:[#allocation3 + $0x62] sm:$0xff]
  %v8162 = vld [vmem:[#allocation3 + $0x6a] sm:$0xff]
  %v8163 = vld [vmem:[#allocation3 + $0x7a] sm:$0xff]
  %v8164 = vld [vmem:[#allocation3 + $0x82] sm:$0xff]
  %v8165 = vld [vmem:[#allocation3 + $0x92] sm:$0xff]
  %v8166 = vld [vmem:[#allocation3 + $0x9a] sm:$0xff]
  %v8167 = vld [vmem:[#allocation3 + $0xaa] sm:$0xff]
  %v8168 = vld [vmem:[#allocation3 + $0xb2] sm:$0xff]
  %v8169 = vld [vmem:[#allocation3 + $0xc2] sm:$0xff]
  %v8170 = vld [vmem:[#allocation3 + $0xca] sm:$0xff]
  %v8171 = vld [vmem:[#allocation3 + $0xda] sm:$0xff]
  %v8172 = vld [vmem:[#allocation3 + $0xe2] sm:$0xff]
  %v8173 = vld [vmem:[#allocation3 + $0xf2] sm:$0xff]
  %v8174 = vld [vmem:[#allocation3 + $0xfa] sm:$0xff]
  %v8175 = vld [vmem:[#allocation3 + $0x10a] sm:$0xff]
  %v8176 = vld [vmem:[#allocation3 + $0x112] sm:$0xff]
  %v8177 = vld [vmem:[#allocation3 + $0x122] sm:$0xff]
  %v8178 = vld [vmem:[#allocation3 + $0x12a] sm:$0xff]
  %v8179 = vld [vmem:[#allocation3 + $0x13a] sm:$0xff]
  %v8180 = vld [vmem:[#allocation3 + $0x142] sm:$0xff]
  %v8181 = vld [vmem:[#allocation3 + $0x152] sm:$0xff]
  %v8182 = vld [vmem:[#allocation3 + $0x15a] sm:$0xff]
  %v8183 = vld [vmem:[#allocation3 + $0x16a] sm:$0xff]
  %v8184 = vld [vmem:[#allocation3 + $0x172] sm:$0xff]
  %v8185 = vld [vmem:[#allocation3 + $0x1b2] sm:$0xff]
  %v8186 = vld [vmem:[#allocation3 + $0x1ba] sm:$0xff]
  %v8187 = vld [vmem:[#allocation3 + $0x1ca] sm:$0xff]
  %v8188 = vld [vmem:[#allocation3 + $0x1d2] sm:$0xff]
  %v8189 = vld [vmem:[#allocation3 + $0x1e2] sm:$0xff]
  %v8190 = vld [vmem:[#allocation3 + $0x1ea] sm:$0xff]
  %v8191 = vld [vmem:[#allocation3 + $0x1fa] sm:$0xff]
  %v8192 = vld [vmem:[#allocation3 + $0x202] sm:$0xff]
  %v8193 = vld [vmem:[#allocation3 + $0x212] sm:$0xff]
  %v8194 = vld [vmem:[#allocation3 + $0x21a] sm:$0xff]
  %v8195 = vld [vmem:[#allocation3 + $0x22a] sm:$0xff]
  %v8196 = vld [vmem:[#allocation3 + $0x232] sm:$0xff]
  %v8197 = vld [vmem:[#allocation3 + $0x242] sm:$0xff]
  %v8198 = vld [vmem:[#allocation3 + $0x24a] sm:$0xff]
  %v8199 = vld [vmem:[#allocation3 + $0x25a] sm:$0xff]
  %v8200 = vld [vmem:[#allocation3 + $0x262] sm:$0xff]
  %v8201 = vld [vmem:[#allocation3 + $0x272] sm:$0xff]
  %v8202 = vld [vmem:[#allocation3 + $0x27a] sm:$0xff]
  %v8203 = vld [vmem:[#allocation3 + $0x28a] sm:$0xff]
  %v8204 = vld [vmem:[#allocation3 + $0x292] sm:$0xff]
  %v8205 = vld [vmem:[#allocation3 + $0x2a2] sm:$0xff]
  %v8206 = vld [vmem:[#allocation3 + $0x2aa] sm:$0xff]
  %v8207 = vld [vmem:[#allocation3 + $0x2ba] sm:$0xff]
  %v8208 = vld [vmem:[#allocation3 + $0x2c2] sm:$0xff]
  %v8209 = vld [vmem:[#allocation3 + $0x2d2] sm:$0xff]
  %v8210 = vld [vmem:[#allocation3 + $0x2da] sm:$0xff]
  %v8211 = vld [vmem:[#allocation3 + $0x2ea] sm:$0xff]
  %v8212 = vld [vmem:[#allocation3 + $0x2f2] sm:$0xff]
  %v8213 = vld [vmem:[#allocation3 + $0x302] sm:$0xff]
  %v8214 = vld [vmem:[#allocation3 + $0x30a] sm:$0xff]
  %v8215 = vld [vmem:[#allocation3 + $0x31a] sm:$0xff]
  %v8216 = vld [vmem:[#allocation3 + $0x322] sm:$0xff]
  %s8217 = scalar_lea.vmem %s4, 8
  %v8218 = vld [vmem:[%s8217] sm:$0xf]
  %v8220 = vsel %vm26, %v8153, 0
  %v8223 = vsel %vm26, %v8154, 0
  %v8226 = vsel %vm26, %v8155, 0
  %v8229 = vsel %vm26, %v8156, 0
  %v8232 = vsel %vm26, %v8157, 0
  %v8235 = vsel %vm26, %v8158, 0
  %v8238 = vsel %vm26, %v8159, 0
  %v8241 = vsel %vm26, %v8160, 0
  %v8244 = vsel %vm26, %v8161, 0
  %v8247 = vsel %vm26, %v8162, 0
  %v8250 = vsel %vm26, %v8163, 0
  %v8253 = vsel %vm26, %v8164, 0
  %v8256 = vsel %vm26, %v8165, 0
  %v8259 = vsel %vm26, %v8166, 0
  %v8262 = vsel %vm26, %v8167, 0
  %v8265 = vsel %vm26, %v8168, 0
  %v8268 = vsel %vm26, %v8169, 0
  %v8271 = vsel %vm26, %v8170, 0
  %v8274 = vsel %vm26, %v8171, 0
  %v8277 = vsel %vm26, %v8172, 0
  %v8280 = vsel %vm26, %v8173, 0
  %v8283 = vsel %vm26, %v8174, 0
  %v8286 = vsel %vm26, %v8175, 0
  %v8289 = vsel %vm26, %v8176, 0
  %v8292 = vsel %vm26, %v8177, 0
  %v8295 = vsel %vm26, %v8178, 0
  %v8298 = vsel %vm26, %v8179, 0
  %v8301 = vsel %vm26, %v8180, 0
  %v8304 = vsel %vm26, %v8181, 0
  %v8307 = vsel %vm26, %v8182, 0
  %v8310 = vsel %vm26, %v8183, 0
  %v8313 = vsel %vm26, %v8184, 0
  %v8316 = vsel %vm26, %v8185, 0
  %v8319 = vsel %vm26, %v8186, 0
  %v8322 = vsel %vm26, %v8187, 0
  %v8325 = vsel %vm26, %v8188, 0
  %v8328 = vsel %vm26, %v8189, 0
  %v8331 = vsel %vm26, %v8190, 0
  %v8334 = vsel %vm26, %v8191, 0
  %v8337 = vsel %vm26, %v8192, 0
  %v8340 = vsel %vm26, %v8193, 0
  %v8343 = vsel %vm26, %v8194, 0
  %v8346 = vsel %vm26, %v8195, 0
  %v8349 = vsel %vm26, %v8196, 0
  %v8352 = vsel %vm26, %v8197, 0
  %v8355 = vsel %vm26, %v8198, 0
  %v8358 = vsel %vm26, %v8199, 0
  %v8361 = vsel %vm26, %v8200, 0
  %v8364 = vsel %vm26, %v8201, 0
  %v8367 = vsel %vm26, %v8202, 0
  %v8370 = vsel %vm26, %v8203, 0
  %v8373 = vsel %vm26, %v8204, 0
  %v8376 = vsel %vm26, %v8205, 0
  %v8379 = vsel %vm26, %v8206, 0
  %v8382 = vsel %vm26, %v8207, 0
  %v8385 = vsel %vm26, %v8208, 0
  %v8388 = vsel %vm26, %v8209, 0
  %v8391 = vsel %vm26, %v8210, 0
  %v8394 = vsel %vm26, %v8211, 0
  %v8397 = vsel %vm26, %v8212, 0
  %v8400 = vsel %vm26, %v8213, 0
  %v8403 = vsel %vm26, %v8214, 0
  %v8406 = vsel %vm26, %v8215, 0
  %v8409 = vsel %vm26, %v8216, 0
  %v8412 = vsel %vm651, %v8218, 0
  %8414 = vmatprep.subr.mxu0 0.0
  %8415 = vmatpush1.msra.mxu0 %v8412
  %8416 = vmatprep.subr.mxu0 0.0
  %8417 = vmatpush1.msra.mxu0 0.0
  %8418 = vmatprep.subr.mxu0 0.0
  %8419 = vmatpush1.msra.mxu0 0.0
  %8420 = vmatprep.subr.mxu0 0.0
  %8421 = vmatpush1.msra.mxu0 0.0
  %8422 = vmatprep.subr.mxu0 0.0
  %8423 = vmatpush1.msra.mxu0 0.0
  %8424 = vmatprep.subr.mxu0 0.0
  %8425 = vmatpush1.msra.mxu0 0.0
  %8426 = vmatprep.subr.mxu0 0.0
  %8427 = vmatpush1.msra.mxu0 0.0
  %8428 = vmatprep.subr.mxu0 0.0
  %8429 = vmatpush1.msra.mxu0 0.0
  %8430 = vmatprep.subr.mxu0 0.0
  %8431 = vmatpush1.msra.mxu0 0.0
  %8432 = vmatprep.subr.mxu0 0.0
  %8433 = vmatpush1.msra.mxu0 0.0
  %8434 = vmatprep.subr.mxu0 0.0
  %8435 = vmatpush1.msra.mxu0 0.0
  %8436 = vmatprep.subr.mxu0 0.0
  %8437 = vmatpush1.msra.mxu0 0.0
  %8438 = vmatprep.subr.mxu0 0.0
  %8439 = vmatpush1.msra.mxu0 0.0
  %8440 = vmatprep.subr.mxu0 0.0
  %8441 = vmatpush1.msra.mxu0 0.0
  %8442 = vmatprep.subr.mxu0 0.0
  %8443 = vmatpush1.msra.mxu0 0.0
  %8444 = vmatprep.subr.mxu0 0.0
  %8445 = vmatpush1.msra.mxu0 0.0
  %8446 = vmatprep.subr.mxu0 0.0
  %8447 = vmatpush1.msra.mxu0 0.0
  %8448 = vmatprep.subr.mxu0 0.0
  %8449 = vmatpush1.msra.mxu0 0.0
  %8450 = vmatprep.subr.mxu0 0.0
  %8451 = vmatpush1.msra.mxu0 0.0
  %8452 = vmatprep.subr.mxu0 0.0
  %8453 = vmatpush1.msra.mxu0 0.0
  %8454 = vmatprep.subr.mxu0 0.0
  %8455 = vmatpush1.msra.mxu0 0.0
  %8456 = vmatprep.subr.mxu0 0.0
  %8457 = vmatpush1.msra.mxu0 0.0
  %8458 = vmatprep.subr.mxu0 0.0
  %8459 = vmatpush1.msra.mxu0 0.0
  %8460 = vmatprep.subr.mxu0 0.0
  %8461 = vmatpush1.msra.mxu0 0.0
  %8462 = vmatprep.subr.mxu0 0.0
  %8463 = vmatpush1.msra.mxu0 0.0
  %8464 = vmatprep.subr.mxu0 0.0
  %8465 = vmatpush1.msra.mxu0 0.0
  %8466 = vmatprep.subr.mxu0 0.0
  %8467 = vmatpush1.msra.mxu0 0.0
  %8468 = vmatprep.subr.mxu0 0.0
  %8469 = vmatpush1.msra.mxu0 0.0
  %8470 = vmatprep.subr.mxu0 0.0
  %8471 = vmatpush1.msra.mxu0 0.0
  %8472 = vmatprep.subr.mxu0 0.0
  %8473 = vmatpush1.msra.mxu0 0.0
  %8474 = vmatprep.subr.mxu0 0.0
  %8475 = vmatpush1.msra.mxu0 0.0
  %8476 = vmatprep.subr.mxu0 0.0
  %8477 = vmatpush1.msra.mxu0 0.0
  %8478 = vmatprep.mubr.f32.mxu0 0.0
  %8479 = vmatmul.mubr.f32.gmra.mrb[0].mxu0 %v8220
  %v8480 = vpop.f32.mrb[0].mxu0
  %v8481 = vadd.f32 0.0, %v8480
  %v8482 = vpop.f32.mrb[0].mxu0
  %8483 = vmatprep.mubr.f32.mxu0 0.0
  %8484 = vmatmul.mubr.f32.gmra.mrb[0].mxu0 %v8223
  %v8485 = vpop.f32.mrb[0].mxu0
  %v8486 = vadd.f32 0.0, %v8485
  %v8487 = vpop.f32.mrb[0].mxu0
  %8488 = vmatprep.mubr.f32.mxu0 0.0
  %8489 = vmatmul.mubr.f32.gmra.mrb[0].mxu0 %v8226
  %v8490 = vpop.f32.mrb[0].mxu0
  %v8491 = vadd.f32 0.0, %v8490
  %v8492 = vpop.f32.mrb[0].mxu0
  %8493 = vmatprep.mubr.f32.mxu0 0.0
  %8494 = vmatmul.mubr.f32.gmra.mrb[0].mxu0 %v8229
  %v8495 = vpop.f32.mrb[0].mxu0
  %v8496 = vadd.f32 0.0, %v8495
  %v8497 = vpop.f32.mrb[0].mxu0
  %8498 = vmatprep.mubr.f32.mxu0 0.0
  %8499 = vmatmul.mubr.f32.gmra.mrb[0].mxu0 %v8232
  %v8500 = vpop.f32.mrb[0].mxu0
  %v8501 = vadd.f32 0.0, %v8500
  %v8502 = vpop.f32.mrb[0].mxu0
  %8503 = vmatprep.mubr.f32.mxu0 0.0
  %8504 = vmatmul.mubr.f32.gmra.mrb[0].mxu0 %v8235
  %v8505 = vpop.f32.mrb[0].mxu0
  %v8506 = vadd.f32 0.0, %v8505
  %v8507 = vpop.f32.mrb[0].mxu0
  %8508 = vmatprep.mubr.f32.mxu0 0.0
  %8509 = vmatmul.mubr.f32.gmra.mrb[0].mxu0 %v8238
  %v8510 = vpop.f32.mrb[0].mxu0
  %v8511 = vadd.f32 0.0, %v8510
  %v8512 = vpop.f32.mrb[0].mxu0
  %8513 = vmatprep.mubr.f32.mxu0 0.0
  %8514 = vmatmul.mubr.f32.gmra.mrb[0].mxu0 %v8241
  %v8515 = vpop.f32.mrb[0].mxu0
  %v8516 = vadd.f32 0.0, %v8515
  %v8517 = vpop.f32.mrb[0].mxu0
  %8518 = vmatprep.mubr.f32.mxu0 0.0
  %8519 = vmatmul.mubr.f32.gmra.mrb[0].mxu0 %v8244
  %v8520 = vpop.f32.mrb[0].mxu0
  %v8521 = vadd.f32 0.0, %v8520
  %v8522 = vpop.f32.mrb[0].mxu0
  %8523 = vmatprep.mubr.f32.mxu0 0.0
  %8524 = vmatmul.mubr.f32.gmra.mrb[0].mxu0 %v8247
  %v8525 = vpop.f32.mrb[0].mxu0
  %v8526 = vadd.f32 0.0, %v8525
  %v8527 = vpop.f32.mrb[0].mxu0
  %8528 = vmatprep.mubr.f32.mxu0 0.0
  %8529 = vmatmul.mubr.f32.gmra.mrb[0].mxu0 %v8250
  %v8530 = vpop.f32.mrb[0].mxu0
  %v8531 = vadd.f32 0.0, %v8530
  %v8532 = vpop.f32.mrb[0].mxu0
  %8533 = vmatprep.mubr.f32.mxu0 0.0
  %8534 = vmatmul.mubr.f32.gmra.mrb[0].mxu0 %v8253
  %v8535 = vpop.f32.mrb[0].mxu0
  %v8536 = vadd.f32 0.0, %v8535
  %v8537 = vpop.f32.mrb[0].mxu0
  %8538 = vmatprep.mubr.f32.mxu0 0.0
  %8539 = vmatmul.mubr.f32.gmra.mrb[0].mxu0 %v8256
  %v8540 = vpop.f32.mrb[0].mxu0
  %v8541 = vadd.f32 0.0, %v8540
  %v8542 = vpop.f32.mrb[0].mxu0
  %8543 = vmatprep.mubr.f32.mxu0 0.0
  %8544 = vmatmul.mubr.f32.gmra.mrb[0].mxu0 %v8259
  %v8545 = vpop.f32.mrb[0].mxu0
  %v8546 = vadd.f32 0.0, %v8545
  %v8547 = vpop.f32.mrb[0].mxu0
  %8548 = vmatprep.mubr.f32.mxu0 0.0
  %8549 = vmatmul.mubr.f32.gmra.mrb[0].mxu0 %v8262
  %v8550 = vpop.f32.mrb[0].mxu0
  %v8551 = vadd.f32 0.0, %v8550
  %v8552 = vpop.f32.mrb[0].mxu0
  %8553 = vmatprep.mubr.f32.mxu0 0.0
  %8554 = vmatmul.mubr.f32.gmra.mrb[0].mxu0 %v8265
  %v8555 = vpop.f32.mrb[0].mxu0
  %v8556 = vadd.f32 0.0, %v8555
  %v8557 = vpop.f32.mrb[0].mxu0
  %8558 = vmatprep.mubr.f32.mxu0 0.0
  %8559 = vmatmul.mubr.f32.gmra.mrb[0].mxu0 %v8268
  %v8560 = vpop.f32.mrb[0].mxu0
  %v8561 = vadd.f32 0.0, %v8560
  %v8562 = vpop.f32.mrb[0].mxu0
  %8563 = vmatprep.mubr.f32.mxu0 0.0
  %8564 = vmatmul.mubr.f32.gmra.mrb[0].mxu0 %v8271
  %v8565 = vpop.f32.mrb[0].mxu0
  %v8566 = vadd.f32 0.0, %v8565
  %v8567 = vpop.f32.mrb[0].mxu0
  %8568 = vmatprep.mubr.f32.mxu0 0.0
  %8569 = vmatmul.mubr.f32.gmra.mrb[0].mxu0 %v8274
  %v8570 = vpop.f32.mrb[0].mxu0
  %v8571 = vadd.f32 0.0, %v8570
  %v8572 = vpop.f32.mrb[0].mxu0
  %8573 = vmatprep.mubr.f32.mxu0 0.0
  %8574 = vmatmul.mubr.f32.gmra.mrb[0].mxu0 %v8277
  %v8575 = vpop.f32.mrb[0].mxu0
  %v8576 = vadd.f32 0.0, %v8575
  %v8577 = vpop.f32.mrb[0].mxu0
  %8578 = vmatprep.mubr.f32.mxu0 0.0
  %8579 = vmatmul.mubr.f32.gmra.mrb[0].mxu0 %v8280
  %v8580 = vpop.f32.mrb[0].mxu0
  %v8581 = vadd.f32 0.0, %v8580
  %v8582 = vpop.f32.mrb[0].mxu0
  %8583 = vmatprep.mubr.f32.mxu0 0.0
  %8584 = vmatmul.mubr.f32.gmra.mrb[0].mxu0 %v8283
  %v8585 = vpop.f32.mrb[0].mxu0
  %v8586 = vadd.f32 0.0, %v8585
  %v8587 = vpop.f32.mrb[0].mxu0
  %8588 = vmatprep.mubr.f32.mxu0 0.0
  %8589 = vmatmul.mubr.f32.gmra.mrb[0].mxu0 %v8286
  %v8590 = vpop.f32.mrb[0].mxu0
  %v8591 = vadd.f32 0.0, %v8590
  %v8592 = vpop.f32.mrb[0].mxu0
  %8593 = vmatprep.mubr.f32.mxu0 0.0
  %8594 = vmatmul.mubr.f32.gmra.mrb[0].mxu0 %v8289
  %v8595 = vpop.f32.mrb[0].mxu0
  %v8596 = vadd.f32 0.0, %v8595
  %v8597 = vpop.f32.mrb[0].mxu0
  %8598 = vmatprep.mubr.f32.mxu0 0.0
  %8599 = vmatmul.mubr.f32.gmra.mrb[0].mxu0 %v8292
  %v8600 = vpop.f32.mrb[0].mxu0
  %v8601 = vadd.f32 0.0, %v8600
  %v8602 = vpop.f32.mrb[0].mxu0
  %8603 = vmatprep.mubr.f32.mxu0 0.0
  %8604 = vmatmul.mubr.f32.gmra.mrb[0].mxu0 %v8295
  %v8605 = vpop.f32.mrb[0].mxu0
  %v8606 = vadd.f32 0.0, %v8605
  %v8607 = vpop.f32.mrb[0].mxu0
  %8608 = vmatprep.mubr.f32.mxu0 0.0
  %8609 = vmatmul.mubr.f32.gmra.mrb[0].mxu0 %v8298
  %v8610 = vpop.f32.mrb[0].mxu0
  %v8611 = vadd.f32 0.0, %v8610
  %v8612 = vpop.f32.mrb[0].mxu0
  %8613 = vmatprep.mubr.f32.mxu0 0.0
  %8614 = vmatmul.mubr.f32.gmra.mrb[0].mxu0 %v8301
  %v8615 = vpop.f32.mrb[0].mxu0
  %v8616 = vadd.f32 0.0, %v8615
  %v8617 = vpop.f32.mrb[0].mxu0
  %8618 = vmatprep.mubr.f32.mxu0 0.0
  %8619 = vmatmul.mubr.f32.gmra.mrb[0].mxu0 %v8304
  %v8620 = vpop.f32.mrb[0].mxu0
  %v8621 = vadd.f32 0.0, %v8620
  %v8622 = vpop.f32.mrb[0].mxu0
  %8623 = vmatprep.mubr.f32.mxu0 0.0
  %8624 = vmatmul.mubr.f32.gmra.mrb[0].mxu0 %v8307
  %v8625 = vpop.f32.mrb[0].mxu0
  %v8626 = vadd.f32 0.0, %v8625
  %v8627 = vpop.f32.mrb[0].mxu0
  %8628 = vmatprep.mubr.f32.mxu0 0.0
  %8629 = vmatmul.mubr.f32.gmra.mrb[0].mxu0 %v8310
  %v8630 = vpop.f32.mrb[0].mxu0
  %v8631 = vadd.f32 0.0, %v8630
  %v8632 = vpop.f32.mrb[0].mxu0
  %8633 = vmatprep.mubr.f32.mxu0 0.0
  %8634 = vmatmul.mubr.f32.gmra.mrb[0].mxu0 %v8313
  %v8635 = vpop.f32.mrb[0].mxu0
  %v8636 = vadd.f32 0.0, %v8635
  %v8637 = vpop.f32.mrb[0].mxu0
  %8638 = vmatprep.mubr.f32.mxu0 0.0
  %8639 = vmatmul.mubr.f32.gmra.mrb[0].mxu0 %v8316
  %v8640 = vpop.f32.mrb[0].mxu0
  %v8641 = vadd.f32 0.0, %v8640
  %v8642 = vpop.f32.mrb[0].mxu0
  %8643 = vmatprep.mubr.f32.mxu0 0.0
  %8644 = vmatmul.mubr.f32.gmra.mrb[0].mxu0 %v8319
  %v8645 = vpop.f32.mrb[0].mxu0
  %v8646 = vadd.f32 0.0, %v8645
  %v8647 = vpop.f32.mrb[0].mxu0
  %8648 = vmatprep.mubr.f32.mxu0 0.0
  %8649 = vmatmul.mubr.f32.gmra.mrb[0].mxu0 %v8322
  %v8650 = vpop.f32.mrb[0].mxu0
  %v8651 = vadd.f32 0.0, %v8650
  %v8652 = vpop.f32.mrb[0].mxu0
  %8653 = vmatprep.mubr.f32.mxu0 0.0
  %8654 = vmatmul.mubr.f32.gmra.mrb[0].mxu0 %v8325
  %v8655 = vpop.f32.mrb[0].mxu0
  %v8656 = vadd.f32 0.0, %v8655
  %v8657 = vpop.f32.mrb[0].mxu0
  %8658 = vmatprep.mubr.f32.mxu0 0.0
  %8659 = vmatmul.mubr.f32.gmra.mrb[0].mxu0 %v8328
  %v8660 = vpop.f32.mrb[0].mxu0
  %v8661 = vadd.f32 0.0, %v8660
  %v8662 = vpop.f32.mrb[0].mxu0
  %8663 = vmatprep.mubr.f32.mxu0 0.0
  %8664 = vmatmul.mubr.f32.gmra.mrb[0].mxu0 %v8331
  %v8665 = vpop.f32.mrb[0].mxu0
  %v8666 = vadd.f32 0.0, %v8665
  %v8667 = vpop.f32.mrb[0].mxu0
  %8668 = vmatprep.mubr.f32.mxu0 0.0
  %8669 = vmatmul.mubr.f32.gmra.mrb[0].mxu0 %v8334
  %v8670 = vpop.f32.mrb[0].mxu0
  %v8671 = vadd.f32 0.0, %v8670
  %v8672 = vpop.f32.mrb[0].mxu0
  %8673 = vmatprep.mubr.f32.mxu0 0.0
  %8674 = vmatmul.mubr.f32.gmra.mrb[0].mxu0 %v8337
  %v8675 = vpop.f32.mrb[0].mxu0
  %v8676 = vadd.f32 0.0, %v8675
  %v8677 = vpop.f32.mrb[0].mxu0
  %8678 = vmatprep.mubr.f32.mxu0 0.0
  %8679 = vmatmul.mubr.f32.gmra.mrb[0].mxu0 %v8340
  %v8680 = vpop.f32.mrb[0].mxu0
  %v8681 = vadd.f32 0.0, %v8680
  %v8682 = vpop.f32.mrb[0].mxu0
  %8683 = vmatprep.mubr.f32.mxu0 0.0
  %8684 = vmatmul.mubr.f32.gmra.mrb[0].mxu0 %v8343
  %v8685 = vpop.f32.mrb[0].mxu0
  %v8686 = vadd.f32 0.0, %v8685
  %v8687 = vpop.f32.mrb[0].mxu0
  %8688 = vmatprep.mubr.f32.mxu0 0.0
  %8689 = vmatmul.mubr.f32.gmra.mrb[0].mxu0 %v8346
  %v8690 = vpop.f32.mrb[0].mxu0
  %v8691 = vadd.f32 0.0, %v8690
  %v8692 = vpop.f32.mrb[0].mxu0
  %8693 = vmatprep.mubr.f32.mxu0 0.0
  %8694 = vmatmul.mubr.f32.gmra.mrb[0].mxu0 %v8349
  %v8695 = vpop.f32.mrb[0].mxu0
  %v8696 = vadd.f32 0.0, %v8695
  %v8697 = vpop.f32.mrb[0].mxu0
  %8698 = vmatprep.mubr.f32.mxu0 0.0
  %8699 = vmatmul.mubr.f32.gmra.mrb[0].mxu0 %v8352
  %v8700 = vpop.f32.mrb[0].mxu0
  %v8701 = vadd.f32 0.0, %v8700
  %v8702 = vpop.f32.mrb[0].mxu0
  %8703 = vmatprep.mubr.f32.mxu0 0.0
  %8704 = vmatmul.mubr.f32.gmra.mrb[0].mxu0 %v8355
  %v8705 = vpop.f32.mrb[0].mxu0
  %v8706 = vadd.f32 0.0, %v8705
  %v8707 = vpop.f32.mrb[0].mxu0
  %8708 = vmatprep.mubr.f32.mxu0 0.0
  %8709 = vmatmul.mubr.f32.gmra.mrb[0].mxu0 %v8358
  %v8710 = vpop.f32.mrb[0].mxu0
  %v8711 = vadd.f32 0.0, %v8710
  %v8712 = vpop.f32.mrb[0].mxu0
  %8713 = vmatprep.mubr.f32.mxu0 0.0
  %8714 = vmatmul.mubr.f32.gmra.mrb[0].mxu0 %v8361
  %v8715 = vpop.f32.mrb[0].mxu0
  %v8716 = vadd.f32 0.0, %v8715
  %v8717 = vpop.f32.mrb[0].mxu0
  %8718 = vmatprep.mubr.f32.mxu0 0.0
  %8719 = vmatmul.mubr.f32.gmra.mrb[0].mxu0 %v8364
  %v8720 = vpop.f32.mrb[0].mxu0
  %v8721 = vadd.f32 0.0, %v8720
  %v8722 = vpop.f32.mrb[0].mxu0
  %8723 = vmatprep.mubr.f32.mxu0 0.0
  %8724 = vmatmul.mubr.f32.gmra.mrb[0].mxu0 %v8367
  %v8725 = vpop.f32.mrb[0].mxu0
  %v8726 = vadd.f32 0.0, %v8725
  %v8727 = vpop.f32.mrb[0].mxu0
  %8728 = vmatprep.mubr.f32.mxu0 0.0
  %8729 = vmatmul.mubr.f32.gmra.mrb[0].mxu0 %v8370
  %v8730 = vpop.f32.mrb[0].mxu0
  %v8731 = vadd.f32 0.0, %v8730
  %v8732 = vpop.f32.mrb[0].mxu0
  %8733 = vmatprep.mubr.f32.mxu0 0.0
  %8734 = vmatmul.mubr.f32.gmra.mrb[0].mxu0 %v8373
  %v8735 = vpop.f32.mrb[0].mxu0
  %v8736 = vadd.f32 0.0, %v8735
  %v8737 = vpop.f32.mrb[0].mxu0
  %8738 = vmatprep.mubr.f32.mxu0 0.0
  %8739 = vmatmul.mubr.f32.gmra.mrb[0].mxu0 %v8376
  %v8740 = vpop.f32.mrb[0].mxu0
  %v8741 = vadd.f32 0.0, %v8740
  %v8742 = vpop.f32.mrb[0].mxu0
  %8743 = vmatprep.mubr.f32.mxu0 0.0
  %8744 = vmatmul.mubr.f32.gmra.mrb[0].mxu0 %v8379
  %v8745 = vpop.f32.mrb[0].mxu0
  %v8746 = vadd.f32 0.0, %v8745
  %v8747 = vpop.f32.mrb[0].mxu0
  %8748 = vmatprep.mubr.f32.mxu0 0.0
  %8749 = vmatmul.mubr.f32.gmra.mrb[0].mxu0 %v8382
  %v8750 = vpop.f32.mrb[0].mxu0
  %v8751 = vadd.f32 0.0, %v8750
  %v8752 = vpop.f32.mrb[0].mxu0
  %8753 = vmatprep.mubr.f32.mxu0 0.0
  %8754 = vmatmul.mubr.f32.gmra.mrb[0].mxu0 %v8385
  %v8755 = vpop.f32.mrb[0].mxu0
  %v8756 = vadd.f32 0.0, %v8755
  %v8757 = vpop.f32.mrb[0].mxu0
  %8758 = vmatprep.mubr.f32.mxu0 0.0
  %8759 = vmatmul.mubr.f32.gmra.mrb[0].mxu0 %v8388
  %v8760 = vpop.f32.mrb[0].mxu0
  %v8761 = vadd.f32 0.0, %v8760
  %v8762 = vpop.f32.mrb[0].mxu0
  %8763 = vmatprep.mubr.f32.mxu0 0.0
  %8764 = vmatmul.mubr.f32.gmra.mrb[0].mxu0 %v8391
  %v8765 = vpop.f32.mrb[0].mxu0
  %v8766 = vadd.f32 0.0, %v8765
  %v8767 = vpop.f32.mrb[0].mxu0
  %8768 = vmatprep.mubr.f32.mxu0 0.0
  %8769 = vmatmul.mubr.f32.gmra.mrb[0].mxu0 %v8394
  %v8770 = vpop.f32.mrb[0].mxu0
  %v8771 = vadd.f32 0.0, %v8770
  %v8772 = vpop.f32.mrb[0].mxu0
  %8773 = vmatprep.mubr.f32.mxu0 0.0
  %8774 = vmatmul.mubr.f32.gmra.mrb[0].mxu0 %v8397
  %v8775 = vpop.f32.mrb[0].mxu0
  %v8776 = vadd.f32 0.0, %v8775
  %v8777 = vpop.f32.mrb[0].mxu0
  %8778 = vmatprep.mubr.f32.mxu0 0.0
  %8779 = vmatmul.mubr.f32.gmra.mrb[0].mxu0 %v8400
  %v8780 = vpop.f32.mrb[0].mxu0
  %v8781 = vadd.f32 0.0, %v8780
  %v8782 = vpop.f32.mrb[0].mxu0
  %8783 = vmatprep.mubr.f32.mxu0 0.0
  %8784 = vmatmul.mubr.f32.gmra.mrb[0].mxu0 %v8403
  %v8785 = vpop.f32.mrb[0].mxu0
  %v8786 = vadd.f32 0.0, %v8785
  %v8787 = vpop.f32.mrb[0].mxu0
  %8788 = vmatprep.mubr.f32.mxu0 0.0
  %8789 = vmatmul.mubr.f32.gmra.mrb[0].mxu0 %v8406
  %v8790 = vpop.f32.mrb[0].mxu0
  %v8791 = vadd.f32 0.0, %v8790
  %v8792 = vpop.f32.mrb[0].mxu0
  %8793 = vmatprep.mubr.f32.mxu0 0.0
  %8794 = vmatmul.mubr.f32.gmra.mrb[0].mxu0 %v8409
  %v8795 = vpop.f32.mrb[0].mxu0
  %v8796 = vadd.f32 0.0, %v8795
  %v8797 = vpop.f32.mrb[0].mxu0
  %8798 = vdwg.mxu0
  %v8799 = vadd.f32 %v7835, %v8481
  %v8800 = vadd.f32 %v7840, %v8486
  %v8801 = vadd.f32 %v7845, %v8491
  %v8802 = vadd.f32 %v7850, %v8496
  %v8803 = vadd.f32 %v7855, %v8501
  %v8804 = vadd.f32 %v7860, %v8506
  %v8805 = vadd.f32 %v7865, %v8511
  %v8806 = vadd.f32 %v7870, %v8516
  %v8807 = vadd.f32 %v7875, %v8521
  %v8808 = vadd.f32 %v7880, %v8526
  %v8809 = vadd.f32 %v7885, %v8531
  %v8810 = vadd.f32 %v7890, %v8536
  %v8811 = vadd.f32 %v7895, %v8541
  %v8812 = vadd.f32 %v7900, %v8546
  %v8813 = vadd.f32 %v7905, %v8551
  %v8814 = vadd.f32 %v7910, %v8556
  %v8815 = vadd.f32 %v7915, %v8561
  %v8816 = vadd.f32 %v7920, %v8566
  %v8817 = vadd.f32 %v7925, %v8571
  %v8818 = vadd.f32 %v7930, %v8576
  %v8819 = vadd.f32 %v7935, %v8581
  %v8820 = vadd.f32 %v7940, %v8586
  %v8821 = vadd.f32 %v7945, %v8591
  %v8822 = vadd.f32 %v7950, %v8596
  %v8823 = vadd.f32 %v7955, %v8601
  %v8824 = vadd.f32 %v7960, %v8606
  %v8825 = vadd.f32 %v7965, %v8611
  %v8826 = vadd.f32 %v7970, %v8616
  %v8827 = vadd.f32 %v7975, %v8621
  %v8828 = vadd.f32 %v7980, %v8626
  %v8829 = vadd.f32 %v7985, %v8631
  %v8830 = vadd.f32 %v7990, %v8636
  %v8831 = vadd.f32 %v7995, %v8641
  %v8832 = vadd.f32 %v8000, %v8646
  %v8833 = vadd.f32 %v8005, %v8651
  %v8834 = vadd.f32 %v8010, %v8656
  %v8835 = vadd.f32 %v8015, %v8661
  %v8836 = vadd.f32 %v8020, %v8666
  %v8837 = vadd.f32 %v8025, %v8671
  %v8838 = vadd.f32 %v8030, %v8676
  %v8839 = vadd.f32 %v8035, %v8681
  %v8840 = vadd.f32 %v8040, %v8686
  %v8841 = vadd.f32 %v8045, %v8691
  %v8842 = vadd.f32 %v8050, %v8696
  %v8843 = vadd.f32 %v8055, %v8701
  %v8844 = vadd.f32 %v8060, %v8706
  %v8845 = vadd.f32 %v8065, %v8711
  %v8846 = vadd.f32 %v8070, %v8716
  %v8847 = vadd.f32 %v8075, %v8721
  %v8848 = vadd.f32 %v8080, %v8726
  %v8849 = vadd.f32 %v8085, %v8731
  %v8850 = vadd.f32 %v8090, %v8736
  %v8851 = vadd.f32 %v8095, %v8741
  %v8852 = vadd.f32 %v8100, %v8746
  %v8853 = vadd.f32 %v8105, %v8751
  %v8854 = vadd.f32 %v8110, %v8756
  %v8855 = vadd.f32 %v8115, %v8761
  %v8856 = vadd.f32 %v8120, %v8766
  %v8857 = vadd.f32 %v8125, %v8771
  %v8858 = vadd.f32 %v8130, %v8776
  %v8859 = vadd.f32 %v8135, %v8781
  %v8860 = vadd.f32 %v8140, %v8786
  %v8861 = vadd.f32 %v8145, %v8791
  %v8862 = vadd.f32 %v8150, %v8796
  %v8863 = vld [vmem:[%s6797] sm:$0xff]
  %v8864 = vld [vmem:[%s6797 + $0x8] sm:$0xff]
  %v8865 = vld [vmem:[%s6797 + $0x18] sm:$0xff]
  %v8866 = vld [vmem:[%s6797 + $0x20] sm:$0xff]
  %v8867 = vld [vmem:[%s6797 + $0x30] sm:$0xff]
  %v8868 = vld [vmem:[%s6797 + $0x38] sm:$0xff]
  %v8869 = vld [vmem:[%s6797 + $0x48] sm:$0xff]
  %v8870 = vld [vmem:[%s6797 + $0x50] sm:$0xff]
  %v8871 = vld [vmem:[%s6797 + $0x60] sm:$0xff]
  %v8872 = vld [vmem:[%s6797 + $0x68] sm:$0xff]
  %v8873 = vld [vmem:[%s6797 + $0x78] sm:$0xff]
  %v8874 = vld [vmem:[%s6797 + $0x80] sm:$0xff]
  %v8875 = vld [vmem:[%s6797 + $0x90] sm:$0xff]
  %v8876 = vld [vmem:[%s6797 + $0x98] sm:$0xff]
  %v8877 = vld [vmem:[%s6797 + $0xa8] sm:$0xff]
  %v8878 = vld [vmem:[%s6797 + $0xb0] sm:$0xff]
  %v8879 = vld [vmem:[%s6797 + $0xc0] sm:$0xff]
  %v8880 = vld [vmem:[%s6797 + $0xc8] sm:$0xff]
  %v8881 = vld [vmem:[%s6797 + $0xd8] sm:$0xff]
  %v8882 = vld [vmem:[%s6797 + $0xe0] sm:$0xff]
  %v8883 = vld [vmem:[%s6797 + $0xf0] sm:$0xff]
  %v8884 = vld [vmem:[%s6797 + $0xf8] sm:$0xff]
  %v8885 = vld [vmem:[%s6797 + $0x108] sm:$0xff]
  %v8886 = vld [vmem:[%s6797 + $0x110] sm:$0xff]
  %v8887 = vld [vmem:[%s6797 + $0x120] sm:$0xff]
  %v8888 = vld [vmem:[%s6797 + $0x128] sm:$0xff]
  %v8889 = vld [vmem:[%s6797 + $0x138] sm:$0xff]
  %v8890 = vld [vmem:[%s6797 + $0x140] sm:$0xff]
  %v8891 = vld [vmem:[%s6797 + $0x150] sm:$0xff]
  %v8892 = vld [vmem:[%s6797 + $0x158] sm:$0xff]
  %v8893 = vld [vmem:[%s6797 + $0x168] sm:$0xff]
  %v8894 = vld [vmem:[%s6797 + $0x170] sm:$0xff]
  %v8895 = vld [vmem:[%s6797 + $0x1b0] sm:$0xff]
  %v8896 = vld [vmem:[%s6797 + $0x1b8] sm:$0xff]
  %v8897 = vld [vmem:[%s6797 + $0x1c8] sm:$0xff]
  %v8898 = vld [vmem:[%s6797 + $0x1d0] sm:$0xff]
  %v8899 = vld [vmem:[%s6797 + $0x1e0] sm:$0xff]
  %v8900 = vld [vmem:[%s6797 + $0x1e8] sm:$0xff]
  %v8901 = vld [vmem:[%s6797 + $0x1f8] sm:$0xff]
  %v8902 = vld [vmem:[%s6797 + $0x200] sm:$0xff]
  %v8903 = vld [vmem:[%s6797 + $0x210] sm:$0xff]
  %v8904 = vld [vmem:[%s6797 + $0x218] sm:$0xff]
  %v8905 = vld [vmem:[%s6797 + $0x228] sm:$0xff]
  %v8906 = vld [vmem:[%s6797 + $0x230] sm:$0xff]
  %v8907 = vld [vmem:[%s6797 + $0x240] sm:$0xff]
  %v8908 = vld [vmem:[%s6797 + $0x248] sm:$0xff]
  %v8909 = vld [vmem:[%s6797 + $0x258] sm:$0xff]
  %v8910 = vld [vmem:[%s6797 + $0x260] sm:$0xff]
  %v8911 = vld [vmem:[%s6797 + $0x270] sm:$0xff]
  %v8912 = vld [vmem:[%s6797 + $0x278] sm:$0xff]
  %v8913 = vld [vmem:[%s6797 + $0x288] sm:$0xff]
  %v8914 = vld [vmem:[%s6797 + $0x290] sm:$0xff]
  %v8915 = vld [vmem:[%s6797 + $0x2a0] sm:$0xff]
  %v8916 = vld [vmem:[%s6797 + $0x2a8] sm:$0xff]
  %v8917 = vld [vmem:[%s6797 + $0x2b8] sm:$0xff]
  %v8918 = vld [vmem:[%s6797 + $0x2c0] sm:$0xff]
  %v8919 = vld [vmem:[%s6797 + $0x2d0] sm:$0xff]
  %v8920 = vld [vmem:[%s6797 + $0x2d8] sm:$0xff]
  %v8921 = vld [vmem:[%s6797 + $0x2e8] sm:$0xff]
  %v8922 = vld [vmem:[%s6797 + $0x2f0] sm:$0xff]
  %v8923 = vld [vmem:[%s6797 + $0x300] sm:$0xff]
  %v8924 = vld [vmem:[%s6797 + $0x308] sm:$0xff]
  %v8925 = vld [vmem:[%s6797 + $0x318] sm:$0xff]
  %v8926 = vld [vmem:[%s6797 + $0x320] sm:$0xff]
  %s8927 = scalar_lea.vmem %s4, 12
  %v8928 = vld [vmem:[%s8927] sm:$0xf]
  %v8930 = vsel %vm26, %v8863, 0
  %v8933 = vsel %vm26, %v8864, 0
  %v8936 = vsel %vm26, %v8865, 0
  %v8939 = vsel %vm26, %v8866, 0
  %v8942 = vsel %vm26, %v8867, 0
  %v8945 = vsel %vm26, %v8868, 0
  %v8948 = vsel %vm26, %v8869, 0
  %v8951 = vsel %vm26, %v8870, 0
  %v8954 = vsel %vm26, %v8871, 0
  %v8957 = vsel %vm26, %v8872, 0
  %v8960 = vsel %vm26, %v8873, 0
  %v8963 = vsel %vm26, %v8874, 0
  %v8966 = vsel %vm26, %v8875, 0
  %v8969 = vsel %vm26, %v8876, 0
  %v8972 = vsel %vm26, %v8877, 0
  %v8975 = vsel %vm26, %v8878, 0
  %v8978 = vsel %vm26, %v8879, 0
  %v8981 = vsel %vm26, %v8880, 0
  %v8984 = vsel %vm26, %v8881, 0
  %v8987 = vsel %vm26, %v8882, 0
  %v8990 = vsel %vm26, %v8883, 0
  %v8993 = vsel %vm26, %v8884, 0
  %v8996 = vsel %vm26, %v8885, 0
  %v8999 = vsel %vm26, %v8886, 0
  %v9002 = vsel %vm26, %v8887, 0
  %v9005 = vsel %vm26, %v8888, 0
  %v9008 = vsel %vm26, %v8889, 0
  %v9011 = vsel %vm26, %v8890, 0
  %v9014 = vsel %vm26, %v8891, 0
  %v9017 = vsel %vm26, %v8892, 0
  %v9020 = vsel %vm26, %v8893, 0
  %v9023 = vsel %vm26, %v8894, 0
  %v9026 = vsel %vm26, %v8895, 0
  %v9029 = vsel %vm26, %v8896, 0
  %v9032 = vsel %vm26, %v8897, 0
  %v9035 = vsel %vm26, %v8898, 0
  %v9038 = vsel %vm26, %v8899, 0
  %v9041 = vsel %vm26, %v8900, 0
  %v9044 = vsel %vm26, %v8901, 0
  %v9047 = vsel %vm26, %v8902, 0
  %v9050 = vsel %vm26, %v8903, 0
  %v9053 = vsel %vm26, %v8904, 0
  %v9056 = vsel %vm26, %v8905, 0
  %v9059 = vsel %vm26, %v8906, 0
  %v9062 = vsel %vm26, %v8907, 0
  %v9065 = vsel %vm26, %v8908, 0
  %v9068 = vsel %vm26, %v8909, 0
  %v9071 = vsel %vm26, %v8910, 0
  %v9074 = vsel %vm26, %v8911, 0
  %v9077 = vsel %vm26, %v8912, 0
  %v9080 = vsel %vm26, %v8913, 0
  %v9083 = vsel %vm26, %v8914, 0
  %v9086 = vsel %vm26, %v8915, 0
  %v9089 = vsel %vm26, %v8916, 0
  %v9092 = vsel %vm26, %v8917, 0
  %v9095 = vsel %vm26, %v8918, 0
  %v9098 = vsel %vm26, %v8919, 0
  %v9101 = vsel %vm26, %v8920, 0
  %v9104 = vsel %vm26, %v8921, 0
  %v9107 = vsel %vm26, %v8922, 0
  %v9110 = vsel %vm26, %v8923, 0
  %v9113 = vsel %vm26, %v8924, 0
  %v9116 = vsel %vm26, %v8925, 0
  %v9119 = vsel %vm26, %v8926, 0
  %v9122 = vsel %vm651, %v8928, 0
  %9124 = vmatprep.subr.mxu0 0.0
  %9125 = vmatpush1.msra.mxu0 %v9122
  %9126 = vmatprep.subr.mxu0 0.0
  %9127 = vmatpush1.msra.mxu0 0.0
  %9128 = vmatprep.subr.mxu0 0.0
  %9129 = vmatpush1.msra.mxu0 0.0
  %9130 = vmatprep.subr.mxu0 0.0
  %9131 = vmatpush1.msra.mxu0 0.0
  %9132 = vmatprep.subr.mxu0 0.0
  %9133 = vmatpush1.msra.mxu0 0.0
  %9134 = vmatprep.subr.mxu0 0.0
  %9135 = vmatpush1.msra.mxu0 0.0
  %9136 = vmatprep.subr.mxu0 0.0
  %9137 = vmatpush1.msra.mxu0 0.0
  %9138 = vmatprep.subr.mxu0 0.0
  %9139 = vmatpush1.msra.mxu0 0.0
  %9140 = vmatprep.subr.mxu0 0.0
  %9141 = vmatpush1.msra.mxu0 0.0
  %9142 = vmatprep.subr.mxu0 0.0
  %9143 = vmatpush1.msra.mxu0 0.0
  %9144 = vmatprep.subr.mxu0 0.0
  %9145 = vmatpush1.msra.mxu0 0.0
  %9146 = vmatprep.subr.mxu0 0.0
  %9147 = vmatpush1.msra.mxu0 0.0
  %9148 = vmatprep.subr.mxu0 0.0
  %9149 = vmatpush1.msra.mxu0 0.0
  %9150 = vmatprep.subr.mxu0 0.0
  %9151 = vmatpush1.msra.mxu0 0.0
  %9152 = vmatprep.subr.mxu0 0.0
  %9153 = vmatpush1.msra.mxu0 0.0
  %9154 = vmatprep.subr.mxu0 0.0
  %9155 = vmatpush1.msra.mxu0 0.0
  %9156 = vmatprep.subr.mxu0 0.0
  %9157 = vmatpush1.msra.mxu0 0.0
  %9158 = vmatprep.subr.mxu0 0.0
  %9159 = vmatpush1.msra.mxu0 0.0
  %9160 = vmatprep.subr.mxu0 0.0
  %9161 = vmatpush1.msra.mxu0 0.0
  %9162 = vmatprep.subr.mxu0 0.0
  %9163 = vmatpush1.msra.mxu0 0.0
  %9164 = vmatprep.subr.mxu0 0.0
  %9165 = vmatpush1.msra.mxu0 0.0
  %9166 = vmatprep.subr.mxu0 0.0
  %9167 = vmatpush1.msra.mxu0 0.0
  %9168 = vmatprep.subr.mxu0 0.0
  %9169 = vmatpush1.msra.mxu0 0.0
  %9170 = vmatprep.subr.mxu0 0.0
  %9171 = vmatpush1.msra.mxu0 0.0
  %9172 = vmatprep.subr.mxu0 0.0
  %9173 = vmatpush1.msra.mxu0 0.0
  %9174 = vmatprep.subr.mxu0 0.0
  %9175 = vmatpush1.msra.mxu0 0.0
  %9176 = vmatprep.subr.mxu0 0.0
  %9177 = vmatpush1.msra.mxu0 0.0
  %9178 = vmatprep.subr.mxu0 0.0
  %9179 = vmatpush1.msra.mxu0 0.0
  %9180 = vmatprep.subr.mxu0 0.0
  %9181 = vmatpush1.msra.mxu0 0.0
  %9182 = vmatprep.subr.mxu0 0.0
  %9183 = vmatpush1.msra.mxu0 0.0
  %9184 = vmatprep.subr.mxu0 0.0
  %9185 = vmatpush1.msra.mxu0 0.0
  %9186 = vmatprep.subr.mxu0 0.0
  %9187 = vmatpush1.msra.mxu0 0.0
  %9188 = vmatprep.mubr.f32.mxu0 0.0
  %9189 = vmatmul.mubr.f32.gmra.mrb[0].mxu0 %v8930
  %v9190 = vpop.f32.mrb[0].mxu0
  %v9191 = vadd.f32 0.0, %v9190
  %v9192 = vpop.f32.mrb[0].mxu0
  %9193 = vmatprep.mubr.f32.mxu0 0.0
  %9194 = vmatmul.mubr.f32.gmra.mrb[0].mxu0 %v8933
  %v9195 = vpop.f32.mrb[0].mxu0
  %v9196 = vadd.f32 0.0, %v9195
  %v9197 = vpop.f32.mrb[0].mxu0
  %9198 = vmatprep.mubr.f32.mxu0 0.0
  %9199 = vmatmul.mubr.f32.gmra.mrb[0].mxu0 %v8936
  %v9200 = vpop.f32.mrb[0].mxu0
  %v9201 = vadd.f32 0.0, %v9200
  %v9202 = vpop.f32.mrb[0].mxu0
  %9203 = vmatprep.mubr.f32.mxu0 0.0
  %9204 = vmatmul.mubr.f32.gmra.mrb[0].mxu0 %v8939
  %v9205 = vpop.f32.mrb[0].mxu0
  %v9206 = vadd.f32 0.0, %v9205
  %v9207 = vpop.f32.mrb[0].mxu0
  %9208 = vmatprep.mubr.f32.mxu0 0.0
  %9209 = vmatmul.mubr.f32.gmra.mrb[0].mxu0 %v8942
  %v9210 = vpop.f32.mrb[0].mxu0
  %v9211 = vadd.f32 0.0, %v9210
  %v9212 = vpop.f32.mrb[0].mxu0
  %9213 = vmatprep.mubr.f32.mxu0 0.0
  %9214 = vmatmul.mubr.f32.gmra.mrb[0].mxu0 %v8945
  %v9215 = vpop.f32.mrb[0].mxu0
  %v9216 = vadd.f32 0.0, %v9215
  %v9217 = vpop.f32.mrb[0].mxu0
  %9218 = vmatprep.mubr.f32.mxu0 0.0
  %9219 = vmatmul.mubr.f32.gmra.mrb[0].mxu0 %v8948
  %v9220 = vpop.f32.mrb[0].mxu0
  %v9221 = vadd.f32 0.0, %v9220
  %v9222 = vpop.f32.mrb[0].mxu0
  %9223 = vmatprep.mubr.f32.mxu0 0.0
  %9224 = vmatmul.mubr.f32.gmra.mrb[0].mxu0 %v8951
  %v9225 = vpop.f32.mrb[0].mxu0
  %v9226 = vadd.f32 0.0, %v9225
  %v9227 = vpop.f32.mrb[0].mxu0
  %9228 = vmatprep.mubr.f32.mxu0 0.0
  %9229 = vmatmul.mubr.f32.gmra.mrb[0].mxu0 %v8954
  %v9230 = vpop.f32.mrb[0].mxu0
  %v9231 = vadd.f32 0.0, %v9230
  %v9232 = vpop.f32.mrb[0].mxu0
  %9233 = vmatprep.mubr.f32.mxu0 0.0
  %9234 = vmatmul.mubr.f32.gmra.mrb[0].mxu0 %v8957
  %v9235 = vpop.f32.mrb[0].mxu0
  %v9236 = vadd.f32 0.0, %v9235
  %v9237 = vpop.f32.mrb[0].mxu0
  %9238 = vmatprep.mubr.f32.mxu0 0.0
  %9239 = vmatmul.mubr.f32.gmra.mrb[0].mxu0 %v8960
  %v9240 = vpop.f32.mrb[0].mxu0
  %v9241 = vadd.f32 0.0, %v9240
  %v9242 = vpop.f32.mrb[0].mxu0
  %9243 = vmatprep.mubr.f32.mxu0 0.0
  %9244 = vmatmul.mubr.f32.gmra.mrb[0].mxu0 %v8963
  %v9245 = vpop.f32.mrb[0].mxu0
  %v9246 = vadd.f32 0.0, %v9245
  %v9247 = vpop.f32.mrb[0].mxu0
  %9248 = vmatprep.mubr.f32.mxu0 0.0
  %9249 = vmatmul.mubr.f32.gmra.mrb[0].mxu0 %v8966
  %v9250 = vpop.f32.mrb[0].mxu0
  %v9251 = vadd.f32 0.0, %v9250
  %v9252 = vpop.f32.mrb[0].mxu0
  %9253 = vmatprep.mubr.f32.mxu0 0.0
  %9254 = vmatmul.mubr.f32.gmra.mrb[0].mxu0 %v8969
  %v9255 = vpop.f32.mrb[0].mxu0
  %v9256 = vadd.f32 0.0, %v9255
  %v9257 = vpop.f32.mrb[0].mxu0
  %9258 = vmatprep.mubr.f32.mxu0 0.0
  %9259 = vmatmul.mubr.f32.gmra.mrb[0].mxu0 %v8972
  %v9260 = vpop.f32.mrb[0].mxu0
  %v9261 = vadd.f32 0.0, %v9260
  %v9262 = vpop.f32.mrb[0].mxu0
  %9263 = vmatprep.mubr.f32.mxu0 0.0
  %9264 = vmatmul.mubr.f32.gmra.mrb[0].mxu0 %v8975
  %v9265 = vpop.f32.mrb[0].mxu0
  %v9266 = vadd.f32 0.0, %v9265
  %v9267 = vpop.f32.mrb[0].mxu0
  %9268 = vmatprep.mubr.f32.mxu0 0.0
  %9269 = vmatmul.mubr.f32.gmra.mrb[0].mxu0 %v8978
  %v9270 = vpop.f32.mrb[0].mxu0
  %v9271 = vadd.f32 0.0, %v9270
  %v9272 = vpop.f32.mrb[0].mxu0
  %9273 = vmatprep.mubr.f32.mxu0 0.0
  %9274 = vmatmul.mubr.f32.gmra.mrb[0].mxu0 %v8981
  %v9275 = vpop.f32.mrb[0].mxu0
  %v9276 = vadd.f32 0.0, %v9275
  %v9277 = vpop.f32.mrb[0].mxu0
  %9278 = vmatprep.mubr.f32.mxu0 0.0
  %9279 = vmatmul.mubr.f32.gmra.mrb[0].mxu0 %v8984
  %v9280 = vpop.f32.mrb[0].mxu0
  %v9281 = vadd.f32 0.0, %v9280
  %v9282 = vpop.f32.mrb[0].mxu0
  %9283 = vmatprep.mubr.f32.mxu0 0.0
  %9284 = vmatmul.mubr.f32.gmra.mrb[0].mxu0 %v8987
  %v9285 = vpop.f32.mrb[0].mxu0
  %v9286 = vadd.f32 0.0, %v9285
  %v9287 = vpop.f32.mrb[0].mxu0
  %9288 = vmatprep.mubr.f32.mxu0 0.0
  %9289 = vmatmul.mubr.f32.gmra.mrb[0].mxu0 %v8990
  %v9290 = vpop.f32.mrb[0].mxu0
  %v9291 = vadd.f32 0.0, %v9290
  %v9292 = vpop.f32.mrb[0].mxu0
  %9293 = vmatprep.mubr.f32.mxu0 0.0
  %9294 = vmatmul.mubr.f32.gmra.mrb[0].mxu0 %v8993
  %v9295 = vpop.f32.mrb[0].mxu0
  %v9296 = vadd.f32 0.0, %v9295
  %v9297 = vpop.f32.mrb[0].mxu0
  %9298 = vmatprep.mubr.f32.mxu0 0.0
  %9299 = vmatmul.mubr.f32.gmra.mrb[0].mxu0 %v8996
  %v9300 = vpop.f32.mrb[0].mxu0
  %v9301 = vadd.f32 0.0, %v9300
  %v9302 = vpop.f32.mrb[0].mxu0
  %9303 = vmatprep.mubr.f32.mxu0 0.0
  %9304 = vmatmul.mubr.f32.gmra.mrb[0].mxu0 %v8999
  %v9305 = vpop.f32.mrb[0].mxu0
  %v9306 = vadd.f32 0.0, %v9305
  %v9307 = vpop.f32.mrb[0].mxu0
  %9308 = vmatprep.mubr.f32.mxu0 0.0
  %9309 = vmatmul.mubr.f32.gmra.mrb[0].mxu0 %v9002
  %v9310 = vpop.f32.mrb[0].mxu0
  %v9311 = vadd.f32 0.0, %v9310
  %v9312 = vpop.f32.mrb[0].mxu0
  %9313 = vmatprep.mubr.f32.mxu0 0.0
  %9314 = vmatmul.mubr.f32.gmra.mrb[0].mxu0 %v9005
  %v9315 = vpop.f32.mrb[0].mxu0
  %v9316 = vadd.f32 0.0, %v9315
  %v9317 = vpop.f32.mrb[0].mxu0
  %9318 = vmatprep.mubr.f32.mxu0 0.0
  %9319 = vmatmul.mubr.f32.gmra.mrb[0].mxu0 %v9008
  %v9320 = vpop.f32.mrb[0].mxu0
  %v9321 = vadd.f32 0.0, %v9320
  %v9322 = vpop.f32.mrb[0].mxu0
  %9323 = vmatprep.mubr.f32.mxu0 0.0
  %9324 = vmatmul.mubr.f32.gmra.mrb[0].mxu0 %v9011
  %v9325 = vpop.f32.mrb[0].mxu0
  %v9326 = vadd.f32 0.0, %v9325
  %v9327 = vpop.f32.mrb[0].mxu0
  %9328 = vmatprep.mubr.f32.mxu0 0.0
  %9329 = vmatmul.mubr.f32.gmra.mrb[0].mxu0 %v9014
  %v9330 = vpop.f32.mrb[0].mxu0
  %v9331 = vadd.f32 0.0, %v9330
  %v9332 = vpop.f32.mrb[0].mxu0
  %9333 = vmatprep.mubr.f32.mxu0 0.0
  %9334 = vmatmul.mubr.f32.gmra.mrb[0].mxu0 %v9017
  %v9335 = vpop.f32.mrb[0].mxu0
  %v9336 = vadd.f32 0.0, %v9335
  %v9337 = vpop.f32.mrb[0].mxu0
  %9338 = vmatprep.mubr.f32.mxu0 0.0
  %9339 = vmatmul.mubr.f32.gmra.mrb[0].mxu0 %v9020
  %v9340 = vpop.f32.mrb[0].mxu0
  %v9341 = vadd.f32 0.0, %v9340
  %v9342 = vpop.f32.mrb[0].mxu0
  %9343 = vmatprep.mubr.f32.mxu0 0.0
  %9344 = vmatmul.mubr.f32.gmra.mrb[0].mxu0 %v9023
  %v9345 = vpop.f32.mrb[0].mxu0
  %v9346 = vadd.f32 0.0, %v9345
  %v9347 = vpop.f32.mrb[0].mxu0
  %9348 = vmatprep.mubr.f32.mxu0 0.0
  %9349 = vmatmul.mubr.f32.gmra.mrb[0].mxu0 %v9026
  %v9350 = vpop.f32.mrb[0].mxu0
  %v9351 = vadd.f32 0.0, %v9350
  %v9352 = vpop.f32.mrb[0].mxu0
  %9353 = vmatprep.mubr.f32.mxu0 0.0
  %9354 = vmatmul.mubr.f32.gmra.mrb[0].mxu0 %v9029
  %v9355 = vpop.f32.mrb[0].mxu0
  %v9356 = vadd.f32 0.0, %v9355
  %v9357 = vpop.f32.mrb[0].mxu0
  %9358 = vmatprep.mubr.f32.mxu0 0.0
  %9359 = vmatmul.mubr.f32.gmra.mrb[0].mxu0 %v9032
  %v9360 = vpop.f32.mrb[0].mxu0
  %v9361 = vadd.f32 0.0, %v9360
  %v9362 = vpop.f32.mrb[0].mxu0
  %9363 = vmatprep.mubr.f32.mxu0 0.0
  %9364 = vmatmul.mubr.f32.gmra.mrb[0].mxu0 %v9035
  %v9365 = vpop.f32.mrb[0].mxu0
  %v9366 = vadd.f32 0.0, %v9365
  %v9367 = vpop.f32.mrb[0].mxu0
  %9368 = vmatprep.mubr.f32.mxu0 0.0
  %9369 = vmatmul.mubr.f32.gmra.mrb[0].mxu0 %v9038
  %v9370 = vpop.f32.mrb[0].mxu0
  %v9371 = vadd.f32 0.0, %v9370
  %v9372 = vpop.f32.mrb[0].mxu0
  %9373 = vmatprep.mubr.f32.mxu0 0.0
  %9374 = vmatmul.mubr.f32.gmra.mrb[0].mxu0 %v9041
  %v9375 = vpop.f32.mrb[0].mxu0
  %v9376 = vadd.f32 0.0, %v9375
  %v9377 = vpop.f32.mrb[0].mxu0
  %9378 = vmatprep.mubr.f32.mxu0 0.0
  %9379 = vmatmul.mubr.f32.gmra.mrb[0].mxu0 %v9044
  %v9380 = vpop.f32.mrb[0].mxu0
  %v9381 = vadd.f32 0.0, %v9380
  %v9382 = vpop.f32.mrb[0].mxu0
  %9383 = vmatprep.mubr.f32.mxu0 0.0
  %9384 = vmatmul.mubr.f32.gmra.mrb[0].mxu0 %v9047
  %v9385 = vpop.f32.mrb[0].mxu0
  %v9386 = vadd.f32 0.0, %v9385
  %v9387 = vpop.f32.mrb[0].mxu0
  %9388 = vmatprep.mubr.f32.mxu0 0.0
  %9389 = vmatmul.mubr.f32.gmra.mrb[0].mxu0 %v9050
  %v9390 = vpop.f32.mrb[0].mxu0
  %v9391 = vadd.f32 0.0, %v9390
  %v9392 = vpop.f32.mrb[0].mxu0
  %9393 = vmatprep.mubr.f32.mxu0 0.0
  %9394 = vmatmul.mubr.f32.gmra.mrb[0].mxu0 %v9053
  %v9395 = vpop.f32.mrb[0].mxu0
  %v9396 = vadd.f32 0.0, %v9395
  %v9397 = vpop.f32.mrb[0].mxu0
  %9398 = vmatprep.mubr.f32.mxu0 0.0
  %9399 = vmatmul.mubr.f32.gmra.mrb[0].mxu0 %v9056
  %v9400 = vpop.f32.mrb[0].mxu0
  %v9401 = vadd.f32 0.0, %v9400
  %v9402 = vpop.f32.mrb[0].mxu0
  %9403 = vmatprep.mubr.f32.mxu0 0.0
  %9404 = vmatmul.mubr.f32.gmra.mrb[0].mxu0 %v9059
  %v9405 = vpop.f32.mrb[0].mxu0
  %v9406 = vadd.f32 0.0, %v9405
  %v9407 = vpop.f32.mrb[0].mxu0
  %9408 = vmatprep.mubr.f32.mxu0 0.0
  %9409 = vmatmul.mubr.f32.gmra.mrb[0].mxu0 %v9062
  %v9410 = vpop.f32.mrb[0].mxu0
  %v9411 = vadd.f32 0.0, %v9410
  %v9412 = vpop.f32.mrb[0].mxu0
  %9413 = vmatprep.mubr.f32.mxu0 0.0
  %9414 = vmatmul.mubr.f32.gmra.mrb[0].mxu0 %v9065
  %v9415 = vpop.f32.mrb[0].mxu0
  %v9416 = vadd.f32 0.0, %v9415
  %v9417 = vpop.f32.mrb[0].mxu0
  %9418 = vmatprep.mubr.f32.mxu0 0.0
  %9419 = vmatmul.mubr.f32.gmra.mrb[0].mxu0 %v9068
  %v9420 = vpop.f32.mrb[0].mxu0
  %v9421 = vadd.f32 0.0, %v9420
  %v9422 = vpop.f32.mrb[0].mxu0
  %9423 = vmatprep.mubr.f32.mxu0 0.0
  %9424 = vmatmul.mubr.f32.gmra.mrb[0].mxu0 %v9071
  %v9425 = vpop.f32.mrb[0].mxu0
  %v9426 = vadd.f32 0.0, %v9425
  %v9427 = vpop.f32.mrb[0].mxu0
  %9428 = vmatprep.mubr.f32.mxu0 0.0
  %9429 = vmatmul.mubr.f32.gmra.mrb[0].mxu0 %v9074
  %v9430 = vpop.f32.mrb[0].mxu0
  %v9431 = vadd.f32 0.0, %v9430
  %v9432 = vpop.f32.mrb[0].mxu0
  %9433 = vmatprep.mubr.f32.mxu0 0.0
  %9434 = vmatmul.mubr.f32.gmra.mrb[0].mxu0 %v9077
  %v9435 = vpop.f32.mrb[0].mxu0
  %v9436 = vadd.f32 0.0, %v9435
  %v9437 = vpop.f32.mrb[0].mxu0
  %9438 = vmatprep.mubr.f32.mxu0 0.0
  %9439 = vmatmul.mubr.f32.gmra.mrb[0].mxu0 %v9080
  %v9440 = vpop.f32.mrb[0].mxu0
  %v9441 = vadd.f32 0.0, %v9440
  %v9442 = vpop.f32.mrb[0].mxu0
  %9443 = vmatprep.mubr.f32.mxu0 0.0
  %9444 = vmatmul.mubr.f32.gmra.mrb[0].mxu0 %v9083
  %v9445 = vpop.f32.mrb[0].mxu0
  %v9446 = vadd.f32 0.0, %v9445
  %v9447 = vpop.f32.mrb[0].mxu0
  %9448 = vmatprep.mubr.f32.mxu0 0.0
  %9449 = vmatmul.mubr.f32.gmra.mrb[0].mxu0 %v9086
  %v9450 = vpop.f32.mrb[0].mxu0
  %v9451 = vadd.f32 0.0, %v9450
  %v9452 = vpop.f32.mrb[0].mxu0
  %9453 = vmatprep.mubr.f32.mxu0 0.0
  %9454 = vmatmul.mubr.f32.gmra.mrb[0].mxu0 %v9089
  %v9455 = vpop.f32.mrb[0].mxu0
  %v9456 = vadd.f32 0.0, %v9455
  %v9457 = vpop.f32.mrb[0].mxu0
  %9458 = vmatprep.mubr.f32.mxu0 0.0
  %9459 = vmatmul.mubr.f32.gmra.mrb[0].mxu0 %v9092
  %v9460 = vpop.f32.mrb[0].mxu0
  %v9461 = vadd.f32 0.0, %v9460
  %v9462 = vpop.f32.mrb[0].mxu0
  %9463 = vmatprep.mubr.f32.mxu0 0.0
  %9464 = vmatmul.mubr.f32.gmra.mrb[0].mxu0 %v9095
  %v9465 = vpop.f32.mrb[0].mxu0
  %v9466 = vadd.f32 0.0, %v9465
  %v9467 = vpop.f32.mrb[0].mxu0
  %9468 = vmatprep.mubr.f32.mxu0 0.0
  %9469 = vmatmul.mubr.f32.gmra.mrb[0].mxu0 %v9098
  %v9470 = vpop.f32.mrb[0].mxu0
  %v9471 = vadd.f32 0.0, %v9470
  %v9472 = vpop.f32.mrb[0].mxu0
  %9473 = vmatprep.mubr.f32.mxu0 0.0
  %9474 = vmatmul.mubr.f32.gmra.mrb[0].mxu0 %v9101
  %v9475 = vpop.f32.mrb[0].mxu0
  %v9476 = vadd.f32 0.0, %v9475
  %v9477 = vpop.f32.mrb[0].mxu0
  %9478 = vmatprep.mubr.f32.mxu0 0.0
  %9479 = vmatmul.mubr.f32.gmra.mrb[0].mxu0 %v9104
  %v9480 = vpop.f32.mrb[0].mxu0
  %v9481 = vadd.f32 0.0, %v9480
  %v9482 = vpop.f32.mrb[0].mxu0
  %9483 = vmatprep.mubr.f32.mxu0 0.0
  %9484 = vmatmul.mubr.f32.gmra.mrb[0].mxu0 %v9107
  %v9485 = vpop.f32.mrb[0].mxu0
  %v9486 = vadd.f32 0.0, %v9485
  %v9487 = vpop.f32.mrb[0].mxu0
  %9488 = vmatprep.mubr.f32.mxu0 0.0
  %9489 = vmatmul.mubr.f32.gmra.mrb[0].mxu0 %v9110
  %v9490 = vpop.f32.mrb[0].mxu0
  %v9491 = vadd.f32 0.0, %v9490
  %v9492 = vpop.f32.mrb[0].mxu0
  %9493 = vmatprep.mubr.f32.mxu0 0.0
  %9494 = vmatmul.mubr.f32.gmra.mrb[0].mxu0 %v9113
  %v9495 = vpop.f32.mrb[0].mxu0
  %v9496 = vadd.f32 0.0, %v9495
  %v9497 = vpop.f32.mrb[0].mxu0
  %9498 = vmatprep.mubr.f32.mxu0 0.0
  %9499 = vmatmul.mubr.f32.gmra.mrb[0].mxu0 %v9116
  %v9500 = vpop.f32.mrb[0].mxu0
  %v9501 = vadd.f32 0.0, %v9500
  %v9502 = vpop.f32.mrb[0].mxu0
  %9503 = vmatprep.mubr.f32.mxu0 0.0
  %9504 = vmatmul.mubr.f32.gmra.mrb[0].mxu0 %v9119
  %v9505 = vpop.f32.mrb[0].mxu0
  %v9506 = vadd.f32 0.0, %v9505
  %v9507 = vpop.f32.mrb[0].mxu0
  %9508 = vdwg.mxu0
  %v9509 = vadd.f32 %v8799, %v9191
  %v9510 = vadd.f32 %v8800, %v9196
  %v9511 = vadd.f32 %v8801, %v9201
  %v9512 = vadd.f32 %v8802, %v9206
  %v9513 = vadd.f32 %v8803, %v9211
  %v9514 = vadd.f32 %v8804, %v9216
  %v9515 = vadd.f32 %v8805, %v9221
  %v9516 = vadd.f32 %v8806, %v9226
  %v9517 = vadd.f32 %v8807, %v9231
  %v9518 = vadd.f32 %v8808, %v9236
  %v9519 = vadd.f32 %v8809, %v9241
  %v9520 = vadd.f32 %v8810, %v9246
  %v9521 = vadd.f32 %v8811, %v9251
  %v9522 = vadd.f32 %v8812, %v9256
  %v9523 = vadd.f32 %v8813, %v9261
  %v9524 = vadd.f32 %v8814, %v9266
  %v9525 = vadd.f32 %v8815, %v9271
  %v9526 = vadd.f32 %v8816, %v9276
  %v9527 = vadd.f32 %v8817, %v9281
  %v9528 = vadd.f32 %v8818, %v9286
  %v9529 = vadd.f32 %v8819, %v9291
  %v9530 = vadd.f32 %v8820, %v9296
  %v9531 = vadd.f32 %v8821, %v9301
  %v9532 = vadd.f32 %v8822, %v9306
  %v9533 = vadd.f32 %v8823, %v9311
  %v9534 = vadd.f32 %v8824, %v9316
  %v9535 = vadd.f32 %v8825, %v9321
  %v9536 = vadd.f32 %v8826, %v9326
  %v9537 = vadd.f32 %v8827, %v9331
  %v9538 = vadd.f32 %v8828, %v9336
  %v9539 = vadd.f32 %v8829, %v9341
  %v9540 = vadd.f32 %v8830, %v9346
  %v9541 = vadd.f32 %v8831, %v9351
  %v9542 = vadd.f32 %v8832, %v9356
  %v9543 = vadd.f32 %v8833, %v9361
  %v9544 = vadd.f32 %v8834, %v9366
  %v9545 = vadd.f32 %v8835, %v9371
  %v9546 = vadd.f32 %v8836, %v9376
  %v9547 = vadd.f32 %v8837, %v9381
  %v9548 = vadd.f32 %v8838, %v9386
  %v9549 = vadd.f32 %v8839, %v9391
  %v9550 = vadd.f32 %v8840, %v9396
  %v9551 = vadd.f32 %v8841, %v9401
  %v9552 = vadd.f32 %v8842, %v9406
  %v9553 = vadd.f32 %v8843, %v9411
  %v9554 = vadd.f32 %v8844, %v9416
  %v9555 = vadd.f32 %v8845, %v9421
  %v9556 = vadd.f32 %v8846, %v9426
  %v9557 = vadd.f32 %v8847, %v9431
  %v9558 = vadd.f32 %v8848, %v9436
  %v9559 = vadd.f32 %v8849, %v9441
  %v9560 = vadd.f32 %v8850, %v9446
  %v9561 = vadd.f32 %v8851, %v9451
  %v9562 = vadd.f32 %v8852, %v9456
  %v9563 = vadd.f32 %v8853, %v9461
  %v9564 = vadd.f32 %v8854, %v9466
  %v9565 = vadd.f32 %v8855, %v9471
  %v9566 = vadd.f32 %v8856, %v9476
  %v9567 = vadd.f32 %v8857, %v9481
  %v9568 = vadd.f32 %v8858, %v9486
  %v9569 = vadd.f32 %v8859, %v9491
  %v9570 = vadd.f32 %v8860, %v9496
  %v9571 = vadd.f32 %v8861, %v9501
  %v9572 = vadd.f32 %v8862, %v9506
  %v9573 = vld [vmem:[%s6797 + $0x1] sm:$0xff]
  %v9574 = vld [vmem:[%s6797 + $0x9] sm:$0xff]
  %v9575 = vld [vmem:[%s6797 + $0x19] sm:$0xff]
  %v9576 = vld [vmem:[%s6797 + $0x21] sm:$0xff]
  %v9577 = vld [vmem:[%s6797 + $0x31] sm:$0xff]
  %v9578 = vld [vmem:[%s6797 + $0x39] sm:$0xff]
  %v9579 = vld [vmem:[%s6797 + $0x49] sm:$0xff]
  %v9580 = vld [vmem:[%s6797 + $0x51] sm:$0xff]
  %v9581 = vld [vmem:[%s6797 + $0x61] sm:$0xff]
  %v9582 = vld [vmem:[%s6797 + $0x69] sm:$0xff]
  %v9583 = vld [vmem:[%s6797 + $0x79] sm:$0xff]
  %v9584 = vld [vmem:[%s6797 + $0x81] sm:$0xff]
  %v9585 = vld [vmem:[%s6797 + $0x91] sm:$0xff]
  %v9586 = vld [vmem:[%s6797 + $0x99] sm:$0xff]
  %v9587 = vld [vmem:[%s6797 + $0xa9] sm:$0xff]
  %v9588 = vld [vmem:[%s6797 + $0xb1] sm:$0xff]
  %v9589 = vld [vmem:[%s6797 + $0xc1] sm:$0xff]
  %v9590 = vld [vmem:[%s6797 + $0xc9] sm:$0xff]
  %v9591 = vld [vmem:[%s6797 + $0xd9] sm:$0xff]
  %v9592 = vld [vmem:[%s6797 + $0xe1] sm:$0xff]
  %v9593 = vld [vmem:[%s6797 + $0xf1] sm:$0xff]
  %v9594 = vld [vmem:[%s6797 + $0xf9] sm:$0xff]
  %v9595 = vld [vmem:[%s6797 + $0x109] sm:$0xff]
  %v9596 = vld [vmem:[%s6797 + $0x111] sm:$0xff]
  %v9597 = vld [vmem:[%s6797 + $0x121] sm:$0xff]
  %v9598 = vld [vmem:[%s6797 + $0x129] sm:$0xff]
  %v9599 = vld [vmem:[%s6797 + $0x139] sm:$0xff]
  %v9600 = vld [vmem:[%s6797 + $0x141] sm:$0xff]
  %v9601 = vld [vmem:[%s6797 + $0x151] sm:$0xff]
  %v9602 = vld [vmem:[%s6797 + $0x159] sm:$0xff]
  %v9603 = vld [vmem:[%s6797 + $0x169] sm:$0xff]
  %v9604 = vld [vmem:[%s6797 + $0x171] sm:$0xff]
  %v9605 = vld [vmem:[%s6797 + $0x1b1] sm:$0xff]
  %v9606 = vld [vmem:[%s6797 + $0x1b9] sm:$0xff]
  %v9607 = vld [vmem:[%s6797 + $0x1c9] sm:$0xff]
  %v9608 = vld [vmem:[%s6797 + $0x1d1] sm:$0xff]
  %v9609 = vld [vmem:[%s6797 + $0x1e1] sm:$0xff]
  %v9610 = vld [vmem:[%s6797 + $0x1e9] sm:$0xff]
  %v9611 = vld [vmem:[%s6797 + $0x1f9] sm:$0xff]
  %v9612 = vld [vmem:[%s6797 + $0x201] sm:$0xff]
  %v9613 = vld [vmem:[%s6797 + $0x211] sm:$0xff]
  %v9614 = vld [vmem:[%s6797 + $0x219] sm:$0xff]
  %v9615 = vld [vmem:[%s6797 + $0x229] sm:$0xff]
  %v9616 = vld [vmem:[%s6797 + $0x231] sm:$0xff]
  %v9617 = vld [vmem:[%s6797 + $0x241] sm:$0xff]
  %v9618 = vld [vmem:[%s6797 + $0x249] sm:$0xff]
  %v9619 = vld [vmem:[%s6797 + $0x259] sm:$0xff]
  %v9620 = vld [vmem:[%s6797 + $0x261] sm:$0xff]
  %v9621 = vld [vmem:[%s6797 + $0x271] sm:$0xff]
  %v9622 = vld [vmem:[%s6797 + $0x279] sm:$0xff]
  %v9623 = vld [vmem:[%s6797 + $0x289] sm:$0xff]
  %v9624 = vld [vmem:[%s6797 + $0x291] sm:$0xff]
  %v9625 = vld [vmem:[%s6797 + $0x2a1] sm:$0xff]
  %v9626 = vld [vmem:[%s6797 + $0x2a9] sm:$0xff]
  %v9627 = vld [vmem:[%s6797 + $0x2b9] sm:$0xff]
  %v9628 = vld [vmem:[%s6797 + $0x2c1] sm:$0xff]
  %v9629 = vld [vmem:[%s6797 + $0x2d1] sm:$0xff]
  %v9630 = vld [vmem:[%s6797 + $0x2d9] sm:$0xff]
  %v9631 = vld [vmem:[%s6797 + $0x2e9] sm:$0xff]
  %v9632 = vld [vmem:[%s6797 + $0x2f1] sm:$0xff]
  %v9633 = vld [vmem:[%s6797 + $0x301] sm:$0xff]
  %v9634 = vld [vmem:[%s6797 + $0x309] sm:$0xff]
  %v9635 = vld [vmem:[%s6797 + $0x319] sm:$0xff]
  %v9636 = vld [vmem:[%s6797 + $0x321] sm:$0xff]
  %s9637 = scalar_lea.vmem %s4, 16
  %v9638 = vld [vmem:[%s9637] sm:$0xf]
  %v9640 = vsel %vm26, %v9573, 0
  %v9643 = vsel %vm26, %v9574, 0
  %v9646 = vsel %vm26, %v9575, 0
  %v9649 = vsel %vm26, %v9576, 0
  %v9652 = vsel %vm26, %v9577, 0
  %v9655 = vsel %vm26, %v9578, 0
  %v9658 = vsel %vm26, %v9579, 0
  %v9661 = vsel %vm26, %v9580, 0
  %v9664 = vsel %vm26, %v9581, 0
  %v9667 = vsel %vm26, %v9582, 0
  %v9670 = vsel %vm26, %v9583, 0
  %v9673 = vsel %vm26, %v9584, 0
  %v9676 = vsel %vm26, %v9585, 0
  %v9679 = vsel %vm26, %v9586, 0
  %v9682 = vsel %vm26, %v9587, 0
  %v9685 = vsel %vm26, %v9588, 0
  %v9688 = vsel %vm26, %v9589, 0
  %v9691 = vsel %vm26, %v9590, 0
  %v9694 = vsel %vm26, %v9591, 0
  %v9697 = vsel %vm26, %v9592, 0
  %v9700 = vsel %vm26, %v9593, 0
  %v9703 = vsel %vm26, %v9594, 0
  %v9706 = vsel %vm26, %v9595, 0
  %v9709 = vsel %vm26, %v9596, 0
  %v9712 = vsel %vm26, %v9597, 0
  %v9715 = vsel %vm26, %v9598, 0
  %v9718 = vsel %vm26, %v9599, 0
  %v9721 = vsel %vm26, %v9600, 0
  %v9724 = vsel %vm26, %v9601, 0
  %v9727 = vsel %vm26, %v9602, 0
  %v9730 = vsel %vm26, %v9603, 0
  %v9733 = vsel %vm26, %v9604, 0
  %v9736 = vsel %vm26, %v9605, 0
  %v9739 = vsel %vm26, %v9606, 0
  %v9742 = vsel %vm26, %v9607, 0
  %v9745 = vsel %vm26, %v9608, 0
  %v9748 = vsel %vm26, %v9609, 0
  %v9751 = vsel %vm26, %v9610, 0
  %v9754 = vsel %vm26, %v9611, 0
  %v9757 = vsel %vm26, %v9612, 0
  %v9760 = vsel %vm26, %v9613, 0
  %v9763 = vsel %vm26, %v9614, 0
  %v9766 = vsel %vm26, %v9615, 0
  %v9769 = vsel %vm26, %v9616, 0
  %v9772 = vsel %vm26, %v9617, 0
  %v9775 = vsel %vm26, %v9618, 0
  %v9778 = vsel %vm26, %v9619, 0
  %v9781 = vsel %vm26, %v9620, 0
  %v9784 = vsel %vm26, %v9621, 0
  %v9787 = vsel %vm26, %v9622, 0
  %v9790 = vsel %vm26, %v9623, 0
  %v9793 = vsel %vm26, %v9624, 0
  %v9796 = vsel %vm26, %v9625, 0
  %v9799 = vsel %vm26, %v9626, 0
  %v9802 = vsel %vm26, %v9627, 0
  %v9805 = vsel %vm26, %v9628, 0
  %v9808 = vsel %vm26, %v9629, 0
  %v9811 = vsel %vm26, %v9630, 0
  %v9814 = vsel %vm26, %v9631, 0
  %v9817 = vsel %vm26, %v9632, 0
  %v9820 = vsel %vm26, %v9633, 0
  %v9823 = vsel %vm26, %v9634, 0
  %v9826 = vsel %vm26, %v9635, 0
  %v9829 = vsel %vm26, %v9636, 0
  %v9832 = vsel %vm651, %v9638, 0
  %9834 = vmatprep.subr.mxu0 0.0
  %9835 = vmatpush1.msra.mxu0 %v9832
  %9836 = vmatprep.subr.mxu0 0.0
  %9837 = vmatpush1.msra.mxu0 0.0
  %9838 = vmatprep.subr.mxu0 0.0
  %9839 = vmatpush1.msra.mxu0 0.0
  %9840 = vmatprep.subr.mxu0 0.0
  %9841 = vmatpush1.msra.mxu0 0.0
  %9842 = vmatprep.subr.mxu0 0.0
  %9843 = vmatpush1.msra.mxu0 0.0
  %9844 = vmatprep.subr.mxu0 0.0
  %9845 = vmatpush1.msra.mxu0 0.0
  %9846 = vmatprep.subr.mxu0 0.0
  %9847 = vmatpush1.msra.mxu0 0.0
  %9848 = vmatprep.subr.mxu0 0.0
  %9849 = vmatpush1.msra.mxu0 0.0
  %9850 = vmatprep.subr.mxu0 0.0
  %9851 = vmatpush1.msra.mxu0 0.0
  %9852 = vmatprep.subr.mxu0 0.0
  %9853 = vmatpush1.msra.mxu0 0.0
  %9854 = vmatprep.subr.mxu0 0.0
  %9855 = vmatpush1.msra.mxu0 0.0
  %9856 = vmatprep.subr.mxu0 0.0
  %9857 = vmatpush1.msra.mxu0 0.0
  %9858 = vmatprep.subr.mxu0 0.0
  %9859 = vmatpush1.msra.mxu0 0.0
  %9860 = vmatprep.subr.mxu0 0.0
  %9861 = vmatpush1.msra.mxu0 0.0
  %9862 = vmatprep.subr.mxu0 0.0
  %9863 = vmatpush1.msra.mxu0 0.0
  %9864 = vmatprep.subr.mxu0 0.0
  %9865 = vmatpush1.msra.mxu0 0.0
  %9866 = vmatprep.subr.mxu0 0.0
  %9867 = vmatpush1.msra.mxu0 0.0
  %9868 = vmatprep.subr.mxu0 0.0
  %9869 = vmatpush1.msra.mxu0 0.0
  %9870 = vmatprep.subr.mxu0 0.0
  %9871 = vmatpush1.msra.mxu0 0.0
  %9872 = vmatprep.subr.mxu0 0.0
  %9873 = vmatpush1.msra.mxu0 0.0
  %9874 = vmatprep.subr.mxu0 0.0
  %9875 = vmatpush1.msra.mxu0 0.0
  %9876 = vmatprep.subr.mxu0 0.0
  %9877 = vmatpush1.msra.mxu0 0.0
  %9878 = vmatprep.subr.mxu0 0.0
  %9879 = vmatpush1.msra.mxu0 0.0
  %9880 = vmatprep.subr.mxu0 0.0
  %9881 = vmatpush1.msra.mxu0 0.0
  %9882 = vmatprep.subr.mxu0 0.0
  %9883 = vmatpush1.msra.mxu0 0.0
  %9884 = vmatprep.subr.mxu0 0.0
  %9885 = vmatpush1.msra.mxu0 0.0
  %9886 = vmatprep.subr.mxu0 0.0
  %9887 = vmatpush1.msra.mxu0 0.0
  %9888 = vmatprep.subr.mxu0 0.0
  %9889 = vmatpush1.msra.mxu0 0.0
  %9890 = vmatprep.subr.mxu0 0.0
  %9891 = vmatpush1.msra.mxu0 0.0
  %9892 = vmatprep.subr.mxu0 0.0
  %9893 = vmatpush1.msra.mxu0 0.0
  %9894 = vmatprep.subr.mxu0 0.0
  %9895 = vmatpush1.msra.mxu0 0.0
  %9896 = vmatprep.subr.mxu0 0.0
  %9897 = vmatpush1.msra.mxu0 0.0
  %9898 = vmatprep.mubr.f32.mxu0 0.0
  %9899 = vmatmul.mubr.f32.gmra.mrb[0].mxu0 %v9640
  %v9900 = vpop.f32.mrb[0].mxu0
  %v9901 = vadd.f32 0.0, %v9900
  %v9902 = vpop.f32.mrb[0].mxu0
  %9903 = vmatprep.mubr.f32.mxu0 0.0
  %9904 = vmatmul.mubr.f32.gmra.mrb[0].mxu0 %v9643
  %v9905 = vpop.f32.mrb[0].mxu0
  %v9906 = vadd.f32 0.0, %v9905
  %v9907 = vpop.f32.mrb[0].mxu0
  %9908 = vmatprep.mubr.f32.mxu0 0.0
  %9909 = vmatmul.mubr.f32.gmra.mrb[0].mxu0 %v9646
  %v9910 = vpop.f32.mrb[0].mxu0
  %v9911 = vadd.f32 0.0, %v9910
  %v9912 = vpop.f32.mrb[0].mxu0
  %9913 = vmatprep.mubr.f32.mxu0 0.0
  %9914 = vmatmul.mubr.f32.gmra.mrb[0].mxu0 %v9649
  %v9915 = vpop.f32.mrb[0].mxu0
  %v9916 = vadd.f32 0.0, %v9915
  %v9917 = vpop.f32.mrb[0].mxu0
  %9918 = vmatprep.mubr.f32.mxu0 0.0
  %9919 = vmatmul.mubr.f32.gmra.mrb[0].mxu0 %v9652
  %v9920 = vpop.f32.mrb[0].mxu0
  %v9921 = vadd.f32 0.0, %v9920
  %v9922 = vpop.f32.mrb[0].mxu0
  %9923 = vmatprep.mubr.f32.mxu0 0.0
  %9924 = vmatmul.mubr.f32.gmra.mrb[0].mxu0 %v9655
  %v9925 = vpop.f32.mrb[0].mxu0
  %v9926 = vadd.f32 0.0, %v9925
  %v9927 = vpop.f32.mrb[0].mxu0
  %9928 = vmatprep.mubr.f32.mxu0 0.0
  %9929 = vmatmul.mubr.f32.gmra.mrb[0].mxu0 %v9658
  %v9930 = vpop.f32.mrb[0].mxu0
  %v9931 = vadd.f32 0.0, %v9930
  %v9932 = vpop.f32.mrb[0].mxu0
  %9933 = vmatprep.mubr.f32.mxu0 0.0
  %9934 = vmatmul.mubr.f32.gmra.mrb[0].mxu0 %v9661
  %v9935 = vpop.f32.mrb[0].mxu0
  %v9936 = vadd.f32 0.0, %v9935
  %v9937 = vpop.f32.mrb[0].mxu0
  %9938 = vmatprep.mubr.f32.mxu0 0.0
  %9939 = vmatmul.mubr.f32.gmra.mrb[0].mxu0 %v9664
  %v9940 = vpop.f32.mrb[0].mxu0
  %v9941 = vadd.f32 0.0, %v9940
  %v9942 = vpop.f32.mrb[0].mxu0
  %9943 = vmatprep.mubr.f32.mxu0 0.0
  %9944 = vmatmul.mubr.f32.gmra.mrb[0].mxu0 %v9667
  %v9945 = vpop.f32.mrb[0].mxu0
  %v9946 = vadd.f32 0.0, %v9945
  %v9947 = vpop.f32.mrb[0].mxu0
  %9948 = vmatprep.mubr.f32.mxu0 0.0
  %9949 = vmatmul.mubr.f32.gmra.mrb[0].mxu0 %v9670
  %v9950 = vpop.f32.mrb[0].mxu0
  %v9951 = vadd.f32 0.0, %v9950
  %v9952 = vpop.f32.mrb[0].mxu0
  %9953 = vmatprep.mubr.f32.mxu0 0.0
  %9954 = vmatmul.mubr.f32.gmra.mrb[0].mxu0 %v9673
  %v9955 = vpop.f32.mrb[0].mxu0
  %v9956 = vadd.f32 0.0, %v9955
  %v9957 = vpop.f32.mrb[0].mxu0
  %9958 = vmatprep.mubr.f32.mxu0 0.0
  %9959 = vmatmul.mubr.f32.gmra.mrb[0].mxu0 %v9676
  %v9960 = vpop.f32.mrb[0].mxu0
  %v9961 = vadd.f32 0.0, %v9960
  %v9962 = vpop.f32.mrb[0].mxu0
  %9963 = vmatprep.mubr.f32.mxu0 0.0
  %9964 = vmatmul.mubr.f32.gmra.mrb[0].mxu0 %v9679
  %v9965 = vpop.f32.mrb[0].mxu0
  %v9966 = vadd.f32 0.0, %v9965
  %v9967 = vpop.f32.mrb[0].mxu0
  %9968 = vmatprep.mubr.f32.mxu0 0.0
  %9969 = vmatmul.mubr.f32.gmra.mrb[0].mxu0 %v9682
  %v9970 = vpop.f32.mrb[0].mxu0
  %v9971 = vadd.f32 0.0, %v9970
  %v9972 = vpop.f32.mrb[0].mxu0
  %9973 = vmatprep.mubr.f32.mxu0 0.0
  %9974 = vmatmul.mubr.f32.gmra.mrb[0].mxu0 %v9685
  %v9975 = vpop.f32.mrb[0].mxu0
  %v9976 = vadd.f32 0.0, %v9975
  %v9977 = vpop.f32.mrb[0].mxu0
  %9978 = vmatprep.mubr.f32.mxu0 0.0
  %9979 = vmatmul.mubr.f32.gmra.mrb[0].mxu0 %v9688
  %v9980 = vpop.f32.mrb[0].mxu0
  %v9981 = vadd.f32 0.0, %v9980
  %v9982 = vpop.f32.mrb[0].mxu0
  %9983 = vmatprep.mubr.f32.mxu0 0.0
  %9984 = vmatmul.mubr.f32.gmra.mrb[0].mxu0 %v9691
  %v9985 = vpop.f32.mrb[0].mxu0
  %v9986 = vadd.f32 0.0, %v9985
  %v9987 = vpop.f32.mrb[0].mxu0
  %9988 = vmatprep.mubr.f32.mxu0 0.0
  %9989 = vmatmul.mubr.f32.gmra.mrb[0].mxu0 %v9694
  %v9990 = vpop.f32.mrb[0].mxu0
  %v9991 = vadd.f32 0.0, %v9990
  %v9992 = vpop.f32.mrb[0].mxu0
  %9993 = vmatprep.mubr.f32.mxu0 0.0
  %9994 = vmatmul.mubr.f32.gmra.mrb[0].mxu0 %v9697
  %v9995 = vpop.f32.mrb[0].mxu0
  %v9996 = vadd.f32 0.0, %v9995
  %v9997 = vpop.f32.mrb[0].mxu0
  %9998 = vmatprep.mubr.f32.mxu0 0.0
  %9999 = vmatmul.mubr.f32.gmra.mrb[0].mxu0 %v9700
  %v10000 = vpop.f32.mrb[0].mxu0
  %v10001 = vadd.f32 0.0, %v10000
  %v10002 = vpop.f32.mrb[0].mxu0
  %10003 = vmatprep.mubr.f32.mxu0 0.0
  %10004 = vmatmul.mubr.f32.gmra.mrb[0].mxu0 %v9703
  %v10005 = vpop.f32.mrb[0].mxu0
  %v10006 = vadd.f32 0.0, %v10005
  %v10007 = vpop.f32.mrb[0].mxu0
  %10008 = vmatprep.mubr.f32.mxu0 0.0
  %10009 = vmatmul.mubr.f32.gmra.mrb[0].mxu0 %v9706
  %v10010 = vpop.f32.mrb[0].mxu0
  %v10011 = vadd.f32 0.0, %v10010
  %v10012 = vpop.f32.mrb[0].mxu0
  %10013 = vmatprep.mubr.f32.mxu0 0.0
  %10014 = vmatmul.mubr.f32.gmra.mrb[0].mxu0 %v9709
  %v10015 = vpop.f32.mrb[0].mxu0
  %v10016 = vadd.f32 0.0, %v10015
  %v10017 = vpop.f32.mrb[0].mxu0
  %10018 = vmatprep.mubr.f32.mxu0 0.0
  %10019 = vmatmul.mubr.f32.gmra.mrb[0].mxu0 %v9712
  %v10020 = vpop.f32.mrb[0].mxu0
  %v10021 = vadd.f32 0.0, %v10020
  %v10022 = vpop.f32.mrb[0].mxu0
  %10023 = vmatprep.mubr.f32.mxu0 0.0
  %10024 = vmatmul.mubr.f32.gmra.mrb[0].mxu0 %v9715
  %v10025 = vpop.f32.mrb[0].mxu0
  %v10026 = vadd.f32 0.0, %v10025
  %v10027 = vpop.f32.mrb[0].mxu0
  %10028 = vmatprep.mubr.f32.mxu0 0.0
  %10029 = vmatmul.mubr.f32.gmra.mrb[0].mxu0 %v9718
  %v10030 = vpop.f32.mrb[0].mxu0
  %v10031 = vadd.f32 0.0, %v10030
  %v10032 = vpop.f32.mrb[0].mxu0
  %10033 = vmatprep.mubr.f32.mxu0 0.0
  %10034 = vmatmul.mubr.f32.gmra.mrb[0].mxu0 %v9721
  %v10035 = vpop.f32.mrb[0].mxu0
  %v10036 = vadd.f32 0.0, %v10035
  %v10037 = vpop.f32.mrb[0].mxu0
  %10038 = vmatprep.mubr.f32.mxu0 0.0
  %10039 = vmatmul.mubr.f32.gmra.mrb[0].mxu0 %v9724
  %v10040 = vpop.f32.mrb[0].mxu0
  %v10041 = vadd.f32 0.0, %v10040
  %v10042 = vpop.f32.mrb[0].mxu0
  %10043 = vmatprep.mubr.f32.mxu0 0.0
  %10044 = vmatmul.mubr.f32.gmra.mrb[0].mxu0 %v9727
  %v10045 = vpop.f32.mrb[0].mxu0
  %v10046 = vadd.f32 0.0, %v10045
  %v10047 = vpop.f32.mrb[0].mxu0
  %10048 = vmatprep.mubr.f32.mxu0 0.0
  %10049 = vmatmul.mubr.f32.gmra.mrb[0].mxu0 %v9730
  %v10050 = vpop.f32.mrb[0].mxu0
  %v10051 = vadd.f32 0.0, %v10050
  %v10052 = vpop.f32.mrb[0].mxu0
  %10053 = vmatprep.mubr.f32.mxu0 0.0
  %10054 = vmatmul.mubr.f32.gmra.mrb[0].mxu0 %v9733
  %v10055 = vpop.f32.mrb[0].mxu0
  %v10056 = vadd.f32 0.0, %v10055
  %v10057 = vpop.f32.mrb[0].mxu0
  %10058 = vmatprep.mubr.f32.mxu0 0.0
  %10059 = vmatmul.mubr.f32.gmra.mrb[0].mxu0 %v9736
  %v10060 = vpop.f32.mrb[0].mxu0
  %v10061 = vadd.f32 0.0, %v10060
  %v10062 = vpop.f32.mrb[0].mxu0
  %10063 = vmatprep.mubr.f32.mxu0 0.0
  %10064 = vmatmul.mubr.f32.gmra.mrb[0].mxu0 %v9739
  %v10065 = vpop.f32.mrb[0].mxu0
  %v10066 = vadd.f32 0.0, %v10065
  %v10067 = vpop.f32.mrb[0].mxu0
  %10068 = vmatprep.mubr.f32.mxu0 0.0
  %10069 = vmatmul.mubr.f32.gmra.mrb[0].mxu0 %v9742
  %v10070 = vpop.f32.mrb[0].mxu0
  %v10071 = vadd.f32 0.0, %v10070
  %v10072 = vpop.f32.mrb[0].mxu0
  %10073 = vmatprep.mubr.f32.mxu0 0.0
  %10074 = vmatmul.mubr.f32.gmra.mrb[0].mxu0 %v9745
  %v10075 = vpop.f32.mrb[0].mxu0
  %v10076 = vadd.f32 0.0, %v10075
  %v10077 = vpop.f32.mrb[0].mxu0
  %10078 = vmatprep.mubr.f32.mxu0 0.0
  %10079 = vmatmul.mubr.f32.gmra.mrb[0].mxu0 %v9748
  %v10080 = vpop.f32.mrb[0].mxu0
  %v10081 = vadd.f32 0.0, %v10080
  %v10082 = vpop.f32.mrb[0].mxu0
  %10083 = vmatprep.mubr.f32.mxu0 0.0
  %10084 = vmatmul.mubr.f32.gmra.mrb[0].mxu0 %v9751
  %v10085 = vpop.f32.mrb[0].mxu0
  %v10086 = vadd.f32 0.0, %v10085
  %v10087 = vpop.f32.mrb[0].mxu0
  %10088 = vmatprep.mubr.f32.mxu0 0.0
  %10089 = vmatmul.mubr.f32.gmra.mrb[0].mxu0 %v9754
  %v10090 = vpop.f32.mrb[0].mxu0
  %v10091 = vadd.f32 0.0, %v10090
  %v10092 = vpop.f32.mrb[0].mxu0
  %10093 = vmatprep.mubr.f32.mxu0 0.0
  %10094 = vmatmul.mubr.f32.gmra.mrb[0].mxu0 %v9757
  %v10095 = vpop.f32.mrb[0].mxu0
  %v10096 = vadd.f32 0.0, %v10095
  %v10097 = vpop.f32.mrb[0].mxu0
  %10098 = vmatprep.mubr.f32.mxu0 0.0
  %10099 = vmatmul.mubr.f32.gmra.mrb[0].mxu0 %v9760
  %v10100 = vpop.f32.mrb[0].mxu0
  %v10101 = vadd.f32 0.0, %v10100
  %v10102 = vpop.f32.mrb[0].mxu0
  %10103 = vmatprep.mubr.f32.mxu0 0.0
  %10104 = vmatmul.mubr.f32.gmra.mrb[0].mxu0 %v9763
  %v10105 = vpop.f32.mrb[0].mxu0
  %v10106 = vadd.f32 0.0, %v10105
  %v10107 = vpop.f32.mrb[0].mxu0
  %10108 = vmatprep.mubr.f32.mxu0 0.0
  %10109 = vmatmul.mubr.f32.gmra.mrb[0].mxu0 %v9766
  %v10110 = vpop.f32.mrb[0].mxu0
  %v10111 = vadd.f32 0.0, %v10110
  %v10112 = vpop.f32.mrb[0].mxu0
  %10113 = vmatprep.mubr.f32.mxu0 0.0
  %10114 = vmatmul.mubr.f32.gmra.mrb[0].mxu0 %v9769
  %v10115 = vpop.f32.mrb[0].mxu0
  %v10116 = vadd.f32 0.0, %v10115
  %v10117 = vpop.f32.mrb[0].mxu0
  %10118 = vmatprep.mubr.f32.mxu0 0.0
  %10119 = vmatmul.mubr.f32.gmra.mrb[0].mxu0 %v9772
  %v10120 = vpop.f32.mrb[0].mxu0
  %v10121 = vadd.f32 0.0, %v10120
  %v10122 = vpop.f32.mrb[0].mxu0
  %10123 = vmatprep.mubr.f32.mxu0 0.0
  %10124 = vmatmul.mubr.f32.gmra.mrb[0].mxu0 %v9775
  %v10125 = vpop.f32.mrb[0].mxu0
  %v10126 = vadd.f32 0.0, %v10125
  %v10127 = vpop.f32.mrb[0].mxu0
  %10128 = vmatprep.mubr.f32.mxu0 0.0
  %10129 = vmatmul.mubr.f32.gmra.mrb[0].mxu0 %v9778
  %v10130 = vpop.f32.mrb[0].mxu0
  %v10131 = vadd.f32 0.0, %v10130
  %v10132 = vpop.f32.mrb[0].mxu0
  %10133 = vmatprep.mubr.f32.mxu0 0.0
  %10134 = vmatmul.mubr.f32.gmra.mrb[0].mxu0 %v9781
  %v10135 = vpop.f32.mrb[0].mxu0
  %v10136 = vadd.f32 0.0, %v10135
  %v10137 = vpop.f32.mrb[0].mxu0
  %10138 = vmatprep.mubr.f32.mxu0 0.0
  %10139 = vmatmul.mubr.f32.gmra.mrb[0].mxu0 %v9784
  %v10140 = vpop.f32.mrb[0].mxu0
  %v10141 = vadd.f32 0.0, %v10140
  %v10142 = vpop.f32.mrb[0].mxu0
  %10143 = vmatprep.mubr.f32.mxu0 0.0
  %10144 = vmatmul.mubr.f32.gmra.mrb[0].mxu0 %v9787
  %v10145 = vpop.f32.mrb[0].mxu0
  %v10146 = vadd.f32 0.0, %v10145
  %v10147 = vpop.f32.mrb[0].mxu0
  %10148 = vmatprep.mubr.f32.mxu0 0.0
  %10149 = vmatmul.mubr.f32.gmra.mrb[0].mxu0 %v9790
  %v10150 = vpop.f32.mrb[0].mxu0
  %v10151 = vadd.f32 0.0, %v10150
  %v10152 = vpop.f32.mrb[0].mxu0
  %10153 = vmatprep.mubr.f32.mxu0 0.0
  %10154 = vmatmul.mubr.f32.gmra.mrb[0].mxu0 %v9793
  %v10155 = vpop.f32.mrb[0].mxu0
  %v10156 = vadd.f32 0.0, %v10155
  %v10157 = vpop.f32.mrb[0].mxu0
  %10158 = vmatprep.mubr.f32.mxu0 0.0
  %10159 = vmatmul.mubr.f32.gmra.mrb[0].mxu0 %v9796
  %v10160 = vpop.f32.mrb[0].mxu0
  %v10161 = vadd.f32 0.0, %v10160
  %v10162 = vpop.f32.mrb[0].mxu0
  %10163 = vmatprep.mubr.f32.mxu0 0.0
  %10164 = vmatmul.mubr.f32.gmra.mrb[0].mxu0 %v9799
  %v10165 = vpop.f32.mrb[0].mxu0
  %v10166 = vadd.f32 0.0, %v10165
  %v10167 = vpop.f32.mrb[0].mxu0
  %10168 = vmatprep.mubr.f32.mxu0 0.0
  %10169 = vmatmul.mubr.f32.gmra.mrb[0].mxu0 %v9802
  %v10170 = vpop.f32.mrb[0].mxu0
  %v10171 = vadd.f32 0.0, %v10170
  %v10172 = vpop.f32.mrb[0].mxu0
  %10173 = vmatprep.mubr.f32.mxu0 0.0
  %10174 = vmatmul.mubr.f32.gmra.mrb[0].mxu0 %v9805
  %v10175 = vpop.f32.mrb[0].mxu0
  %v10176 = vadd.f32 0.0, %v10175
  %v10177 = vpop.f32.mrb[0].mxu0
  %10178 = vmatprep.mubr.f32.mxu0 0.0
  %10179 = vmatmul.mubr.f32.gmra.mrb[0].mxu0 %v9808
  %v10180 = vpop.f32.mrb[0].mxu0
  %v10181 = vadd.f32 0.0, %v10180
  %v10182 = vpop.f32.mrb[0].mxu0
  %10183 = vmatprep.mubr.f32.mxu0 0.0
  %10184 = vmatmul.mubr.f32.gmra.mrb[0].mxu0 %v9811
  %v10185 = vpop.f32.mrb[0].mxu0
  %v10186 = vadd.f32 0.0, %v10185
  %v10187 = vpop.f32.mrb[0].mxu0
  %10188 = vmatprep.mubr.f32.mxu0 0.0
  %10189 = vmatmul.mubr.f32.gmra.mrb[0].mxu0 %v9814
  %v10190 = vpop.f32.mrb[0].mxu0
  %v10191 = vadd.f32 0.0, %v10190
  %v10192 = vpop.f32.mrb[0].mxu0
  %10193 = vmatprep.mubr.f32.mxu0 0.0
  %10194 = vmatmul.mubr.f32.gmra.mrb[0].mxu0 %v9817
  %v10195 = vpop.f32.mrb[0].mxu0
  %v10196 = vadd.f32 0.0, %v10195
  %v10197 = vpop.f32.mrb[0].mxu0
  %10198 = vmatprep.mubr.f32.mxu0 0.0
  %10199 = vmatmul.mubr.f32.gmra.mrb[0].mxu0 %v9820
  %v10200 = vpop.f32.mrb[0].mxu0
  %v10201 = vadd.f32 0.0, %v10200
  %v10202 = vpop.f32.mrb[0].mxu0
  %10203 = vmatprep.mubr.f32.mxu0 0.0
  %10204 = vmatmul.mubr.f32.gmra.mrb[0].mxu0 %v9823
  %v10205 = vpop.f32.mrb[0].mxu0
  %v10206 = vadd.f32 0.0, %v10205
  %v10207 = vpop.f32.mrb[0].mxu0
  %10208 = vmatprep.mubr.f32.mxu0 0.0
  %10209 = vmatmul.mubr.f32.gmra.mrb[0].mxu0 %v9826
  %v10210 = vpop.f32.mrb[0].mxu0
  %v10211 = vadd.f32 0.0, %v10210
  %v10212 = vpop.f32.mrb[0].mxu0
  %10213 = vmatprep.mubr.f32.mxu0 0.0
  %10214 = vmatmul.mubr.f32.gmra.mrb[0].mxu0 %v9829
  %v10215 = vpop.f32.mrb[0].mxu0
  %v10216 = vadd.f32 0.0, %v10215
  %v10217 = vpop.f32.mrb[0].mxu0
  %10218 = vdwg.mxu0
  %v10219 = vadd.f32 %v9509, %v9901
  %v10220 = vadd.f32 %v9510, %v9906
  %v10221 = vadd.f32 %v9511, %v9911
  %v10222 = vadd.f32 %v9512, %v9916
  %v10223 = vadd.f32 %v9513, %v9921
  %v10224 = vadd.f32 %v9514, %v9926
  %v10225 = vadd.f32 %v9515, %v9931
  %v10226 = vadd.f32 %v9516, %v9936
  %v10227 = vadd.f32 %v9517, %v9941
  %v10228 = vadd.f32 %v9518, %v9946
  %v10229 = vadd.f32 %v9519, %v9951
  %v10230 = vadd.f32 %v9520, %v9956
  %v10231 = vadd.f32 %v9521, %v9961
  %v10232 = vadd.f32 %v9522, %v9966
  %v10233 = vadd.f32 %v9523, %v9971
  %v10234 = vadd.f32 %v9524, %v9976
  %v10235 = vadd.f32 %v9525, %v9981
  %v10236 = vadd.f32 %v9526, %v9986
  %v10237 = vadd.f32 %v9527, %v9991
  %v10238 = vadd.f32 %v9528, %v9996
  %v10239 = vadd.f32 %v9529, %v10001
  %v10240 = vadd.f32 %v9530, %v10006
  %v10241 = vadd.f32 %v9531, %v10011
  %v10242 = vadd.f32 %v9532, %v10016
  %v10243 = vadd.f32 %v9533, %v10021
  %v10244 = vadd.f32 %v9534, %v10026
  %v10245 = vadd.f32 %v9535, %v10031
  %v10246 = vadd.f32 %v9536, %v10036
  %v10247 = vadd.f32 %v9537, %v10041
  %v10248 = vadd.f32 %v9538, %v10046
  %v10249 = vadd.f32 %v9539, %v10051
  %v10250 = vadd.f32 %v9540, %v10056
  %v10251 = vadd.f32 %v9541, %v10061
  %v10252 = vadd.f32 %v9542, %v10066
  %v10253 = vadd.f32 %v9543, %v10071
  %v10254 = vadd.f32 %v9544, %v10076
  %v10255 = vadd.f32 %v9545, %v10081
  %v10256 = vadd.f32 %v9546, %v10086
  %v10257 = vadd.f32 %v9547, %v10091
  %v10258 = vadd.f32 %v9548, %v10096
  %v10259 = vadd.f32 %v9549, %v10101
  %v10260 = vadd.f32 %v9550, %v10106
  %v10261 = vadd.f32 %v9551, %v10111
  %v10262 = vadd.f32 %v9552, %v10116
  %v10263 = vadd.f32 %v9553, %v10121
  %v10264 = vadd.f32 %v9554, %v10126
  %v10265 = vadd.f32 %v9555, %v10131
  %v10266 = vadd.f32 %v9556, %v10136
  %v10267 = vadd.f32 %v9557, %v10141
  %v10268 = vadd.f32 %v9558, %v10146
  %v10269 = vadd.f32 %v9559, %v10151
  %v10270 = vadd.f32 %v9560, %v10156
  %v10271 = vadd.f32 %v9561, %v10161
  %v10272 = vadd.f32 %v9562, %v10166
  %v10273 = vadd.f32 %v9563, %v10171
  %v10274 = vadd.f32 %v9564, %v10176
  %v10275 = vadd.f32 %v9565, %v10181
  %v10276 = vadd.f32 %v9566, %v10186
  %v10277 = vadd.f32 %v9567, %v10191
  %v10278 = vadd.f32 %v9568, %v10196
  %v10279 = vadd.f32 %v9569, %v10201
  %v10280 = vadd.f32 %v9570, %v10206
  %v10281 = vadd.f32 %v9571, %v10211
  %v10282 = vadd.f32 %v9572, %v10216
  %v10283 = vld [vmem:[%s6797 + $0x2] sm:$0xff]
  %v10284 = vld [vmem:[%s6797 + $0xa] sm:$0xff]
  %v10285 = vld [vmem:[%s6797 + $0x1a] sm:$0xff]
  %v10286 = vld [vmem:[%s6797 + $0x22] sm:$0xff]
  %v10287 = vld [vmem:[%s6797 + $0x32] sm:$0xff]
  %v10288 = vld [vmem:[%s6797 + $0x3a] sm:$0xff]
  %v10289 = vld [vmem:[%s6797 + $0x4a] sm:$0xff]
  %v10290 = vld [vmem:[%s6797 + $0x52] sm:$0xff]
  %v10291 = vld [vmem:[%s6797 + $0x62] sm:$0xff]
  %v10292 = vld [vmem:[%s6797 + $0x6a] sm:$0xff]
  %v10293 = vld [vmem:[%s6797 + $0x7a] sm:$0xff]
  %v10294 = vld [vmem:[%s6797 + $0x82] sm:$0xff]
  %v10295 = vld [vmem:[%s6797 + $0x92] sm:$0xff]
  %v10296 = vld [vmem:[%s6797 + $0x9a] sm:$0xff]
  %v10297 = vld [vmem:[%s6797 + $0xaa] sm:$0xff]
  %v10298 = vld [vmem:[%s6797 + $0xb2] sm:$0xff]
  %v10299 = vld [vmem:[%s6797 + $0xc2] sm:$0xff]
  %v10300 = vld [vmem:[%s6797 + $0xca] sm:$0xff]
  %v10301 = vld [vmem:[%s6797 + $0xda] sm:$0xff]
  %v10302 = vld [vmem:[%s6797 + $0xe2] sm:$0xff]
  %v10303 = vld [vmem:[%s6797 + $0xf2] sm:$0xff]
  %v10304 = vld [vmem:[%s6797 + $0xfa] sm:$0xff]
  %v10305 = vld [vmem:[%s6797 + $0x10a] sm:$0xff]
  %v10306 = vld [vmem:[%s6797 + $0x112] sm:$0xff]
  %v10307 = vld [vmem:[%s6797 + $0x122] sm:$0xff]
  %v10308 = vld [vmem:[%s6797 + $0x12a] sm:$0xff]
  %v10309 = vld [vmem:[%s6797 + $0x13a] sm:$0xff]
  %v10310 = vld [vmem:[%s6797 + $0x142] sm:$0xff]
  %v10311 = vld [vmem:[%s6797 + $0x152] sm:$0xff]
  %v10312 = vld [vmem:[%s6797 + $0x15a] sm:$0xff]
  %v10313 = vld [vmem:[%s6797 + $0x16a] sm:$0xff]
  %v10314 = vld [vmem:[%s6797 + $0x172] sm:$0xff]
  %v10315 = vld [vmem:[%s6797 + $0x1b2] sm:$0xff]
  %v10316 = vld [vmem:[%s6797 + $0x1ba] sm:$0xff]
  %v10317 = vld [vmem:[%s6797 + $0x1ca] sm:$0xff]
  %v10318 = vld [vmem:[%s6797 + $0x1d2] sm:$0xff]
  %v10319 = vld [vmem:[%s6797 + $0x1e2] sm:$0xff]
  %v10320 = vld [vmem:[%s6797 + $0x1ea] sm:$0xff]
  %v10321 = vld [vmem:[%s6797 + $0x1fa] sm:$0xff]
  %v10322 = vld [vmem:[%s6797 + $0x202] sm:$0xff]
  %v10323 = vld [vmem:[%s6797 + $0x212] sm:$0xff]
  %v10324 = vld [vmem:[%s6797 + $0x21a] sm:$0xff]
  %v10325 = vld [vmem:[%s6797 + $0x22a] sm:$0xff]
  %v10326 = vld [vmem:[%s6797 + $0x232] sm:$0xff]
  %v10327 = vld [vmem:[%s6797 + $0x242] sm:$0xff]
  %v10328 = vld [vmem:[%s6797 + $0x24a] sm:$0xff]
  %v10329 = vld [vmem:[%s6797 + $0x25a] sm:$0xff]
  %v10330 = vld [vmem:[%s6797 + $0x262] sm:$0xff]
  %v10331 = vld [vmem:[%s6797 + $0x272] sm:$0xff]
  %v10332 = vld [vmem:[%s6797 + $0x27a] sm:$0xff]
  %v10333 = vld [vmem:[%s6797 + $0x28a] sm:$0xff]
  %v10334 = vld [vmem:[%s6797 + $0x292] sm:$0xff]
  %v10335 = vld [vmem:[%s6797 + $0x2a2] sm:$0xff]
  %v10336 = vld [vmem:[%s6797 + $0x2aa] sm:$0xff]
  %v10337 = vld [vmem:[%s6797 + $0x2ba] sm:$0xff]
  %v10338 = vld [vmem:[%s6797 + $0x2c2] sm:$0xff]
  %v10339 = vld [vmem:[%s6797 + $0x2d2] sm:$0xff]
  %v10340 = vld [vmem:[%s6797 + $0x2da] sm:$0xff]
  %v10341 = vld [vmem:[%s6797 + $0x2ea] sm:$0xff]
  %v10342 = vld [vmem:[%s6797 + $0x2f2] sm:$0xff]
  %v10343 = vld [vmem:[%s6797 + $0x302] sm:$0xff]
  %v10344 = vld [vmem:[%s6797 + $0x30a] sm:$0xff]
  %v10345 = vld [vmem:[%s6797 + $0x31a] sm:$0xff]
  %v10346 = vld [vmem:[%s6797 + $0x322] sm:$0xff]
  %s10347 = scalar_lea.vmem %s4, 20
  %v10348 = vld [vmem:[%s10347] sm:$0xf]
  %v10350 = vsel %vm26, %v10283, 0
  %v10353 = vsel %vm26, %v10284, 0
  %v10356 = vsel %vm26, %v10285, 0
  %v10359 = vsel %vm26, %v10286, 0
  %v10362 = vsel %vm26, %v10287, 0
  %v10365 = vsel %vm26, %v10288, 0
  %v10368 = vsel %vm26, %v10289, 0
  %v10371 = vsel %vm26, %v10290, 0
  %v10374 = vsel %vm26, %v10291, 0
  %v10377 = vsel %vm26, %v10292, 0
  %v10380 = vsel %vm26, %v10293, 0
  %v10383 = vsel %vm26, %v10294, 0
  %v10386 = vsel %vm26, %v10295, 0
  %v10389 = vsel %vm26, %v10296, 0
  %v10392 = vsel %vm26, %v10297, 0
  %v10395 = vsel %vm26, %v10298, 0
  %v10398 = vsel %vm26, %v10299, 0
  %v10401 = vsel %vm26, %v10300, 0
  %v10404 = vsel %vm26, %v10301, 0
  %v10407 = vsel %vm26, %v10302, 0
  %v10410 = vsel %vm26, %v10303, 0
  %v10413 = vsel %vm26, %v10304, 0
  %v10416 = vsel %vm26, %v10305, 0
  %v10419 = vsel %vm26, %v10306, 0
  %v10422 = vsel %vm26, %v10307, 0
  %v10425 = vsel %vm26, %v10308, 0
  %v10428 = vsel %vm26, %v10309, 0
  %v10431 = vsel %vm26, %v10310, 0
  %v10434 = vsel %vm26, %v10311, 0
  %v10437 = vsel %vm26, %v10312, 0
  %v10440 = vsel %vm26, %v10313, 0
  %v10443 = vsel %vm26, %v10314, 0
  %v10446 = vsel %vm26, %v10315, 0
  %v10449 = vsel %vm26, %v10316, 0
  %v10452 = vsel %vm26, %v10317, 0
  %v10455 = vsel %vm26, %v10318, 0
  %v10458 = vsel %vm26, %v10319, 0
  %v10461 = vsel %vm26, %v10320, 0
  %v10464 = vsel %vm26, %v10321, 0
  %v10467 = vsel %vm26, %v10322, 0
  %v10470 = vsel %vm26, %v10323, 0
  %v10473 = vsel %vm26, %v10324, 0
  %v10476 = vsel %vm26, %v10325, 0
  %v10479 = vsel %vm26, %v10326, 0
  %v10482 = vsel %vm26, %v10327, 0
  %v10485 = vsel %vm26, %v10328, 0
  %v10488 = vsel %vm26, %v10329, 0
  %v10491 = vsel %vm26, %v10330, 0
  %v10494 = vsel %vm26, %v10331, 0
  %v10497 = vsel %vm26, %v10332, 0
  %v10500 = vsel %vm26, %v10333, 0
  %v10503 = vsel %vm26, %v10334, 0
  %v10506 = vsel %vm26, %v10335, 0
  %v10509 = vsel %vm26, %v10336, 0
  %v10512 = vsel %vm26, %v10337, 0
  %v10515 = vsel %vm26, %v10338, 0
  %v10518 = vsel %vm26, %v10339, 0
  %v10521 = vsel %vm26, %v10340, 0
  %v10524 = vsel %vm26, %v10341, 0
  %v10527 = vsel %vm26, %v10342, 0
  %v10530 = vsel %vm26, %v10343, 0
  %v10533 = vsel %vm26, %v10344, 0
  %v10536 = vsel %vm26, %v10345, 0
  %v10539 = vsel %vm26, %v10346, 0
  %v10542 = vsel %vm651, %v10348, 0
  %10544 = vmatprep.subr.mxu0 0.0
  %10545 = vmatpush1.msra.mxu0 %v10542
  %10546 = vmatprep.subr.mxu0 0.0
  %10547 = vmatpush1.msra.mxu0 0.0
  %10548 = vmatprep.subr.mxu0 0.0
  %10549 = vmatpush1.msra.mxu0 0.0
  %10550 = vmatprep.subr.mxu0 0.0
  %10551 = vmatpush1.msra.mxu0 0.0
  %10552 = vmatprep.subr.mxu0 0.0
  %10553 = vmatpush1.msra.mxu0 0.0
  %10554 = vmatprep.subr.mxu0 0.0
  %10555 = vmatpush1.msra.mxu0 0.0
  %10556 = vmatprep.subr.mxu0 0.0
  %10557 = vmatpush1.msra.mxu0 0.0
  %10558 = vmatprep.subr.mxu0 0.0
  %10559 = vmatpush1.msra.mxu0 0.0
  %10560 = vmatprep.subr.mxu0 0.0
  %10561 = vmatpush1.msra.mxu0 0.0
  %10562 = vmatprep.subr.mxu0 0.0
  %10563 = vmatpush1.msra.mxu0 0.0
  %10564 = vmatprep.subr.mxu0 0.0
  %10565 = vmatpush1.msra.mxu0 0.0
  %10566 = vmatprep.subr.mxu0 0.0
  %10567 = vmatpush1.msra.mxu0 0.0
  %10568 = vmatprep.subr.mxu0 0.0
  %10569 = vmatpush1.msra.mxu0 0.0
  %10570 = vmatprep.subr.mxu0 0.0
  %10571 = vmatpush1.msra.mxu0 0.0
  %10572 = vmatprep.subr.mxu0 0.0
  %10573 = vmatpush1.msra.mxu0 0.0
  %10574 = vmatprep.subr.mxu0 0.0
  %10575 = vmatpush1.msra.mxu0 0.0
  %10576 = vmatprep.subr.mxu0 0.0
  %10577 = vmatpush1.msra.mxu0 0.0
  %10578 = vmatprep.subr.mxu0 0.0
  %10579 = vmatpush1.msra.mxu0 0.0
  %10580 = vmatprep.subr.mxu0 0.0
  %10581 = vmatpush1.msra.mxu0 0.0
  %10582 = vmatprep.subr.mxu0 0.0
  %10583 = vmatpush1.msra.mxu0 0.0
  %10584 = vmatprep.subr.mxu0 0.0
  %10585 = vmatpush1.msra.mxu0 0.0
  %10586 = vmatprep.subr.mxu0 0.0
  %10587 = vmatpush1.msra.mxu0 0.0
  %10588 = vmatprep.subr.mxu0 0.0
  %10589 = vmatpush1.msra.mxu0 0.0
  %10590 = vmatprep.subr.mxu0 0.0
  %10591 = vmatpush1.msra.mxu0 0.0
  %10592 = vmatprep.subr.mxu0 0.0
  %10593 = vmatpush1.msra.mxu0 0.0
  %10594 = vmatprep.subr.mxu0 0.0
  %10595 = vmatpush1.msra.mxu0 0.0
  %10596 = vmatprep.subr.mxu0 0.0
  %10597 = vmatpush1.msra.mxu0 0.0
  %10598 = vmatprep.subr.mxu0 0.0
  %10599 = vmatpush1.msra.mxu0 0.0
  %10600 = vmatprep.subr.mxu0 0.0
  %10601 = vmatpush1.msra.mxu0 0.0
  %10602 = vmatprep.subr.mxu0 0.0
  %10603 = vmatpush1.msra.mxu0 0.0
  %10604 = vmatprep.subr.mxu0 0.0
  %10605 = vmatpush1.msra.mxu0 0.0
  %10606 = vmatprep.subr.mxu0 0.0
  %10607 = vmatpush1.msra.mxu0 0.0
  %10608 = vmatprep.mubr.f32.mxu0 0.0
  %10609 = vmatmul.mubr.f32.gmra.mrb[0].mxu0 %v10350
  %v10610 = vpop.f32.mrb[0].mxu0
  %v10611 = vadd.f32 0.0, %v10610
  %v10612 = vpop.f32.mrb[0].mxu0
  %10613 = vmatprep.mubr.f32.mxu0 0.0
  %10614 = vmatmul.mubr.f32.gmra.mrb[0].mxu0 %v10353
  %v10615 = vpop.f32.mrb[0].mxu0
  %v10616 = vadd.f32 0.0, %v10615
  %v10617 = vpop.f32.mrb[0].mxu0
  %10618 = vmatprep.mubr.f32.mxu0 0.0
  %10619 = vmatmul.mubr.f32.gmra.mrb[0].mxu0 %v10356
  %v10620 = vpop.f32.mrb[0].mxu0
  %v10621 = vadd.f32 0.0, %v10620
  %v10622 = vpop.f32.mrb[0].mxu0
  %10623 = vmatprep.mubr.f32.mxu0 0.0
  %10624 = vmatmul.mubr.f32.gmra.mrb[0].mxu0 %v10359
  %v10625 = vpop.f32.mrb[0].mxu0
  %v10626 = vadd.f32 0.0, %v10625
  %v10627 = vpop.f32.mrb[0].mxu0
  %10628 = vmatprep.mubr.f32.mxu0 0.0
  %10629 = vmatmul.mubr.f32.gmra.mrb[0].mxu0 %v10362
  %v10630 = vpop.f32.mrb[0].mxu0
  %v10631 = vadd.f32 0.0, %v10630
  %v10632 = vpop.f32.mrb[0].mxu0
  %10633 = vmatprep.mubr.f32.mxu0 0.0
  %10634 = vmatmul.mubr.f32.gmra.mrb[0].mxu0 %v10365
  %v10635 = vpop.f32.mrb[0].mxu0
  %v10636 = vadd.f32 0.0, %v10635
  %v10637 = vpop.f32.mrb[0].mxu0
  %10638 = vmatprep.mubr.f32.mxu0 0.0
  %10639 = vmatmul.mubr.f32.gmra.mrb[0].mxu0 %v10368
  %v10640 = vpop.f32.mrb[0].mxu0
  %v10641 = vadd.f32 0.0, %v10640
  %v10642 = vpop.f32.mrb[0].mxu0
  %10643 = vmatprep.mubr.f32.mxu0 0.0
  %10644 = vmatmul.mubr.f32.gmra.mrb[0].mxu0 %v10371
  %v10645 = vpop.f32.mrb[0].mxu0
  %v10646 = vadd.f32 0.0, %v10645
  %v10647 = vpop.f32.mrb[0].mxu0
  %10648 = vmatprep.mubr.f32.mxu0 0.0
  %10649 = vmatmul.mubr.f32.gmra.mrb[0].mxu0 %v10374
  %v10650 = vpop.f32.mrb[0].mxu0
  %v10651 = vadd.f32 0.0, %v10650
  %v10652 = vpop.f32.mrb[0].mxu0
  %10653 = vmatprep.mubr.f32.mxu0 0.0
  %10654 = vmatmul.mubr.f32.gmra.mrb[0].mxu0 %v10377
  %v10655 = vpop.f32.mrb[0].mxu0
  %v10656 = vadd.f32 0.0, %v10655
  %v10657 = vpop.f32.mrb[0].mxu0
  %10658 = vmatprep.mubr.f32.mxu0 0.0
  %10659 = vmatmul.mubr.f32.gmra.mrb[0].mxu0 %v10380
  %v10660 = vpop.f32.mrb[0].mxu0
  %v10661 = vadd.f32 0.0, %v10660
  %v10662 = vpop.f32.mrb[0].mxu0
  %10663 = vmatprep.mubr.f32.mxu0 0.0
  %10664 = vmatmul.mubr.f32.gmra.mrb[0].mxu0 %v10383
  %v10665 = vpop.f32.mrb[0].mxu0
  %v10666 = vadd.f32 0.0, %v10665
  %v10667 = vpop.f32.mrb[0].mxu0
  %10668 = vmatprep.mubr.f32.mxu0 0.0
  %10669 = vmatmul.mubr.f32.gmra.mrb[0].mxu0 %v10386
  %v10670 = vpop.f32.mrb[0].mxu0
  %v10671 = vadd.f32 0.0, %v10670
  %v10672 = vpop.f32.mrb[0].mxu0
  %10673 = vmatprep.mubr.f32.mxu0 0.0
  %10674 = vmatmul.mubr.f32.gmra.mrb[0].mxu0 %v10389
  %v10675 = vpop.f32.mrb[0].mxu0
  %v10676 = vadd.f32 0.0, %v10675
  %v10677 = vpop.f32.mrb[0].mxu0
  %10678 = vmatprep.mubr.f32.mxu0 0.0
  %10679 = vmatmul.mubr.f32.gmra.mrb[0].mxu0 %v10392
  %v10680 = vpop.f32.mrb[0].mxu0
  %v10681 = vadd.f32 0.0, %v10680
  %v10682 = vpop.f32.mrb[0].mxu0
  %10683 = vmatprep.mubr.f32.mxu0 0.0
  %10684 = vmatmul.mubr.f32.gmra.mrb[0].mxu0 %v10395
  %v10685 = vpop.f32.mrb[0].mxu0
  %v10686 = vadd.f32 0.0, %v10685
  %v10687 = vpop.f32.mrb[0].mxu0
  %10688 = vmatprep.mubr.f32.mxu0 0.0
  %10689 = vmatmul.mubr.f32.gmra.mrb[0].mxu0 %v10398
  %v10690 = vpop.f32.mrb[0].mxu0
  %v10691 = vadd.f32 0.0, %v10690
  %v10692 = vpop.f32.mrb[0].mxu0
  %10693 = vmatprep.mubr.f32.mxu0 0.0
  %10694 = vmatmul.mubr.f32.gmra.mrb[0].mxu0 %v10401
  %v10695 = vpop.f32.mrb[0].mxu0
  %v10696 = vadd.f32 0.0, %v10695
  %v10697 = vpop.f32.mrb[0].mxu0
  %10698 = vmatprep.mubr.f32.mxu0 0.0
  %10699 = vmatmul.mubr.f32.gmra.mrb[0].mxu0 %v10404
  %v10700 = vpop.f32.mrb[0].mxu0
  %v10701 = vadd.f32 0.0, %v10700
  %v10702 = vpop.f32.mrb[0].mxu0
  %10703 = vmatprep.mubr.f32.mxu0 0.0
  %10704 = vmatmul.mubr.f32.gmra.mrb[0].mxu0 %v10407
  %v10705 = vpop.f32.mrb[0].mxu0
  %v10706 = vadd.f32 0.0, %v10705
  %v10707 = vpop.f32.mrb[0].mxu0
  %10708 = vmatprep.mubr.f32.mxu0 0.0
  %10709 = vmatmul.mubr.f32.gmra.mrb[0].mxu0 %v10410
  %v10710 = vpop.f32.mrb[0].mxu0
  %v10711 = vadd.f32 0.0, %v10710
  %v10712 = vpop.f32.mrb[0].mxu0
  %10713 = vmatprep.mubr.f32.mxu0 0.0
  %10714 = vmatmul.mubr.f32.gmra.mrb[0].mxu0 %v10413
  %v10715 = vpop.f32.mrb[0].mxu0
  %v10716 = vadd.f32 0.0, %v10715
  %v10717 = vpop.f32.mrb[0].mxu0
  %10718 = vmatprep.mubr.f32.mxu0 0.0
  %10719 = vmatmul.mubr.f32.gmra.mrb[0].mxu0 %v10416
  %v10720 = vpop.f32.mrb[0].mxu0
  %v10721 = vadd.f32 0.0, %v10720
  %v10722 = vpop.f32.mrb[0].mxu0
  %10723 = vmatprep.mubr.f32.mxu0 0.0
  %10724 = vmatmul.mubr.f32.gmra.mrb[0].mxu0 %v10419
  %v10725 = vpop.f32.mrb[0].mxu0
  %v10726 = vadd.f32 0.0, %v10725
  %v10727 = vpop.f32.mrb[0].mxu0
  %10728 = vmatprep.mubr.f32.mxu0 0.0
  %10729 = vmatmul.mubr.f32.gmra.mrb[0].mxu0 %v10422
  %v10730 = vpop.f32.mrb[0].mxu0
  %v10731 = vadd.f32 0.0, %v10730
  %v10732 = vpop.f32.mrb[0].mxu0
  %10733 = vmatprep.mubr.f32.mxu0 0.0
  %10734 = vmatmul.mubr.f32.gmra.mrb[0].mxu0 %v10425
  %v10735 = vpop.f32.mrb[0].mxu0
  %v10736 = vadd.f32 0.0, %v10735
  %v10737 = vpop.f32.mrb[0].mxu0
  %10738 = vmatprep.mubr.f32.mxu0 0.0
  %10739 = vmatmul.mubr.f32.gmra.mrb[0].mxu0 %v10428
  %v10740 = vpop.f32.mrb[0].mxu0
  %v10741 = vadd.f32 0.0, %v10740
  %v10742 = vpop.f32.mrb[0].mxu0
  %10743 = vmatprep.mubr.f32.mxu0 0.0
  %10744 = vmatmul.mubr.f32.gmra.mrb[0].mxu0 %v10431
  %v10745 = vpop.f32.mrb[0].mxu0
  %v10746 = vadd.f32 0.0, %v10745
  %v10747 = vpop.f32.mrb[0].mxu0
  %10748 = vmatprep.mubr.f32.mxu0 0.0
  %10749 = vmatmul.mubr.f32.gmra.mrb[0].mxu0 %v10434
  %v10750 = vpop.f32.mrb[0].mxu0
  %v10751 = vadd.f32 0.0, %v10750
  %v10752 = vpop.f32.mrb[0].mxu0
  %10753 = vmatprep.mubr.f32.mxu0 0.0
  %10754 = vmatmul.mubr.f32.gmra.mrb[0].mxu0 %v10437
  %v10755 = vpop.f32.mrb[0].mxu0
  %v10756 = vadd.f32 0.0, %v10755
  %v10757 = vpop.f32.mrb[0].mxu0
  %10758 = vmatprep.mubr.f32.mxu0 0.0
  %10759 = vmatmul.mubr.f32.gmra.mrb[0].mxu0 %v10440
  %v10760 = vpop.f32.mrb[0].mxu0
  %v10761 = vadd.f32 0.0, %v10760
  %v10762 = vpop.f32.mrb[0].mxu0
  %10763 = vmatprep.mubr.f32.mxu0 0.0
  %10764 = vmatmul.mubr.f32.gmra.mrb[0].mxu0 %v10443
  %v10765 = vpop.f32.mrb[0].mxu0
  %v10766 = vadd.f32 0.0, %v10765
  %v10767 = vpop.f32.mrb[0].mxu0
  %10768 = vmatprep.mubr.f32.mxu0 0.0
  %10769 = vmatmul.mubr.f32.gmra.mrb[0].mxu0 %v10446
  %v10770 = vpop.f32.mrb[0].mxu0
  %v10771 = vadd.f32 0.0, %v10770
  %v10772 = vpop.f32.mrb[0].mxu0
  %10773 = vmatprep.mubr.f32.mxu0 0.0
  %10774 = vmatmul.mubr.f32.gmra.mrb[0].mxu0 %v10449
  %v10775 = vpop.f32.mrb[0].mxu0
  %v10776 = vadd.f32 0.0, %v10775
  %v10777 = vpop.f32.mrb[0].mxu0
  %10778 = vmatprep.mubr.f32.mxu0 0.0
  %10779 = vmatmul.mubr.f32.gmra.mrb[0].mxu0 %v10452
  %v10780 = vpop.f32.mrb[0].mxu0
  %v10781 = vadd.f32 0.0, %v10780
  %v10782 = vpop.f32.mrb[0].mxu0
  %10783 = vmatprep.mubr.f32.mxu0 0.0
  %10784 = vmatmul.mubr.f32.gmra.mrb[0].mxu0 %v10455
  %v10785 = vpop.f32.mrb[0].mxu0
  %v10786 = vadd.f32 0.0, %v10785
  %v10787 = vpop.f32.mrb[0].mxu0
  %10788 = vmatprep.mubr.f32.mxu0 0.0
  %10789 = vmatmul.mubr.f32.gmra.mrb[0].mxu0 %v10458
  %v10790 = vpop.f32.mrb[0].mxu0
  %v10791 = vadd.f32 0.0, %v10790
  %v10792 = vpop.f32.mrb[0].mxu0
  %10793 = vmatprep.mubr.f32.mxu0 0.0
  %10794 = vmatmul.mubr.f32.gmra.mrb[0].mxu0 %v10461
  %v10795 = vpop.f32.mrb[0].mxu0
  %v10796 = vadd.f32 0.0, %v10795
  %v10797 = vpop.f32.mrb[0].mxu0
  %10798 = vmatprep.mubr.f32.mxu0 0.0
  %10799 = vmatmul.mubr.f32.gmra.mrb[0].mxu0 %v10464
  %v10800 = vpop.f32.mrb[0].mxu0
  %v10801 = vadd.f32 0.0, %v10800
  %v10802 = vpop.f32.mrb[0].mxu0
  %10803 = vmatprep.mubr.f32.mxu0 0.0
  %10804 = vmatmul.mubr.f32.gmra.mrb[0].mxu0 %v10467
  %v10805 = vpop.f32.mrb[0].mxu0
  %v10806 = vadd.f32 0.0, %v10805
  %v10807 = vpop.f32.mrb[0].mxu0
  %10808 = vmatprep.mubr.f32.mxu0 0.0
  %10809 = vmatmul.mubr.f32.gmra.mrb[0].mxu0 %v10470
  %v10810 = vpop.f32.mrb[0].mxu0
  %v10811 = vadd.f32 0.0, %v10810
  %v10812 = vpop.f32.mrb[0].mxu0
  %10813 = vmatprep.mubr.f32.mxu0 0.0
  %10814 = vmatmul.mubr.f32.gmra.mrb[0].mxu0 %v10473
  %v10815 = vpop.f32.mrb[0].mxu0
  %v10816 = vadd.f32 0.0, %v10815
  %v10817 = vpop.f32.mrb[0].mxu0
  %10818 = vmatprep.mubr.f32.mxu0 0.0
  %10819 = vmatmul.mubr.f32.gmra.mrb[0].mxu0 %v10476
  %v10820 = vpop.f32.mrb[0].mxu0
  %v10821 = vadd.f32 0.0, %v10820
  %v10822 = vpop.f32.mrb[0].mxu0
  %10823 = vmatprep.mubr.f32.mxu0 0.0
  %10824 = vmatmul.mubr.f32.gmra.mrb[0].mxu0 %v10479
  %v10825 = vpop.f32.mrb[0].mxu0
  %v10826 = vadd.f32 0.0, %v10825
  %v10827 = vpop.f32.mrb[0].mxu0
  %10828 = vmatprep.mubr.f32.mxu0 0.0
  %10829 = vmatmul.mubr.f32.gmra.mrb[0].mxu0 %v10482
  %v10830 = vpop.f32.mrb[0].mxu0
  %v10831 = vadd.f32 0.0, %v10830
  %v10832 = vpop.f32.mrb[0].mxu0
  %10833 = vmatprep.mubr.f32.mxu0 0.0
  %10834 = vmatmul.mubr.f32.gmra.mrb[0].mxu0 %v10485
  %v10835 = vpop.f32.mrb[0].mxu0
  %v10836 = vadd.f32 0.0, %v10835
  %v10837 = vpop.f32.mrb[0].mxu0
  %10838 = vmatprep.mubr.f32.mxu0 0.0
  %10839 = vmatmul.mubr.f32.gmra.mrb[0].mxu0 %v10488
  %v10840 = vpop.f32.mrb[0].mxu0
  %v10841 = vadd.f32 0.0, %v10840
  %v10842 = vpop.f32.mrb[0].mxu0
  %10843 = vmatprep.mubr.f32.mxu0 0.0
  %10844 = vmatmul.mubr.f32.gmra.mrb[0].mxu0 %v10491
  %v10845 = vpop.f32.mrb[0].mxu0
  %v10846 = vadd.f32 0.0, %v10845
  %v10847 = vpop.f32.mrb[0].mxu0
  %10848 = vmatprep.mubr.f32.mxu0 0.0
  %10849 = vmatmul.mubr.f32.gmra.mrb[0].mxu0 %v10494
  %v10850 = vpop.f32.mrb[0].mxu0
  %v10851 = vadd.f32 0.0, %v10850
  %v10852 = vpop.f32.mrb[0].mxu0
  %10853 = vmatprep.mubr.f32.mxu0 0.0
  %10854 = vmatmul.mubr.f32.gmra.mrb[0].mxu0 %v10497
  %v10855 = vpop.f32.mrb[0].mxu0
  %v10856 = vadd.f32 0.0, %v10855
  %v10857 = vpop.f32.mrb[0].mxu0
  %10858 = vmatprep.mubr.f32.mxu0 0.0
  %10859 = vmatmul.mubr.f32.gmra.mrb[0].mxu0 %v10500
  %v10860 = vpop.f32.mrb[0].mxu0
  %v10861 = vadd.f32 0.0, %v10860
  %v10862 = vpop.f32.mrb[0].mxu0
  %10863 = vmatprep.mubr.f32.mxu0 0.0
  %10864 = vmatmul.mubr.f32.gmra.mrb[0].mxu0 %v10503
  %v10865 = vpop.f32.mrb[0].mxu0
  %v10866 = vadd.f32 0.0, %v10865
  %v10867 = vpop.f32.mrb[0].mxu0
  %10868 = vmatprep.mubr.f32.mxu0 0.0
  %10869 = vmatmul.mubr.f32.gmra.mrb[0].mxu0 %v10506
  %v10870 = vpop.f32.mrb[0].mxu0
  %v10871 = vadd.f32 0.0, %v10870
  %v10872 = vpop.f32.mrb[0].mxu0
  %10873 = vmatprep.mubr.f32.mxu0 0.0
  %10874 = vmatmul.mubr.f32.gmra.mrb[0].mxu0 %v10509
  %v10875 = vpop.f32.mrb[0].mxu0
  %v10876 = vadd.f32 0.0, %v10875
  %v10877 = vpop.f32.mrb[0].mxu0
  %10878 = vmatprep.mubr.f32.mxu0 0.0
  %10879 = vmatmul.mubr.f32.gmra.mrb[0].mxu0 %v10512
  %v10880 = vpop.f32.mrb[0].mxu0
  %v10881 = vadd.f32 0.0, %v10880
  %v10882 = vpop.f32.mrb[0].mxu0
  %10883 = vmatprep.mubr.f32.mxu0 0.0
  %10884 = vmatmul.mubr.f32.gmra.mrb[0].mxu0 %v10515
  %v10885 = vpop.f32.mrb[0].mxu0
  %v10886 = vadd.f32 0.0, %v10885
  %v10887 = vpop.f32.mrb[0].mxu0
  %10888 = vmatprep.mubr.f32.mxu0 0.0
  %10889 = vmatmul.mubr.f32.gmra.mrb[0].mxu0 %v10518
  %v10890 = vpop.f32.mrb[0].mxu0
  %v10891 = vadd.f32 0.0, %v10890
  %v10892 = vpop.f32.mrb[0].mxu0
  %10893 = vmatprep.mubr.f32.mxu0 0.0
  %10894 = vmatmul.mubr.f32.gmra.mrb[0].mxu0 %v10521
  %v10895 = vpop.f32.mrb[0].mxu0
  %v10896 = vadd.f32 0.0, %v10895
  %v10897 = vpop.f32.mrb[0].mxu0
  %10898 = vmatprep.mubr.f32.mxu0 0.0
  %10899 = vmatmul.mubr.f32.gmra.mrb[0].mxu0 %v10524
  %v10900 = vpop.f32.mrb[0].mxu0
  %v10901 = vadd.f32 0.0, %v10900
  %v10902 = vpop.f32.mrb[0].mxu0
  %10903 = vmatprep.mubr.f32.mxu0 0.0
  %10904 = vmatmul.mubr.f32.gmra.mrb[0].mxu0 %v10527
  %v10905 = vpop.f32.mrb[0].mxu0
  %v10906 = vadd.f32 0.0, %v10905
  %v10907 = vpop.f32.mrb[0].mxu0
  %10908 = vmatprep.mubr.f32.mxu0 0.0
  %10909 = vmatmul.mubr.f32.gmra.mrb[0].mxu0 %v10530
  %v10910 = vpop.f32.mrb[0].mxu0
  %v10911 = vadd.f32 0.0, %v10910
  %v10912 = vpop.f32.mrb[0].mxu0
  %10913 = vmatprep.mubr.f32.mxu0 0.0
  %10914 = vmatmul.mubr.f32.gmra.mrb[0].mxu0 %v10533
  %v10915 = vpop.f32.mrb[0].mxu0
  %v10916 = vadd.f32 0.0, %v10915
  %v10917 = vpop.f32.mrb[0].mxu0
  %10918 = vmatprep.mubr.f32.mxu0 0.0
  %10919 = vmatmul.mubr.f32.gmra.mrb[0].mxu0 %v10536
  %v10920 = vpop.f32.mrb[0].mxu0
  %v10921 = vadd.f32 0.0, %v10920
  %v10922 = vpop.f32.mrb[0].mxu0
  %10923 = vmatprep.mubr.f32.mxu0 0.0
  %10924 = vmatmul.mubr.f32.gmra.mrb[0].mxu0 %v10539
  %v10925 = vpop.f32.mrb[0].mxu0
  %v10926 = vadd.f32 0.0, %v10925
  %v10927 = vpop.f32.mrb[0].mxu0
  %10928 = vdwg.mxu0
  %v10929 = vadd.f32 %v10219, %v10611
  %v10930 = vadd.f32 %v10220, %v10616
  %v10931 = vadd.f32 %v10221, %v10621
  %v10932 = vadd.f32 %v10222, %v10626
  %v10933 = vadd.f32 %v10223, %v10631
  %v10934 = vadd.f32 %v10224, %v10636
  %v10935 = vadd.f32 %v10225, %v10641
  %v10936 = vadd.f32 %v10226, %v10646
  %v10937 = vadd.f32 %v10227, %v10651
  %v10938 = vadd.f32 %v10228, %v10656
  %v10939 = vadd.f32 %v10229, %v10661
  %v10940 = vadd.f32 %v10230, %v10666
  %v10941 = vadd.f32 %v10231, %v10671
  %v10942 = vadd.f32 %v10232, %v10676
  %v10943 = vadd.f32 %v10233, %v10681
  %v10944 = vadd.f32 %v10234, %v10686
  %v10945 = vadd.f32 %v10235, %v10691
  %v10946 = vadd.f32 %v10236, %v10696
  %v10947 = vadd.f32 %v10237, %v10701
  %v10948 = vadd.f32 %v10238, %v10706
  %v10949 = vadd.f32 %v10239, %v10711
  %v10950 = vadd.f32 %v10240, %v10716
  %v10951 = vadd.f32 %v10241, %v10721
  %v10952 = vadd.f32 %v10242, %v10726
  %v10953 = vadd.f32 %v10243, %v10731
  %v10954 = vadd.f32 %v10244, %v10736
  %v10955 = vadd.f32 %v10245, %v10741
  %v10956 = vadd.f32 %v10246, %v10746
  %v10957 = vadd.f32 %v10247, %v10751
  %v10958 = vadd.f32 %v10248, %v10756
  %v10959 = vadd.f32 %v10249, %v10761
  %v10960 = vadd.f32 %v10250, %v10766
  %v10961 = vadd.f32 %v10251, %v10771
  %v10962 = vadd.f32 %v10252, %v10776
  %v10963 = vadd.f32 %v10253, %v10781
  %v10964 = vadd.f32 %v10254, %v10786
  %v10965 = vadd.f32 %v10255, %v10791
  %v10966 = vadd.f32 %v10256, %v10796
  %v10967 = vadd.f32 %v10257, %v10801
  %v10968 = vadd.f32 %v10258, %v10806
  %v10969 = vadd.f32 %v10259, %v10811
  %v10970 = vadd.f32 %v10260, %v10816
  %v10971 = vadd.f32 %v10261, %v10821
  %v10972 = vadd.f32 %v10262, %v10826
  %v10973 = vadd.f32 %v10263, %v10831
  %v10974 = vadd.f32 %v10264, %v10836
  %v10975 = vadd.f32 %v10265, %v10841
  %v10976 = vadd.f32 %v10266, %v10846
  %v10977 = vadd.f32 %v10267, %v10851
  %v10978 = vadd.f32 %v10268, %v10856
  %v10979 = vadd.f32 %v10269, %v10861
  %v10980 = vadd.f32 %v10270, %v10866
  %v10981 = vadd.f32 %v10271, %v10871
  %v10982 = vadd.f32 %v10272, %v10876
  %v10983 = vadd.f32 %v10273, %v10881
  %v10984 = vadd.f32 %v10274, %v10886
  %v10985 = vadd.f32 %v10275, %v10891
  %v10986 = vadd.f32 %v10276, %v10896
  %v10987 = vadd.f32 %v10277, %v10901
  %v10988 = vadd.f32 %v10278, %v10906
  %v10989 = vadd.f32 %v10279, %v10911
  %v10990 = vadd.f32 %v10280, %v10916
  %v10991 = vadd.f32 %v10281, %v10921
  %v10992 = vadd.f32 %v10282, %v10926
  %s10993 = scalar_lea.vmem [#allocation3], 48
  %v10994 = vld [vmem:[%s10993] sm:$0xff]
  %v10995 = vld [vmem:[%s10993 + $0x8] sm:$0xff]
  %v10996 = vld [vmem:[%s10993 + $0x18] sm:$0xff]
  %v10997 = vld [vmem:[%s10993 + $0x20] sm:$0xff]
  %v10998 = vld [vmem:[%s10993 + $0x30] sm:$0xff]
  %v10999 = vld [vmem:[%s10993 + $0x38] sm:$0xff]
  %v11000 = vld [vmem:[%s10993 + $0x48] sm:$0xff]
  %v11001 = vld [vmem:[%s10993 + $0x50] sm:$0xff]
  %v11002 = vld [vmem:[%s10993 + $0x60] sm:$0xff]
  %v11003 = vld [vmem:[%s10993 + $0x68] sm:$0xff]
  %v11004 = vld [vmem:[%s10993 + $0x78] sm:$0xff]
  %v11005 = vld [vmem:[%s10993 + $0x80] sm:$0xff]
  %v11006 = vld [vmem:[%s10993 + $0x90] sm:$0xff]
  %v11007 = vld [vmem:[%s10993 + $0x98] sm:$0xff]
  %v11008 = vld [vmem:[%s10993 + $0xa8] sm:$0xff]
  %v11009 = vld [vmem:[%s10993 + $0xb0] sm:$0xff]
  %v11010 = vld [vmem:[%s10993 + $0xc0] sm:$0xff]
  %v11011 = vld [vmem:[%s10993 + $0xc8] sm:$0xff]
  %v11012 = vld [vmem:[%s10993 + $0xd8] sm:$0xff]
  %v11013 = vld [vmem:[%s10993 + $0xe0] sm:$0xff]
  %v11014 = vld [vmem:[%s10993 + $0xf0] sm:$0xff]
  %v11015 = vld [vmem:[%s10993 + $0xf8] sm:$0xff]
  %v11016 = vld [vmem:[%s10993 + $0x108] sm:$0xff]
  %v11017 = vld [vmem:[%s10993 + $0x110] sm:$0xff]
  %v11018 = vld [vmem:[%s10993 + $0x120] sm:$0xff]
  %v11019 = vld [vmem:[%s10993 + $0x128] sm:$0xff]
  %v11020 = vld [vmem:[%s10993 + $0x138] sm:$0xff]
  %v11021 = vld [vmem:[%s10993 + $0x140] sm:$0xff]
  %v11022 = vld [vmem:[%s10993 + $0x150] sm:$0xff]
  %v11023 = vld [vmem:[%s10993 + $0x158] sm:$0xff]
  %v11024 = vld [vmem:[%s10993 + $0x168] sm:$0xff]
  %v11025 = vld [vmem:[%s10993 + $0x170] sm:$0xff]
  %v11026 = vld [vmem:[%s10993 + $0x1b0] sm:$0xff]
  %v11027 = vld [vmem:[%s10993 + $0x1b8] sm:$0xff]
  %v11028 = vld [vmem:[%s10993 + $0x1c8] sm:$0xff]
  %v11029 = vld [vmem:[%s10993 + $0x1d0] sm:$0xff]
  %v11030 = vld [vmem:[%s10993 + $0x1e0] sm:$0xff]
  %v11031 = vld [vmem:[%s10993 + $0x1e8] sm:$0xff]
  %v11032 = vld [vmem:[%s10993 + $0x1f8] sm:$0xff]
  %v11033 = vld [vmem:[%s10993 + $0x200] sm:$0xff]
  %v11034 = vld [vmem:[%s10993 + $0x210] sm:$0xff]
  %v11035 = vld [vmem:[%s10993 + $0x218] sm:$0xff]
  %v11036 = vld [vmem:[%s10993 + $0x228] sm:$0xff]
  %v11037 = vld [vmem:[%s10993 + $0x230] sm:$0xff]
  %v11038 = vld [vmem:[%s10993 + $0x240] sm:$0xff]
  %v11039 = vld [vmem:[%s10993 + $0x248] sm:$0xff]
  %v11040 = vld [vmem:[%s10993 + $0x258] sm:$0xff]
  %v11041 = vld [vmem:[%s10993 + $0x260] sm:$0xff]
  %v11042 = vld [vmem:[%s10993 + $0x270] sm:$0xff]
  %v11043 = vld [vmem:[%s10993 + $0x278] sm:$0xff]
  %v11044 = vld [vmem:[%s10993 + $0x288] sm:$0xff]
  %v11045 = vld [vmem:[%s10993 + $0x290] sm:$0xff]
  %v11046 = vld [vmem:[%s10993 + $0x2a0] sm:$0xff]
  %v11047 = vld [vmem:[%s10993 + $0x2a8] sm:$0xff]
  %v11048 = vld [vmem:[%s10993 + $0x2b8] sm:$0xff]
  %v11049 = vld [vmem:[%s10993 + $0x2c0] sm:$0xff]
  %v11050 = vld [vmem:[%s10993 + $0x2d0] sm:$0xff]
  %v11051 = vld [vmem:[%s10993 + $0x2d8] sm:$0xff]
  %v11052 = vld [vmem:[%s10993 + $0x2e8] sm:$0xff]
  %v11053 = vld [vmem:[%s10993 + $0x2f0] sm:$0xff]
  %v11054 = vld [vmem:[%s10993 + $0x300] sm:$0xff]
  %v11055 = vld [vmem:[%s10993 + $0x308] sm:$0xff]
  %v11056 = vld [vmem:[%s10993 + $0x318] sm:$0xff]
  %v11057 = vld [vmem:[%s10993 + $0x320] sm:$0xff]
  %s11058 = scalar_lea.vmem %s4, 24
  %v11059 = vld [vmem:[%s11058] sm:$0xf]
  %v11061 = vsel %vm26, %v10994, 0
  %v11064 = vsel %vm26, %v10995, 0
  %v11067 = vsel %vm26, %v10996, 0
  %v11070 = vsel %vm26, %v10997, 0
  %v11073 = vsel %vm26, %v10998, 0
  %v11076 = vsel %vm26, %v10999, 0
  %v11079 = vsel %vm26, %v11000, 0
  %v11082 = vsel %vm26, %v11001, 0
  %v11085 = vsel %vm26, %v11002, 0
  %v11088 = vsel %vm26, %v11003, 0
  %v11091 = vsel %vm26, %v11004, 0
  %v11094 = vsel %vm26, %v11005, 0
  %v11097 = vsel %vm26, %v11006, 0
  %v11100 = vsel %vm26, %v11007, 0
  %v11103 = vsel %vm26, %v11008, 0
  %v11106 = vsel %vm26, %v11009, 0
  %v11109 = vsel %vm26, %v11010, 0
  %v11112 = vsel %vm26, %v11011, 0
  %v11115 = vsel %vm26, %v11012, 0
  %v11118 = vsel %vm26, %v11013, 0
  %v11121 = vsel %vm26, %v11014, 0
  %v11124 = vsel %vm26, %v11015, 0
  %v11127 = vsel %vm26, %v11016, 0
  %v11130 = vsel %vm26, %v11017, 0
  %v11133 = vsel %vm26, %v11018, 0
  %v11136 = vsel %vm26, %v11019, 0
  %v11139 = vsel %vm26, %v11020, 0
  %v11142 = vsel %vm26, %v11021, 0
  %v11145 = vsel %vm26, %v11022, 0
  %v11148 = vsel %vm26, %v11023, 0
  %v11151 = vsel %vm26, %v11024, 0
  %v11154 = vsel %vm26, %v11025, 0
  %v11157 = vsel %vm26, %v11026, 0
  %v11160 = vsel %vm26, %v11027, 0
  %v11163 = vsel %vm26, %v11028, 0
  %v11166 = vsel %vm26, %v11029, 0
  %v11169 = vsel %vm26, %v11030, 0
  %v11172 = vsel %vm26, %v11031, 0
  %v11175 = vsel %vm26, %v11032, 0
  %v11178 = vsel %vm26, %v11033, 0
  %v11181 = vsel %vm26, %v11034, 0
  %v11184 = vsel %vm26, %v11035, 0
  %v11187 = vsel %vm26, %v11036, 0
  %v11190 = vsel %vm26, %v11037, 0
  %v11193 = vsel %vm26, %v11038, 0
  %v11196 = vsel %vm26, %v11039, 0
  %v11199 = vsel %vm26, %v11040, 0
  %v11202 = vsel %vm26, %v11041, 0
  %v11205 = vsel %vm26, %v11042, 0
  %v11208 = vsel %vm26, %v11043, 0
  %v11211 = vsel %vm26, %v11044, 0
  %v11214 = vsel %vm26, %v11045, 0
  %v11217 = vsel %vm26, %v11046, 0
  %v11220 = vsel %vm26, %v11047, 0
  %v11223 = vsel %vm26, %v11048, 0
  %v11226 = vsel %vm26, %v11049, 0
  %v11229 = vsel %vm26, %v11050, 0
  %v11232 = vsel %vm26, %v11051, 0
  %v11235 = vsel %vm26, %v11052, 0
  %v11238 = vsel %vm26, %v11053, 0
  %v11241 = vsel %vm26, %v11054, 0
  %v11244 = vsel %vm26, %v11055, 0
  %v11247 = vsel %vm26, %v11056, 0
  %v11250 = vsel %vm26, %v11057, 0
  %v11253 = vsel %vm651, %v11059, 0
  %11255 = vmatprep.subr.mxu0 0.0
  %11256 = vmatpush1.msra.mxu0 %v11253
  %11257 = vmatprep.subr.mxu0 0.0
  %11258 = vmatpush1.msra.mxu0 0.0
  %11259 = vmatprep.subr.mxu0 0.0
  %11260 = vmatpush1.msra.mxu0 0.0
  %11261 = vmatprep.subr.mxu0 0.0
  %11262 = vmatpush1.msra.mxu0 0.0
  %11263 = vmatprep.subr.mxu0 0.0
  %11264 = vmatpush1.msra.mxu0 0.0
  %11265 = vmatprep.subr.mxu0 0.0
  %11266 = vmatpush1.msra.mxu0 0.0
  %11267 = vmatprep.subr.mxu0 0.0
  %11268 = vmatpush1.msra.mxu0 0.0
  %11269 = vmatprep.subr.mxu0 0.0
  %11270 = vmatpush1.msra.mxu0 0.0
  %11271 = vmatprep.subr.mxu0 0.0
  %11272 = vmatpush1.msra.mxu0 0.0
  %11273 = vmatprep.subr.mxu0 0.0
  %11274 = vmatpush1.msra.mxu0 0.0
  %11275 = vmatprep.subr.mxu0 0.0
  %11276 = vmatpush1.msra.mxu0 0.0
  %11277 = vmatprep.subr.mxu0 0.0
  %11278 = vmatpush1.msra.mxu0 0.0
  %11279 = vmatprep.subr.mxu0 0.0
  %11280 = vmatpush1.msra.mxu0 0.0
  %11281 = vmatprep.subr.mxu0 0.0
  %11282 = vmatpush1.msra.mxu0 0.0
  %11283 = vmatprep.subr.mxu0 0.0
  %11284 = vmatpush1.msra.mxu0 0.0
  %11285 = vmatprep.subr.mxu0 0.0
  %11286 = vmatpush1.msra.mxu0 0.0
  %11287 = vmatprep.subr.mxu0 0.0
  %11288 = vmatpush1.msra.mxu0 0.0
  %11289 = vmatprep.subr.mxu0 0.0
  %11290 = vmatpush1.msra.mxu0 0.0
  %11291 = vmatprep.subr.mxu0 0.0
  %11292 = vmatpush1.msra.mxu0 0.0
  %11293 = vmatprep.subr.mxu0 0.0
  %11294 = vmatpush1.msra.mxu0 0.0
  %11295 = vmatprep.subr.mxu0 0.0
  %11296 = vmatpush1.msra.mxu0 0.0
  %11297 = vmatprep.subr.mxu0 0.0
  %11298 = vmatpush1.msra.mxu0 0.0
  %11299 = vmatprep.subr.mxu0 0.0
  %11300 = vmatpush1.msra.mxu0 0.0
  %11301 = vmatprep.subr.mxu0 0.0
  %11302 = vmatpush1.msra.mxu0 0.0
  %11303 = vmatprep.subr.mxu0 0.0
  %11304 = vmatpush1.msra.mxu0 0.0
  %11305 = vmatprep.subr.mxu0 0.0
  %11306 = vmatpush1.msra.mxu0 0.0
  %11307 = vmatprep.subr.mxu0 0.0
  %11308 = vmatpush1.msra.mxu0 0.0
  %11309 = vmatprep.subr.mxu0 0.0
  %11310 = vmatpush1.msra.mxu0 0.0
  %11311 = vmatprep.subr.mxu0 0.0
  %11312 = vmatpush1.msra.mxu0 0.0
  %11313 = vmatprep.subr.mxu0 0.0
  %11314 = vmatpush1.msra.mxu0 0.0
  %11315 = vmatprep.subr.mxu0 0.0
  %11316 = vmatpush1.msra.mxu0 0.0
  %11317 = vmatprep.subr.mxu0 0.0
  %11318 = vmatpush1.msra.mxu0 0.0
  %11319 = vmatprep.mubr.f32.mxu0 0.0
  %11320 = vmatmul.mubr.f32.gmra.mrb[0].mxu0 %v11061
  %v11321 = vpop.f32.mrb[0].mxu0
  %v11322 = vadd.f32 0.0, %v11321
  %v11323 = vpop.f32.mrb[0].mxu0
  %11324 = vmatprep.mubr.f32.mxu0 0.0
  %11325 = vmatmul.mubr.f32.gmra.mrb[0].mxu0 %v11064
  %v11326 = vpop.f32.mrb[0].mxu0
  %v11327 = vadd.f32 0.0, %v11326
  %v11328 = vpop.f32.mrb[0].mxu0
  %11329 = vmatprep.mubr.f32.mxu0 0.0
  %11330 = vmatmul.mubr.f32.gmra.mrb[0].mxu0 %v11067
  %v11331 = vpop.f32.mrb[0].mxu0
  %v11332 = vadd.f32 0.0, %v11331
  %v11333 = vpop.f32.mrb[0].mxu0
  %11334 = vmatprep.mubr.f32.mxu0 0.0
  %11335 = vmatmul.mubr.f32.gmra.mrb[0].mxu0 %v11070
  %v11336 = vpop.f32.mrb[0].mxu0
  %v11337 = vadd.f32 0.0, %v11336
  %v11338 = vpop.f32.mrb[0].mxu0
  %11339 = vmatprep.mubr.f32.mxu0 0.0
  %11340 = vmatmul.mubr.f32.gmra.mrb[0].mxu0 %v11073
  %v11341 = vpop.f32.mrb[0].mxu0
  %v11342 = vadd.f32 0.0, %v11341
  %v11343 = vpop.f32.mrb[0].mxu0
  %11344 = vmatprep.mubr.f32.mxu0 0.0
  %11345 = vmatmul.mubr.f32.gmra.mrb[0].mxu0 %v11076
  %v11346 = vpop.f32.mrb[0].mxu0
  %v11347 = vadd.f32 0.0, %v11346
  %v11348 = vpop.f32.mrb[0].mxu0
  %11349 = vmatprep.mubr.f32.mxu0 0.0
  %11350 = vmatmul.mubr.f32.gmra.mrb[0].mxu0 %v11079
  %v11351 = vpop.f32.mrb[0].mxu0
  %v11352 = vadd.f32 0.0, %v11351
  %v11353 = vpop.f32.mrb[0].mxu0
  %11354 = vmatprep.mubr.f32.mxu0 0.0
  %11355 = vmatmul.mubr.f32.gmra.mrb[0].mxu0 %v11082
  %v11356 = vpop.f32.mrb[0].mxu0
  %v11357 = vadd.f32 0.0, %v11356
  %v11358 = vpop.f32.mrb[0].mxu0
  %11359 = vmatprep.mubr.f32.mxu0 0.0
  %11360 = vmatmul.mubr.f32.gmra.mrb[0].mxu0 %v11085
  %v11361 = vpop.f32.mrb[0].mxu0
  %v11362 = vadd.f32 0.0, %v11361
  %v11363 = vpop.f32.mrb[0].mxu0
  %11364 = vmatprep.mubr.f32.mxu0 0.0
  %11365 = vmatmul.mubr.f32.gmra.mrb[0].mxu0 %v11088
  %v11366 = vpop.f32.mrb[0].mxu0
  %v11367 = vadd.f32 0.0, %v11366
  %v11368 = vpop.f32.mrb[0].mxu0
  %11369 = vmatprep.mubr.f32.mxu0 0.0
  %11370 = vmatmul.mubr.f32.gmra.mrb[0].mxu0 %v11091
  %v11371 = vpop.f32.mrb[0].mxu0
  %v11372 = vadd.f32 0.0, %v11371
  %v11373 = vpop.f32.mrb[0].mxu0
  %11374 = vmatprep.mubr.f32.mxu0 0.0
  %11375 = vmatmul.mubr.f32.gmra.mrb[0].mxu0 %v11094
  %v11376 = vpop.f32.mrb[0].mxu0
  %v11377 = vadd.f32 0.0, %v11376
  %v11378 = vpop.f32.mrb[0].mxu0
  %11379 = vmatprep.mubr.f32.mxu0 0.0
  %11380 = vmatmul.mubr.f32.gmra.mrb[0].mxu0 %v11097
  %v11381 = vpop.f32.mrb[0].mxu0
  %v11382 = vadd.f32 0.0, %v11381
  %v11383 = vpop.f32.mrb[0].mxu0
  %11384 = vmatprep.mubr.f32.mxu0 0.0
  %11385 = vmatmul.mubr.f32.gmra.mrb[0].mxu0 %v11100
  %v11386 = vpop.f32.mrb[0].mxu0
  %v11387 = vadd.f32 0.0, %v11386
  %v11388 = vpop.f32.mrb[0].mxu0
  %11389 = vmatprep.mubr.f32.mxu0 0.0
  %11390 = vmatmul.mubr.f32.gmra.mrb[0].mxu0 %v11103
  %v11391 = vpop.f32.mrb[0].mxu0
  %v11392 = vadd.f32 0.0, %v11391
  %v11393 = vpop.f32.mrb[0].mxu0
  %11394 = vmatprep.mubr.f32.mxu0 0.0
  %11395 = vmatmul.mubr.f32.gmra.mrb[0].mxu0 %v11106
  %v11396 = vpop.f32.mrb[0].mxu0
  %v11397 = vadd.f32 0.0, %v11396
  %v11398 = vpop.f32.mrb[0].mxu0
  %11399 = vmatprep.mubr.f32.mxu0 0.0
  %11400 = vmatmul.mubr.f32.gmra.mrb[0].mxu0 %v11109
  %v11401 = vpop.f32.mrb[0].mxu0
  %v11402 = vadd.f32 0.0, %v11401
  %v11403 = vpop.f32.mrb[0].mxu0
  %11404 = vmatprep.mubr.f32.mxu0 0.0
  %11405 = vmatmul.mubr.f32.gmra.mrb[0].mxu0 %v11112
  %v11406 = vpop.f32.mrb[0].mxu0
  %v11407 = vadd.f32 0.0, %v11406
  %v11408 = vpop.f32.mrb[0].mxu0
  %11409 = vmatprep.mubr.f32.mxu0 0.0
  %11410 = vmatmul.mubr.f32.gmra.mrb[0].mxu0 %v11115
  %v11411 = vpop.f32.mrb[0].mxu0
  %v11412 = vadd.f32 0.0, %v11411
  %v11413 = vpop.f32.mrb[0].mxu0
  %11414 = vmatprep.mubr.f32.mxu0 0.0
  %11415 = vmatmul.mubr.f32.gmra.mrb[0].mxu0 %v11118
  %v11416 = vpop.f32.mrb[0].mxu0
  %v11417 = vadd.f32 0.0, %v11416
  %v11418 = vpop.f32.mrb[0].mxu0
  %11419 = vmatprep.mubr.f32.mxu0 0.0
  %11420 = vmatmul.mubr.f32.gmra.mrb[0].mxu0 %v11121
  %v11421 = vpop.f32.mrb[0].mxu0
  %v11422 = vadd.f32 0.0, %v11421
  %v11423 = vpop.f32.mrb[0].mxu0
  %11424 = vmatprep.mubr.f32.mxu0 0.0
  %11425 = vmatmul.mubr.f32.gmra.mrb[0].mxu0 %v11124
  %v11426 = vpop.f32.mrb[0].mxu0
  %v11427 = vadd.f32 0.0, %v11426
  %v11428 = vpop.f32.mrb[0].mxu0
  %11429 = vmatprep.mubr.f32.mxu0 0.0
  %11430 = vmatmul.mubr.f32.gmra.mrb[0].mxu0 %v11127
  %v11431 = vpop.f32.mrb[0].mxu0
  %v11432 = vadd.f32 0.0, %v11431
  %v11433 = vpop.f32.mrb[0].mxu0
  %11434 = vmatprep.mubr.f32.mxu0 0.0
  %11435 = vmatmul.mubr.f32.gmra.mrb[0].mxu0 %v11130
  %v11436 = vpop.f32.mrb[0].mxu0
  %v11437 = vadd.f32 0.0, %v11436
  %v11438 = vpop.f32.mrb[0].mxu0
  %11439 = vmatprep.mubr.f32.mxu0 0.0
  %11440 = vmatmul.mubr.f32.gmra.mrb[0].mxu0 %v11133
  %v11441 = vpop.f32.mrb[0].mxu0
  %v11442 = vadd.f32 0.0, %v11441
  %v11443 = vpop.f32.mrb[0].mxu0
  %11444 = vmatprep.mubr.f32.mxu0 0.0
  %11445 = vmatmul.mubr.f32.gmra.mrb[0].mxu0 %v11136
  %v11446 = vpop.f32.mrb[0].mxu0
  %v11447 = vadd.f32 0.0, %v11446
  %v11448 = vpop.f32.mrb[0].mxu0
  %11449 = vmatprep.mubr.f32.mxu0 0.0
  %11450 = vmatmul.mubr.f32.gmra.mrb[0].mxu0 %v11139
  %v11451 = vpop.f32.mrb[0].mxu0
  %v11452 = vadd.f32 0.0, %v11451
  %v11453 = vpop.f32.mrb[0].mxu0
  %11454 = vmatprep.mubr.f32.mxu0 0.0
  %11455 = vmatmul.mubr.f32.gmra.mrb[0].mxu0 %v11142
  %v11456 = vpop.f32.mrb[0].mxu0
  %v11457 = vadd.f32 0.0, %v11456
  %v11458 = vpop.f32.mrb[0].mxu0
  %11459 = vmatprep.mubr.f32.mxu0 0.0
  %11460 = vmatmul.mubr.f32.gmra.mrb[0].mxu0 %v11145
  %v11461 = vpop.f32.mrb[0].mxu0
  %v11462 = vadd.f32 0.0, %v11461
  %v11463 = vpop.f32.mrb[0].mxu0
  %11464 = vmatprep.mubr.f32.mxu0 0.0
  %11465 = vmatmul.mubr.f32.gmra.mrb[0].mxu0 %v11148
  %v11466 = vpop.f32.mrb[0].mxu0
  %v11467 = vadd.f32 0.0, %v11466
  %v11468 = vpop.f32.mrb[0].mxu0
  %11469 = vmatprep.mubr.f32.mxu0 0.0
  %11470 = vmatmul.mubr.f32.gmra.mrb[0].mxu0 %v11151
  %v11471 = vpop.f32.mrb[0].mxu0
  %v11472 = vadd.f32 0.0, %v11471
  %v11473 = vpop.f32.mrb[0].mxu0
  %11474 = vmatprep.mubr.f32.mxu0 0.0
  %11475 = vmatmul.mubr.f32.gmra.mrb[0].mxu0 %v11154
  %v11476 = vpop.f32.mrb[0].mxu0
  %v11477 = vadd.f32 0.0, %v11476
  %v11478 = vpop.f32.mrb[0].mxu0
  %11479 = vmatprep.mubr.f32.mxu0 0.0
  %11480 = vmatmul.mubr.f32.gmra.mrb[0].mxu0 %v11157
  %v11481 = vpop.f32.mrb[0].mxu0
  %v11482 = vadd.f32 0.0, %v11481
  %v11483 = vpop.f32.mrb[0].mxu0
  %11484 = vmatprep.mubr.f32.mxu0 0.0
  %11485 = vmatmul.mubr.f32.gmra.mrb[0].mxu0 %v11160
  %v11486 = vpop.f32.mrb[0].mxu0
  %v11487 = vadd.f32 0.0, %v11486
  %v11488 = vpop.f32.mrb[0].mxu0
  %11489 = vmatprep.mubr.f32.mxu0 0.0
  %11490 = vmatmul.mubr.f32.gmra.mrb[0].mxu0 %v11163
  %v11491 = vpop.f32.mrb[0].mxu0
  %v11492 = vadd.f32 0.0, %v11491
  %v11493 = vpop.f32.mrb[0].mxu0
  %11494 = vmatprep.mubr.f32.mxu0 0.0
  %11495 = vmatmul.mubr.f32.gmra.mrb[0].mxu0 %v11166
  %v11496 = vpop.f32.mrb[0].mxu0
  %v11497 = vadd.f32 0.0, %v11496
  %v11498 = vpop.f32.mrb[0].mxu0
  %11499 = vmatprep.mubr.f32.mxu0 0.0
  %11500 = vmatmul.mubr.f32.gmra.mrb[0].mxu0 %v11169
  %v11501 = vpop.f32.mrb[0].mxu0
  %v11502 = vadd.f32 0.0, %v11501
  %v11503 = vpop.f32.mrb[0].mxu0
  %11504 = vmatprep.mubr.f32.mxu0 0.0
  %11505 = vmatmul.mubr.f32.gmra.mrb[0].mxu0 %v11172
  %v11506 = vpop.f32.mrb[0].mxu0
  %v11507 = vadd.f32 0.0, %v11506
  %v11508 = vpop.f32.mrb[0].mxu0
  %11509 = vmatprep.mubr.f32.mxu0 0.0
  %11510 = vmatmul.mubr.f32.gmra.mrb[0].mxu0 %v11175
  %v11511 = vpop.f32.mrb[0].mxu0
  %v11512 = vadd.f32 0.0, %v11511
  %v11513 = vpop.f32.mrb[0].mxu0
  %11514 = vmatprep.mubr.f32.mxu0 0.0
  %11515 = vmatmul.mubr.f32.gmra.mrb[0].mxu0 %v11178
  %v11516 = vpop.f32.mrb[0].mxu0
  %v11517 = vadd.f32 0.0, %v11516
  %v11518 = vpop.f32.mrb[0].mxu0
  %11519 = vmatprep.mubr.f32.mxu0 0.0
  %11520 = vmatmul.mubr.f32.gmra.mrb[0].mxu0 %v11181
  %v11521 = vpop.f32.mrb[0].mxu0
  %v11522 = vadd.f32 0.0, %v11521
  %v11523 = vpop.f32.mrb[0].mxu0
  %11524 = vmatprep.mubr.f32.mxu0 0.0
  %11525 = vmatmul.mubr.f32.gmra.mrb[0].mxu0 %v11184
  %v11526 = vpop.f32.mrb[0].mxu0
  %v11527 = vadd.f32 0.0, %v11526
  %v11528 = vpop.f32.mrb[0].mxu0
  %11529 = vmatprep.mubr.f32.mxu0 0.0
  %11530 = vmatmul.mubr.f32.gmra.mrb[0].mxu0 %v11187
  %v11531 = vpop.f32.mrb[0].mxu0
  %v11532 = vadd.f32 0.0, %v11531
  %v11533 = vpop.f32.mrb[0].mxu0
  %11534 = vmatprep.mubr.f32.mxu0 0.0
  %11535 = vmatmul.mubr.f32.gmra.mrb[0].mxu0 %v11190
  %v11536 = vpop.f32.mrb[0].mxu0
  %v11537 = vadd.f32 0.0, %v11536
  %v11538 = vpop.f32.mrb[0].mxu0
  %11539 = vmatprep.mubr.f32.mxu0 0.0
  %11540 = vmatmul.mubr.f32.gmra.mrb[0].mxu0 %v11193
  %v11541 = vpop.f32.mrb[0].mxu0
  %v11542 = vadd.f32 0.0, %v11541
  %v11543 = vpop.f32.mrb[0].mxu0
  %11544 = vmatprep.mubr.f32.mxu0 0.0
  %11545 = vmatmul.mubr.f32.gmra.mrb[0].mxu0 %v11196
  %v11546 = vpop.f32.mrb[0].mxu0
  %v11547 = vadd.f32 0.0, %v11546
  %v11548 = vpop.f32.mrb[0].mxu0
  %11549 = vmatprep.mubr.f32.mxu0 0.0
  %11550 = vmatmul.mubr.f32.gmra.mrb[0].mxu0 %v11199
  %v11551 = vpop.f32.mrb[0].mxu0
  %v11552 = vadd.f32 0.0, %v11551
  %v11553 = vpop.f32.mrb[0].mxu0
  %11554 = vmatprep.mubr.f32.mxu0 0.0
  %11555 = vmatmul.mubr.f32.gmra.mrb[0].mxu0 %v11202
  %v11556 = vpop.f32.mrb[0].mxu0
  %v11557 = vadd.f32 0.0, %v11556
  %v11558 = vpop.f32.mrb[0].mxu0
  %11559 = vmatprep.mubr.f32.mxu0 0.0
  %11560 = vmatmul.mubr.f32.gmra.mrb[0].mxu0 %v11205
  %v11561 = vpop.f32.mrb[0].mxu0
  %v11562 = vadd.f32 0.0, %v11561
  %v11563 = vpop.f32.mrb[0].mxu0
  %11564 = vmatprep.mubr.f32.mxu0 0.0
  %11565 = vmatmul.mubr.f32.gmra.mrb[0].mxu0 %v11208
  %v11566 = vpop.f32.mrb[0].mxu0
  %v11567 = vadd.f32 0.0, %v11566
  %v11568 = vpop.f32.mrb[0].mxu0
  %11569 = vmatprep.mubr.f32.mxu0 0.0
  %11570 = vmatmul.mubr.f32.gmra.mrb[0].mxu0 %v11211
  %v11571 = vpop.f32.mrb[0].mxu0
  %v11572 = vadd.f32 0.0, %v11571
  %v11573 = vpop.f32.mrb[0].mxu0
  %11574 = vmatprep.mubr.f32.mxu0 0.0
  %11575 = vmatmul.mubr.f32.gmra.mrb[0].mxu0 %v11214
  %v11576 = vpop.f32.mrb[0].mxu0
  %v11577 = vadd.f32 0.0, %v11576
  %v11578 = vpop.f32.mrb[0].mxu0
  %11579 = vmatprep.mubr.f32.mxu0 0.0
  %11580 = vmatmul.mubr.f32.gmra.mrb[0].mxu0 %v11217
  %v11581 = vpop.f32.mrb[0].mxu0
  %v11582 = vadd.f32 0.0, %v11581
  %v11583 = vpop.f32.mrb[0].mxu0
  %11584 = vmatprep.mubr.f32.mxu0 0.0
  %11585 = vmatmul.mubr.f32.gmra.mrb[0].mxu0 %v11220
  %v11586 = vpop.f32.mrb[0].mxu0
  %v11587 = vadd.f32 0.0, %v11586
  %v11588 = vpop.f32.mrb[0].mxu0
  %11589 = vmatprep.mubr.f32.mxu0 0.0
  %11590 = vmatmul.mubr.f32.gmra.mrb[0].mxu0 %v11223
  %v11591 = vpop.f32.mrb[0].mxu0
  %v11592 = vadd.f32 0.0, %v11591
  %v11593 = vpop.f32.mrb[0].mxu0
  %11594 = vmatprep.mubr.f32.mxu0 0.0
  %11595 = vmatmul.mubr.f32.gmra.mrb[0].mxu0 %v11226
  %v11596 = vpop.f32.mrb[0].mxu0
  %v11597 = vadd.f32 0.0, %v11596
  %v11598 = vpop.f32.mrb[0].mxu0
  %11599 = vmatprep.mubr.f32.mxu0 0.0
  %11600 = vmatmul.mubr.f32.gmra.mrb[0].mxu0 %v11229
  %v11601 = vpop.f32.mrb[0].mxu0
  %v11602 = vadd.f32 0.0, %v11601
  %v11603 = vpop.f32.mrb[0].mxu0
  %11604 = vmatprep.mubr.f32.mxu0 0.0
  %11605 = vmatmul.mubr.f32.gmra.mrb[0].mxu0 %v11232
  %v11606 = vpop.f32.mrb[0].mxu0
  %v11607 = vadd.f32 0.0, %v11606
  %v11608 = vpop.f32.mrb[0].mxu0
  %11609 = vmatprep.mubr.f32.mxu0 0.0
  %11610 = vmatmul.mubr.f32.gmra.mrb[0].mxu0 %v11235
  %v11611 = vpop.f32.mrb[0].mxu0
  %v11612 = vadd.f32 0.0, %v11611
  %v11613 = vpop.f32.mrb[0].mxu0
  %11614 = vmatprep.mubr.f32.mxu0 0.0
  %11615 = vmatmul.mubr.f32.gmra.mrb[0].mxu0 %v11238
  %v11616 = vpop.f32.mrb[0].mxu0
  %v11617 = vadd.f32 0.0, %v11616
  %v11618 = vpop.f32.mrb[0].mxu0
  %11619 = vmatprep.mubr.f32.mxu0 0.0
  %11620 = vmatmul.mubr.f32.gmra.mrb[0].mxu0 %v11241
  %v11621 = vpop.f32.mrb[0].mxu0
  %v11622 = vadd.f32 0.0, %v11621
  %v11623 = vpop.f32.mrb[0].mxu0
  %11624 = vmatprep.mubr.f32.mxu0 0.0
  %11625 = vmatmul.mubr.f32.gmra.mrb[0].mxu0 %v11244
  %v11626 = vpop.f32.mrb[0].mxu0
  %v11627 = vadd.f32 0.0, %v11626
  %v11628 = vpop.f32.mrb[0].mxu0
  %11629 = vmatprep.mubr.f32.mxu0 0.0
  %11630 = vmatmul.mubr.f32.gmra.mrb[0].mxu0 %v11247
  %v11631 = vpop.f32.mrb[0].mxu0
  %v11632 = vadd.f32 0.0, %v11631
  %v11633 = vpop.f32.mrb[0].mxu0
  %11634 = vmatprep.mubr.f32.mxu0 0.0
  %11635 = vmatmul.mubr.f32.gmra.mrb[0].mxu0 %v11250
  %v11636 = vpop.f32.mrb[0].mxu0
  %v11637 = vadd.f32 0.0, %v11636
  %v11638 = vpop.f32.mrb[0].mxu0
  %11639 = vdwg.mxu0
  %v11640 = vadd.f32 %v10929, %v11322
  %v11641 = vadd.f32 %v10930, %v11327
  %v11642 = vadd.f32 %v10931, %v11332
  %v11643 = vadd.f32 %v10932, %v11337
  %v11644 = vadd.f32 %v10933, %v11342
  %v11645 = vadd.f32 %v10934, %v11347
  %v11646 = vadd.f32 %v10935, %v11352
  %v11647 = vadd.f32 %v10936, %v11357
  %v11648 = vadd.f32 %v10937, %v11362
  %v11649 = vadd.f32 %v10938, %v11367
  %v11650 = vadd.f32 %v10939, %v11372
  %v11651 = vadd.f32 %v10940, %v11377
  %v11652 = vadd.f32 %v10941, %v11382
  %v11653 = vadd.f32 %v10942, %v11387
  %v11654 = vadd.f32 %v10943, %v11392
  %v11655 = vadd.f32 %v10944, %v11397
  %v11656 = vadd.f32 %v10945, %v11402
  %v11657 = vadd.f32 %v10946, %v11407
  %v11658 = vadd.f32 %v10947, %v11412
  %v11659 = vadd.f32 %v10948, %v11417
  %v11660 = vadd.f32 %v10949, %v11422
  %v11661 = vadd.f32 %v10950, %v11427
  %v11662 = vadd.f32 %v10951, %v11432
  %v11663 = vadd.f32 %v10952, %v11437
  %v11664 = vadd.f32 %v10953, %v11442
  %v11665 = vadd.f32 %v10954, %v11447
  %v11666 = vadd.f32 %v10955, %v11452
  %v11667 = vadd.f32 %v10956, %v11457
  %v11668 = vadd.f32 %v10957, %v11462
  %v11669 = vadd.f32 %v10958, %v11467
  %v11670 = vadd.f32 %v10959, %v11472
  %v11671 = vadd.f32 %v10960, %v11477
  %v11672 = vadd.f32 %v10961, %v11482
  %v11673 = vadd.f32 %v10962, %v11487
  %v11674 = vadd.f32 %v10963, %v11492
  %v11675 = vadd.f32 %v10964, %v11497
  %v11676 = vadd.f32 %v10965, %v11502
  %v11677 = vadd.f32 %v10966, %v11507
  %v11678 = vadd.f32 %v10967, %v11512
  %v11679 = vadd.f32 %v10968, %v11517
  %v11680 = vadd.f32 %v10969, %v11522
  %v11681 = vadd.f32 %v10970, %v11527
  %v11682 = vadd.f32 %v10971, %v11532
  %v11683 = vadd.f32 %v10972, %v11537
  %v11684 = vadd.f32 %v10973, %v11542
  %v11685 = vadd.f32 %v10974, %v11547
  %v11686 = vadd.f32 %v10975, %v11552
  %v11687 = vadd.f32 %v10976, %v11557
  %v11688 = vadd.f32 %v10977, %v11562
  %v11689 = vadd.f32 %v10978, %v11567
  %v11690 = vadd.f32 %v10979, %v11572
  %v11691 = vadd.f32 %v10980, %v11577
  %v11692 = vadd.f32 %v10981, %v11582
  %v11693 = vadd.f32 %v10982, %v11587
  %v11694 = vadd.f32 %v10983, %v11592
  %v11695 = vadd.f32 %v10984, %v11597
  %v11696 = vadd.f32 %v10985, %v11602
  %v11697 = vadd.f32 %v10986, %v11607
  %v11698 = vadd.f32 %v10987, %v11612
  %v11699 = vadd.f32 %v10988, %v11617
  %v11700 = vadd.f32 %v10989, %v11622
  %v11701 = vadd.f32 %v10990, %v11627
  %v11702 = vadd.f32 %v10991, %v11632
  %v11703 = vadd.f32 %v10992, %v11637
  %v11704 = vld [vmem:[%s10993 + $0x1] sm:$0xff]
  %v11705 = vld [vmem:[%s10993 + $0x9] sm:$0xff]
  %v11706 = vld [vmem:[%s10993 + $0x19] sm:$0xff]
  %v11707 = vld [vmem:[%s10993 + $0x21] sm:$0xff]
  %v11708 = vld [vmem:[%s10993 + $0x31] sm:$0xff]
  %v11709 = vld [vmem:[%s10993 + $0x39] sm:$0xff]
  %v11710 = vld [vmem:[%s10993 + $0x49] sm:$0xff]
  %v11711 = vld [vmem:[%s10993 + $0x51] sm:$0xff]
  %v11712 = vld [vmem:[%s10993 + $0x61] sm:$0xff]
  %v11713 = vld [vmem:[%s10993 + $0x69] sm:$0xff]
  %v11714 = vld [vmem:[%s10993 + $0x79] sm:$0xff]
  %v11715 = vld [vmem:[%s10993 + $0x81] sm:$0xff]
  %v11716 = vld [vmem:[%s10993 + $0x91] sm:$0xff]
  %v11717 = vld [vmem:[%s10993 + $0x99] sm:$0xff]
  %v11718 = vld [vmem:[%s10993 + $0xa9] sm:$0xff]
  %v11719 = vld [vmem:[%s10993 + $0xb1] sm:$0xff]
  %v11720 = vld [vmem:[%s10993 + $0xc1] sm:$0xff]
  %v11721 = vld [vmem:[%s10993 + $0xc9] sm:$0xff]
  %v11722 = vld [vmem:[%s10993 + $0xd9] sm:$0xff]
  %v11723 = vld [vmem:[%s10993 + $0xe1] sm:$0xff]
  %v11724 = vld [vmem:[%s10993 + $0xf1] sm:$0xff]
  %v11725 = vld [vmem:[%s10993 + $0xf9] sm:$0xff]
  %v11726 = vld [vmem:[%s10993 + $0x109] sm:$0xff]
  %v11727 = vld [vmem:[%s10993 + $0x111] sm:$0xff]
  %v11728 = vld [vmem:[%s10993 + $0x121] sm:$0xff]
  %v11729 = vld [vmem:[%s10993 + $0x129] sm:$0xff]
  %v11730 = vld [vmem:[%s10993 + $0x139] sm:$0xff]
  %v11731 = vld [vmem:[%s10993 + $0x141] sm:$0xff]
  %v11732 = vld [vmem:[%s10993 + $0x151] sm:$0xff]
  %v11733 = vld [vmem:[%s10993 + $0x159] sm:$0xff]
  %v11734 = vld [vmem:[%s10993 + $0x169] sm:$0xff]
  %v11735 = vld [vmem:[%s10993 + $0x171] sm:$0xff]
  %v11736 = vld [vmem:[%s10993 + $0x1b1] sm:$0xff]
  %v11737 = vld [vmem:[%s10993 + $0x1b9] sm:$0xff]
  %v11738 = vld [vmem:[%s10993 + $0x1c9] sm:$0xff]
  %v11739 = vld [vmem:[%s10993 + $0x1d1] sm:$0xff]
  %v11740 = vld [vmem:[%s10993 + $0x1e1] sm:$0xff]
  %v11741 = vld [vmem:[%s10993 + $0x1e9] sm:$0xff]
  %v11742 = vld [vmem:[%s10993 + $0x1f9] sm:$0xff]
  %v11743 = vld [vmem:[%s10993 + $0x201] sm:$0xff]
  %v11744 = vld [vmem:[%s10993 + $0x211] sm:$0xff]
  %v11745 = vld [vmem:[%s10993 + $0x219] sm:$0xff]
  %v11746 = vld [vmem:[%s10993 + $0x229] sm:$0xff]
  %v11747 = vld [vmem:[%s10993 + $0x231] sm:$0xff]
  %v11748 = vld [vmem:[%s10993 + $0x241] sm:$0xff]
  %v11749 = vld [vmem:[%s10993 + $0x249] sm:$0xff]
  %v11750 = vld [vmem:[%s10993 + $0x259] sm:$0xff]
  %v11751 = vld [vmem:[%s10993 + $0x261] sm:$0xff]
  %v11752 = vld [vmem:[%s10993 + $0x271] sm:$0xff]
  %v11753 = vld [vmem:[%s10993 + $0x279] sm:$0xff]
  %v11754 = vld [vmem:[%s10993 + $0x289] sm:$0xff]
  %v11755 = vld [vmem:[%s10993 + $0x291] sm:$0xff]
  %v11756 = vld [vmem:[%s10993 + $0x2a1] sm:$0xff]
  %v11757 = vld [vmem:[%s10993 + $0x2a9] sm:$0xff]
  %v11758 = vld [vmem:[%s10993 + $0x2b9] sm:$0xff]
  %v11759 = vld [vmem:[%s10993 + $0x2c1] sm:$0xff]
  %v11760 = vld [vmem:[%s10993 + $0x2d1] sm:$0xff]
  %v11761 = vld [vmem:[%s10993 + $0x2d9] sm:$0xff]
  %v11762 = vld [vmem:[%s10993 + $0x2e9] sm:$0xff]
  %v11763 = vld [vmem:[%s10993 + $0x2f1] sm:$0xff]
  %v11764 = vld [vmem:[%s10993 + $0x301] sm:$0xff]
  %v11765 = vld [vmem:[%s10993 + $0x309] sm:$0xff]
  %v11766 = vld [vmem:[%s10993 + $0x319] sm:$0xff]
  %v11767 = vld [vmem:[%s10993 + $0x321] sm:$0xff]
  %s11768 = scalar_lea.vmem %s4, 28
  %v11769 = vld [vmem:[%s11768] sm:$0xf]
  %v11771 = vsel %vm26, %v11704, 0
  %v11774 = vsel %vm26, %v11705, 0
  %v11777 = vsel %vm26, %v11706, 0
  %v11780 = vsel %vm26, %v11707, 0
  %v11783 = vsel %vm26, %v11708, 0
  %v11786 = vsel %vm26, %v11709, 0
  %v11789 = vsel %vm26, %v11710, 0
  %v11792 = vsel %vm26, %v11711, 0
  %v11795 = vsel %vm26, %v11712, 0
  %v11798 = vsel %vm26, %v11713, 0
  %v11801 = vsel %vm26, %v11714, 0
  %v11804 = vsel %vm26, %v11715, 0
  %v11807 = vsel %vm26, %v11716, 0
  %v11810 = vsel %vm26, %v11717, 0
  %v11813 = vsel %vm26, %v11718, 0
  %v11816 = vsel %vm26, %v11719, 0
  %v11819 = vsel %vm26, %v11720, 0
  %v11822 = vsel %vm26, %v11721, 0
  %v11825 = vsel %vm26, %v11722, 0
  %v11828 = vsel %vm26, %v11723, 0
  %v11831 = vsel %vm26, %v11724, 0
  %v11834 = vsel %vm26, %v11725, 0
  %v11837 = vsel %vm26, %v11726, 0
  %v11840 = vsel %vm26, %v11727, 0
  %v11843 = vsel %vm26, %v11728, 0
  %v11846 = vsel %vm26, %v11729, 0
  %v11849 = vsel %vm26, %v11730, 0
  %v11852 = vsel %vm26, %v11731, 0
  %v11855 = vsel %vm26, %v11732, 0
  %v11858 = vsel %vm26, %v11733, 0
  %v11861 = vsel %vm26, %v11734, 0
  %v11864 = vsel %vm26, %v11735, 0
  %v11867 = vsel %vm26, %v11736, 0
  %v11870 = vsel %vm26, %v11737, 0
  %v11873 = vsel %vm26, %v11738, 0
  %v11876 = vsel %vm26, %v11739, 0
  %v11879 = vsel %vm26, %v11740, 0
  %v11882 = vsel %vm26, %v11741, 0
  %v11885 = vsel %vm26, %v11742, 0
  %v11888 = vsel %vm26, %v11743, 0
  %v11891 = vsel %vm26, %v11744, 0
  %v11894 = vsel %vm26, %v11745, 0
  %v11897 = vsel %vm26, %v11746, 0
  %v11900 = vsel %vm26, %v11747, 0
  %v11903 = vsel %vm26, %v11748, 0
  %v11906 = vsel %vm26, %v11749, 0
  %v11909 = vsel %vm26, %v11750, 0
  %v11912 = vsel %vm26, %v11751, 0
  %v11915 = vsel %vm26, %v11752, 0
  %v11918 = vsel %vm26, %v11753, 0
  %v11921 = vsel %vm26, %v11754, 0
  %v11924 = vsel %vm26, %v11755, 0
  %v11927 = vsel %vm26, %v11756, 0
  %v11930 = vsel %vm26, %v11757, 0
  %v11933 = vsel %vm26, %v11758, 0
  %v11936 = vsel %vm26, %v11759, 0
  %v11939 = vsel %vm26, %v11760, 0
  %v11942 = vsel %vm26, %v11761, 0
  %v11945 = vsel %vm26, %v11762, 0
  %v11948 = vsel %vm26, %v11763, 0
  %v11951 = vsel %vm26, %v11764, 0
  %v11954 = vsel %vm26, %v11765, 0
  %v11957 = vsel %vm26, %v11766, 0
  %v11960 = vsel %vm26, %v11767, 0
  %v11963 = vsel %vm651, %v11769, 0
  %11965 = vmatprep.subr.mxu0 0.0
  %11966 = vmatpush1.msra.mxu0 %v11963
  %11967 = vmatprep.subr.mxu0 0.0
  %11968 = vmatpush1.msra.mxu0 0.0
  %11969 = vmatprep.subr.mxu0 0.0
  %11970 = vmatpush1.msra.mxu0 0.0
  %11971 = vmatprep.subr.mxu0 0.0
  %11972 = vmatpush1.msra.mxu0 0.0
  %11973 = vmatprep.subr.mxu0 0.0
  %11974 = vmatpush1.msra.mxu0 0.0
  %11975 = vmatprep.subr.mxu0 0.0
  %11976 = vmatpush1.msra.mxu0 0.0
  %11977 = vmatprep.subr.mxu0 0.0
  %11978 = vmatpush1.msra.mxu0 0.0
  %11979 = vmatprep.subr.mxu0 0.0
  %11980 = vmatpush1.msra.mxu0 0.0
  %11981 = vmatprep.subr.mxu0 0.0
  %11982 = vmatpush1.msra.mxu0 0.0
  %11983 = vmatprep.subr.mxu0 0.0
  %11984 = vmatpush1.msra.mxu0 0.0
  %11985 = vmatprep.subr.mxu0 0.0
  %11986 = vmatpush1.msra.mxu0 0.0
  %11987 = vmatprep.subr.mxu0 0.0
  %11988 = vmatpush1.msra.mxu0 0.0
  %11989 = vmatprep.subr.mxu0 0.0
  %11990 = vmatpush1.msra.mxu0 0.0
  %11991 = vmatprep.subr.mxu0 0.0
  %11992 = vmatpush1.msra.mxu0 0.0
  %11993 = vmatprep.subr.mxu0 0.0
  %11994 = vmatpush1.msra.mxu0 0.0
  %11995 = vmatprep.subr.mxu0 0.0
  %11996 = vmatpush1.msra.mxu0 0.0
  %11997 = vmatprep.subr.mxu0 0.0
  %11998 = vmatpush1.msra.mxu0 0.0
  %11999 = vmatprep.subr.mxu0 0.0
  %12000 = vmatpush1.msra.mxu0 0.0
  %12001 = vmatprep.subr.mxu0 0.0
  %12002 = vmatpush1.msra.mxu0 0.0
  %12003 = vmatprep.subr.mxu0 0.0
  %12004 = vmatpush1.msra.mxu0 0.0
  %12005 = vmatprep.subr.mxu0 0.0
  %12006 = vmatpush1.msra.mxu0 0.0
  %12007 = vmatprep.subr.mxu0 0.0
  %12008 = vmatpush1.msra.mxu0 0.0
  %12009 = vmatprep.subr.mxu0 0.0
  %12010 = vmatpush1.msra.mxu0 0.0
  %12011 = vmatprep.subr.mxu0 0.0
  %12012 = vmatpush1.msra.mxu0 0.0
  %12013 = vmatprep.subr.mxu0 0.0
  %12014 = vmatpush1.msra.mxu0 0.0
  %12015 = vmatprep.subr.mxu0 0.0
  %12016 = vmatpush1.msra.mxu0 0.0
  %12017 = vmatprep.subr.mxu0 0.0
  %12018 = vmatpush1.msra.mxu0 0.0
  %12019 = vmatprep.subr.mxu0 0.0
  %12020 = vmatpush1.msra.mxu0 0.0
  %12021 = vmatprep.subr.mxu0 0.0
  %12022 = vmatpush1.msra.mxu0 0.0
  %12023 = vmatprep.subr.mxu0 0.0
  %12024 = vmatpush1.msra.mxu0 0.0
  %12025 = vmatprep.subr.mxu0 0.0
  %12026 = vmatpush1.msra.mxu0 0.0
  %12027 = vmatprep.subr.mxu0 0.0
  %12028 = vmatpush1.msra.mxu0 0.0
  %12029 = vmatprep.mubr.f32.mxu0 0.0
  %12030 = vmatmul.mubr.f32.gmra.mrb[0].mxu0 %v11771
  %v12031 = vpop.f32.mrb[0].mxu0
  %v12032 = vadd.f32 0.0, %v12031
  %v12033 = vpop.f32.mrb[0].mxu0
  %12034 = vmatprep.mubr.f32.mxu0 0.0
  %12035 = vmatmul.mubr.f32.gmra.mrb[0].mxu0 %v11774
  %v12036 = vpop.f32.mrb[0].mxu0
  %v12037 = vadd.f32 0.0, %v12036
  %v12038 = vpop.f32.mrb[0].mxu0
  %12039 = vmatprep.mubr.f32.mxu0 0.0
  %12040 = vmatmul.mubr.f32.gmra.mrb[0].mxu0 %v11777
  %v12041 = vpop.f32.mrb[0].mxu0
  %v12042 = vadd.f32 0.0, %v12041
  %v12043 = vpop.f32.mrb[0].mxu0
  %12044 = vmatprep.mubr.f32.mxu0 0.0
  %12045 = vmatmul.mubr.f32.gmra.mrb[0].mxu0 %v11780
  %v12046 = vpop.f32.mrb[0].mxu0
  %v12047 = vadd.f32 0.0, %v12046
  %v12048 = vpop.f32.mrb[0].mxu0
  %12049 = vmatprep.mubr.f32.mxu0 0.0
  %12050 = vmatmul.mubr.f32.gmra.mrb[0].mxu0 %v11783
  %v12051 = vpop.f32.mrb[0].mxu0
  %v12052 = vadd.f32 0.0, %v12051
  %v12053 = vpop.f32.mrb[0].mxu0
  %12054 = vmatprep.mubr.f32.mxu0 0.0
  %12055 = vmatmul.mubr.f32.gmra.mrb[0].mxu0 %v11786
  %v12056 = vpop.f32.mrb[0].mxu0
  %v12057 = vadd.f32 0.0, %v12056
  %v12058 = vpop.f32.mrb[0].mxu0
  %12059 = vmatprep.mubr.f32.mxu0 0.0
  %12060 = vmatmul.mubr.f32.gmra.mrb[0].mxu0 %v11789
  %v12061 = vpop.f32.mrb[0].mxu0
  %v12062 = vadd.f32 0.0, %v12061
  %v12063 = vpop.f32.mrb[0].mxu0
  %12064 = vmatprep.mubr.f32.mxu0 0.0
  %12065 = vmatmul.mubr.f32.gmra.mrb[0].mxu0 %v11792
  %v12066 = vpop.f32.mrb[0].mxu0
  %v12067 = vadd.f32 0.0, %v12066
  %v12068 = vpop.f32.mrb[0].mxu0
  %12069 = vmatprep.mubr.f32.mxu0 0.0
  %12070 = vmatmul.mubr.f32.gmra.mrb[0].mxu0 %v11795
  %v12071 = vpop.f32.mrb[0].mxu0
  %v12072 = vadd.f32 0.0, %v12071
  %v12073 = vpop.f32.mrb[0].mxu0
  %12074 = vmatprep.mubr.f32.mxu0 0.0
  %12075 = vmatmul.mubr.f32.gmra.mrb[0].mxu0 %v11798
  %v12076 = vpop.f32.mrb[0].mxu0
  %v12077 = vadd.f32 0.0, %v12076
  %v12078 = vpop.f32.mrb[0].mxu0
  %12079 = vmatprep.mubr.f32.mxu0 0.0
  %12080 = vmatmul.mubr.f32.gmra.mrb[0].mxu0 %v11801
  %v12081 = vpop.f32.mrb[0].mxu0
  %v12082 = vadd.f32 0.0, %v12081
  %v12083 = vpop.f32.mrb[0].mxu0
  %12084 = vmatprep.mubr.f32.mxu0 0.0
  %12085 = vmatmul.mubr.f32.gmra.mrb[0].mxu0 %v11804
  %v12086 = vpop.f32.mrb[0].mxu0
  %v12087 = vadd.f32 0.0, %v12086
  %v12088 = vpop.f32.mrb[0].mxu0
  %12089 = vmatprep.mubr.f32.mxu0 0.0
  %12090 = vmatmul.mubr.f32.gmra.mrb[0].mxu0 %v11807
  %v12091 = vpop.f32.mrb[0].mxu0
  %v12092 = vadd.f32 0.0, %v12091
  %v12093 = vpop.f32.mrb[0].mxu0
  %12094 = vmatprep.mubr.f32.mxu0 0.0
  %12095 = vmatmul.mubr.f32.gmra.mrb[0].mxu0 %v11810
  %v12096 = vpop.f32.mrb[0].mxu0
  %v12097 = vadd.f32 0.0, %v12096
  %v12098 = vpop.f32.mrb[0].mxu0
  %12099 = vmatprep.mubr.f32.mxu0 0.0
  %12100 = vmatmul.mubr.f32.gmra.mrb[0].mxu0 %v11813
  %v12101 = vpop.f32.mrb[0].mxu0
  %v12102 = vadd.f32 0.0, %v12101
  %v12103 = vpop.f32.mrb[0].mxu0
  %12104 = vmatprep.mubr.f32.mxu0 0.0
  %12105 = vmatmul.mubr.f32.gmra.mrb[0].mxu0 %v11816
  %v12106 = vpop.f32.mrb[0].mxu0
  %v12107 = vadd.f32 0.0, %v12106
  %v12108 = vpop.f32.mrb[0].mxu0
  %12109 = vmatprep.mubr.f32.mxu0 0.0
  %12110 = vmatmul.mubr.f32.gmra.mrb[0].mxu0 %v11819
  %v12111 = vpop.f32.mrb[0].mxu0
  %v12112 = vadd.f32 0.0, %v12111
  %v12113 = vpop.f32.mrb[0].mxu0
  %12114 = vmatprep.mubr.f32.mxu0 0.0
  %12115 = vmatmul.mubr.f32.gmra.mrb[0].mxu0 %v11822
  %v12116 = vpop.f32.mrb[0].mxu0
  %v12117 = vadd.f32 0.0, %v12116
  %v12118 = vpop.f32.mrb[0].mxu0
  %12119 = vmatprep.mubr.f32.mxu0 0.0
  %12120 = vmatmul.mubr.f32.gmra.mrb[0].mxu0 %v11825
  %v12121 = vpop.f32.mrb[0].mxu0
  %v12122 = vadd.f32 0.0, %v12121
  %v12123 = vpop.f32.mrb[0].mxu0
  %12124 = vmatprep.mubr.f32.mxu0 0.0
  %12125 = vmatmul.mubr.f32.gmra.mrb[0].mxu0 %v11828
  %v12126 = vpop.f32.mrb[0].mxu0
  %v12127 = vadd.f32 0.0, %v12126
  %v12128 = vpop.f32.mrb[0].mxu0
  %12129 = vmatprep.mubr.f32.mxu0 0.0
  %12130 = vmatmul.mubr.f32.gmra.mrb[0].mxu0 %v11831
  %v12131 = vpop.f32.mrb[0].mxu0
  %v12132 = vadd.f32 0.0, %v12131
  %v12133 = vpop.f32.mrb[0].mxu0
  %12134 = vmatprep.mubr.f32.mxu0 0.0
  %12135 = vmatmul.mubr.f32.gmra.mrb[0].mxu0 %v11834
  %v12136 = vpop.f32.mrb[0].mxu0
  %v12137 = vadd.f32 0.0, %v12136
  %v12138 = vpop.f32.mrb[0].mxu0
  %12139 = vmatprep.mubr.f32.mxu0 0.0
  %12140 = vmatmul.mubr.f32.gmra.mrb[0].mxu0 %v11837
  %v12141 = vpop.f32.mrb[0].mxu0
  %v12142 = vadd.f32 0.0, %v12141
  %v12143 = vpop.f32.mrb[0].mxu0
  %12144 = vmatprep.mubr.f32.mxu0 0.0
  %12145 = vmatmul.mubr.f32.gmra.mrb[0].mxu0 %v11840
  %v12146 = vpop.f32.mrb[0].mxu0
  %v12147 = vadd.f32 0.0, %v12146
  %v12148 = vpop.f32.mrb[0].mxu0
  %12149 = vmatprep.mubr.f32.mxu0 0.0
  %12150 = vmatmul.mubr.f32.gmra.mrb[0].mxu0 %v11843
  %v12151 = vpop.f32.mrb[0].mxu0
  %v12152 = vadd.f32 0.0, %v12151
  %v12153 = vpop.f32.mrb[0].mxu0
  %12154 = vmatprep.mubr.f32.mxu0 0.0
  %12155 = vmatmul.mubr.f32.gmra.mrb[0].mxu0 %v11846
  %v12156 = vpop.f32.mrb[0].mxu0
  %v12157 = vadd.f32 0.0, %v12156
  %v12158 = vpop.f32.mrb[0].mxu0
  %12159 = vmatprep.mubr.f32.mxu0 0.0
  %12160 = vmatmul.mubr.f32.gmra.mrb[0].mxu0 %v11849
  %v12161 = vpop.f32.mrb[0].mxu0
  %v12162 = vadd.f32 0.0, %v12161
  %v12163 = vpop.f32.mrb[0].mxu0
  %12164 = vmatprep.mubr.f32.mxu0 0.0
  %12165 = vmatmul.mubr.f32.gmra.mrb[0].mxu0 %v11852
  %v12166 = vpop.f32.mrb[0].mxu0
  %v12167 = vadd.f32 0.0, %v12166
  %v12168 = vpop.f32.mrb[0].mxu0
  %12169 = vmatprep.mubr.f32.mxu0 0.0
  %12170 = vmatmul.mubr.f32.gmra.mrb[0].mxu0 %v11855
  %v12171 = vpop.f32.mrb[0].mxu0
  %v12172 = vadd.f32 0.0, %v12171
  %v12173 = vpop.f32.mrb[0].mxu0
  %12174 = vmatprep.mubr.f32.mxu0 0.0
  %12175 = vmatmul.mubr.f32.gmra.mrb[0].mxu0 %v11858
  %v12176 = vpop.f32.mrb[0].mxu0
  %v12177 = vadd.f32 0.0, %v12176
  %v12178 = vpop.f32.mrb[0].mxu0
  %12179 = vmatprep.mubr.f32.mxu0 0.0
  %12180 = vmatmul.mubr.f32.gmra.mrb[0].mxu0 %v11861
  %v12181 = vpop.f32.mrb[0].mxu0
  %v12182 = vadd.f32 0.0, %v12181
  %v12183 = vpop.f32.mrb[0].mxu0
  %12184 = vmatprep.mubr.f32.mxu0 0.0
  %12185 = vmatmul.mubr.f32.gmra.mrb[0].mxu0 %v11864
  %v12186 = vpop.f32.mrb[0].mxu0
  %v12187 = vadd.f32 0.0, %v12186
  %v12188 = vpop.f32.mrb[0].mxu0
  %12189 = vmatprep.mubr.f32.mxu0 0.0
  %12190 = vmatmul.mubr.f32.gmra.mrb[0].mxu0 %v11867
  %v12191 = vpop.f32.mrb[0].mxu0
  %v12192 = vadd.f32 0.0, %v12191
  %v12193 = vpop.f32.mrb[0].mxu0
  %12194 = vmatprep.mubr.f32.mxu0 0.0
  %12195 = vmatmul.mubr.f32.gmra.mrb[0].mxu0 %v11870
  %v12196 = vpop.f32.mrb[0].mxu0
  %v12197 = vadd.f32 0.0, %v12196
  %v12198 = vpop.f32.mrb[0].mxu0
  %12199 = vmatprep.mubr.f32.mxu0 0.0
  %12200 = vmatmul.mubr.f32.gmra.mrb[0].mxu0 %v11873
  %v12201 = vpop.f32.mrb[0].mxu0
  %v12202 = vadd.f32 0.0, %v12201
  %v12203 = vpop.f32.mrb[0].mxu0
  %12204 = vmatprep.mubr.f32.mxu0 0.0
  %12205 = vmatmul.mubr.f32.gmra.mrb[0].mxu0 %v11876
  %v12206 = vpop.f32.mrb[0].mxu0
  %v12207 = vadd.f32 0.0, %v12206
  %v12208 = vpop.f32.mrb[0].mxu0
  %12209 = vmatprep.mubr.f32.mxu0 0.0
  %12210 = vmatmul.mubr.f32.gmra.mrb[0].mxu0 %v11879
  %v12211 = vpop.f32.mrb[0].mxu0
  %v12212 = vadd.f32 0.0, %v12211
  %v12213 = vpop.f32.mrb[0].mxu0
  %12214 = vmatprep.mubr.f32.mxu0 0.0
  %12215 = vmatmul.mubr.f32.gmra.mrb[0].mxu0 %v11882
  %v12216 = vpop.f32.mrb[0].mxu0
  %v12217 = vadd.f32 0.0, %v12216
  %v12218 = vpop.f32.mrb[0].mxu0
  %12219 = vmatprep.mubr.f32.mxu0 0.0
  %12220 = vmatmul.mubr.f32.gmra.mrb[0].mxu0 %v11885
  %v12221 = vpop.f32.mrb[0].mxu0
  %v12222 = vadd.f32 0.0, %v12221
  %v12223 = vpop.f32.mrb[0].mxu0
  %12224 = vmatprep.mubr.f32.mxu0 0.0
  %12225 = vmatmul.mubr.f32.gmra.mrb[0].mxu0 %v11888
  %v12226 = vpop.f32.mrb[0].mxu0
  %v12227 = vadd.f32 0.0, %v12226
  %v12228 = vpop.f32.mrb[0].mxu0
  %12229 = vmatprep.mubr.f32.mxu0 0.0
  %12230 = vmatmul.mubr.f32.gmra.mrb[0].mxu0 %v11891
  %v12231 = vpop.f32.mrb[0].mxu0
  %v12232 = vadd.f32 0.0, %v12231
  %v12233 = vpop.f32.mrb[0].mxu0
  %12234 = vmatprep.mubr.f32.mxu0 0.0
  %12235 = vmatmul.mubr.f32.gmra.mrb[0].mxu0 %v11894
  %v12236 = vpop.f32.mrb[0].mxu0
  %v12237 = vadd.f32 0.0, %v12236
  %v12238 = vpop.f32.mrb[0].mxu0
  %12239 = vmatprep.mubr.f32.mxu0 0.0
  %12240 = vmatmul.mubr.f32.gmra.mrb[0].mxu0 %v11897
  %v12241 = vpop.f32.mrb[0].mxu0
  %v12242 = vadd.f32 0.0, %v12241
  %v12243 = vpop.f32.mrb[0].mxu0
  %12244 = vmatprep.mubr.f32.mxu0 0.0
  %12245 = vmatmul.mubr.f32.gmra.mrb[0].mxu0 %v11900
  %v12246 = vpop.f32.mrb[0].mxu0
  %v12247 = vadd.f32 0.0, %v12246
  %v12248 = vpop.f32.mrb[0].mxu0
  %12249 = vmatprep.mubr.f32.mxu0 0.0
  %12250 = vmatmul.mubr.f32.gmra.mrb[0].mxu0 %v11903
  %v12251 = vpop.f32.mrb[0].mxu0
  %v12252 = vadd.f32 0.0, %v12251
  %v12253 = vpop.f32.mrb[0].mxu0
  %12254 = vmatprep.mubr.f32.mxu0 0.0
  %12255 = vmatmul.mubr.f32.gmra.mrb[0].mxu0 %v11906
  %v12256 = vpop.f32.mrb[0].mxu0
  %v12257 = vadd.f32 0.0, %v12256
  %v12258 = vpop.f32.mrb[0].mxu0
  %12259 = vmatprep.mubr.f32.mxu0 0.0
  %12260 = vmatmul.mubr.f32.gmra.mrb[0].mxu0 %v11909
  %v12261 = vpop.f32.mrb[0].mxu0
  %v12262 = vadd.f32 0.0, %v12261
  %v12263 = vpop.f32.mrb[0].mxu0
  %12264 = vmatprep.mubr.f32.mxu0 0.0
  %12265 = vmatmul.mubr.f32.gmra.mrb[0].mxu0 %v11912
  %v12266 = vpop.f32.mrb[0].mxu0
  %v12267 = vadd.f32 0.0, %v12266
  %v12268 = vpop.f32.mrb[0].mxu0
  %12269 = vmatprep.mubr.f32.mxu0 0.0
  %12270 = vmatmul.mubr.f32.gmra.mrb[0].mxu0 %v11915
  %v12271 = vpop.f32.mrb[0].mxu0
  %v12272 = vadd.f32 0.0, %v12271
  %v12273 = vpop.f32.mrb[0].mxu0
  %12274 = vmatprep.mubr.f32.mxu0 0.0
  %12275 = vmatmul.mubr.f32.gmra.mrb[0].mxu0 %v11918
  %v12276 = vpop.f32.mrb[0].mxu0
  %v12277 = vadd.f32 0.0, %v12276
  %v12278 = vpop.f32.mrb[0].mxu0
  %12279 = vmatprep.mubr.f32.mxu0 0.0
  %12280 = vmatmul.mubr.f32.gmra.mrb[0].mxu0 %v11921
  %v12281 = vpop.f32.mrb[0].mxu0
  %v12282 = vadd.f32 0.0, %v12281
  %v12283 = vpop.f32.mrb[0].mxu0
  %12284 = vmatprep.mubr.f32.mxu0 0.0
  %12285 = vmatmul.mubr.f32.gmra.mrb[0].mxu0 %v11924
  %v12286 = vpop.f32.mrb[0].mxu0
  %v12287 = vadd.f32 0.0, %v12286
  %v12288 = vpop.f32.mrb[0].mxu0
  %12289 = vmatprep.mubr.f32.mxu0 0.0
  %12290 = vmatmul.mubr.f32.gmra.mrb[0].mxu0 %v11927
  %v12291 = vpop.f32.mrb[0].mxu0
  %v12292 = vadd.f32 0.0, %v12291
  %v12293 = vpop.f32.mrb[0].mxu0
  %12294 = vmatprep.mubr.f32.mxu0 0.0
  %12295 = vmatmul.mubr.f32.gmra.mrb[0].mxu0 %v11930
  %v12296 = vpop.f32.mrb[0].mxu0
  %v12297 = vadd.f32 0.0, %v12296
  %v12298 = vpop.f32.mrb[0].mxu0
  %12299 = vmatprep.mubr.f32.mxu0 0.0
  %12300 = vmatmul.mubr.f32.gmra.mrb[0].mxu0 %v11933
  %v12301 = vpop.f32.mrb[0].mxu0
  %v12302 = vadd.f32 0.0, %v12301
  %v12303 = vpop.f32.mrb[0].mxu0
  %12304 = vmatprep.mubr.f32.mxu0 0.0
  %12305 = vmatmul.mubr.f32.gmra.mrb[0].mxu0 %v11936
  %v12306 = vpop.f32.mrb[0].mxu0
  %v12307 = vadd.f32 0.0, %v12306
  %v12308 = vpop.f32.mrb[0].mxu0
  %12309 = vmatprep.mubr.f32.mxu0 0.0
  %12310 = vmatmul.mubr.f32.gmra.mrb[0].mxu0 %v11939
  %v12311 = vpop.f32.mrb[0].mxu0
  %v12312 = vadd.f32 0.0, %v12311
  %v12313 = vpop.f32.mrb[0].mxu0
  %12314 = vmatprep.mubr.f32.mxu0 0.0
  %12315 = vmatmul.mubr.f32.gmra.mrb[0].mxu0 %v11942
  %v12316 = vpop.f32.mrb[0].mxu0
  %v12317 = vadd.f32 0.0, %v12316
  %v12318 = vpop.f32.mrb[0].mxu0
  %12319 = vmatprep.mubr.f32.mxu0 0.0
  %12320 = vmatmul.mubr.f32.gmra.mrb[0].mxu0 %v11945
  %v12321 = vpop.f32.mrb[0].mxu0
  %v12322 = vadd.f32 0.0, %v12321
  %v12323 = vpop.f32.mrb[0].mxu0
  %12324 = vmatprep.mubr.f32.mxu0 0.0
  %12325 = vmatmul.mubr.f32.gmra.mrb[0].mxu0 %v11948
  %v12326 = vpop.f32.mrb[0].mxu0
  %v12327 = vadd.f32 0.0, %v12326
  %v12328 = vpop.f32.mrb[0].mxu0
  %12329 = vmatprep.mubr.f32.mxu0 0.0
  %12330 = vmatmul.mubr.f32.gmra.mrb[0].mxu0 %v11951
  %v12331 = vpop.f32.mrb[0].mxu0
  %v12332 = vadd.f32 0.0, %v12331
  %v12333 = vpop.f32.mrb[0].mxu0
  %12334 = vmatprep.mubr.f32.mxu0 0.0
  %12335 = vmatmul.mubr.f32.gmra.mrb[0].mxu0 %v11954
  %v12336 = vpop.f32.mrb[0].mxu0
  %v12337 = vadd.f32 0.0, %v12336
  %v12338 = vpop.f32.mrb[0].mxu0
  %12339 = vmatprep.mubr.f32.mxu0 0.0
  %12340 = vmatmul.mubr.f32.gmra.mrb[0].mxu0 %v11957
  %v12341 = vpop.f32.mrb[0].mxu0
  %v12342 = vadd.f32 0.0, %v12341
  %v12343 = vpop.f32.mrb[0].mxu0
  %12344 = vmatprep.mubr.f32.mxu0 0.0
  %12345 = vmatmul.mubr.f32.gmra.mrb[0].mxu0 %v11960
  %v12346 = vpop.f32.mrb[0].mxu0
  %v12347 = vadd.f32 0.0, %v12346
  %v12348 = vpop.f32.mrb[0].mxu0
  %12349 = vdwg.mxu0
  %v12350 = vadd.f32 %v11640, %v12032
  %v12351 = vadd.f32 %v11641, %v12037
  %v12352 = vadd.f32 %v11642, %v12042
  %v12353 = vadd.f32 %v11643, %v12047
  %v12354 = vadd.f32 %v11644, %v12052
  %v12355 = vadd.f32 %v11645, %v12057
  %v12356 = vadd.f32 %v11646, %v12062
  %v12357 = vadd.f32 %v11647, %v12067
  %v12358 = vadd.f32 %v11648, %v12072
  %v12359 = vadd.f32 %v11649, %v12077
  %v12360 = vadd.f32 %v11650, %v12082
  %v12361 = vadd.f32 %v11651, %v12087
  %v12362 = vadd.f32 %v11652, %v12092
  %v12363 = vadd.f32 %v11653, %v12097
  %v12364 = vadd.f32 %v11654, %v12102
  %v12365 = vadd.f32 %v11655, %v12107
  %v12366 = vadd.f32 %v11656, %v12112
  %v12367 = vadd.f32 %v11657, %v12117
  %v12368 = vadd.f32 %v11658, %v12122
  %v12369 = vadd.f32 %v11659, %v12127
  %v12370 = vadd.f32 %v11660, %v12132
  %v12371 = vadd.f32 %v11661, %v12137
  %v12372 = vadd.f32 %v11662, %v12142
  %v12373 = vadd.f32 %v11663, %v12147
  %v12374 = vadd.f32 %v11664, %v12152
  %v12375 = vadd.f32 %v11665, %v12157
  %v12376 = vadd.f32 %v11666, %v12162
  %v12377 = vadd.f32 %v11667, %v12167
  %v12378 = vadd.f32 %v11668, %v12172
  %v12379 = vadd.f32 %v11669, %v12177
  %v12380 = vadd.f32 %v11670, %v12182
  %v12381 = vadd.f32 %v11671, %v12187
  %v12382 = vadd.f32 %v11672, %v12192
  %v12383 = vadd.f32 %v11673, %v12197
  %v12384 = vadd.f32 %v11674, %v12202
  %v12385 = vadd.f32 %v11675, %v12207
  %v12386 = vadd.f32 %v11676, %v12212
  %v12387 = vadd.f32 %v11677, %v12217
  %v12388 = vadd.f32 %v11678, %v12222
  %v12389 = vadd.f32 %v11679, %v12227
  %v12390 = vadd.f32 %v11680, %v12232
  %v12391 = vadd.f32 %v11681, %v12237
  %v12392 = vadd.f32 %v11682, %v12242
  %v12393 = vadd.f32 %v11683, %v12247
  %v12394 = vadd.f32 %v11684, %v12252
  %v12395 = vadd.f32 %v11685, %v12257
  %v12396 = vadd.f32 %v11686, %v12262
  %v12397 = vadd.f32 %v11687, %v12267
  %v12398 = vadd.f32 %v11688, %v12272
  %v12399 = vadd.f32 %v11689, %v12277
  %v12400 = vadd.f32 %v11690, %v12282
  %v12401 = vadd.f32 %v11691, %v12287
  %v12402 = vadd.f32 %v11692, %v12292
  %v12403 = vadd.f32 %v11693, %v12297
  %v12404 = vadd.f32 %v11694, %v12302
  %v12405 = vadd.f32 %v11695, %v12307
  %v12406 = vadd.f32 %v11696, %v12312
  %v12407 = vadd.f32 %v11697, %v12317
  %v12408 = vadd.f32 %v11698, %v12322
  %v12409 = vadd.f32 %v11699, %v12327
  %v12410 = vadd.f32 %v11700, %v12332
  %v12411 = vadd.f32 %v11701, %v12337
  %v12412 = vadd.f32 %v11702, %v12342
  %v12413 = vadd.f32 %v11703, %v12347
  %v12414 = vld [vmem:[%s10993 + $0x2] sm:$0xff]
  %v12415 = vld [vmem:[%s10993 + $0xa] sm:$0xff]
  %v12416 = vld [vmem:[%s10993 + $0x1a] sm:$0xff]
  %v12417 = vld [vmem:[%s10993 + $0x22] sm:$0xff]
  %v12418 = vld [vmem:[%s10993 + $0x32] sm:$0xff]
  %v12419 = vld [vmem:[%s10993 + $0x3a] sm:$0xff]
  %v12420 = vld [vmem:[%s10993 + $0x4a] sm:$0xff]
  %v12421 = vld [vmem:[%s10993 + $0x52] sm:$0xff]
  %v12422 = vld [vmem:[%s10993 + $0x62] sm:$0xff]
  %v12423 = vld [vmem:[%s10993 + $0x6a] sm:$0xff]
  %v12424 = vld [vmem:[%s10993 + $0x7a] sm:$0xff]
  %v12425 = vld [vmem:[%s10993 + $0x82] sm:$0xff]
  %v12426 = vld [vmem:[%s10993 + $0x92] sm:$0xff]
  %v12427 = vld [vmem:[%s10993 + $0x9a] sm:$0xff]
  %v12428 = vld [vmem:[%s10993 + $0xaa] sm:$0xff]
  %v12429 = vld [vmem:[%s10993 + $0xb2] sm:$0xff]
  %v12430 = vld [vmem:[%s10993 + $0xc2] sm:$0xff]
  %v12431 = vld [vmem:[%s10993 + $0xca] sm:$0xff]
  %v12432 = vld [vmem:[%s10993 + $0xda] sm:$0xff]
  %v12433 = vld [vmem:[%s10993 + $0xe2] sm:$0xff]
  %v12434 = vld [vmem:[%s10993 + $0xf2] sm:$0xff]
  %v12435 = vld [vmem:[%s10993 + $0xfa] sm:$0xff]
  %v12436 = vld [vmem:[%s10993 + $0x10a] sm:$0xff]
  %v12437 = vld [vmem:[%s10993 + $0x112] sm:$0xff]
  %v12438 = vld [vmem:[%s10993 + $0x122] sm:$0xff]
  %v12439 = vld [vmem:[%s10993 + $0x12a] sm:$0xff]
  %v12440 = vld [vmem:[%s10993 + $0x13a] sm:$0xff]
  %v12441 = vld [vmem:[%s10993 + $0x142] sm:$0xff]
  %v12442 = vld [vmem:[%s10993 + $0x152] sm:$0xff]
  %v12443 = vld [vmem:[%s10993 + $0x15a] sm:$0xff]
  %v12444 = vld [vmem:[%s10993 + $0x16a] sm:$0xff]
  %v12445 = vld [vmem:[%s10993 + $0x172] sm:$0xff]
  %v12446 = vld [vmem:[%s10993 + $0x1b2] sm:$0xff]
  %v12447 = vld [vmem:[%s10993 + $0x1ba] sm:$0xff]
  %v12448 = vld [vmem:[%s10993 + $0x1ca] sm:$0xff]
  %v12449 = vld [vmem:[%s10993 + $0x1d2] sm:$0xff]
  %v12450 = vld [vmem:[%s10993 + $0x1e2] sm:$0xff]
  %v12451 = vld [vmem:[%s10993 + $0x1ea] sm:$0xff]
  %v12452 = vld [vmem:[%s10993 + $0x1fa] sm:$0xff]
  %v12453 = vld [vmem:[%s10993 + $0x202] sm:$0xff]
  %v12454 = vld [vmem:[%s10993 + $0x212] sm:$0xff]
  %v12455 = vld [vmem:[%s10993 + $0x21a] sm:$0xff]
  %v12456 = vld [vmem:[%s10993 + $0x22a] sm:$0xff]
  %v12457 = vld [vmem:[%s10993 + $0x232] sm:$0xff]
  %v12458 = vld [vmem:[%s10993 + $0x242] sm:$0xff]
  %v12459 = vld [vmem:[%s10993 + $0x24a] sm:$0xff]
  %v12460 = vld [vmem:[%s10993 + $0x25a] sm:$0xff]
  %v12461 = vld [vmem:[%s10993 + $0x262] sm:$0xff]
  %v12462 = vld [vmem:[%s10993 + $0x272] sm:$0xff]
  %v12463 = vld [vmem:[%s10993 + $0x27a] sm:$0xff]
  %v12464 = vld [vmem:[%s10993 + $0x28a] sm:$0xff]
  %v12465 = vld [vmem:[%s10993 + $0x292] sm:$0xff]
  %v12466 = vld [vmem:[%s10993 + $0x2a2] sm:$0xff]
  %v12467 = vld [vmem:[%s10993 + $0x2aa] sm:$0xff]
  %v12468 = vld [vmem:[%s10993 + $0x2ba] sm:$0xff]
  %v12469 = vld [vmem:[%s10993 + $0x2c2] sm:$0xff]
  %v12470 = vld [vmem:[%s10993 + $0x2d2] sm:$0xff]
  %v12471 = vld [vmem:[%s10993 + $0x2da] sm:$0xff]
  %v12472 = vld [vmem:[%s10993 + $0x2ea] sm:$0xff]
  %v12473 = vld [vmem:[%s10993 + $0x2f2] sm:$0xff]
  %v12474 = vld [vmem:[%s10993 + $0x302] sm:$0xff]
  %v12475 = vld [vmem:[%s10993 + $0x30a] sm:$0xff]
  %v12476 = vld [vmem:[%s10993 + $0x31a] sm:$0xff]
  %v12477 = vld [vmem:[%s10993 + $0x322] sm:$0xff]
  %s12478 = scalar_lea.vmem %s4, 32
  %v12479 = vld [vmem:[%s12478] sm:$0xf]
  %v12481 = vsel %vm26, %v12414, 0
  %v12484 = vsel %vm26, %v12415, 0
  %v12487 = vsel %vm26, %v12416, 0
  %v12490 = vsel %vm26, %v12417, 0
  %v12493 = vsel %vm26, %v12418, 0
  %v12496 = vsel %vm26, %v12419, 0
  %v12499 = vsel %vm26, %v12420, 0
  %v12502 = vsel %vm26, %v12421, 0
  %v12505 = vsel %vm26, %v12422, 0
  %v12508 = vsel %vm26, %v12423, 0
  %v12511 = vsel %vm26, %v12424, 0
  %v12514 = vsel %vm26, %v12425, 0
  %v12517 = vsel %vm26, %v12426, 0
  %v12520 = vsel %vm26, %v12427, 0
  %v12523 = vsel %vm26, %v12428, 0
  %v12526 = vsel %vm26, %v12429, 0
  %v12529 = vsel %vm26, %v12430, 0
  %v12532 = vsel %vm26, %v12431, 0
  %v12535 = vsel %vm26, %v12432, 0
  %v12538 = vsel %vm26, %v12433, 0
  %v12541 = vsel %vm26, %v12434, 0
  %v12544 = vsel %vm26, %v12435, 0
  %v12547 = vsel %vm26, %v12436, 0
  %v12550 = vsel %vm26, %v12437, 0
  %v12553 = vsel %vm26, %v12438, 0
  %v12556 = vsel %vm26, %v12439, 0
  %v12559 = vsel %vm26, %v12440, 0
  %v12562 = vsel %vm26, %v12441, 0
  %v12565 = vsel %vm26, %v12442, 0
  %v12568 = vsel %vm26, %v12443, 0
  %v12571 = vsel %vm26, %v12444, 0
  %v12574 = vsel %vm26, %v12445, 0
  %v12577 = vsel %vm26, %v12446, 0
  %v12580 = vsel %vm26, %v12447, 0
  %v12583 = vsel %vm26, %v12448, 0
  %v12586 = vsel %vm26, %v12449, 0
  %v12589 = vsel %vm26, %v12450, 0
  %v12592 = vsel %vm26, %v12451, 0
  %v12595 = vsel %vm26, %v12452, 0
  %v12598 = vsel %vm26, %v12453, 0
  %v12601 = vsel %vm26, %v12454, 0
  %v12604 = vsel %vm26, %v12455, 0
  %v12607 = vsel %vm26, %v12456, 0
  %v12610 = vsel %vm26, %v12457, 0
  %v12613 = vsel %vm26, %v12458, 0
  %v12616 = vsel %vm26, %v12459, 0
  %v12619 = vsel %vm26, %v12460, 0
  %v12622 = vsel %vm26, %v12461, 0
  %v12625 = vsel %vm26, %v12462, 0
  %v12628 = vsel %vm26, %v12463, 0
  %v12631 = vsel %vm26, %v12464, 0
  %v12634 = vsel %vm26, %v12465, 0
  %v12637 = vsel %vm26, %v12466, 0
  %v12640 = vsel %vm26, %v12467, 0
  %v12643 = vsel %vm26, %v12468, 0
  %v12646 = vsel %vm26, %v12469, 0
  %v12649 = vsel %vm26, %v12470, 0
  %v12652 = vsel %vm26, %v12471, 0
  %v12655 = vsel %vm26, %v12472, 0
  %v12658 = vsel %vm26, %v12473, 0
  %v12661 = vsel %vm26, %v12474, 0
  %v12664 = vsel %vm26, %v12475, 0
  %v12667 = vsel %vm26, %v12476, 0
  %v12670 = vsel %vm26, %v12477, 0
  %v12673 = vsel %vm651, %v12479, 0
  %12675 = vmatprep.subr.mxu0 0.0
  %12676 = vmatpush1.msra.mxu0 %v12673
  %12677 = vmatprep.subr.mxu0 0.0
  %12678 = vmatpush1.msra.mxu0 0.0
  %12679 = vmatprep.subr.mxu0 0.0
  %12680 = vmatpush1.msra.mxu0 0.0
  %12681 = vmatprep.subr.mxu0 0.0
  %12682 = vmatpush1.msra.mxu0 0.0
  %12683 = vmatprep.subr.mxu0 0.0
  %12684 = vmatpush1.msra.mxu0 0.0
  %12685 = vmatprep.subr.mxu0 0.0
  %12686 = vmatpush1.msra.mxu0 0.0
  %12687 = vmatprep.subr.mxu0 0.0
  %12688 = vmatpush1.msra.mxu0 0.0
  %12689 = vmatprep.subr.mxu0 0.0
  %12690 = vmatpush1.msra.mxu0 0.0
  %12691 = vmatprep.subr.mxu0 0.0
  %12692 = vmatpush1.msra.mxu0 0.0
  %12693 = vmatprep.subr.mxu0 0.0
  %12694 = vmatpush1.msra.mxu0 0.0
  %12695 = vmatprep.subr.mxu0 0.0
  %12696 = vmatpush1.msra.mxu0 0.0
  %12697 = vmatprep.subr.mxu0 0.0
  %12698 = vmatpush1.msra.mxu0 0.0
  %12699 = vmatprep.subr.mxu0 0.0
  %12700 = vmatpush1.msra.mxu0 0.0
  %12701 = vmatprep.subr.mxu0 0.0
  %12702 = vmatpush1.msra.mxu0 0.0
  %12703 = vmatprep.subr.mxu0 0.0
  %12704 = vmatpush1.msra.mxu0 0.0
  %12705 = vmatprep.subr.mxu0 0.0
  %12706 = vmatpush1.msra.mxu0 0.0
  %12707 = vmatprep.subr.mxu0 0.0
  %12708 = vmatpush1.msra.mxu0 0.0
  %12709 = vmatprep.subr.mxu0 0.0
  %12710 = vmatpush1.msra.mxu0 0.0
  %12711 = vmatprep.subr.mxu0 0.0
  %12712 = vmatpush1.msra.mxu0 0.0
  %12713 = vmatprep.subr.mxu0 0.0
  %12714 = vmatpush1.msra.mxu0 0.0
  %12715 = vmatprep.subr.mxu0 0.0
  %12716 = vmatpush1.msra.mxu0 0.0
  %12717 = vmatprep.subr.mxu0 0.0
  %12718 = vmatpush1.msra.mxu0 0.0
  %12719 = vmatprep.subr.mxu0 0.0
  %12720 = vmatpush1.msra.mxu0 0.0
  %12721 = vmatprep.subr.mxu0 0.0
  %12722 = vmatpush1.msra.mxu0 0.0
  %12723 = vmatprep.subr.mxu0 0.0
  %12724 = vmatpush1.msra.mxu0 0.0
  %12725 = vmatprep.subr.mxu0 0.0
  %12726 = vmatpush1.msra.mxu0 0.0
  %12727 = vmatprep.subr.mxu0 0.0
  %12728 = vmatpush1.msra.mxu0 0.0
  %12729 = vmatprep.subr.mxu0 0.0
  %12730 = vmatpush1.msra.mxu0 0.0
  %12731 = vmatprep.subr.mxu0 0.0
  %12732 = vmatpush1.msra.mxu0 0.0
  %12733 = vmatprep.subr.mxu0 0.0
  %12734 = vmatpush1.msra.mxu0 0.0
  %12735 = vmatprep.subr.mxu0 0.0
  %12736 = vmatpush1.msra.mxu0 0.0
  %12737 = vmatprep.subr.mxu0 0.0
  %12738 = vmatpush1.msra.mxu0 0.0
  %12739 = vmatprep.mubr.f32.mxu0 0.0
  %12740 = vmatmul.mubr.f32.gmra.mrb[0].mxu0 %v12481
  %v12741 = vpop.f32.mrb[0].mxu0
  %v12742 = vadd.f32 0.0, %v12741
  %v12743 = vpop.f32.mrb[0].mxu0
  %12744 = vmatprep.mubr.f32.mxu0 0.0
  %12745 = vmatmul.mubr.f32.gmra.mrb[0].mxu0 %v12484
  %v12746 = vpop.f32.mrb[0].mxu0
  %v12747 = vadd.f32 0.0, %v12746
  %v12748 = vpop.f32.mrb[0].mxu0
  %12749 = vmatprep.mubr.f32.mxu0 0.0
  %12750 = vmatmul.mubr.f32.gmra.mrb[0].mxu0 %v12487
  %v12751 = vpop.f32.mrb[0].mxu0
  %v12752 = vadd.f32 0.0, %v12751
  %v12753 = vpop.f32.mrb[0].mxu0
  %12754 = vmatprep.mubr.f32.mxu0 0.0
  %12755 = vmatmul.mubr.f32.gmra.mrb[0].mxu0 %v12490
  %v12756 = vpop.f32.mrb[0].mxu0
  %v12757 = vadd.f32 0.0, %v12756
  %v12758 = vpop.f32.mrb[0].mxu0
  %12759 = vmatprep.mubr.f32.mxu0 0.0
  %12760 = vmatmul.mubr.f32.gmra.mrb[0].mxu0 %v12493
  %v12761 = vpop.f32.mrb[0].mxu0
  %v12762 = vadd.f32 0.0, %v12761
  %v12763 = vpop.f32.mrb[0].mxu0
  %12764 = vmatprep.mubr.f32.mxu0 0.0
  %12765 = vmatmul.mubr.f32.gmra.mrb[0].mxu0 %v12496
  %v12766 = vpop.f32.mrb[0].mxu0
  %v12767 = vadd.f32 0.0, %v12766
  %v12768 = vpop.f32.mrb[0].mxu0
  %12769 = vmatprep.mubr.f32.mxu0 0.0
  %12770 = vmatmul.mubr.f32.gmra.mrb[0].mxu0 %v12499
  %v12771 = vpop.f32.mrb[0].mxu0
  %v12772 = vadd.f32 0.0, %v12771
  %v12773 = vpop.f32.mrb[0].mxu0
  %12774 = vmatprep.mubr.f32.mxu0 0.0
  %12775 = vmatmul.mubr.f32.gmra.mrb[0].mxu0 %v12502
  %v12776 = vpop.f32.mrb[0].mxu0
  %v12777 = vadd.f32 0.0, %v12776
  %v12778 = vpop.f32.mrb[0].mxu0
  %12779 = vmatprep.mubr.f32.mxu0 0.0
  %12780 = vmatmul.mubr.f32.gmra.mrb[0].mxu0 %v12505
  %v12781 = vpop.f32.mrb[0].mxu0
  %v12782 = vadd.f32 0.0, %v12781
  %v12783 = vpop.f32.mrb[0].mxu0
  %12784 = vmatprep.mubr.f32.mxu0 0.0
  %12785 = vmatmul.mubr.f32.gmra.mrb[0].mxu0 %v12508
  %v12786 = vpop.f32.mrb[0].mxu0
  %v12787 = vadd.f32 0.0, %v12786
  %v12788 = vpop.f32.mrb[0].mxu0
  %12789 = vmatprep.mubr.f32.mxu0 0.0
  %12790 = vmatmul.mubr.f32.gmra.mrb[0].mxu0 %v12511
  %v12791 = vpop.f32.mrb[0].mxu0
  %v12792 = vadd.f32 0.0, %v12791
  %v12793 = vpop.f32.mrb[0].mxu0
  %12794 = vmatprep.mubr.f32.mxu0 0.0
  %12795 = vmatmul.mubr.f32.gmra.mrb[0].mxu0 %v12514
  %v12796 = vpop.f32.mrb[0].mxu0
  %v12797 = vadd.f32 0.0, %v12796
  %v12798 = vpop.f32.mrb[0].mxu0
  %12799 = vmatprep.mubr.f32.mxu0 0.0
  %12800 = vmatmul.mubr.f32.gmra.mrb[0].mxu0 %v12517
  %v12801 = vpop.f32.mrb[0].mxu0
  %v12802 = vadd.f32 0.0, %v12801
  %v12803 = vpop.f32.mrb[0].mxu0
  %12804 = vmatprep.mubr.f32.mxu0 0.0
  %12805 = vmatmul.mubr.f32.gmra.mrb[0].mxu0 %v12520
  %v12806 = vpop.f32.mrb[0].mxu0
  %v12807 = vadd.f32 0.0, %v12806
  %v12808 = vpop.f32.mrb[0].mxu0
  %12809 = vmatprep.mubr.f32.mxu0 0.0
  %12810 = vmatmul.mubr.f32.gmra.mrb[0].mxu0 %v12523
  %v12811 = vpop.f32.mrb[0].mxu0
  %v12812 = vadd.f32 0.0, %v12811
  %v12813 = vpop.f32.mrb[0].mxu0
  %12814 = vmatprep.mubr.f32.mxu0 0.0
  %12815 = vmatmul.mubr.f32.gmra.mrb[0].mxu0 %v12526
  %v12816 = vpop.f32.mrb[0].mxu0
  %v12817 = vadd.f32 0.0, %v12816
  %v12818 = vpop.f32.mrb[0].mxu0
  %12819 = vmatprep.mubr.f32.mxu0 0.0
  %12820 = vmatmul.mubr.f32.gmra.mrb[0].mxu0 %v12529
  %v12821 = vpop.f32.mrb[0].mxu0
  %v12822 = vadd.f32 0.0, %v12821
  %v12823 = vpop.f32.mrb[0].mxu0
  %12824 = vmatprep.mubr.f32.mxu0 0.0
  %12825 = vmatmul.mubr.f32.gmra.mrb[0].mxu0 %v12532
  %v12826 = vpop.f32.mrb[0].mxu0
  %v12827 = vadd.f32 0.0, %v12826
  %v12828 = vpop.f32.mrb[0].mxu0
  %12829 = vmatprep.mubr.f32.mxu0 0.0
  %12830 = vmatmul.mubr.f32.gmra.mrb[0].mxu0 %v12535
  %v12831 = vpop.f32.mrb[0].mxu0
  %v12832 = vadd.f32 0.0, %v12831
  %v12833 = vpop.f32.mrb[0].mxu0
  %12834 = vmatprep.mubr.f32.mxu0 0.0
  %12835 = vmatmul.mubr.f32.gmra.mrb[0].mxu0 %v12538
  %v12836 = vpop.f32.mrb[0].mxu0
  %v12837 = vadd.f32 0.0, %v12836
  %v12838 = vpop.f32.mrb[0].mxu0
  %12839 = vmatprep.mubr.f32.mxu0 0.0
  %12840 = vmatmul.mubr.f32.gmra.mrb[0].mxu0 %v12541
  %v12841 = vpop.f32.mrb[0].mxu0
  %v12842 = vadd.f32 0.0, %v12841
  %v12843 = vpop.f32.mrb[0].mxu0
  %12844 = vmatprep.mubr.f32.mxu0 0.0
  %12845 = vmatmul.mubr.f32.gmra.mrb[0].mxu0 %v12544
  %v12846 = vpop.f32.mrb[0].mxu0
  %v12847 = vadd.f32 0.0, %v12846
  %v12848 = vpop.f32.mrb[0].mxu0
  %12849 = vmatprep.mubr.f32.mxu0 0.0
  %12850 = vmatmul.mubr.f32.gmra.mrb[0].mxu0 %v12547
  %v12851 = vpop.f32.mrb[0].mxu0
  %v12852 = vadd.f32 0.0, %v12851
  %v12853 = vpop.f32.mrb[0].mxu0
  %12854 = vmatprep.mubr.f32.mxu0 0.0
  %12855 = vmatmul.mubr.f32.gmra.mrb[0].mxu0 %v12550
  %v12856 = vpop.f32.mrb[0].mxu0
  %v12857 = vadd.f32 0.0, %v12856
  %v12858 = vpop.f32.mrb[0].mxu0
  %12859 = vmatprep.mubr.f32.mxu0 0.0
  %12860 = vmatmul.mubr.f32.gmra.mrb[0].mxu0 %v12553
  %v12861 = vpop.f32.mrb[0].mxu0
  %v12862 = vadd.f32 0.0, %v12861
  %v12863 = vpop.f32.mrb[0].mxu0
  %12864 = vmatprep.mubr.f32.mxu0 0.0
  %12865 = vmatmul.mubr.f32.gmra.mrb[0].mxu0 %v12556
  %v12866 = vpop.f32.mrb[0].mxu0
  %v12867 = vadd.f32 0.0, %v12866
  %v12868 = vpop.f32.mrb[0].mxu0
  %12869 = vmatprep.mubr.f32.mxu0 0.0
  %12870 = vmatmul.mubr.f32.gmra.mrb[0].mxu0 %v12559
  %v12871 = vpop.f32.mrb[0].mxu0
  %v12872 = vadd.f32 0.0, %v12871
  %v12873 = vpop.f32.mrb[0].mxu0
  %12874 = vmatprep.mubr.f32.mxu0 0.0
  %12875 = vmatmul.mubr.f32.gmra.mrb[0].mxu0 %v12562
  %v12876 = vpop.f32.mrb[0].mxu0
  %v12877 = vadd.f32 0.0, %v12876
  %v12878 = vpop.f32.mrb[0].mxu0
  %12879 = vmatprep.mubr.f32.mxu0 0.0
  %12880 = vmatmul.mubr.f32.gmra.mrb[0].mxu0 %v12565
  %v12881 = vpop.f32.mrb[0].mxu0
  %v12882 = vadd.f32 0.0, %v12881
  %v12883 = vpop.f32.mrb[0].mxu0
  %12884 = vmatprep.mubr.f32.mxu0 0.0
  %12885 = vmatmul.mubr.f32.gmra.mrb[0].mxu0 %v12568
  %v12886 = vpop.f32.mrb[0].mxu0
  %v12887 = vadd.f32 0.0, %v12886
  %v12888 = vpop.f32.mrb[0].mxu0
  %12889 = vmatprep.mubr.f32.mxu0 0.0
  %12890 = vmatmul.mubr.f32.gmra.mrb[0].mxu0 %v12571
  %v12891 = vpop.f32.mrb[0].mxu0
  %v12892 = vadd.f32 0.0, %v12891
  %v12893 = vpop.f32.mrb[0].mxu0
  %12894 = vmatprep.mubr.f32.mxu0 0.0
  %12895 = vmatmul.mubr.f32.gmra.mrb[0].mxu0 %v12574
  %v12896 = vpop.f32.mrb[0].mxu0
  %v12897 = vadd.f32 0.0, %v12896
  %v12898 = vpop.f32.mrb[0].mxu0
  %12899 = vmatprep.mubr.f32.mxu0 0.0
  %12900 = vmatmul.mubr.f32.gmra.mrb[0].mxu0 %v12577
  %v12901 = vpop.f32.mrb[0].mxu0
  %v12902 = vadd.f32 0.0, %v12901
  %v12903 = vpop.f32.mrb[0].mxu0
  %12904 = vmatprep.mubr.f32.mxu0 0.0
  %12905 = vmatmul.mubr.f32.gmra.mrb[0].mxu0 %v12580
  %v12906 = vpop.f32.mrb[0].mxu0
  %v12907 = vadd.f32 0.0, %v12906
  %v12908 = vpop.f32.mrb[0].mxu0
  %12909 = vmatprep.mubr.f32.mxu0 0.0
  %12910 = vmatmul.mubr.f32.gmra.mrb[0].mxu0 %v12583
  %v12911 = vpop.f32.mrb[0].mxu0
  %v12912 = vadd.f32 0.0, %v12911
  %v12913 = vpop.f32.mrb[0].mxu0
  %12914 = vmatprep.mubr.f32.mxu0 0.0
  %12915 = vmatmul.mubr.f32.gmra.mrb[0].mxu0 %v12586
  %v12916 = vpop.f32.mrb[0].mxu0
  %v12917 = vadd.f32 0.0, %v12916
  %v12918 = vpop.f32.mrb[0].mxu0
  %12919 = vmatprep.mubr.f32.mxu0 0.0
  %12920 = vmatmul.mubr.f32.gmra.mrb[0].mxu0 %v12589
  %v12921 = vpop.f32.mrb[0].mxu0
  %v12922 = vadd.f32 0.0, %v12921
  %v12923 = vpop.f32.mrb[0].mxu0
  %12924 = vmatprep.mubr.f32.mxu0 0.0
  %12925 = vmatmul.mubr.f32.gmra.mrb[0].mxu0 %v12592
  %v12926 = vpop.f32.mrb[0].mxu0
  %v12927 = vadd.f32 0.0, %v12926
  %v12928 = vpop.f32.mrb[0].mxu0
  %12929 = vmatprep.mubr.f32.mxu0 0.0
  %12930 = vmatmul.mubr.f32.gmra.mrb[0].mxu0 %v12595
  %v12931 = vpop.f32.mrb[0].mxu0
  %v12932 = vadd.f32 0.0, %v12931
  %v12933 = vpop.f32.mrb[0].mxu0
  %12934 = vmatprep.mubr.f32.mxu0 0.0
  %12935 = vmatmul.mubr.f32.gmra.mrb[0].mxu0 %v12598
  %v12936 = vpop.f32.mrb[0].mxu0
  %v12937 = vadd.f32 0.0, %v12936
  %v12938 = vpop.f32.mrb[0].mxu0
  %12939 = vmatprep.mubr.f32.mxu0 0.0
  %12940 = vmatmul.mubr.f32.gmra.mrb[0].mxu0 %v12601
  %v12941 = vpop.f32.mrb[0].mxu0
  %v12942 = vadd.f32 0.0, %v12941
  %v12943 = vpop.f32.mrb[0].mxu0
  %12944 = vmatprep.mubr.f32.mxu0 0.0
  %12945 = vmatmul.mubr.f32.gmra.mrb[0].mxu0 %v12604
  %v12946 = vpop.f32.mrb[0].mxu0
  %v12947 = vadd.f32 0.0, %v12946
  %v12948 = vpop.f32.mrb[0].mxu0
  %12949 = vmatprep.mubr.f32.mxu0 0.0
  %12950 = vmatmul.mubr.f32.gmra.mrb[0].mxu0 %v12607
  %v12951 = vpop.f32.mrb[0].mxu0
  %v12952 = vadd.f32 0.0, %v12951
  %v12953 = vpop.f32.mrb[0].mxu0
  %12954 = vmatprep.mubr.f32.mxu0 0.0
  %12955 = vmatmul.mubr.f32.gmra.mrb[0].mxu0 %v12610
  %v12956 = vpop.f32.mrb[0].mxu0
  %v12957 = vadd.f32 0.0, %v12956
  %v12958 = vpop.f32.mrb[0].mxu0
  %12959 = vmatprep.mubr.f32.mxu0 0.0
  %12960 = vmatmul.mubr.f32.gmra.mrb[0].mxu0 %v12613
  %v12961 = vpop.f32.mrb[0].mxu0
  %v12962 = vadd.f32 0.0, %v12961
  %v12963 = vpop.f32.mrb[0].mxu0
  %12964 = vmatprep.mubr.f32.mxu0 0.0
  %12965 = vmatmul.mubr.f32.gmra.mrb[0].mxu0 %v12616
  %v12966 = vpop.f32.mrb[0].mxu0
  %v12967 = vadd.f32 0.0, %v12966
  %v12968 = vpop.f32.mrb[0].mxu0
  %12969 = vmatprep.mubr.f32.mxu0 0.0
  %12970 = vmatmul.mubr.f32.gmra.mrb[0].mxu0 %v12619
  %v12971 = vpop.f32.mrb[0].mxu0
  %v12972 = vadd.f32 0.0, %v12971
  %v12973 = vpop.f32.mrb[0].mxu0
  %12974 = vmatprep.mubr.f32.mxu0 0.0
  %12975 = vmatmul.mubr.f32.gmra.mrb[0].mxu0 %v12622
  %v12976 = vpop.f32.mrb[0].mxu0
  %v12977 = vadd.f32 0.0, %v12976
  %v12978 = vpop.f32.mrb[0].mxu0
  %12979 = vmatprep.mubr.f32.mxu0 0.0
  %12980 = vmatmul.mubr.f32.gmra.mrb[0].mxu0 %v12625
  %v12981 = vpop.f32.mrb[0].mxu0
  %v12982 = vadd.f32 0.0, %v12981
  %v12983 = vpop.f32.mrb[0].mxu0
  %12984 = vmatprep.mubr.f32.mxu0 0.0
  %12985 = vmatmul.mubr.f32.gmra.mrb[0].mxu0 %v12628
  %v12986 = vpop.f32.mrb[0].mxu0
  %v12987 = vadd.f32 0.0, %v12986
  %v12988 = vpop.f32.mrb[0].mxu0
  %12989 = vmatprep.mubr.f32.mxu0 0.0
  %12990 = vmatmul.mubr.f32.gmra.mrb[0].mxu0 %v12631
  %v12991 = vpop.f32.mrb[0].mxu0
  %v12992 = vadd.f32 0.0, %v12991
  %v12993 = vpop.f32.mrb[0].mxu0
  %12994 = vmatprep.mubr.f32.mxu0 0.0
  %12995 = vmatmul.mubr.f32.gmra.mrb[0].mxu0 %v12634
  %v12996 = vpop.f32.mrb[0].mxu0
  %v12997 = vadd.f32 0.0, %v12996
  %v12998 = vpop.f32.mrb[0].mxu0
  %12999 = vmatprep.mubr.f32.mxu0 0.0
  %13000 = vmatmul.mubr.f32.gmra.mrb[0].mxu0 %v12637
  %v13001 = vpop.f32.mrb[0].mxu0
  %v13002 = vadd.f32 0.0, %v13001
  %v13003 = vpop.f32.mrb[0].mxu0
  %13004 = vmatprep.mubr.f32.mxu0 0.0
  %13005 = vmatmul.mubr.f32.gmra.mrb[0].mxu0 %v12640
  %v13006 = vpop.f32.mrb[0].mxu0
  %v13007 = vadd.f32 0.0, %v13006
  %v13008 = vpop.f32.mrb[0].mxu0
  %13009 = vmatprep.mubr.f32.mxu0 0.0
  %13010 = vmatmul.mubr.f32.gmra.mrb[0].mxu0 %v12643
  %v13011 = vpop.f32.mrb[0].mxu0
  %v13012 = vadd.f32 0.0, %v13011
  %v13013 = vpop.f32.mrb[0].mxu0
  %13014 = vmatprep.mubr.f32.mxu0 0.0
  %13015 = vmatmul.mubr.f32.gmra.mrb[0].mxu0 %v12646
  %v13016 = vpop.f32.mrb[0].mxu0
  %v13017 = vadd.f32 0.0, %v13016
  %v13018 = vpop.f32.mrb[0].mxu0
  %13019 = vmatprep.mubr.f32.mxu0 0.0
  %13020 = vmatmul.mubr.f32.gmra.mrb[0].mxu0 %v12649
  %v13021 = vpop.f32.mrb[0].mxu0
  %v13022 = vadd.f32 0.0, %v13021
  %v13023 = vpop.f32.mrb[0].mxu0
  %13024 = vmatprep.mubr.f32.mxu0 0.0
  %13025 = vmatmul.mubr.f32.gmra.mrb[0].mxu0 %v12652
  %v13026 = vpop.f32.mrb[0].mxu0
  %v13027 = vadd.f32 0.0, %v13026
  %v13028 = vpop.f32.mrb[0].mxu0
  %13029 = vmatprep.mubr.f32.mxu0 0.0
  %13030 = vmatmul.mubr.f32.gmra.mrb[0].mxu0 %v12655
  %v13031 = vpop.f32.mrb[0].mxu0
  %v13032 = vadd.f32 0.0, %v13031
  %v13033 = vpop.f32.mrb[0].mxu0
  %13034 = vmatprep.mubr.f32.mxu0 0.0
  %13035 = vmatmul.mubr.f32.gmra.mrb[0].mxu0 %v12658
  %v13036 = vpop.f32.mrb[0].mxu0
  %v13037 = vadd.f32 0.0, %v13036
  %v13038 = vpop.f32.mrb[0].mxu0
  %13039 = vmatprep.mubr.f32.mxu0 0.0
  %13040 = vmatmul.mubr.f32.gmra.mrb[0].mxu0 %v12661
  %v13041 = vpop.f32.mrb[0].mxu0
  %v13042 = vadd.f32 0.0, %v13041
  %v13043 = vpop.f32.mrb[0].mxu0
  %13044 = vmatprep.mubr.f32.mxu0 0.0
  %13045 = vmatmul.mubr.f32.gmra.mrb[0].mxu0 %v12664
  %v13046 = vpop.f32.mrb[0].mxu0
  %v13047 = vadd.f32 0.0, %v13046
  %v13048 = vpop.f32.mrb[0].mxu0
  %13049 = vmatprep.mubr.f32.mxu0 0.0
  %13050 = vmatmul.mubr.f32.gmra.mrb[0].mxu0 %v12667
  %v13051 = vpop.f32.mrb[0].mxu0
  %v13052 = vadd.f32 0.0, %v13051
  %v13053 = vpop.f32.mrb[0].mxu0
  %13054 = vmatprep.mubr.f32.mxu0 0.0
  %13055 = vmatmul.mubr.f32.gmra.mrb[0].mxu0 %v12670
  %v13056 = vpop.f32.mrb[0].mxu0
  %v13057 = vadd.f32 0.0, %v13056
  %v13058 = vpop.f32.mrb[0].mxu0
  %13059 = vdwg.mxu0
  %v13060 = vadd.f32 %v12350, %v12742
  %v13061 = vadd.f32 %v12351, %v12747
  %v13062 = vadd.f32 %v12352, %v12752
  %v13063 = vadd.f32 %v12353, %v12757
  %v13064 = vadd.f32 %v12354, %v12762
  %v13065 = vadd.f32 %v12355, %v12767
  %v13066 = vadd.f32 %v12356, %v12772
  %v13067 = vadd.f32 %v12357, %v12777
  %v13068 = vadd.f32 %v12358, %v12782
  %v13069 = vadd.f32 %v12359, %v12787
  %v13070 = vadd.f32 %v12360, %v12792
  %v13071 = vadd.f32 %v12361, %v12797
  %v13072 = vadd.f32 %v12362, %v12802
  %v13073 = vadd.f32 %v12363, %v12807
  %v13074 = vadd.f32 %v12364, %v12812
  %v13075 = vadd.f32 %v12365, %v12817
  %v13076 = vadd.f32 %v12366, %v12822
  %v13077 = vadd.f32 %v12367, %v12827
  %v13078 = vadd.f32 %v12368, %v12832
  %v13079 = vadd.f32 %v12369, %v12837
  %v13080 = vadd.f32 %v12370, %v12842
  %v13081 = vadd.f32 %v12371, %v12847
  %v13082 = vadd.f32 %v12372, %v12852
  %v13083 = vadd.f32 %v12373, %v12857
  %v13084 = vadd.f32 %v12374, %v12862
  %v13085 = vadd.f32 %v12375, %v12867
  %v13086 = vadd.f32 %v12376, %v12872
  %v13087 = vadd.f32 %v12377, %v12877
  %v13088 = vadd.f32 %v12378, %v12882
  %v13089 = vadd.f32 %v12379, %v12887
  %v13090 = vadd.f32 %v12380, %v12892
  %v13091 = vadd.f32 %v12381, %v12897
  %v13092 = vadd.f32 %v12382, %v12902
  %v13093 = vadd.f32 %v12383, %v12907
  %v13094 = vadd.f32 %v12384, %v12912
  %v13095 = vadd.f32 %v12385, %v12917
  %v13096 = vadd.f32 %v12386, %v12922
  %v13097 = vadd.f32 %v12387, %v12927
  %v13098 = vadd.f32 %v12388, %v12932
  %v13099 = vadd.f32 %v12389, %v12937
  %v13100 = vadd.f32 %v12390, %v12942
  %v13101 = vadd.f32 %v12391, %v12947
  %v13102 = vadd.f32 %v12392, %v12952
  %v13103 = vadd.f32 %v12393, %v12957
  %v13104 = vadd.f32 %v12394, %v12962
  %v13105 = vadd.f32 %v12395, %v12967
  %v13106 = vadd.f32 %v12396, %v12972
  %v13107 = vadd.f32 %v12397, %v12977
  %v13108 = vadd.f32 %v12398, %v12982
  %v13109 = vadd.f32 %v12399, %v12987
  %v13110 = vadd.f32 %v12400, %v12992
  %v13111 = vadd.f32 %v12401, %v12997
  %v13112 = vadd.f32 %v12402, %v13002
  %v13113 = vadd.f32 %v12403, %v13007
  %v13114 = vadd.f32 %v12404, %v13012
  %v13115 = vadd.f32 %v12405, %v13017
  %v13116 = vadd.f32 %v12406, %v13022
  %v13117 = vadd.f32 %v12407, %v13027
  %v13118 = vadd.f32 %v12408, %v13032
  %v13119 = vadd.f32 %v12409, %v13037
  %v13120 = vadd.f32 %v12410, %v13042
  %v13121 = vadd.f32 %v12411, %v13047
  %v13122 = vadd.f32 %v12412, %v13052
  %v13123 = vadd.f32 %v12413, %v13057
  %v13124 = vld [vmem:[%s5] sm:$0x1]
  %v13126 = vlaneseq
  %v13127 = vshrl.u32 %v13126, 7
  %v13128 = vsub.s32 0, %v13127
  %v13129 = vrot.slane %v13124, %v13128
  %v13131 = vmul.f32 %v13060, %v13129
  %v13132 = vmul.f32 %v13061, %v13129
  %v13133 = vmul.f32 %v13062, %v13129
  %v13134 = vmul.f32 %v13063, %v13129
  %v13135 = vmul.f32 %v13064, %v13129
  %v13136 = vmul.f32 %v13065, %v13129
  %v13137 = vmul.f32 %v13066, %v13129
  %v13138 = vmul.f32 %v13067, %v13129
  %v13139 = vmul.f32 %v13068, %v13129
  %v13140 = vmul.f32 %v13069, %v13129
  %v13141 = vmul.f32 %v13070, %v13129
  %v13142 = vmul.f32 %v13071, %v13129
  %v13143 = vmul.f32 %v13072, %v13129
  %v13144 = vmul.f32 %v13073, %v13129
  %v13145 = vmul.f32 %v13074, %v13129
  %v13146 = vmul.f32 %v13075, %v13129
  %v13147 = vmul.f32 %v13076, %v13129
  %v13148 = vmul.f32 %v13077, %v13129
  %v13149 = vmul.f32 %v13078, %v13129
  %v13150 = vmul.f32 %v13079, %v13129
  %v13151 = vmul.f32 %v13080, %v13129
  %v13152 = vmul.f32 %v13081, %v13129
  %v13153 = vmul.f32 %v13082, %v13129
  %v13154 = vmul.f32 %v13083, %v13129
  %v13155 = vmul.f32 %v13084, %v13129
  %v13156 = vmul.f32 %v13085, %v13129
  %v13157 = vmul.f32 %v13086, %v13129
  %v13158 = vmul.f32 %v13087, %v13129
  %v13159 = vmul.f32 %v13088, %v13129
  %v13160 = vmul.f32 %v13089, %v13129
  %v13161 = vmul.f32 %v13090, %v13129
  %v13162 = vmul.f32 %v13091, %v13129
  %v13163 = vmul.f32 %v13092, %v13129
  %v13164 = vmul.f32 %v13093, %v13129
  %v13165 = vmul.f32 %v13094, %v13129
  %v13166 = vmul.f32 %v13095, %v13129
  %v13167 = vmul.f32 %v13096, %v13129
  %v13168 = vmul.f32 %v13097, %v13129
  %v13169 = vmul.f32 %v13098, %v13129
  %v13170 = vmul.f32 %v13099, %v13129
  %v13171 = vmul.f32 %v13100, %v13129
  %v13172 = vmul.f32 %v13101, %v13129
  %v13173 = vmul.f32 %v13102, %v13129
  %v13174 = vmul.f32 %v13103, %v13129
  %v13175 = vmul.f32 %v13104, %v13129
  %v13176 = vmul.f32 %v13105, %v13129
  %v13177 = vmul.f32 %v13106, %v13129
  %v13178 = vmul.f32 %v13107, %v13129
  %v13179 = vmul.f32 %v13108, %v13129
  %v13180 = vmul.f32 %v13109, %v13129
  %v13181 = vmul.f32 %v13110, %v13129
  %v13182 = vmul.f32 %v13111, %v13129
  %v13183 = vmul.f32 %v13112, %v13129
  %v13184 = vmul.f32 %v13113, %v13129
  %v13185 = vmul.f32 %v13114, %v13129
  %v13186 = vmul.f32 %v13115, %v13129
  %v13187 = vmul.f32 %v13116, %v13129
  %v13188 = vmul.f32 %v13117, %v13129
  %v13189 = vmul.f32 %v13118, %v13129
  %v13190 = vmul.f32 %v13119, %v13129
  %v13191 = vmul.f32 %v13120, %v13129
  %v13192 = vmul.f32 %v13121, %v13129
  %v13193 = vmul.f32 %v13122, %v13129
  %v13194 = vmul.f32 %v13123, %v13129
  %v13195 = vld [vmem:[%s6] sm:$0x1]
  %v13197 = vlaneseq
  %v13198 = vshrl.u32 %v13197, 7
  %v13199 = vsub.s32 0, %v13198
  %v13200 = vrot.slane %v13195, %v13199
  %v13202 = vadd.f32 %v13131, %v13200
  %v13203 = vadd.f32 %v13132, %v13200
  %v13204 = vadd.f32 %v13133, %v13200
  %v13205 = vadd.f32 %v13134, %v13200
  %v13206 = vadd.f32 %v13135, %v13200
  %v13207 = vadd.f32 %v13136, %v13200
  %v13208 = vadd.f32 %v13137, %v13200
  %v13209 = vadd.f32 %v13138, %v13200
  %v13210 = vadd.f32 %v13139, %v13200
  %v13211 = vadd.f32 %v13140, %v13200
  %v13212 = vadd.f32 %v13141, %v13200
  %v13213 = vadd.f32 %v13142, %v13200
  %v13214 = vadd.f32 %v13143, %v13200
  %v13215 = vadd.f32 %v13144, %v13200
  %v13216 = vadd.f32 %v13145, %v13200
  %v13217 = vadd.f32 %v13146, %v13200
  %v13218 = vadd.f32 %v13147, %v13200
  %v13219 = vadd.f32 %v13148, %v13200
  %v13220 = vadd.f32 %v13149, %v13200
  %v13221 = vadd.f32 %v13150, %v13200
  %v13222 = vadd.f32 %v13151, %v13200
  %v13223 = vadd.f32 %v13152, %v13200
  %v13224 = vadd.f32 %v13153, %v13200
  %v13225 = vadd.f32 %v13154, %v13200
  %v13226 = vadd.f32 %v13155, %v13200
  %v13227 = vadd.f32 %v13156, %v13200
  %v13228 = vadd.f32 %v13157, %v13200
  %v13229 = vadd.f32 %v13158, %v13200
  %v13230 = vadd.f32 %v13159, %v13200
  %v13231 = vadd.f32 %v13160, %v13200
  %v13232 = vadd.f32 %v13161, %v13200
  %v13233 = vadd.f32 %v13162, %v13200
  %v13234 = vadd.f32 %v13163, %v13200
  %v13235 = vadd.f32 %v13164, %v13200
  %v13236 = vadd.f32 %v13165, %v13200
  %v13237 = vadd.f32 %v13166, %v13200
  %v13238 = vadd.f32 %v13167, %v13200
  %v13239 = vadd.f32 %v13168, %v13200
  %v13240 = vadd.f32 %v13169, %v13200
  %v13241 = vadd.f32 %v13170, %v13200
  %v13242 = vadd.f32 %v13171, %v13200
  %v13243 = vadd.f32 %v13172, %v13200
  %v13244 = vadd.f32 %v13173, %v13200
  %v13245 = vadd.f32 %v13174, %v13200
  %v13246 = vadd.f32 %v13175, %v13200
  %v13247 = vadd.f32 %v13176, %v13200
  %v13248 = vadd.f32 %v13177, %v13200
  %v13249 = vadd.f32 %v13178, %v13200
  %v13250 = vadd.f32 %v13179, %v13200
  %v13251 = vadd.f32 %v13180, %v13200
  %v13252 = vadd.f32 %v13181, %v13200
  %v13253 = vadd.f32 %v13182, %v13200
  %v13254 = vadd.f32 %v13183, %v13200
  %v13255 = vadd.f32 %v13184, %v13200
  %v13256 = vadd.f32 %v13185, %v13200
  %v13257 = vadd.f32 %v13186, %v13200
  %v13258 = vadd.f32 %v13187, %v13200
  %v13259 = vadd.f32 %v13188, %v13200
  %v13260 = vadd.f32 %v13189, %v13200
  %v13261 = vadd.f32 %v13190, %v13200
  %v13262 = vadd.f32 %v13191, %v13200
  %v13263 = vadd.f32 %v13192, %v13200
  %v13264 = vadd.f32 %v13193, %v13200
  %v13265 = vadd.f32 %v13194, %v13200
  %v13266 = vadd.f32 %v13202, %v199
  %v13267 = vadd.f32 %v13203, %v200
  %v13268 = vadd.f32 %v13204, %v201
  %v13269 = vadd.f32 %v13205, %v202
  %v13270 = vadd.f32 %v13206, %v203
  %v13271 = vadd.f32 %v13207, %v204
  %v13272 = vadd.f32 %v13208, %v205
  %v13273 = vadd.f32 %v13209, %v206
  %v13274 = vadd.f32 %v13210, %v207
  %v13275 = vadd.f32 %v13211, %v208
  %v13276 = vadd.f32 %v13212, %v209
  %v13277 = vadd.f32 %v13213, %v210
  %v13278 = vadd.f32 %v13214, %v211
  %v13279 = vadd.f32 %v13215, %v212
  %v13280 = vadd.f32 %v13216, %v213
  %v13281 = vadd.f32 %v13217, %v214
  %v13282 = vadd.f32 %v13218, %v215
  %v13283 = vadd.f32 %v13219, %v216
  %v13284 = vadd.f32 %v13220, %v217
  %v13285 = vadd.f32 %v13221, %v218
  %v13286 = vadd.f32 %v13222, %v219
  %v13287 = vadd.f32 %v13223, %v220
  %v13288 = vadd.f32 %v13224, %v221
  %v13289 = vadd.f32 %v13225, %v222
  %v13290 = vadd.f32 %v13226, %v223
  %v13291 = vadd.f32 %v13227, %v224
  %v13292 = vadd.f32 %v13228, %v225
  %v13293 = vadd.f32 %v13229, %v226
  %v13294 = vadd.f32 %v13230, %v227
  %v13295 = vadd.f32 %v13231, %v228
  %v13296 = vadd.f32 %v13232, %v229
  %v13297 = vadd.f32 %v13233, %v230
  %v13298 = vadd.f32 %v13234, %v231
  %v13299 = vadd.f32 %v13235, %v232
  %v13300 = vadd.f32 %v13236, %v233
  %v13301 = vadd.f32 %v13237, %v234
  %v13302 = vadd.f32 %v13238, %v235
  %v13303 = vadd.f32 %v13239, %v236
  %v13304 = vadd.f32 %v13240, %v237
  %v13305 = vadd.f32 %v13241, %v238
  %v13306 = vadd.f32 %v13242, %v239
  %v13307 = vadd.f32 %v13243, %v240
  %v13308 = vadd.f32 %v13244, %v241
  %v13309 = vadd.f32 %v13245, %v242
  %v13310 = vadd.f32 %v13246, %v243
  %v13311 = vadd.f32 %v13247, %v244
  %v13312 = vadd.f32 %v13248, %v245
  %v13313 = vadd.f32 %v13249, %v246
  %v13314 = vadd.f32 %v13250, %v247
  %v13315 = vadd.f32 %v13251, %v248
  %v13316 = vadd.f32 %v13252, %v249
  %v13317 = vadd.f32 %v13253, %v250
  %v13318 = vadd.f32 %v13254, %v251
  %v13319 = vadd.f32 %v13255, %v252
  %v13320 = vadd.f32 %v13256, %v253
  %v13321 = vadd.f32 %v13257, %v254
  %v13322 = vadd.f32 %v13258, %v255
  %v13323 = vadd.f32 %v13259, %v256
  %v13324 = vadd.f32 %v13260, %v257
  %v13325 = vadd.f32 %v13261, %v258
  %v13326 = vadd.f32 %v13262, %v259
  %v13327 = vadd.f32 %v13263, %v260
  %v13328 = vadd.f32 %v13264, %v261
  %v13329 = vadd.f32 %v13265, %v262
  %v13330 = vmax.f32 %v13266, 0.0
  %v13331 = vmax.f32 %v13267, 0.0
  %v13332 = vmax.f32 %v13268, 0.0
  %v13333 = vmax.f32 %v13269, 0.0
  %v13334 = vmax.f32 %v13270, 0.0
  %v13335 = vmax.f32 %v13271, 0.0
  %v13336 = vmax.f32 %v13272, 0.0
  %v13337 = vmax.f32 %v13273, 0.0
  %v13338 = vmax.f32 %v13274, 0.0
  %v13339 = vmax.f32 %v13275, 0.0
  %v13340 = vmax.f32 %v13276, 0.0
  %v13341 = vmax.f32 %v13277, 0.0
  %v13342 = vmax.f32 %v13278, 0.0
  %v13343 = vmax.f32 %v13279, 0.0
  %v13344 = vmax.f32 %v13280, 0.0
  %v13345 = vmax.f32 %v13281, 0.0
  %v13346 = vmax.f32 %v13282, 0.0
  %v13347 = vmax.f32 %v13283, 0.0
  %v13348 = vmax.f32 %v13284, 0.0
  %v13349 = vmax.f32 %v13285, 0.0
  %v13350 = vmax.f32 %v13286, 0.0
  %v13351 = vmax.f32 %v13287, 0.0
  %v13352 = vmax.f32 %v13288, 0.0
  %v13353 = vmax.f32 %v13289, 0.0
  %v13354 = vmax.f32 %v13290, 0.0
  %v13355 = vmax.f32 %v13291, 0.0
  %v13356 = vmax.f32 %v13292, 0.0
  %v13357 = vmax.f32 %v13293, 0.0
  %v13358 = vmax.f32 %v13294, 0.0
  %v13359 = vmax.f32 %v13295, 0.0
  %v13360 = vmax.f32 %v13296, 0.0
  %v13361 = vmax.f32 %v13297, 0.0
  %v13362 = vmax.f32 %v13298, 0.0
  %v13363 = vmax.f32 %v13299, 0.0
  %v13364 = vmax.f32 %v13300, 0.0
  %v13365 = vmax.f32 %v13301, 0.0
  %v13366 = vmax.f32 %v13302, 0.0
  %v13367 = vmax.f32 %v13303, 0.0
  %v13368 = vmax.f32 %v13304, 0.0
  %v13369 = vmax.f32 %v13305, 0.0
  %v13370 = vmax.f32 %v13306, 0.0
  %v13371 = vmax.f32 %v13307, 0.0
  %v13372 = vmax.f32 %v13308, 0.0
  %v13373 = vmax.f32 %v13309, 0.0
  %v13374 = vmax.f32 %v13310, 0.0
  %v13375 = vmax.f32 %v13311, 0.0
  %v13376 = vmax.f32 %v13312, 0.0
  %v13377 = vmax.f32 %v13313, 0.0
  %v13378 = vmax.f32 %v13314, 0.0
  %v13379 = vmax.f32 %v13315, 0.0
  %v13380 = vmax.f32 %v13316, 0.0
  %v13381 = vmax.f32 %v13317, 0.0
  %v13382 = vmax.f32 %v13318, 0.0
  %v13383 = vmax.f32 %v13319, 0.0
  %v13384 = vmax.f32 %v13320, 0.0
  %v13385 = vmax.f32 %v13321, 0.0
  %v13386 = vmax.f32 %v13322, 0.0
  %v13387 = vmax.f32 %v13323, 0.0
  %v13388 = vmax.f32 %v13324, 0.0
  %v13389 = vmax.f32 %v13325, 0.0
  %v13390 = vmax.f32 %v13326, 0.0
  %v13391 = vmax.f32 %v13327, 0.0
  %v13392 = vmax.f32 %v13328, 0.0
  %v13393 = vmax.f32 %v13329, 0.0
  %13394 = vst.msk [vmem:[%s7] sm:$0xff] %vm26, %v13330
  %13395 = vst.msk [vmem:[%s7 + $0x8] sm:$0xff] %vm26, %v13331
  %13396 = vst.msk [vmem:[%s7 + $0x10] sm:$0xff] %vm26, %v13332
  %13397 = vst.msk [vmem:[%s7 + $0x18] sm:$0xff] %vm26, %v13333
  %13398 = vst.msk [vmem:[%s7 + $0x20] sm:$0xff] %vm26, %v13334
  %13399 = vst.msk [vmem:[%s7 + $0x28] sm:$0xff] %vm26, %v13335
  %13400 = vst.msk [vmem:[%s7 + $0x30] sm:$0xff] %vm26, %v13336
  %13401 = vst.msk [vmem:[%s7 + $0x38] sm:$0xff] %vm26, %v13337
  %13402 = vst.msk [vmem:[%s7 + $0x40] sm:$0xff] %vm26, %v13338
  %13403 = vst.msk [vmem:[%s7 + $0x48] sm:$0xff] %vm26, %v13339
  %13404 = vst.msk [vmem:[%s7 + $0x50] sm:$0xff] %vm26, %v13340
  %13405 = vst.msk [vmem:[%s7 + $0x58] sm:$0xff] %vm26, %v13341
  %13406 = vst.msk [vmem:[%s7 + $0x60] sm:$0xff] %vm26, %v13342
  %13407 = vst.msk [vmem:[%s7 + $0x68] sm:$0xff] %vm26, %v13343
  %13408 = vst.msk [vmem:[%s7 + $0x70] sm:$0xff] %vm26, %v13344
  %13409 = vst.msk [vmem:[%s7 + $0x78] sm:$0xff] %vm26, %v13345
  %13410 = vst.msk [vmem:[%s7 + $0x80] sm:$0xff] %vm26, %v13346
  %13411 = vst.msk [vmem:[%s7 + $0x88] sm:$0xff] %vm26, %v13347
  %13412 = vst.msk [vmem:[%s7 + $0x90] sm:$0xff] %vm26, %v13348
  %13413 = vst.msk [vmem:[%s7 + $0x98] sm:$0xff] %vm26, %v13349
  %13414 = vst.msk [vmem:[%s7 + $0xa0] sm:$0xff] %vm26, %v13350
  %13415 = vst.msk [vmem:[%s7 + $0xa8] sm:$0xff] %vm26, %v13351
  %13416 = vst.msk [vmem:[%s7 + $0xb0] sm:$0xff] %vm26, %v13352
  %13417 = vst.msk [vmem:[%s7 + $0xb8] sm:$0xff] %vm26, %v13353
  %13418 = vst.msk [vmem:[%s7 + $0xc0] sm:$0xff] %vm26, %v13354
  %13419 = vst.msk [vmem:[%s7 + $0xc8] sm:$0xff] %vm26, %v13355
  %13420 = vst.msk [vmem:[%s7 + $0xd0] sm:$0xff] %vm26, %v13356
  %13421 = vst.msk [vmem:[%s7 + $0xd8] sm:$0xff] %vm26, %v13357
  %13422 = vst.msk [vmem:[%s7 + $0xe0] sm:$0xff] %vm26, %v13358
  %13423 = vst.msk [vmem:[%s7 + $0xe8] sm:$0xff] %vm26, %v13359
  %13424 = vst.msk [vmem:[%s7 + $0xf0] sm:$0xff] %vm26, %v13360
  %13425 = vst.msk [vmem:[%s7 + $0xf8] sm:$0xff] %vm26, %v13361
  %13426 = vst.msk [vmem:[%s7 + $0x100] sm:$0xff] %vm26, %v13362
  %13427 = vst.msk [vmem:[%s7 + $0x108] sm:$0xff] %vm26, %v13363
  %13428 = vst.msk [vmem:[%s7 + $0x110] sm:$0xff] %vm26, %v13364
  %13429 = vst.msk [vmem:[%s7 + $0x118] sm:$0xff] %vm26, %v13365
  %13430 = vst.msk [vmem:[%s7 + $0x120] sm:$0xff] %vm26, %v13366
  %13431 = vst.msk [vmem:[%s7 + $0x128] sm:$0xff] %vm26, %v13367
  %13432 = vst.msk [vmem:[%s7 + $0x130] sm:$0xff] %vm26, %v13368
  %13433 = vst.msk [vmem:[%s7 + $0x138] sm:$0xff] %vm26, %v13369
  %13434 = vst.msk [vmem:[%s7 + $0x140] sm:$0xff] %vm26, %v13370
  %13435 = vst.msk [vmem:[%s7 + $0x148] sm:$0xff] %vm26, %v13371
  %13436 = vst.msk [vmem:[%s7 + $0x150] sm:$0xff] %vm26, %v13372
  %13437 = vst.msk [vmem:[%s7 + $0x158] sm:$0xff] %vm26, %v13373
  %13438 = vst.msk [vmem:[%s7 + $0x160] sm:$0xff] %vm26, %v13374
  %13439 = vst.msk [vmem:[%s7 + $0x168] sm:$0xff] %vm26, %v13375
  %13440 = vst.msk [vmem:[%s7 + $0x170] sm:$0xff] %vm26, %v13376
  %13441 = vst.msk [vmem:[%s7 + $0x178] sm:$0xff] %vm26, %v13377
  %13442 = vst.msk [vmem:[%s7 + $0x180] sm:$0xff] %vm26, %v13378
  %13443 = vst.msk [vmem:[%s7 + $0x188] sm:$0xff] %vm26, %v13379
  %13444 = vst.msk [vmem:[%s7 + $0x190] sm:$0xff] %vm26, %v13380
  %13445 = vst.msk [vmem:[%s7 + $0x198] sm:$0xff] %vm26, %v13381
  %13446 = vst.msk [vmem:[%s7 + $0x1a0] sm:$0xff] %vm26, %v13382
  %13447 = vst.msk [vmem:[%s7 + $0x1a8] sm:$0xff] %vm26, %v13383
  %13448 = vst.msk [vmem:[%s7 + $0x1b0] sm:$0xff] %vm26, %v13384
  %13449 = vst.msk [vmem:[%s7 + $0x1b8] sm:$0xff] %vm26, %v13385
  %13450 = vst.msk [vmem:[%s7 + $0x1c0] sm:$0xff] %vm26, %v13386
  %13451 = vst.msk [vmem:[%s7 + $0x1c8] sm:$0xff] %vm26, %v13387
  %13452 = vst.msk [vmem:[%s7 + $0x1d0] sm:$0xff] %vm26, %v13388
  %13453 = vst.msk [vmem:[%s7 + $0x1d8] sm:$0xff] %vm26, %v13389
  %13454 = vst.msk [vmem:[%s7 + $0x1e0] sm:$0xff] %vm26, %v13390
  %13455 = vst.msk [vmem:[%s7 + $0x1e8] sm:$0xff] %vm26, %v13391
  %13456 = vst.msk [vmem:[%s7 + $0x1f0] sm:$0xff] %vm26, %v13392
  %13457 = vst.msk [vmem:[%s7 + $0x1f8] sm:$0xff] %vm26, %v13393
  // Predicated region
  $region30: #{tpu_custom_call.1} parent=0 // pred_check
    _
  $region31: #{tpu_custom_call.1} parent=0 // pred_check_branch
    %13459 = sbr.rel (0) target = $region33
  $region32: #{tpu_custom_call.1} parent=0 // pred_region
    _
  $region33: #{tpu_custom_call.1} parent=0 // pred_fallthru
    _
  // Predicated region
  $region34: #{tpu_custom_call.1} parent=0 // pred_check
    _
  $region35: #{tpu_custom_call.1} parent=0 // pred_check_branch
    %13461 = sbr.rel (0) target = $region37
  $region36: #{tpu_custom_call.1} parent=0 // pred_region
    _
  $region37: #{tpu_custom_call.1} parent=0 // pred_fallthru
    _

</llo_original>
